<compile_context>
chip_gen: v7x
topology: tpu7x:2x2x1
jax: 0.10.0
libtpu: 0.0.40
codegen_flags: <defaults>
</compile_context>

<pallas_src>
import numpy as np
import jax
import jax.numpy as jnp
from jax.experimental import pallas as pl
from jax.experimental.pallas import tpu as pltpu


# ----------------------------------------------------------------------------
# Static geometry helpers (constants built with numpy at trace time)
# ----------------------------------------------------------------------------
def _pad_rows(H, W):
    # flat zero-padded activation: (H+2)*(W+2) rows + 2 slack rows so the last conv
    # tap's contiguous read stays in-bounds.
    return (H + 2) * (W + 2) + 2


def _pool_pad_gather(H, W):
    """(4, pad_rows(H/2,W/2), H*(W+2)) one-hot matrices G_t.

    G_t @ conv_out gathers pool-tap t of every 2x2 window and scatters it into the
    interior of the next layer's zero-padded flat buffer (borders/slack rows are 0).
    The fused pool is then  max_t (G_t @ conv_out).
    """
    Ho, Wo = H // 2, W // 2
    Wp_in, Wp_out = W + 2, Wo + 2
    g = np.zeros((4, _pad_rows(Ho, Wo), H * Wp_in), np.float32)
    for dh in range(2):
        for dw in range(2):
            t = dh * 2 + dw
            for ho in range(Ho):
                for wo in range(Wo):
                    dst = (ho + 1) * Wp_out + (wo + 1)
                    src = (2 * ho + dh) * Wp_in + (2 * wo + dw)
                    g[t, dst, src] = 1.0
    return jnp.asarray(g)


def _avg_select(H, W):
    """(1, H*(W+2)) weights averaging the valid spatial positions (adaptive avg pool 1x1)."""
    Wp = W + 2
    a = np.zeros((1, H * Wp), np.float32)
    for h in range(H):
        for w in range(W):
            a[0, h * Wp + w] = 1.0 / (H * W)
    return jnp.asarray(a)


# ----------------------------------------------------------------------------
# Fused kernel: entire forward pass for one image per grid step
# ----------------------------------------------------------------------------
def _fused_kernel(img_ref,
                  w1_ref, b1_ref, g1_ref,
                  w2_ref, b2_ref, g2_ref,
                  w3_ref, b3_ref, g3_ref,
                  w4_ref, b4_ref, avg_ref,
                  lw1_ref, lb1_ref, lw2_ref, lb2_ref,
                  bbox_ref,
                  out_ref,
                  pad2_ref, pad3_ref, pad4_ref):
    f32 = jnp.float32

    def conv_relu(read, H, Wp, w_ref, b_ref):
        # 'same' 3x3 conv via 9 per-tap matmuls over the flat zero-padded activation.
        n = H * Wp
        acc = None
        for kh in range(3):
            for kw in range(3):
                lhs = read(kh * Wp + kw, n)                       # (H*Wp, Cin) contiguous
                part = jnp.dot(lhs, w_ref[kh * 3 + kw],
                               preferred_element_type=f32)
                acc = part if acc is None else acc + part
        return jnp.maximum(acc + b_ref[...], 0.0)                 # (H*Wp, Cout)

    def pool_pad(y, g_ref, dst_ref):
        # 2x2/2 maxpool fused with re-padding: max over 4 one-hot gather matmuls.
        acc = jnp.dot(g_ref[0], y, preferred_element_type=f32)
        for t in range(1, 4):
            acc = jnp.maximum(acc, jnp.dot(g_ref[t], y, preferred_element_type=f32))
        dst_ref[...] = acc                                        # full store, zero borders

    # conv1: 16x16x3 -> 16x16x64, pool -> padded 8x8x64
    y1 = conv_relu(lambda off, n: img_ref[0, pl.ds(off, n), :], 16, 18, w1_ref, b1_ref)
    pool_pad(y1, g1_ref, pad2_ref)
    # conv2: 8x8x64 -> 8x8x96, pool -> padded 4x4x96
    y2 = conv_relu(lambda off, n: pad2_ref[pl.ds(off, n), :], 8, 10, w2_ref, b2_ref)
    pool_pad(y2, g2_ref, pad3_ref)
    # conv3: 4x4x96 -> 4x4x128, pool -> padded 2x2x128
    y3 = conv_relu(lambda off, n: pad3_ref[pl.ds(off, n), :], 4, 6, w3_ref, b3_ref)
    pool_pad(y3, g3_ref, pad4_ref)
    # conv4: 2x2x128 -> 2x2x192 (no pool)
    y4 = conv_relu(lambda off, n: pad4_ref[pl.ds(off, n), :], 2, 4, w4_ref, b4_ref)

    # head: adaptive avg pool (1,1) + linear1+ReLU + linear2+ReLU + bbox add
    feat = jnp.dot(avg_ref[...], y4, preferred_element_type=f32)                       # (1, 192)
    h1 = jnp.maximum(jnp.dot(feat, lw1_ref[...], preferred_element_type=f32)
                     + lb1_ref[...], 0.0)                                              # (1, 64)
    h2 = jnp.maximum(jnp.dot(h1, lw2_ref[...], preferred_element_type=f32)
                     + lb2_ref[...], 0.0)                                              # (1, 4)
    out_ref[0] = (h2 + bbox_ref[0]).astype(out_ref.dtype)


# ----------------------------------------------------------------------------
# Wrapper: one pallas_call for the whole network
# ----------------------------------------------------------------------------
def multi_input_net2(image_nchw, unrefined_bounding_box, p):
    B = image_nchw.shape[0]

    # One-time input layout prep (cheap XLA glue): NCHW -> NHWC, zero-pad to 18x18,
    # flatten rows and append 2 zero slack rows -> (B, 326, 3).
    x = jnp.transpose(image_nchw, (0, 2, 3, 1)).astype(jnp.float32)
    xp = jnp.pad(x, ((0, 0), (1, 1), (1, 1), (0, 0)))
    xf = jnp.pad(xp.reshape(B, 18 * 18, 3), ((0, 0), (0, 2), (0, 0)))

    g1, g2, g3 = _pool_pad_gather(16, 16), _pool_pad_gather(8, 8), _pool_pad_gather(4, 4)
    avg = _avg_select(2, 2)

    def cw(w):   # (3,3,Cin,Cout) -> (9,Cin,Cout), tap = kh*3+kw
        return w.reshape(9, w.shape[2], w.shape[3])

    def rb(b):   # (C,) -> (1,C)
        return b.reshape(1, -1)

    bbox = unrefined_bounding_box.reshape(B, 1, 4).astype(jnp.float32)

    def const_spec(shape):
        zeros = (0,) * len(shape)
        return pl.BlockSpec(shape, lambda b, _z=zeros: _z)

    in_specs = [
        pl.BlockSpec((1, 326, 3), lambda b: (b, 0, 0)),                     # image
        const_spec((9, 3, 64)),  const_spec((1, 64)),  const_spec((4, 102, 288)),
        const_spec((9, 64, 96)), const_spec((1, 96)),  const_spec((4, 38, 80)),
        const_spec((9, 96, 128)), const_spec((1, 128)), const_spec((4, 18, 24)),
        const_spec((9, 128, 192)), const_spec((1, 192)), const_spec((1, 8)),
        const_spec((192, 64)), const_spec((1, 64)),
        const_spec((64, 4)),  const_spec((1, 4)),
        pl.BlockSpec((1, 1, 4), lambda b: (b, 0, 0)),                       # bbox
    ]

    out = pl.pallas_call(
        _fused_kernel,
        out_shape=jax.ShapeDtypeStruct((B, 1, 4), jnp.float32),
        grid=(B,),
        in_specs=in_specs,
        out_specs=pl.BlockSpec((1, 1, 4), lambda b: (b, 0, 0)),
        scratch_shapes=[
            pltpu.VMEM((_pad_rows(8, 8), 64), jnp.float32),    # padded conv2 input (102, 64)
            pltpu.VMEM((_pad_rows(4, 4), 96), jnp.float32),    # padded conv3 input (38, 96)
            pltpu.VMEM((_pad_rows(2, 2), 128), jnp.float32),   # padded conv4 input (18, 128)
        ],
        compiler_params=pltpu.CompilerParams(dimension_semantics=("parallel",)),
    )(xf,
      cw(p["cw1"]), rb(p["cb1"]), g1,
      cw(p["cw2"]), rb(p["cb2"]), g2,
      cw(p["cw3"]), rb(p["cb3"]), g3,
      cw(p["cw4"]), rb(p["cb4"]), avg,
      p["lw1"], rb(p["lb1"]), p["lw2"], rb(p["lb2"]),
      bbox)
    return out.reshape(B, 4)


# ----------------------------------------------------------------------------
# Deterministic parameter init (shapes from MultiInputNet2.__init__)
# ----------------------------------------------------------------------------
def init_params(key):
    def conv_w(k, cin, cout):
        return jax.random.normal(k, (3, 3, cin, cout), jnp.float32) / jnp.sqrt(9.0 * cin)

    def lin_w(k, cin, cout):
        return jax.random.normal(k, (cin, cout), jnp.float32) / jnp.sqrt(float(cin))

    ks = jax.random.split(key, 12)
    return {
        "cw1": conv_w(ks[0], 3, 64),    "cb1": 0.01 * jax.random.normal(ks[1], (64,), jnp.float32),
        "cw2": conv_w(ks[2], 64, 96),   "cb2": 0.01 * jax.random.normal(ks[3], (96,), jnp.float32),
        "cw3": conv_w(ks[4], 96, 128),  "cb3": 0.01 * jax.random.normal(ks[5], (128,), jnp.float32),
        "cw4": conv_w(ks[6], 128, 192), "cb4": 0.01 * jax.random.normal(ks[7], (192,), jnp.float32),
        "lw1": lin_w(ks[8], 192, 64),   "lb1": 0.01 * jax.random.normal(ks[9], (64,), jnp.float32),
        "lw2": lin_w(ks[10], 64, 4),    "lb2": 0.01 * jax.random.normal(ks[11], (4,), jnp.float32),
    }


# ----------------------------------------------------------------------------
# Pure-JAX reference for correctness checking
# ----------------------------------------------------------------------------
def reference_forward(image_nchw, bbox, p):
    x = jnp.transpose(image_nchw, (0, 2, 3, 1))

    def conv(x, w, b):
        y = jax.lax.conv_general_dilated(
            x, w, window_strides=(1, 1), padding="SAME",
            dimension_numbers=("NHWC", "HWIO", "NHWC"))
        return jax.nn.relu(y + b)

    def pool(x):
        return jax.lax.reduce_window(x, -jnp.inf, jax.lax.max,
                                     (1, 2, 2, 1), (1, 2, 2, 1), "VALID")

    x = pool(conv(x, p["cw1"], p["cb1"]))
    x = pool(conv(x, p["cw2"], p["cb2"]))
    x = pool(conv(x, p["cw3"], p["cb3"]))
    x = conv(x, p["cw4"], p["cb4"])
    feat = x.mean(axis=(1, 2))
    h = jax.nn.relu(feat @ p["lw1"] + p["lb1"])
    y = jax.nn.relu(h @ p["lw2"] + p["lb2"])
    return y + bbox


if __name__ == "__main__":
    key = jax.random.PRNGKey(0)
    k_img, k_bbox, k_p = jax.random.split(key, 3)
    image = jax.random.normal(k_img, (2, 3, 16, 16), jnp.float32)   # NCHW, like PyTorch
    bbox = jax.random.normal(k_bbox, (2, 4), jnp.float32)
    params = init_params(k_p)

    out = jax.jit(multi_input_net2)(image, bbox, params)
    out = jax.block_until_ready(out)

    ref = reference_forward(image, bbox, params)
    assert out.shape == (2, 4), out.shape
    assert jnp.allclose(out, ref, rtol=2e-3, atol=2e-3), (out, ref)
    print("KERNEL_OK")
</pallas_src>

<mosaic_0001>
module attributes {stable_mosaic.version = 11 : i64} {
  func.func @_fused_kernel(%arg0: i32, %arg1: memref<1x326x3xf32, #tpu.memory_space<vmem>>, %arg2: memref<9x3x64xf32, #tpu.memory_space<vmem>>, %arg3: memref<1x64xf32, #tpu.memory_space<vmem>>, %arg4: memref<4x102x288xf32, #tpu.memory_space<vmem>>, %arg5: memref<9x64x96xf32, #tpu.memory_space<vmem>>, %arg6: memref<1x96xf32, #tpu.memory_space<vmem>>, %arg7: memref<4x38x80xf32, #tpu.memory_space<vmem>>, %arg8: memref<9x96x128xf32, #tpu.memory_space<vmem>>, %arg9: memref<1x128xf32, #tpu.memory_space<vmem>>, %arg10: memref<4x18x24xf32, #tpu.memory_space<vmem>>, %arg11: memref<9x128x192xf32, #tpu.memory_space<vmem>>, %arg12: memref<1x192xf32, #tpu.memory_space<vmem>>, %arg13: memref<1x8xf32, #tpu.memory_space<vmem>>, %arg14: memref<192x64xf32, #tpu.memory_space<vmem>>, %arg15: memref<1x64xf32, #tpu.memory_space<vmem>>, %arg16: memref<64x4xf32, #tpu.memory_space<vmem>>, %arg17: memref<1x4xf32, #tpu.memory_space<vmem>>, %arg18: memref<1x1x4xf32, #tpu.memory_space<vmem>>, %arg19: memref<1x1x4xf32, #tpu.memory_space<vmem>>, %arg20: memref<102x64xf32, #tpu.memory_space<vmem>>, %arg21: memref<38x96xf32, #tpu.memory_space<vmem>>, %arg22: memref<18x128xf32, #tpu.memory_space<vmem>>) attributes {dimension_semantics = [#tpu.dimension_semantics<parallel>], iteration_bounds = array<i64: 2>, scalar_prefetch = 0 : i64, scratch_operands = 3 : i64, tpu.core_type = #tpu.core_type<tc>, window_params = [{transform_indices = @transform_0, window_bounds = array<i64: 1, 326, 3>}, {pipeline_mode = #tpu.pipeline_mode<synchronous>, transform_indices = @transform_1, window_bounds = array<i64: 9, 3, 64>}, {pipeline_mode = #tpu.pipeline_mode<synchronous>, transform_indices = @transform_2, window_bounds = array<i64: 1, 64>}, {pipeline_mode = #tpu.pipeline_mode<synchronous>, transform_indices = @transform_3, window_bounds = array<i64: 4, 102, 288>}, {pipeline_mode = #tpu.pipeline_mode<synchronous>, transform_indices = @transform_4, window_bounds = array<i64: 9, 64, 96>}, {pipeline_mode = #tpu.pipeline_mode<synchronous>, transform_indices = @transform_5, window_bounds = array<i64: 1, 96>}, {pipeline_mode = #tpu.pipeline_mode<synchronous>, transform_indices = @transform_6, window_bounds = array<i64: 4, 38, 80>}, {pipeline_mode = #tpu.pipeline_mode<synchronous>, transform_indices = @transform_7, window_bounds = array<i64: 9, 96, 128>}, {pipeline_mode = #tpu.pipeline_mode<synchronous>, transform_indices = @transform_8, window_bounds = array<i64: 1, 128>}, {pipeline_mode = #tpu.pipeline_mode<synchronous>, transform_indices = @transform_9, window_bounds = array<i64: 4, 18, 24>}, {pipeline_mode = #tpu.pipeline_mode<synchronous>, transform_indices = @transform_10, window_bounds = array<i64: 9, 128, 192>}, {pipeline_mode = #tpu.pipeline_mode<synchronous>, transform_indices = @transform_11, window_bounds = array<i64: 1, 192>}, {pipeline_mode = #tpu.pipeline_mode<synchronous>, transform_indices = @transform_12, window_bounds = array<i64: 1, 8>}, {pipeline_mode = #tpu.pipeline_mode<synchronous>, transform_indices = @transform_13, window_bounds = array<i64: 192, 64>}, {pipeline_mode = #tpu.pipeline_mode<synchronous>, transform_indices = @transform_14, window_bounds = array<i64: 1, 64>}, {pipeline_mode = #tpu.pipeline_mode<synchronous>, transform_indices = @transform_15, window_bounds = array<i64: 64, 4>}, {pipeline_mode = #tpu.pipeline_mode<synchronous>, transform_indices = @transform_16, window_bounds = array<i64: 1, 4>}, {transform_indices = @transform_17, window_bounds = array<i64: 1, 1, 4>}, {transform_indices = @transform_18, window_bounds = array<i64: 1, 1, 4>}]} {
    %c0 = arith.constant 0 : index
    %c0_0 = arith.constant 0 : index
    %c0_1 = arith.constant 0 : index
    %0 = vector.load %arg1[%c0, %c0_0, %c0_1] : memref<1x326x3xf32, #tpu.memory_space<vmem>>, vector<1x288x3xf32>
    %1 = vector.shape_cast %0 : vector<1x288x3xf32> to vector<288x3xf32>
    %c0_2 = arith.constant 0 : index
    %c0_3 = arith.constant 0 : index
    %c0_4 = arith.constant 0 : index
    %2 = vector.load %arg2[%c0_2, %c0_3, %c0_4] : memref<9x3x64xf32, #tpu.memory_space<vmem>>, vector<1x3x64xf32>
    %3 = vector.shape_cast %2 : vector<1x3x64xf32> to vector<3x64xf32>
    %cst = arith.constant dense<0.000000e+00> : vector<288x64xf32>
    %4 = tpu.matmul %1, %3, %cst {dimension_numbers = #tpu.dot_dimension_numbers<[1], [0], [0], [1], [0, 0, 1, 1], [], []>} : vector<288x3xf32>, vector<3x64xf32>, vector<288x64xf32> -> vector<288x64xf32>
    %c0_5 = arith.constant 0 : index
    %c1 = arith.constant 1 : index
    %c0_6 = arith.constant 0 : index
    %5 = vector.load %arg1[%c0_5, %c1, %c0_6] : memref<1x326x3xf32, #tpu.memory_space<vmem>>, vector<1x288x3xf32>
    %6 = vector.shape_cast %5 : vector<1x288x3xf32> to vector<288x3xf32>
    %c1_7 = arith.constant 1 : index
    %c0_8 = arith.constant 0 : index
    %c0_9 = arith.constant 0 : index
    %7 = vector.load %arg2[%c1_7, %c0_8, %c0_9] : memref<9x3x64xf32, #tpu.memory_space<vmem>>, vector<1x3x64xf32>
    %8 = vector.shape_cast %7 : vector<1x3x64xf32> to vector<3x64xf32>
    %cst_10 = arith.constant dense<0.000000e+00> : vector<288x64xf32>
    %9 = tpu.matmul %6, %8, %cst_10 {dimension_numbers = #tpu.dot_dimension_numbers<[1], [0], [0], [1], [0, 0, 1, 1], [], []>} : vector<288x3xf32>, vector<3x64xf32>, vector<288x64xf32> -> vector<288x64xf32>
    %10 = arith.addf %4, %9 : vector<288x64xf32>
    %c0_11 = arith.constant 0 : index
    %c2 = arith.constant 2 : index
    %c0_12 = arith.constant 0 : index
    %11 = vector.load %arg1[%c0_11, %c2, %c0_12] : memref<1x326x3xf32, #tpu.memory_space<vmem>>, vector<1x288x3xf32>
    %12 = vector.shape_cast %11 : vector<1x288x3xf32> to vector<288x3xf32>
    %c2_13 = arith.constant 2 : index
    %c0_14 = arith.constant 0 : index
    %c0_15 = arith.constant 0 : index
    %13 = vector.load %arg2[%c2_13, %c0_14, %c0_15] : memref<9x3x64xf32, #tpu.memory_space<vmem>>, vector<1x3x64xf32>
    %14 = vector.shape_cast %13 : vector<1x3x64xf32> to vector<3x64xf32>
    %cst_16 = arith.constant dense<0.000000e+00> : vector<288x64xf32>
    %15 = tpu.matmul %12, %14, %cst_16 {dimension_numbers = #tpu.dot_dimension_numbers<[1], [0], [0], [1], [0, 0, 1, 1], [], []>} : vector<288x3xf32>, vector<3x64xf32>, vector<288x64xf32> -> vector<288x64xf32>
    %16 = arith.addf %10, %15 : vector<288x64xf32>
    %c0_17 = arith.constant 0 : index
    %c18 = arith.constant 18 : index
    %c0_18 = arith.constant 0 : index
    %17 = vector.load %arg1[%c0_17, %c18, %c0_18] : memref<1x326x3xf32, #tpu.memory_space<vmem>>, vector<1x288x3xf32>
    %18 = vector.shape_cast %17 : vector<1x288x3xf32> to vector<288x3xf32>
    %c3 = arith.constant 3 : index
    %c0_19 = arith.constant 0 : index
    %c0_20 = arith.constant 0 : index
    %19 = vector.load %arg2[%c3, %c0_19, %c0_20] : memref<9x3x64xf32, #tpu.memory_space<vmem>>, vector<1x3x64xf32>
    %20 = vector.shape_cast %19 : vector<1x3x64xf32> to vector<3x64xf32>
    %cst_21 = arith.constant dense<0.000000e+00> : vector<288x64xf32>
    %21 = tpu.matmul %18, %20, %cst_21 {dimension_numbers = #tpu.dot_dimension_numbers<[1], [0], [0], [1], [0, 0, 1, 1], [], []>} : vector<288x3xf32>, vector<3x64xf32>, vector<288x64xf32> -> vector<288x64xf32>
    %22 = arith.addf %16, %21 : vector<288x64xf32>
    %c0_22 = arith.constant 0 : index
    %c19 = arith.constant 19 : index
    %c0_23 = arith.constant 0 : index
    %23 = vector.load %arg1[%c0_22, %c19, %c0_23] : memref<1x326x3xf32, #tpu.memory_space<vmem>>, vector<1x288x3xf32>
    %24 = vector.shape_cast %23 : vector<1x288x3xf32> to vector<288x3xf32>
    %c4 = arith.constant 4 : index
    %c0_24 = arith.constant 0 : index
    %c0_25 = arith.constant 0 : index
    %25 = vector.load %arg2[%c4, %c0_24, %c0_25] : memref<9x3x64xf32, #tpu.memory_space<vmem>>, vector<1x3x64xf32>
    %26 = vector.shape_cast %25 : vector<1x3x64xf32> to vector<3x64xf32>
    %cst_26 = arith.constant dense<0.000000e+00> : vector<288x64xf32>
    %27 = tpu.matmul %24, %26, %cst_26 {dimension_numbers = #tpu.dot_dimension_numbers<[1], [0], [0], [1], [0, 0, 1, 1], [], []>} : vector<288x3xf32>, vector<3x64xf32>, vector<288x64xf32> -> vector<288x64xf32>
    %28 = arith.addf %22, %27 : vector<288x64xf32>
    %c0_27 = arith.constant 0 : index
    %c20 = arith.constant 20 : index
    %c0_28 = arith.constant 0 : index
    %29 = vector.load %arg1[%c0_27, %c20, %c0_28] : memref<1x326x3xf32, #tpu.memory_space<vmem>>, vector<1x288x3xf32>
    %30 = vector.shape_cast %29 : vector<1x288x3xf32> to vector<288x3xf32>
    %c5 = arith.constant 5 : index
    %c0_29 = arith.constant 0 : index
    %c0_30 = arith.constant 0 : index
    %31 = vector.load %arg2[%c5, %c0_29, %c0_30] : memref<9x3x64xf32, #tpu.memory_space<vmem>>, vector<1x3x64xf32>
    %32 = vector.shape_cast %31 : vector<1x3x64xf32> to vector<3x64xf32>
    %cst_31 = arith.constant dense<0.000000e+00> : vector<288x64xf32>
    %33 = tpu.matmul %30, %32, %cst_31 {dimension_numbers = #tpu.dot_dimension_numbers<[1], [0], [0], [1], [0, 0, 1, 1], [], []>} : vector<288x3xf32>, vector<3x64xf32>, vector<288x64xf32> -> vector<288x64xf32>
    %34 = arith.addf %28, %33 : vector<288x64xf32>
    %c0_32 = arith.constant 0 : index
    %c36 = arith.constant 36 : index
    %c0_33 = arith.constant 0 : index
    %35 = vector.load %arg1[%c0_32, %c36, %c0_33] : memref<1x326x3xf32, #tpu.memory_space<vmem>>, vector<1x288x3xf32>
    %36 = vector.shape_cast %35 : vector<1x288x3xf32> to vector<288x3xf32>
    %c6 = arith.constant 6 : index
    %c0_34 = arith.constant 0 : index
    %c0_35 = arith.constant 0 : index
    %37 = vector.load %arg2[%c6, %c0_34, %c0_35] : memref<9x3x64xf32, #tpu.memory_space<vmem>>, vector<1x3x64xf32>
    %38 = vector.shape_cast %37 : vector<1x3x64xf32> to vector<3x64xf32>
    %cst_36 = arith.constant dense<0.000000e+00> : vector<288x64xf32>
    %39 = tpu.matmul %36, %38, %cst_36 {dimension_numbers = #tpu.dot_dimension_numbers<[1], [0], [0], [1], [0, 0, 1, 1], [], []>} : vector<288x3xf32>, vector<3x64xf32>, vector<288x64xf32> -> vector<288x64xf32>
    %40 = arith.addf %34, %39 : vector<288x64xf32>
    %c0_37 = arith.constant 0 : index
    %c37 = arith.constant 37 : index
    %c0_38 = arith.constant 0 : index
    %41 = vector.load %arg1[%c0_37, %c37, %c0_38] : memref<1x326x3xf32, #tpu.memory_space<vmem>>, vector<1x288x3xf32>
    %42 = vector.shape_cast %41 : vector<1x288x3xf32> to vector<288x3xf32>
    %c7 = arith.constant 7 : index
    %c0_39 = arith.constant 0 : index
    %c0_40 = arith.constant 0 : index
    %43 = vector.load %arg2[%c7, %c0_39, %c0_40] : memref<9x3x64xf32, #tpu.memory_space<vmem>>, vector<1x3x64xf32>
    %44 = vector.shape_cast %43 : vector<1x3x64xf32> to vector<3x64xf32>
    %cst_41 = arith.constant dense<0.000000e+00> : vector<288x64xf32>
    %45 = tpu.matmul %42, %44, %cst_41 {dimension_numbers = #tpu.dot_dimension_numbers<[1], [0], [0], [1], [0, 0, 1, 1], [], []>} : vector<288x3xf32>, vector<3x64xf32>, vector<288x64xf32> -> vector<288x64xf32>
    %46 = arith.addf %40, %45 : vector<288x64xf32>
    %c0_42 = arith.constant 0 : index
    %c38 = arith.constant 38 : index
    %c0_43 = arith.constant 0 : index
    %47 = vector.load %arg1[%c0_42, %c38, %c0_43] : memref<1x326x3xf32, #tpu.memory_space<vmem>>, vector<1x288x3xf32>
    %48 = vector.shape_cast %47 : vector<1x288x3xf32> to vector<288x3xf32>
    %c8 = arith.constant 8 : index
    %c0_44 = arith.constant 0 : index
    %c0_45 = arith.constant 0 : index
    %49 = vector.load %arg2[%c8, %c0_44, %c0_45] : memref<9x3x64xf32, #tpu.memory_space<vmem>>, vector<1x3x64xf32>
    %50 = vector.shape_cast %49 : vector<1x3x64xf32> to vector<3x64xf32>
    %cst_46 = arith.constant dense<0.000000e+00> : vector<288x64xf32>
    %51 = tpu.matmul %48, %50, %cst_46 {dimension_numbers = #tpu.dot_dimension_numbers<[1], [0], [0], [1], [0, 0, 1, 1], [], []>} : vector<288x3xf32>, vector<3x64xf32>, vector<288x64xf32> -> vector<288x64xf32>
    %52 = arith.addf %46, %51 : vector<288x64xf32>
    %c0_47 = arith.constant 0 : index
    %c0_48 = arith.constant 0 : index
    %53 = vector.load %arg3[%c0_47, %c0_48] : memref<1x64xf32, #tpu.memory_space<vmem>>, vector<1x64xf32>
    %54 = vector.broadcast %53 : vector<1x64xf32> to vector<288x64xf32>
    %55 = arith.addf %52, %54 : vector<288x64xf32>
    %cst_49 = arith.constant 0.000000e+00 : f32
    %56 = vector.broadcast %cst_49 : f32 to vector<288x64xf32>
    %57 = arith.maximumf %55, %56 : vector<288x64xf32>
    %c0_50 = arith.constant 0 : index
    %c0_51 = arith.constant 0 : index
    %c0_52 = arith.constant 0 : index
    %58 = vector.load %arg4[%c0_50, %c0_51, %c0_52] : memref<4x102x288xf32, #tpu.memory_space<vmem>>, vector<1x102x288xf32>
    %59 = vector.shape_cast %58 : vector<1x102x288xf32> to vector<102x288xf32>
    %cst_53 = arith.constant dense<0.000000e+00> : vector<102x64xf32>
    %60 = tpu.matmul %59, %57, %cst_53 {dimension_numbers = #tpu.dot_dimension_numbers<[1], [0], [0], [1], [0, 0, 1, 1], [], []>} : vector<102x288xf32>, vector<288x64xf32>, vector<102x64xf32> -> vector<102x64xf32>
    %c1_54 = arith.constant 1 : index
    %c0_55 = arith.constant 0 : index
    %c0_56 = arith.constant 0 : index
    %61 = vector.load %arg4[%c1_54, %c0_55, %c0_56] : memref<4x102x288xf32, #tpu.memory_space<vmem>>, vector<1x102x288xf32>
    %62 = vector.shape_cast %61 : vector<1x102x288xf32> to vector<102x288xf32>
    %cst_57 = arith.constant dense<0.000000e+00> : vector<102x64xf32>
    %63 = tpu.matmul %62, %57, %cst_57 {dimension_numbers = #tpu.dot_dimension_numbers<[1], [0], [0], [1], [0, 0, 1, 1], [], []>} : vector<102x288xf32>, vector<288x64xf32>, vector<102x64xf32> -> vector<102x64xf32>
    %64 = arith.maximumf %60, %63 : vector<102x64xf32>
    %c2_58 = arith.constant 2 : index
    %c0_59 = arith.constant 0 : index
    %c0_60 = arith.constant 0 : index
    %65 = vector.load %arg4[%c2_58, %c0_59, %c0_60] : memref<4x102x288xf32, #tpu.memory_space<vmem>>, vector<1x102x288xf32>
    %66 = vector.shape_cast %65 : vector<1x102x288xf32> to vector<102x288xf32>
    %cst_61 = arith.constant dense<0.000000e+00> : vector<102x64xf32>
    %67 = tpu.matmul %66, %57, %cst_61 {dimension_numbers = #tpu.dot_dimension_numbers<[1], [0], [0], [1], [0, 0, 1, 1], [], []>} : vector<102x288xf32>, vector<288x64xf32>, vector<102x64xf32> -> vector<102x64xf32>
    %68 = arith.maximumf %64, %67 : vector<102x64xf32>
    %c3_62 = arith.constant 3 : index
    %c0_63 = arith.constant 0 : index
    %c0_64 = arith.constant 0 : index
    %69 = vector.load %arg4[%c3_62, %c0_63, %c0_64] : memref<4x102x288xf32, #tpu.memory_space<vmem>>, vector<1x102x288xf32>
    %70 = vector.shape_cast %69 : vector<1x102x288xf32> to vector<102x288xf32>
    %cst_65 = arith.constant dense<0.000000e+00> : vector<102x64xf32>
    %71 = tpu.matmul %70, %57, %cst_65 {dimension_numbers = #tpu.dot_dimension_numbers<[1], [0], [0], [1], [0, 0, 1, 1], [], []>} : vector<102x288xf32>, vector<288x64xf32>, vector<102x64xf32> -> vector<102x64xf32>
    %72 = arith.maximumf %68, %71 : vector<102x64xf32>
    %c0_66 = arith.constant 0 : index
    %c0_67 = arith.constant 0 : index
    %73 = vector.load %arg20[%c0_66, %c0_67] : memref<102x64xf32, #tpu.memory_space<vmem>>, vector<102x64xf32>
    tpu.vector_store %arg20[%c0_66, %c0_67], %72 {strides = array<i32>} : memref<102x64xf32, #tpu.memory_space<vmem>>, vector<102x64xf32>,
    %c0_68 = arith.constant 0 : index
    %c0_69 = arith.constant 0 : index
    %74 = vector.load %arg20[%c0_68, %c0_69] : memref<102x64xf32, #tpu.memory_space<vmem>>, vector<80x64xf32>
    %c0_70 = arith.constant 0 : index
    %c0_71 = arith.constant 0 : index
    %c0_72 = arith.constant 0 : index
    %75 = vector.load %arg5[%c0_70, %c0_71, %c0_72] : memref<9x64x96xf32, #tpu.memory_space<vmem>>, vector<1x64x96xf32>
    %76 = vector.shape_cast %75 : vector<1x64x96xf32> to vector<64x96xf32>
    %cst_73 = arith.constant dense<0.000000e+00> : vector<80x96xf32>
    %77 = tpu.matmul %74, %76, %cst_73 {dimension_numbers = #tpu.dot_dimension_numbers<[1], [0], [0], [1], [0, 0, 1, 1], [], []>} : vector<80x64xf32>, vector<64x96xf32>, vector<80x96xf32> -> vector<80x96xf32>
    %c1_74 = arith.constant 1 : index
    %c0_75 = arith.constant 0 : index
    %78 = vector.load %arg20[%c1_74, %c0_75] : memref<102x64xf32, #tpu.memory_space<vmem>>, vector<80x64xf32>
    %c1_76 = arith.constant 1 : index
    %c0_77 = arith.constant 0 : index
    %c0_78 = arith.constant 0 : index
    %79 = vector.load %arg5[%c1_76, %c0_77, %c0_78] : memref<9x64x96xf32, #tpu.memory_space<vmem>>, vector<1x64x96xf32>
    %80 = vector.shape_cast %79 : vector<1x64x96xf32> to vector<64x96xf32>
    %cst_79 = arith.constant dense<0.000000e+00> : vector<80x96xf32>
    %81 = tpu.matmul %78, %80, %cst_79 {dimension_numbers = #tpu.dot_dimension_numbers<[1], [0], [0], [1], [0, 0, 1, 1], [], []>} : vector<80x64xf32>, vector<64x96xf32>, vector<80x96xf32> -> vector<80x96xf32>
    %82 = arith.addf %77, %81 : vector<80x96xf32>
    %c2_80 = arith.constant 2 : index
    %c0_81 = arith.constant 0 : index
    %83 = vector.load %arg20[%c2_80, %c0_81] : memref<102x64xf32, #tpu.memory_space<vmem>>, vector<80x64xf32>
    %c2_82 = arith.constant 2 : index
    %c0_83 = arith.constant 0 : index
    %c0_84 = arith.constant 0 : index
    %84 = vector.load %arg5[%c2_82, %c0_83, %c0_84] : memref<9x64x96xf32, #tpu.memory_space<vmem>>, vector<1x64x96xf32>
    %85 = vector.shape_cast %84 : vector<1x64x96xf32> to vector<64x96xf32>
    %cst_85 = arith.constant dense<0.000000e+00> : vector<80x96xf32>
    %86 = tpu.matmul %83, %85, %cst_85 {dimension_numbers = #tpu.dot_dimension_numbers<[1], [0], [0], [1], [0, 0, 1, 1], [], []>} : vector<80x64xf32>, vector<64x96xf32>, vector<80x96xf32> -> vector<80x96xf32>
    %87 = arith.addf %82, %86 : vector<80x96xf32>
    %c10 = arith.constant 10 : index
    %c0_86 = arith.constant 0 : index
    %88 = vector.load %arg20[%c10, %c0_86] : memref<102x64xf32, #tpu.memory_space<vmem>>, vector<80x64xf32>
    %c3_87 = arith.constant 3 : index
    %c0_88 = arith.constant 0 : index
    %c0_89 = arith.constant 0 : index
    %89 = vector.load %arg5[%c3_87, %c0_88, %c0_89] : memref<9x64x96xf32, #tpu.memory_space<vmem>>, vector<1x64x96xf32>
    %90 = vector.shape_cast %89 : vector<1x64x96xf32> to vector<64x96xf32>
    %cst_90 = arith.constant dense<0.000000e+00> : vector<80x96xf32>
    %91 = tpu.matmul %88, %90, %cst_90 {dimension_numbers = #tpu.dot_dimension_numbers<[1], [0], [0], [1], [0, 0, 1, 1], [], []>} : vector<80x64xf32>, vector<64x96xf32>, vector<80x96xf32> -> vector<80x96xf32>
    %92 = arith.addf %87, %91 : vector<80x96xf32>
    %c11 = arith.constant 11 : index
    %c0_91 = arith.constant 0 : index
    %93 = vector.load %arg20[%c11, %c0_91] : memref<102x64xf32, #tpu.memory_space<vmem>>, vector<80x64xf32>
    %c4_92 = arith.constant 4 : index
    %c0_93 = arith.constant 0 : index
    %c0_94 = arith.constant 0 : index
    %94 = vector.load %arg5[%c4_92, %c0_93, %c0_94] : memref<9x64x96xf32, #tpu.memory_space<vmem>>, vector<1x64x96xf32>
    %95 = vector.shape_cast %94 : vector<1x64x96xf32> to vector<64x96xf32>
    %cst_95 = arith.constant dense<0.000000e+00> : vector<80x96xf32>
    %96 = tpu.matmul %93, %95, %cst_95 {dimension_numbers = #tpu.dot_dimension_numbers<[1], [0], [0], [1], [0, 0, 1, 1], [], []>} : vector<80x64xf32>, vector<64x96xf32>, vector<80x96xf32> -> vector<80x96xf32>
    %97 = arith.addf %92, %96 : vector<80x96xf32>
    %c12 = arith.constant 12 : index
    %c0_96 = arith.constant 0 : index
    %98 = vector.load %arg20[%c12, %c0_96] : memref<102x64xf32, #tpu.memory_space<vmem>>, vector<80x64xf32>
    %c5_97 = arith.constant 5 : index
    %c0_98 = arith.constant 0 : index
    %c0_99 = arith.constant 0 : index
    %99 = vector.load %arg5[%c5_97, %c0_98, %c0_99] : memref<9x64x96xf32, #tpu.memory_space<vmem>>, vector<1x64x96xf32>
    %100 = vector.shape_cast %99 : vector<1x64x96xf32> to vector<64x96xf32>
    %cst_100 = arith.constant dense<0.000000e+00> : vector<80x96xf32>
    %101 = tpu.matmul %98, %100, %cst_100 {dimension_numbers = #tpu.dot_dimension_numbers<[1], [0], [0], [1], [0, 0, 1, 1], [], []>} : vector<80x64xf32>, vector<64x96xf32>, vector<80x96xf32> -> vector<80x96xf32>
    %102 = arith.addf %97, %101 : vector<80x96xf32>
    %c20_101 = arith.constant 20 : index
    %c0_102 = arith.constant 0 : index
    %103 = vector.load %arg20[%c20_101, %c0_102] : memref<102x64xf32, #tpu.memory_space<vmem>>, vector<80x64xf32>
    %c6_103 = arith.constant 6 : index
    %c0_104 = arith.constant 0 : index
    %c0_105 = arith.constant 0 : index
    %104 = vector.load %arg5[%c6_103, %c0_104, %c0_105] : memref<9x64x96xf32, #tpu.memory_space<vmem>>, vector<1x64x96xf32>
    %105 = vector.shape_cast %104 : vector<1x64x96xf32> to vector<64x96xf32>
    %cst_106 = arith.constant dense<0.000000e+00> : vector<80x96xf32>
    %106 = tpu.matmul %103, %105, %cst_106 {dimension_numbers = #tpu.dot_dimension_numbers<[1], [0], [0], [1], [0, 0, 1, 1], [], []>} : vector<80x64xf32>, vector<64x96xf32>, vector<80x96xf32> -> vector<80x96xf32>
    %107 = arith.addf %102, %106 : vector<80x96xf32>
    %c21 = arith.constant 21 : index
    %c0_107 = arith.constant 0 : index
    %108 = vector.load %arg20[%c21, %c0_107] : memref<102x64xf32, #tpu.memory_space<vmem>>, vector<80x64xf32>
    %c7_108 = arith.constant 7 : index
    %c0_109 = arith.constant 0 : index
    %c0_110 = arith.constant 0 : index
    %109 = vector.load %arg5[%c7_108, %c0_109, %c0_110] : memref<9x64x96xf32, #tpu.memory_space<vmem>>, vector<1x64x96xf32>
    %110 = vector.shape_cast %109 : vector<1x64x96xf32> to vector<64x96xf32>
    %cst_111 = arith.constant dense<0.000000e+00> : vector<80x96xf32>
    %111 = tpu.matmul %108, %110, %cst_111 {dimension_numbers = #tpu.dot_dimension_numbers<[1], [0], [0], [1], [0, 0, 1, 1], [], []>} : vector<80x64xf32>, vector<64x96xf32>, vector<80x96xf32> -> vector<80x96xf32>
    %112 = arith.addf %107, %111 : vector<80x96xf32>
    %c22 = arith.constant 22 : index
    %c0_112 = arith.constant 0 : index
    %113 = vector.load %arg20[%c22, %c0_112] : memref<102x64xf32, #tpu.memory_space<vmem>>, vector<80x64xf32>
    %c8_113 = arith.constant 8 : index
    %c0_114 = arith.constant 0 : index
    %c0_115 = arith.constant 0 : index
    %114 = vector.load %arg5[%c8_113, %c0_114, %c0_115] : memref<9x64x96xf32, #tpu.memory_space<vmem>>, vector<1x64x96xf32>
    %115 = vector.shape_cast %114 : vector<1x64x96xf32> to vector<64x96xf32>
    %cst_116 = arith.constant dense<0.000000e+00> : vector<80x96xf32>
    %116 = tpu.matmul %113, %115, %cst_116 {dimension_numbers = #tpu.dot_dimension_numbers<[1], [0], [0], [1], [0, 0, 1, 1], [], []>} : vector<80x64xf32>, vector<64x96xf32>, vector<80x96xf32> -> vector<80x96xf32>
    %117 = arith.addf %112, %116 : vector<80x96xf32>
    %c0_117 = arith.constant 0 : index
    %c0_118 = arith.constant 0 : index
    %118 = vector.load %arg6[%c0_117, %c0_118] : memref<1x96xf32, #tpu.memory_space<vmem>>, vector<1x96xf32>
    %119 = vector.broadcast %118 : vector<1x96xf32> to vector<80x96xf32>
    %120 = arith.addf %117, %119 : vector<80x96xf32>
    %cst_119 = arith.constant 0.000000e+00 : f32
    %121 = vector.broadcast %cst_119 : f32 to vector<80x96xf32>
    %122 = arith.maximumf %120, %121 : vector<80x96xf32>
    %c0_120 = arith.constant 0 : index
    %c0_121 = arith.constant 0 : index
    %c0_122 = arith.constant 0 : index
    %123 = vector.load %arg7[%c0_120, %c0_121, %c0_122] : memref<4x38x80xf32, #tpu.memory_space<vmem>>, vector<1x38x80xf32>
    %124 = vector.shape_cast %123 : vector<1x38x80xf32> to vector<38x80xf32>
    %cst_123 = arith.constant dense<0.000000e+00> : vector<38x96xf32>
    %125 = tpu.matmul %124, %122, %cst_123 {dimension_numbers = #tpu.dot_dimension_numbers<[1], [0], [0], [1], [0, 0, 1, 1], [], []>} : vector<38x80xf32>, vector<80x96xf32>, vector<38x96xf32> -> vector<38x96xf32>
    %c1_124 = arith.constant 1 : index
    %c0_125 = arith.constant 0 : index
    %c0_126 = arith.constant 0 : index
    %126 = vector.load %arg7[%c1_124, %c0_125, %c0_126] : memref<4x38x80xf32, #tpu.memory_space<vmem>>, vector<1x38x80xf32>
    %127 = vector.shape_cast %126 : vector<1x38x80xf32> to vector<38x80xf32>
    %cst_127 = arith.constant dense<0.000000e+00> : vector<38x96xf32>
    %128 = tpu.matmul %127, %122, %cst_127 {dimension_numbers = #tpu.dot_dimension_numbers<[1], [0], [0], [1], [0, 0, 1, 1], [], []>} : vector<38x80xf32>, vector<80x96xf32>, vector<38x96xf32> -> vector<38x96xf32>
    %129 = arith.maximumf %125, %128 : vector<38x96xf32>
    %c2_128 = arith.constant 2 : index
    %c0_129 = arith.constant 0 : index
    %c0_130 = arith.constant 0 : index
    %130 = vector.load %arg7[%c2_128, %c0_129, %c0_130] : memref<4x38x80xf32, #tpu.memory_space<vmem>>, vector<1x38x80xf32>
    %131 = vector.shape_cast %130 : vector<1x38x80xf32> to vector<38x80xf32>
    %cst_131 = arith.constant dense<0.000000e+00> : vector<38x96xf32>
    %132 = tpu.matmul %131, %122, %cst_131 {dimension_numbers = #tpu.dot_dimension_numbers<[1], [0], [0], [1], [0, 0, 1, 1], [], []>} : vector<38x80xf32>, vector<80x96xf32>, vector<38x96xf32> -> vector<38x96xf32>
    %133 = arith.maximumf %129, %132 : vector<38x96xf32>
    %c3_132 = arith.constant 3 : index
    %c0_133 = arith.constant 0 : index
    %c0_134 = arith.constant 0 : index
    %134 = vector.load %arg7[%c3_132, %c0_133, %c0_134] : memref<4x38x80xf32, #tpu.memory_space<vmem>>, vector<1x38x80xf32>
    %135 = vector.shape_cast %134 : vector<1x38x80xf32> to vector<38x80xf32>
    %cst_135 = arith.constant dense<0.000000e+00> : vector<38x96xf32>
    %136 = tpu.matmul %135, %122, %cst_135 {dimension_numbers = #tpu.dot_dimension_numbers<[1], [0], [0], [1], [0, 0, 1, 1], [], []>} : vector<38x80xf32>, vector<80x96xf32>, vector<38x96xf32> -> vector<38x96xf32>
    %137 = arith.maximumf %133, %136 : vector<38x96xf32>
    %c0_136 = arith.constant 0 : index
    %c0_137 = arith.constant 0 : index
    %138 = vector.load %arg21[%c0_136, %c0_137] : memref<38x96xf32, #tpu.memory_space<vmem>>, vector<38x96xf32>
    tpu.vector_store %arg21[%c0_136, %c0_137], %137 {strides = array<i32>} : memref<38x96xf32, #tpu.memory_space<vmem>>, vector<38x96xf32>,
    %c0_138 = arith.constant 0 : index
    %c0_139 = arith.constant 0 : index
    %139 = vector.load %arg21[%c0_138, %c0_139] : memref<38x96xf32, #tpu.memory_space<vmem>>, vector<24x96xf32>
    %c0_140 = arith.constant 0 : index
    %c0_141 = arith.constant 0 : index
    %c0_142 = arith.constant 0 : index
    %140 = vector.load %arg8[%c0_140, %c0_141, %c0_142] : memref<9x96x128xf32, #tpu.memory_space<vmem>>, vector<1x96x128xf32>
    %141 = vector.shape_cast %140 : vector<1x96x128xf32> to vector<96x128xf32>
    %cst_143 = arith.constant dense<0.000000e+00> : vector<24x128xf32>
    %142 = tpu.matmul %139, %141, %cst_143 {dimension_numbers = #tpu.dot_dimension_numbers<[1], [0], [0], [1], [0, 0, 1, 1], [], []>} : vector<24x96xf32>, vector<96x128xf32>, vector<24x128xf32> -> vector<24x128xf32>
    %c1_144 = arith.constant 1 : index
    %c0_145 = arith.constant 0 : index
    %143 = vector.load %arg21[%c1_144, %c0_145] : memref<38x96xf32, #tpu.memory_space<vmem>>, vector<24x96xf32>
    %c1_146 = arith.constant 1 : index
    %c0_147 = arith.constant 0 : index
    %c0_148 = arith.constant 0 : index
    %144 = vector.load %arg8[%c1_146, %c0_147, %c0_148] : memref<9x96x128xf32, #tpu.memory_space<vmem>>, vector<1x96x128xf32>
    %145 = vector.shape_cast %144 : vector<1x96x128xf32> to vector<96x128xf32>
    %cst_149 = arith.constant dense<0.000000e+00> : vector<24x128xf32>
    %146 = tpu.matmul %143, %145, %cst_149 {dimension_numbers = #tpu.dot_dimension_numbers<[1], [0], [0], [1], [0, 0, 1, 1], [], []>} : vector<24x96xf32>, vector<96x128xf32>, vector<24x128xf32> -> vector<24x128xf32>
    %147 = arith.addf %142, %146 : vector<24x128xf32>
    %c2_150 = arith.constant 2 : index
    %c0_151 = arith.constant 0 : index
    %148 = vector.load %arg21[%c2_150, %c0_151] : memref<38x96xf32, #tpu.memory_space<vmem>>, vector<24x96xf32>
    %c2_152 = arith.constant 2 : index
    %c0_153 = arith.constant 0 : index
    %c0_154 = arith.constant 0 : index
    %149 = vector.load %arg8[%c2_152, %c0_153, %c0_154] : memref<9x96x128xf32, #tpu.memory_space<vmem>>, vector<1x96x128xf32>
    %150 = vector.shape_cast %149 : vector<1x96x128xf32> to vector<96x128xf32>
    %cst_155 = arith.constant dense<0.000000e+00> : vector<24x128xf32>
    %151 = tpu.matmul %148, %150, %cst_155 {dimension_numbers = #tpu.dot_dimension_numbers<[1], [0], [0], [1], [0, 0, 1, 1], [], []>} : vector<24x96xf32>, vector<96x128xf32>, vector<24x128xf32> -> vector<24x128xf32>
    %152 = arith.addf %147, %151 : vector<24x128xf32>
    %c6_156 = arith.constant 6 : index
    %c0_157 = arith.constant 0 : index
    %153 = vector.load %arg21[%c6_156, %c0_157] : memref<38x96xf32, #tpu.memory_space<vmem>>, vector<24x96xf32>
    %c3_158 = arith.constant 3 : index
    %c0_159 = arith.constant 0 : index
    %c0_160 = arith.constant 0 : index
    %154 = vector.load %arg8[%c3_158, %c0_159, %c0_160] : memref<9x96x128xf32, #tpu.memory_space<vmem>>, vector<1x96x128xf32>
    %155 = vector.shape_cast %154 : vector<1x96x128xf32> to vector<96x128xf32>
    %cst_161 = arith.constant dense<0.000000e+00> : vector<24x128xf32>
    %156 = tpu.matmul %153, %155, %cst_161 {dimension_numbers = #tpu.dot_dimension_numbers<[1], [0], [0], [1], [0, 0, 1, 1], [], []>} : vector<24x96xf32>, vector<96x128xf32>, vector<24x128xf32> -> vector<24x128xf32>
    %157 = arith.addf %152, %156 : vector<24x128xf32>
    %c7_162 = arith.constant 7 : index
    %c0_163 = arith.constant 0 : index
    %158 = vector.load %arg21[%c7_162, %c0_163] : memref<38x96xf32, #tpu.memory_space<vmem>>, vector<24x96xf32>
    %c4_164 = arith.constant 4 : index
    %c0_165 = arith.constant 0 : index
    %c0_166 = arith.constant 0 : index
    %159 = vector.load %arg8[%c4_164, %c0_165, %c0_166] : memref<9x96x128xf32, #tpu.memory_space<vmem>>, vector<1x96x128xf32>
    %160 = vector.shape_cast %159 : vector<1x96x128xf32> to vector<96x128xf32>
    %cst_167 = arith.constant dense<0.000000e+00> : vector<24x128xf32>
    %161 = tpu.matmul %158, %160, %cst_167 {dimension_numbers = #tpu.dot_dimension_numbers<[1], [0], [0], [1], [0, 0, 1, 1], [], []>} : vector<24x96xf32>, vector<96x128xf32>, vector<24x128xf32> -> vector<24x128xf32>
    %162 = arith.addf %157, %161 : vector<24x128xf32>
    %c8_168 = arith.constant 8 : index
    %c0_169 = arith.constant 0 : index
    %163 = vector.load %arg21[%c8_168, %c0_169] : memref<38x96xf32, #tpu.memory_space<vmem>>, vector<24x96xf32>
    %c5_170 = arith.constant 5 : index
    %c0_171 = arith.constant 0 : index
    %c0_172 = arith.constant 0 : index
    %164 = vector.load %arg8[%c5_170, %c0_171, %c0_172] : memref<9x96x128xf32, #tpu.memory_space<vmem>>, vector<1x96x128xf32>
    %165 = vector.shape_cast %164 : vector<1x96x128xf32> to vector<96x128xf32>
    %cst_173 = arith.constant dense<0.000000e+00> : vector<24x128xf32>
    %166 = tpu.matmul %163, %165, %cst_173 {dimension_numbers = #tpu.dot_dimension_numbers<[1], [0], [0], [1], [0, 0, 1, 1], [], []>} : vector<24x96xf32>, vector<96x128xf32>, vector<24x128xf32> -> vector<24x128xf32>
    %167 = arith.addf %162, %166 : vector<24x128xf32>
    %c12_174 = arith.constant 12 : index
    %c0_175 = arith.constant 0 : index
    %168 = vector.load %arg21[%c12_174, %c0_175] : memref<38x96xf32, #tpu.memory_space<vmem>>, vector<24x96xf32>
    %c6_176 = arith.constant 6 : index
    %c0_177 = arith.constant 0 : index
    %c0_178 = arith.constant 0 : index
    %169 = vector.load %arg8[%c6_176, %c0_177, %c0_178] : memref<9x96x128xf32, #tpu.memory_space<vmem>>, vector<1x96x128xf32>
    %170 = vector.shape_cast %169 : vector<1x96x128xf32> to vector<96x128xf32>
    %cst_179 = arith.constant dense<0.000000e+00> : vector<24x128xf32>
    %171 = tpu.matmul %168, %170, %cst_179 {dimension_numbers = #tpu.dot_dimension_numbers<[1], [0], [0], [1], [0, 0, 1, 1], [], []>} : vector<24x96xf32>, vector<96x128xf32>, vector<24x128xf32> -> vector<24x128xf32>
    %172 = arith.addf %167, %171 : vector<24x128xf32>
    %c13 = arith.constant 13 : index
    %c0_180 = arith.constant 0 : index
    %173 = vector.load %arg21[%c13, %c0_180] : memref<38x96xf32, #tpu.memory_space<vmem>>, vector<24x96xf32>
    %c7_181 = arith.constant 7 : index
    %c0_182 = arith.constant 0 : index
    %c0_183 = arith.constant 0 : index
    %174 = vector.load %arg8[%c7_181, %c0_182, %c0_183] : memref<9x96x128xf32, #tpu.memory_space<vmem>>, vector<1x96x128xf32>
    %175 = vector.shape_cast %174 : vector<1x96x128xf32> to vector<96x128xf32>
    %cst_184 = arith.constant dense<0.000000e+00> : vector<24x128xf32>
    %176 = tpu.matmul %173, %175, %cst_184 {dimension_numbers = #tpu.dot_dimension_numbers<[1], [0], [0], [1], [0, 0, 1, 1], [], []>} : vector<24x96xf32>, vector<96x128xf32>, vector<24x128xf32> -> vector<24x128xf32>
    %177 = arith.addf %172, %176 : vector<24x128xf32>
    %c14 = arith.constant 14 : index
    %c0_185 = arith.constant 0 : index
    %178 = vector.load %arg21[%c14, %c0_185] : memref<38x96xf32, #tpu.memory_space<vmem>>, vector<24x96xf32>
    %c8_186 = arith.constant 8 : index
    %c0_187 = arith.constant 0 : index
    %c0_188 = arith.constant 0 : index
    %179 = vector.load %arg8[%c8_186, %c0_187, %c0_188] : memref<9x96x128xf32, #tpu.memory_space<vmem>>, vector<1x96x128xf32>
    %180 = vector.shape_cast %179 : vector<1x96x128xf32> to vector<96x128xf32>
    %cst_189 = arith.constant dense<0.000000e+00> : vector<24x128xf32>
    %181 = tpu.matmul %178, %180, %cst_189 {dimension_numbers = #tpu.dot_dimension_numbers<[1], [0], [0], [1], [0, 0, 1, 1], [], []>} : vector<24x96xf32>, vector<96x128xf32>, vector<24x128xf32> -> vector<24x128xf32>
    %182 = arith.addf %177, %181 : vector<24x128xf32>
    %c0_190 = arith.constant 0 : index
    %c0_191 = arith.constant 0 : index
    %183 = vector.load %arg9[%c0_190, %c0_191] : memref<1x128xf32, #tpu.memory_space<vmem>>, vector<1x128xf32>
    %184 = vector.broadcast %183 : vector<1x128xf32> to vector<24x128xf32>
    %185 = arith.addf %182, %184 : vector<24x128xf32>
    %cst_192 = arith.constant 0.000000e+00 : f32
    %186 = vector.broadcast %cst_192 : f32 to vector<24x128xf32>
    %187 = arith.maximumf %185, %186 : vector<24x128xf32>
    %c0_193 = arith.constant 0 : index
    %c0_194 = arith.constant 0 : index
    %c0_195 = arith.constant 0 : index
    %188 = vector.load %arg10[%c0_193, %c0_194, %c0_195] : memref<4x18x24xf32, #tpu.memory_space<vmem>>, vector<1x18x24xf32>
    %189 = vector.shape_cast %188 : vector<1x18x24xf32> to vector<18x24xf32>
    %cst_196 = arith.constant dense<0.000000e+00> : vector<18x128xf32>
    %190 = tpu.matmul %189, %187, %cst_196 {dimension_numbers = #tpu.dot_dimension_numbers<[1], [0], [0], [1], [0, 0, 1, 1], [], []>} : vector<18x24xf32>, vector<24x128xf32>, vector<18x128xf32> -> vector<18x128xf32>
    %c1_197 = arith.constant 1 : index
    %c0_198 = arith.constant 0 : index
    %c0_199 = arith.constant 0 : index
    %191 = vector.load %arg10[%c1_197, %c0_198, %c0_199] : memref<4x18x24xf32, #tpu.memory_space<vmem>>, vector<1x18x24xf32>
    %192 = vector.shape_cast %191 : vector<1x18x24xf32> to vector<18x24xf32>
    %cst_200 = arith.constant dense<0.000000e+00> : vector<18x128xf32>
    %193 = tpu.matmul %192, %187, %cst_200 {dimension_numbers = #tpu.dot_dimension_numbers<[1], [0], [0], [1], [0, 0, 1, 1], [], []>} : vector<18x24xf32>, vector<24x128xf32>, vector<18x128xf32> -> vector<18x128xf32>
    %194 = arith.maximumf %190, %193 : vector<18x128xf32>
    %c2_201 = arith.constant 2 : index
    %c0_202 = arith.constant 0 : index
    %c0_203 = arith.constant 0 : index
    %195 = vector.load %arg10[%c2_201, %c0_202, %c0_203] : memref<4x18x24xf32, #tpu.memory_space<vmem>>, vector<1x18x24xf32>
    %196 = vector.shape_cast %195 : vector<1x18x24xf32> to vector<18x24xf32>
    %cst_204 = arith.constant dense<0.000000e+00> : vector<18x128xf32>
    %197 = tpu.matmul %196, %187, %cst_204 {dimension_numbers = #tpu.dot_dimension_numbers<[1], [0], [0], [1], [0, 0, 1, 1], [], []>} : vector<18x24xf32>, vector<24x128xf32>, vector<18x128xf32> -> vector<18x128xf32>
    %198 = arith.maximumf %194, %197 : vector<18x128xf32>
    %c3_205 = arith.constant 3 : index
    %c0_206 = arith.constant 0 : index
    %c0_207 = arith.constant 0 : index
    %199 = vector.load %arg10[%c3_205, %c0_206, %c0_207] : memref<4x18x24xf32, #tpu.memory_space<vmem>>, vector<1x18x24xf32>
    %200 = vector.shape_cast %199 : vector<1x18x24xf32> to vector<18x24xf32>
    %cst_208 = arith.constant dense<0.000000e+00> : vector<18x128xf32>
    %201 = tpu.matmul %200, %187, %cst_208 {dimension_numbers = #tpu.dot_dimension_numbers<[1], [0], [0], [1], [0, 0, 1, 1], [], []>} : vector<18x24xf32>, vector<24x128xf32>, vector<18x128xf32> -> vector<18x128xf32>
    %202 = arith.maximumf %198, %201 : vector<18x128xf32>
    %c0_209 = arith.constant 0 : index
    %c0_210 = arith.constant 0 : index
    %203 = vector.load %arg22[%c0_209, %c0_210] : memref<18x128xf32, #tpu.memory_space<vmem>>, vector<18x128xf32>
    tpu.vector_store %arg22[%c0_209, %c0_210], %202 {strides = array<i32>} : memref<18x128xf32, #tpu.memory_space<vmem>>, vector<18x128xf32>,
    %c0_211 = arith.constant 0 : index
    %c0_212 = arith.constant 0 : index
    %204 = vector.load %arg22[%c0_211, %c0_212] : memref<18x128xf32, #tpu.memory_space<vmem>>, vector<8x128xf32>
    %c0_213 = arith.constant 0 : index
    %c0_214 = arith.constant 0 : index
    %c0_215 = arith.constant 0 : index
    %205 = vector.load %arg11[%c0_213, %c0_214, %c0_215] : memref<9x128x192xf32, #tpu.memory_space<vmem>>, vector<1x128x192xf32>
    %206 = vector.shape_cast %205 : vector<1x128x192xf32> to vector<128x192xf32>
    %cst_216 = arith.constant dense<0.000000e+00> : vector<8x192xf32>
    %207 = tpu.matmul %204, %206, %cst_216 {dimension_numbers = #tpu.dot_dimension_numbers<[1], [0], [0], [1], [0, 0, 1, 1], [], []>} : vector<8x128xf32>, vector<128x192xf32>, vector<8x192xf32> -> vector<8x192xf32>
    %c1_217 = arith.constant 1 : index
    %c0_218 = arith.constant 0 : index
    %208 = vector.load %arg22[%c1_217, %c0_218] : memref<18x128xf32, #tpu.memory_space<vmem>>, vector<8x128xf32>
    %c1_219 = arith.constant 1 : index
    %c0_220 = arith.constant 0 : index
    %c0_221 = arith.constant 0 : index
    %209 = vector.load %arg11[%c1_219, %c0_220, %c0_221] : memref<9x128x192xf32, #tpu.memory_space<vmem>>, vector<1x128x192xf32>
    %210 = vector.shape_cast %209 : vector<1x128x192xf32> to vector<128x192xf32>
    %cst_222 = arith.constant dense<0.000000e+00> : vector<8x192xf32>
    %211 = tpu.matmul %208, %210, %cst_222 {dimension_numbers = #tpu.dot_dimension_numbers<[1], [0], [0], [1], [0, 0, 1, 1], [], []>} : vector<8x128xf32>, vector<128x192xf32>, vector<8x192xf32> -> vector<8x192xf32>
    %212 = arith.addf %207, %211 : vector<8x192xf32>
    %c2_223 = arith.constant 2 : index
    %c0_224 = arith.constant 0 : index
    %213 = vector.load %arg22[%c2_223, %c0_224] : memref<18x128xf32, #tpu.memory_space<vmem>>, vector<8x128xf32>
    %c2_225 = arith.constant 2 : index
    %c0_226 = arith.constant 0 : index
    %c0_227 = arith.constant 0 : index
    %214 = vector.load %arg11[%c2_225, %c0_226, %c0_227] : memref<9x128x192xf32, #tpu.memory_space<vmem>>, vector<1x128x192xf32>
    %215 = vector.shape_cast %214 : vector<1x128x192xf32> to vector<128x192xf32>
    %cst_228 = arith.constant dense<0.000000e+00> : vector<8x192xf32>
    %216 = tpu.matmul %213, %215, %cst_228 {dimension_numbers = #tpu.dot_dimension_numbers<[1], [0], [0], [1], [0, 0, 1, 1], [], []>} : vector<8x128xf32>, vector<128x192xf32>, vector<8x192xf32> -> vector<8x192xf32>
    %217 = arith.addf %212, %216 : vector<8x192xf32>
    %c4_229 = arith.constant 4 : index
    %c0_230 = arith.constant 0 : index
    %218 = vector.load %arg22[%c4_229, %c0_230] : memref<18x128xf32, #tpu.memory_space<vmem>>, vector<8x128xf32>
    %c3_231 = arith.constant 3 : index
    %c0_232 = arith.constant 0 : index
    %c0_233 = arith.constant 0 : index
    %219 = vector.load %arg11[%c3_231, %c0_232, %c0_233] : memref<9x128x192xf32, #tpu.memory_space<vmem>>, vector<1x128x192xf32>
    %220 = vector.shape_cast %219 : vector<1x128x192xf32> to vector<128x192xf32>
    %cst_234 = arith.constant dense<0.000000e+00> : vector<8x192xf32>
    %221 = tpu.matmul %218, %220, %cst_234 {dimension_numbers = #tpu.dot_dimension_numbers<[1], [0], [0], [1], [0, 0, 1, 1], [], []>} : vector<8x128xf32>, vector<128x192xf32>, vector<8x192xf32> -> vector<8x192xf32>
    %222 = arith.addf %217, %221 : vector<8x192xf32>
    %c5_235 = arith.constant 5 : index
    %c0_236 = arith.constant 0 : index
    %223 = vector.load %arg22[%c5_235, %c0_236] : memref<18x128xf32, #tpu.memory_space<vmem>>, vector<8x128xf32>
    %c4_237 = arith.constant 4 : index
    %c0_238 = arith.constant 0 : index
    %c0_239 = arith.constant 0 : index
    %224 = vector.load %arg11[%c4_237, %c0_238, %c0_239] : memref<9x128x192xf32, #tpu.memory_space<vmem>>, vector<1x128x192xf32>
    %225 = vector.shape_cast %224 : vector<1x128x192xf32> to vector<128x192xf32>
    %cst_240 = arith.constant dense<0.000000e+00> : vector<8x192xf32>
    %226 = tpu.matmul %223, %225, %cst_240 {dimension_numbers = #tpu.dot_dimension_numbers<[1], [0], [0], [1], [0, 0, 1, 1], [], []>} : vector<8x128xf32>, vector<128x192xf32>, vector<8x192xf32> -> vector<8x192xf32>
    %227 = arith.addf %222, %226 : vector<8x192xf32>
    %c6_241 = arith.constant 6 : index
    %c0_242 = arith.constant 0 : index
    %228 = vector.load %arg22[%c6_241, %c0_242] : memref<18x128xf32, #tpu.memory_space<vmem>>, vector<8x128xf32>
    %c5_243 = arith.constant 5 : index
    %c0_244 = arith.constant 0 : index
    %c0_245 = arith.constant 0 : index
    %229 = vector.load %arg11[%c5_243, %c0_244, %c0_245] : memref<9x128x192xf32, #tpu.memory_space<vmem>>, vector<1x128x192xf32>
    %230 = vector.shape_cast %229 : vector<1x128x192xf32> to vector<128x192xf32>
    %cst_246 = arith.constant dense<0.000000e+00> : vector<8x192xf32>
    %231 = tpu.matmul %228, %230, %cst_246 {dimension_numbers = #tpu.dot_dimension_numbers<[1], [0], [0], [1], [0, 0, 1, 1], [], []>} : vector<8x128xf32>, vector<128x192xf32>, vector<8x192xf32> -> vector<8x192xf32>
    %232 = arith.addf %227, %231 : vector<8x192xf32>
    %c8_247 = arith.constant 8 : index
    %c0_248 = arith.constant 0 : index
    %233 = vector.load %arg22[%c8_247, %c0_248] : memref<18x128xf32, #tpu.memory_space<vmem>>, vector<8x128xf32>
    %c6_249 = arith.constant 6 : index
    %c0_250 = arith.constant 0 : index
    %c0_251 = arith.constant 0 : index
    %234 = vector.load %arg11[%c6_249, %c0_250, %c0_251] : memref<9x128x192xf32, #tpu.memory_space<vmem>>, vector<1x128x192xf32>
    %235 = vector.shape_cast %234 : vector<1x128x192xf32> to vector<128x192xf32>
    %cst_252 = arith.constant dense<0.000000e+00> : vector<8x192xf32>
    %236 = tpu.matmul %233, %235, %cst_252 {dimension_numbers = #tpu.dot_dimension_numbers<[1], [0], [0], [1], [0, 0, 1, 1], [], []>} : vector<8x128xf32>, vector<128x192xf32>, vector<8x192xf32> -> vector<8x192xf32>
    %237 = arith.addf %232, %236 : vector<8x192xf32>
    %c9 = arith.constant 9 : index
    %c0_253 = arith.constant 0 : index
    %238 = vector.load %arg22[%c9, %c0_253] : memref<18x128xf32, #tpu.memory_space<vmem>>, vector<8x128xf32>
    %c7_254 = arith.constant 7 : index
    %c0_255 = arith.constant 0 : index
    %c0_256 = arith.constant 0 : index
    %239 = vector.load %arg11[%c7_254, %c0_255, %c0_256] : memref<9x128x192xf32, #tpu.memory_space<vmem>>, vector<1x128x192xf32>
    %240 = vector.shape_cast %239 : vector<1x128x192xf32> to vector<128x192xf32>
    %cst_257 = arith.constant dense<0.000000e+00> : vector<8x192xf32>
    %241 = tpu.matmul %238, %240, %cst_257 {dimension_numbers = #tpu.dot_dimension_numbers<[1], [0], [0], [1], [0, 0, 1, 1], [], []>} : vector<8x128xf32>, vector<128x192xf32>, vector<8x192xf32> -> vector<8x192xf32>
    %242 = arith.addf %237, %241 : vector<8x192xf32>
    %c10_258 = arith.constant 10 : index
    %c0_259 = arith.constant 0 : index
    %243 = vector.load %arg22[%c10_258, %c0_259] : memref<18x128xf32, #tpu.memory_space<vmem>>, vector<8x128xf32>
    %c8_260 = arith.constant 8 : index
    %c0_261 = arith.constant 0 : index
    %c0_262 = arith.constant 0 : index
    %244 = vector.load %arg11[%c8_260, %c0_261, %c0_262] : memref<9x128x192xf32, #tpu.memory_space<vmem>>, vector<1x128x192xf32>
    %245 = vector.shape_cast %244 : vector<1x128x192xf32> to vector<128x192xf32>
    %cst_263 = arith.constant dense<0.000000e+00> : vector<8x192xf32>
    %246 = tpu.matmul %243, %245, %cst_263 {dimension_numbers = #tpu.dot_dimension_numbers<[1], [0], [0], [1], [0, 0, 1, 1], [], []>} : vector<8x128xf32>, vector<128x192xf32>, vector<8x192xf32> -> vector<8x192xf32>
    %247 = arith.addf %242, %246 : vector<8x192xf32>
    %c0_264 = arith.constant 0 : index
    %c0_265 = arith.constant 0 : index
    %248 = vector.load %arg12[%c0_264, %c0_265] : memref<1x192xf32, #tpu.memory_space<vmem>>, vector<1x192xf32>
    %249 = vector.broadcast %248 : vector<1x192xf32> to vector<8x192xf32>
    %250 = arith.addf %247, %249 : vector<8x192xf32>
    %cst_266 = arith.constant 0.000000e+00 : f32
    %251 = vector.broadcast %cst_266 : f32 to vector<8x192xf32>
    %252 = arith.maximumf %250, %251 : vector<8x192xf32>
    %c0_267 = arith.constant 0 : index
    %c0_268 = arith.constant 0 : index
    %253 = vector.load %arg13[%c0_267, %c0_268] : memref<1x8xf32, #tpu.memory_space<vmem>>, vector<1x8xf32>
    %cst_269 = arith.constant dense<0.000000e+00> : vector<1x192xf32>
    %254 = tpu.matmul %253, %252, %cst_269 {dimension_numbers = #tpu.dot_dimension_numbers<[1], [0], [0], [1], [0, 0, 1, 1], [], []>} : vector<1x8xf32>, vector<8x192xf32>, vector<1x192xf32> -> vector<1x192xf32>
    %c0_270 = arith.constant 0 : index
    %c0_271 = arith.constant 0 : index
    %255 = vector.load %arg14[%c0_270, %c0_271] : memref<192x64xf32, #tpu.memory_space<vmem>>, vector<192x64xf32>
    %cst_272 = arith.constant dense<0.000000e+00> : vector<1x64xf32>
    %256 = tpu.matmul %254, %255, %cst_272 {dimension_numbers = #tpu.dot_dimension_numbers<[1], [0], [0], [1], [0, 0, 1, 1], [], []>} : vector<1x192xf32>, vector<192x64xf32>, vector<1x64xf32> -> vector<1x64xf32>
    %c0_273 = arith.constant 0 : index
    %c0_274 = arith.constant 0 : index
    %257 = vector.load %arg15[%c0_273, %c0_274] : memref<1x64xf32, #tpu.memory_space<vmem>>, vector<1x64xf32>
    %258 = arith.addf %256, %257 : vector<1x64xf32>
    %cst_275 = arith.constant 0.000000e+00 : f32
    %259 = vector.broadcast %cst_275 : f32 to vector<1x64xf32>
    %260 = arith.maximumf %258, %259 : vector<1x64xf32>
    %c0_276 = arith.constant 0 : index
    %c0_277 = arith.constant 0 : index
    %261 = vector.load %arg16[%c0_276, %c0_277] : memref<64x4xf32, #tpu.memory_space<vmem>>, vector<64x4xf32>
    %cst_278 = arith.constant dense<0.000000e+00> : vector<1x4xf32>
    %262 = tpu.matmul %260, %261, %cst_278 {dimension_numbers = #tpu.dot_dimension_numbers<[1], [0], [0], [1], [0, 0, 1, 1], [], []>} : vector<1x64xf32>, vector<64x4xf32>, vector<1x4xf32> -> vector<1x4xf32>
    %c0_279 = arith.constant 0 : index
    %c0_280 = arith.constant 0 : index
    %263 = vector.load %arg17[%c0_279, %c0_280] : memref<1x4xf32, #tpu.memory_space<vmem>>, vector<1x4xf32>
    %264 = arith.addf %262, %263 : vector<1x4xf32>
    %cst_281 = arith.constant 0.000000e+00 : f32
    %265 = vector.broadcast %cst_281 : f32 to vector<1x4xf32>
    %266 = arith.maximumf %264, %265 : vector<1x4xf32>
    %c0_282 = arith.constant 0 : index
    %c0_283 = arith.constant 0 : index
    %c0_284 = arith.constant 0 : index
    %267 = vector.load %arg18[%c0_282, %c0_283, %c0_284] : memref<1x1x4xf32, #tpu.memory_space<vmem>>, vector<1x1x4xf32>
    %268 = vector.shape_cast %267 : vector<1x1x4xf32> to vector<1x4xf32>
    %269 = arith.addf %266, %268 : vector<1x4xf32>
    %c0_285 = arith.constant 0 : index
    %c0_286 = arith.constant 0 : index
    %c0_287 = arith.constant 0 : index
    %270 = vector.load %arg19[%c0_285, %c0_286, %c0_287] : memref<1x1x4xf32, #tpu.memory_space<vmem>>, vector<1x1x4xf32>
    %271 = vector.shape_cast %270 : vector<1x1x4xf32> to vector<1x4xf32>
    %272 = vector.shape_cast %269 : vector<1x4xf32> to vector<1x1x4xf32>
    tpu.vector_store %arg19[%c0_285, %c0_286, %c0_287], %272 {strides = array<i32>} : memref<1x1x4xf32, #tpu.memory_space<vmem>>, vector<1x1x4xf32>,
    return
  }
  func.func @transform_0(%arg0: i32) -> (i32, i32, i32) {
    %c0_i32 = arith.constant 0 : i32
    %c0_i32_0 = arith.constant 0 : i32
    %c0_i32_1 = arith.constant 0 : i32
    return %arg0, %c0_i32, %c0_i32_0 : i32, i32, i32
  }
  func.func @transform_1(%arg0: i32) -> (i32, i32, i32) {
    %c0_i32 = arith.constant 0 : i32
    %c0_i32_0 = arith.constant 0 : i32
    %c0_i32_1 = arith.constant 0 : i32
    %c0_i32_2 = arith.constant 0 : i32
    return %c0_i32, %c0_i32_0, %c0_i32_1 : i32, i32, i32
  }
  func.func @transform_2(%arg0: i32) -> (i32, i32) {
    %c0_i32 = arith.constant 0 : i32
    %c0_i32_0 = arith.constant 0 : i32
    %c0_i32_1 = arith.constant 0 : i32
    return %c0_i32, %c0_i32_0 : i32, i32
  }
  func.func @transform_3(%arg0: i32) -> (i32, i32, i32) {
    %c0_i32 = arith.constant 0 : i32
    %c0_i32_0 = arith.constant 0 : i32
    %c0_i32_1 = arith.constant 0 : i32
    %c0_i32_2 = arith.constant 0 : i32
    return %c0_i32, %c0_i32_0, %c0_i32_1 : i32, i32, i32
  }
  func.func @transform_4(%arg0: i32) -> (i32, i32, i32) {
    %c0_i32 = arith.constant 0 : i32
    %c0_i32_0 = arith.constant 0 : i32
    %c0_i32_1 = arith.constant 0 : i32
    %c0_i32_2 = arith.constant 0 : i32
    return %c0_i32, %c0_i32_0, %c0_i32_1 : i32, i32, i32
  }
  func.func @transform_5(%arg0: i32) -> (i32, i32) {
    %c0_i32 = arith.constant 0 : i32
    %c0_i32_0 = arith.constant 0 : i32
    %c0_i32_1 = arith.constant 0 : i32
    return %c0_i32, %c0_i32_0 : i32, i32
  }
  func.func @transform_6(%arg0: i32) -> (i32, i32, i32) {
    %c0_i32 = arith.constant 0 : i32
    %c0_i32_0 = arith.constant 0 : i32
    %c0_i32_1 = arith.constant 0 : i32
    %c0_i32_2 = arith.constant 0 : i32
    return %c0_i32, %c0_i32_0, %c0_i32_1 : i32, i32, i32
  }
  func.func @transform_7(%arg0: i32) -> (i32, i32, i32) {
    %c0_i32 = arith.constant 0 : i32
    %c0_i32_0 = arith.constant 0 : i32
    %c0_i32_1 = arith.constant 0 : i32
    %c0_i32_2 = arith.constant 0 : i32
    return %c0_i32, %c0_i32_0, %c0_i32_1 : i32, i32, i32
  }
  func.func @transform_8(%arg0: i32) -> (i32, i32) {
    %c0_i32 = arith.constant 0 : i32
    %c0_i32_0 = arith.constant 0 : i32
    %c0_i32_1 = arith.constant 0 : i32
    return %c0_i32, %c0_i32_0 : i32, i32
  }
  func.func @transform_9(%arg0: i32) -> (i32, i32, i32) {
    %c0_i32 = arith.constant 0 : i32
    %c0_i32_0 = arith.constant 0 : i32
    %c0_i32_1 = arith.constant 0 : i32
    %c0_i32_2 = arith.constant 0 : i32
    return %c0_i32, %c0_i32_0, %c0_i32_1 : i32, i32, i32
  }
  func.func @transform_10(%arg0: i32) -> (i32, i32, i32) {
    %c0_i32 = arith.constant 0 : i32
    %c0_i32_0 = arith.constant 0 : i32
    %c0_i32_1 = arith.constant 0 : i32
    %c0_i32_2 = arith.constant 0 : i32
    return %c0_i32, %c0_i32_0, %c0_i32_1 : i32, i32, i32
  }
  func.func @transform_11(%arg0: i32) -> (i32, i32) {
    %c0_i32 = arith.constant 0 : i32
    %c0_i32_0 = arith.constant 0 : i32
    %c0_i32_1 = arith.constant 0 : i32
    return %c0_i32, %c0_i32_0 : i32, i32
  }
  func.func @transform_12(%arg0: i32) -> (i32, i32) {
    %c0_i32 = arith.constant 0 : i32
    %c0_i32_0 = arith.constant 0 : i32
    %c0_i32_1 = arith.constant 0 : i32
    return %c0_i32, %c0_i32_0 : i32, i32
  }
  func.func @transform_13(%arg0: i32) -> (i32, i32) {
    %c0_i32 = arith.constant 0 : i32
    %c0_i32_0 = arith.constant 0 : i32
    %c0_i32_1 = arith.constant 0 : i32
    return %c0_i32, %c0_i32_0 : i32, i32
  }
  func.func @transform_14(%arg0: i32) -> (i32, i32) {
    %c0_i32 = arith.constant 0 : i32
    %c0_i32_0 = arith.constant 0 : i32
    %c0_i32_1 = arith.constant 0 : i32
    return %c0_i32, %c0_i32_0 : i32, i32
  }
  func.func @transform_15(%arg0: i32) -> (i32, i32) {
    %c0_i32 = arith.constant 0 : i32
    %c0_i32_0 = arith.constant 0 : i32
    %c0_i32_1 = arith.constant 0 : i32
    return %c0_i32, %c0_i32_0 : i32, i32
  }
  func.func @transform_16(%arg0: i32) -> (i32, i32) {
    %c0_i32 = arith.constant 0 : i32
    %c0_i32_0 = arith.constant 0 : i32
    %c0_i32_1 = arith.constant 0 : i32
    return %c0_i32, %c0_i32_0 : i32, i32
  }
  func.func @transform_17(%arg0: i32) -> (i32, i32, i32) {
    %c0_i32 = arith.constant 0 : i32
    %c0_i32_0 = arith.constant 0 : i32
    %c0_i32_1 = arith.constant 0 : i32
    return %arg0, %c0_i32, %c0_i32_0 : i32, i32, i32
  }
  func.func @transform_18(%arg0: i32) -> (i32, i32, i32) {
    %c0_i32 = arith.constant 0 : i32
    %c0_i32_0 = arith.constant 0 : i32
    %c0_i32_1 = arith.constant 0 : i32
    return %arg0, %c0_i32, %c0_i32_0 : i32, i32, i32
  }
}

</mosaic_0001>

<llo_original>
// kernel: multi_input_net2.1
$region0: #{multi_input_net2.1}
  #allocation0 [shape = 'u32[]', space=smem, size = 0x4, offset = 0x4, fixed_abs, tag = 'smem constant byte address 0x4 - core index']
  #allocation1 [shape = 'u32[144,128]{1,0:T(1,128)}', space=vmem, size = 0x12000, scoped, tag = 'internal scratch']
  #allocation2 [shape = 'f32[102,64]{1,0:T(8,128)}', space=vmem, size = 0xd000, scoped, tag = 'scratch operand']
  #allocation3 [shape = 'f32[38,96]{1,0:T(8,128)}', space=vmem, size = 0x5000, scoped, tag = 'scratch operand']
  #allocation4 [shape = 'f32[18,128]{1,0:T(8,128)}', space=vmem, size = 0x3000, scoped, tag = 'scratch operand']
  %s0 = inlined_call_operand.vmem [shape: f32[2,326,3], index: 0, kind: input, shape index: {}]
  %s1 = inlined_call_operand.vmem [shape: f32[9,3,64], index: 1, kind: input, shape index: {}]
  %s2 = inlined_call_operand.vmem [shape: f32[1,64], index: 2, kind: input, shape index: {}]
  %s3 = inlined_call_operand.vmem [shape: f32[4,102,288], index: 3, kind: input, shape index: {}]
  %s4 = inlined_call_operand.vmem [shape: f32[9,64,96], index: 4, kind: input, shape index: {}]
  %s5 = inlined_call_operand.vmem [shape: f32[1,96], index: 5, kind: input, shape index: {}]
  %s6 = inlined_call_operand.vmem [shape: f32[4,38,80], index: 6, kind: input, shape index: {}]
  %s7 = inlined_call_operand.vmem [shape: f32[9,96,128], index: 7, kind: input, shape index: {}]
  %s8 = inlined_call_operand.vmem [shape: f32[1,128], index: 8, kind: input, shape index: {}]
  %s9 = inlined_call_operand.vmem [shape: f32[4,18,24], index: 9, kind: input, shape index: {}]
  %s10 = inlined_call_operand.vmem [shape: f32[9,128,192], index: 10, kind: input, shape index: {}]
  %s11 = inlined_call_operand.vmem [shape: f32[1,192], index: 11, kind: input, shape index: {}]
  %s12 = inlined_call_operand.vmem [shape: f32[1,8], index: 12, kind: input, shape index: {}]
  %s13 = inlined_call_operand.vmem [shape: f32[192,64], index: 13, kind: input, shape index: {}]
  %s14 = inlined_call_operand.vmem [shape: f32[1,64], index: 14, kind: input, shape index: {}]
  %s15 = inlined_call_operand.vmem [shape: f32[64,4], index: 15, kind: input, shape index: {}]
  %s16 = inlined_call_operand.vmem [shape: f32[1,4], index: 16, kind: input, shape index: {}]
  %s17 = inlined_call_operand.vmem [shape: f32[2,1,4], index: 17, kind: input, shape index: {}]
  %s18 = inlined_call_operand.hbm [shape: f32[2,1,4], index: 18, kind: output, shape index: {}]
  %s19 = sld [smem:[#allocation0]]
  $region105: #{multi_input_net2.1} parent=0
    _
  %s21 = ssub.s32 1, %s19
  %s22 = scalar_select 0, %s21, %s19
  $region1: #{multi_input_net2.1} parent=0
    #allocation5 [shape = 'u8[1024]{0}', space=vmem, size = 0x400, scoped, tag = 'output window, operand 0']
    #allocation6 [shape = 's32[2]{0}', space=sflag, size = 0x8, scoped, tag = 'scoped memory for multi_input_net2.1']
    %23 = vsyncpa [#allocation6], 0
    %s24 = scalar_lea.sflag [#allocation6], 1
    %25 = vsyncpa %s24, 0
    loop: start=0, step=1, limit=4
    $region2: #{multi_input_net2.1} parent=1 // loop_pre_header
      _
    $region3: #{multi_input_net2.1} parent=1 // loop_header
      %s27 = sphi 0, %s31
      %p28 = scmp.ge.s32.totalorder %s27, 4
      %s37 = sphi 0, %s39
      %s40 = sphi 0, %s37
      %s41 = sphi 0, %s40
      %s57 = sphi 0, %s41
      %s61 = sphi 0, %s61
      %s63 = sphi 0, %s61
      %s64 = sphi 0, %s63
      %s78 = sphi 0, %s64
      %s82 = sphi 0, %s82
      %s84 = sphi 0, %s82
      %s85 = sphi 0, %s84
      %s99 = sphi 0, %s85
      %s103 = sphi 0, %s103
      %s105 = sphi 0, %s103
      %s106 = sphi 0, %s105
      %s120 = sphi 0, %s106
      %s124 = sphi 0, %s124
      %s126 = sphi 0, %s124
      %s127 = sphi 0, %s126
      %s141 = sphi 0, %s127
      %s145 = sphi 0, %s145
      %s147 = sphi 0, %s145
      %s148 = sphi 0, %s147
      %s162 = sphi 0, %s148
      %s166 = sphi 0, %s166
      %s168 = sphi 0, %s166
      %s169 = sphi 0, %s168
      %s183 = sphi 0, %s169
      %s187 = sphi 0, %s187
      %s189 = sphi 0, %s187
      %s190 = sphi 0, %s189
      %s204 = sphi 0, %s190
      %s208 = sphi 0, %s208
      %s210 = sphi 0, %s208
      %s211 = sphi 0, %s210
      %s225 = sphi 0, %s211
      %s229 = sphi 0, %s229
      %s231 = sphi 0, %s229
      %s232 = sphi 0, %s231
      %s246 = sphi 0, %s232
      %s250 = sphi 0, %s250
      %s252 = sphi 0, %s250
      %s253 = sphi 0, %s252
      %s267 = sphi 0, %s253
      %s271 = sphi 0, %s271
      %s273 = sphi 0, %s271
      %s274 = sphi 0, %s273
      %s288 = sphi 0, %s274
      %s292 = sphi 0, %s292
      %s294 = sphi 0, %s292
      %s295 = sphi 0, %s294
      %s309 = sphi 0, %s295
      %s313 = sphi 0, %s313
      %s315 = sphi 0, %s313
      %s316 = sphi 0, %s315
      %s330 = sphi 0, %s316
      %s334 = sphi 0, %s334
      %s336 = sphi 0, %s334
      %s337 = sphi 0, %s336
      %s351 = sphi 0, %s337
      %s355 = sphi 0, %s355
      %s357 = sphi 0, %s355
      %s358 = sphi 0, %s357
      %s372 = sphi 0, %s358
      %s376 = sphi 0, %s376
      %s378 = sphi 0, %s376
      %s379 = sphi 0, %s378
      %s393 = sphi 0, %s379
      %s399 = sphi 0, %s401
      %s402 = sphi 0, %s399
      %s403 = sphi 0, %s402
      %s419 = sphi 0, %s403
      %s425 = sphi 0, %s427
      %s428 = sphi 0, %s425
      %s429 = sphi 0, %s428
      %s445 = sphi 0, %s429
    $region4: #{multi_input_net2.1} parent=1 // loop_header_branch
      %30 = sbr.rel (%p28) target = $region8
    $region5: #{multi_input_net2.1} parent=1 // loop_body
      %s32 = ssub.s32 %s27, 1
      %s33 = ssub.s32 %s27, 2
      %s34 = sadd.s32 %s27, 1
      %s35 = ssub.s32 %s27, %s34
      %p36 = scmp.eq.s32.totalorder %s35, 0
      %s38 = sadd.s32 %s37, 1
      %s39 = scalar_select %p36, %s37, %s38
      %p42 = pneg %p36
      %p43 = scmp.eq.s32.totalorder %s27, 1
      %p44 = por %p42, %p43
      %p45 = scmp.ne.s32.totalorder %s37, %s40
      %p46 = scmp.eq.s32.totalorder %s27, 0
      %p47 = por %p45, %p46
      %p48 = scmp.ne.s32.totalorder %s37, %s40
      %p49 = scmp.eq.s32.totalorder %s32, 1
      %p50 = por %p48, %p49
      %p51 = scmp.ne.s32.totalorder %s40, %s41
      %p52 = scmp.eq.s32.totalorder %s32, 0
      %p53 = por %p51, %p52
      %p54 = scmp.ne.s32.totalorder %s40, %s41
      %p55 = scmp.eq.s32.totalorder %s33, 1
      %p56 = por %p54, %p55
      %p58 = scmp.ne.s32.totalorder %s41, %s57
      %p59 = scmp.eq.s32.totalorder %s33, 0
      %p60 = por %p58, %p59
      %s62 = sadd.s32 %s61, 1
      %p65 = scmp.eq.s32.totalorder %s27, 1
      %p66 = scmp.ne.s32.totalorder %s61, %s63
      %p67 = scmp.eq.s32.totalorder %s27, 0
      %p68 = por %p66, %p67
      %p69 = scmp.ne.s32.totalorder %s61, %s63
      %p70 = scmp.eq.s32.totalorder %s32, 1
      %p71 = por %p69, %p70
      %p72 = scmp.ne.s32.totalorder %s63, %s64
      %p73 = scmp.eq.s32.totalorder %s32, 0
      %p74 = por %p72, %p73
      %p75 = scmp.ne.s32.totalorder %s63, %s64
      %p76 = scmp.eq.s32.totalorder %s33, 1
      %p77 = por %p75, %p76
      %p79 = scmp.ne.s32.totalorder %s64, %s78
      %p80 = scmp.eq.s32.totalorder %s33, 0
      %p81 = por %p79, %p80
      %s83 = sadd.s32 %s82, 1
      %p86 = scmp.eq.s32.totalorder %s27, 1
      %p87 = scmp.ne.s32.totalorder %s82, %s84
      %p88 = scmp.eq.s32.totalorder %s27, 0
      %p89 = por %p87, %p88
      %p90 = scmp.ne.s32.totalorder %s82, %s84
      %p91 = scmp.eq.s32.totalorder %s32, 1
      %p92 = por %p90, %p91
      %p93 = scmp.ne.s32.totalorder %s84, %s85
      %p94 = scmp.eq.s32.totalorder %s32, 0
      %p95 = por %p93, %p94
      %p96 = scmp.ne.s32.totalorder %s84, %s85
      %p97 = scmp.eq.s32.totalorder %s33, 1
      %p98 = por %p96, %p97
      %p100 = scmp.ne.s32.totalorder %s85, %s99
      %p101 = scmp.eq.s32.totalorder %s33, 0
      %p102 = por %p100, %p101
      %s104 = sadd.s32 %s103, 1
      %p107 = scmp.eq.s32.totalorder %s27, 1
      %p108 = scmp.ne.s32.totalorder %s103, %s105
      %p109 = scmp.eq.s32.totalorder %s27, 0
      %p110 = por %p108, %p109
      %p111 = scmp.ne.s32.totalorder %s103, %s105
      %p112 = scmp.eq.s32.totalorder %s32, 1
      %p113 = por %p111, %p112
      %p114 = scmp.ne.s32.totalorder %s105, %s106
      %p115 = scmp.eq.s32.totalorder %s32, 0
      %p116 = por %p114, %p115
      %p117 = scmp.ne.s32.totalorder %s105, %s106
      %p118 = scmp.eq.s32.totalorder %s33, 1
      %p119 = por %p117, %p118
      %p121 = scmp.ne.s32.totalorder %s106, %s120
      %p122 = scmp.eq.s32.totalorder %s33, 0
      %p123 = por %p121, %p122
      %s125 = sadd.s32 %s124, 1
      %p128 = scmp.eq.s32.totalorder %s27, 1
      %p129 = scmp.ne.s32.totalorder %s124, %s126
      %p130 = scmp.eq.s32.totalorder %s27, 0
      %p131 = por %p129, %p130
      %p132 = scmp.ne.s32.totalorder %s124, %s126
      %p133 = scmp.eq.s32.totalorder %s32, 1
      %p134 = por %p132, %p133
      %p135 = scmp.ne.s32.totalorder %s126, %s127
      %p136 = scmp.eq.s32.totalorder %s32, 0
      %p137 = por %p135, %p136
      %p138 = scmp.ne.s32.totalorder %s126, %s127
      %p139 = scmp.eq.s32.totalorder %s33, 1
      %p140 = por %p138, %p139
      %p142 = scmp.ne.s32.totalorder %s127, %s141
      %p143 = scmp.eq.s32.totalorder %s33, 0
      %p144 = por %p142, %p143
      %s146 = sadd.s32 %s145, 1
      %p149 = scmp.eq.s32.totalorder %s27, 1
      %p150 = scmp.ne.s32.totalorder %s145, %s147
      %p151 = scmp.eq.s32.totalorder %s27, 0
      %p152 = por %p150, %p151
      %p153 = scmp.ne.s32.totalorder %s145, %s147
      %p154 = scmp.eq.s32.totalorder %s32, 1
      %p155 = por %p153, %p154
      %p156 = scmp.ne.s32.totalorder %s147, %s148
      %p157 = scmp.eq.s32.totalorder %s32, 0
      %p158 = por %p156, %p157
      %p159 = scmp.ne.s32.totalorder %s147, %s148
      %p160 = scmp.eq.s32.totalorder %s33, 1
      %p161 = por %p159, %p160
      %p163 = scmp.ne.s32.totalorder %s148, %s162
      %p164 = scmp.eq.s32.totalorder %s33, 0
      %p165 = por %p163, %p164
      %s167 = sadd.s32 %s166, 1
      %p170 = scmp.eq.s32.totalorder %s27, 1
      %p171 = scmp.ne.s32.totalorder %s166, %s168
      %p172 = scmp.eq.s32.totalorder %s27, 0
      %p173 = por %p171, %p172
      %p174 = scmp.ne.s32.totalorder %s166, %s168
      %p175 = scmp.eq.s32.totalorder %s32, 1
      %p176 = por %p174, %p175
      %p177 = scmp.ne.s32.totalorder %s168, %s169
      %p178 = scmp.eq.s32.totalorder %s32, 0
      %p179 = por %p177, %p178
      %p180 = scmp.ne.s32.totalorder %s168, %s169
      %p181 = scmp.eq.s32.totalorder %s33, 1
      %p182 = por %p180, %p181
      %p184 = scmp.ne.s32.totalorder %s169, %s183
      %p185 = scmp.eq.s32.totalorder %s33, 0
      %p186 = por %p184, %p185
      %s188 = sadd.s32 %s187, 1
      %p191 = scmp.eq.s32.totalorder %s27, 1
      %p192 = scmp.ne.s32.totalorder %s187, %s189
      %p193 = scmp.eq.s32.totalorder %s27, 0
      %p194 = por %p192, %p193
      %p195 = scmp.ne.s32.totalorder %s187, %s189
      %p196 = scmp.eq.s32.totalorder %s32, 1
      %p197 = por %p195, %p196
      %p198 = scmp.ne.s32.totalorder %s189, %s190
      %p199 = scmp.eq.s32.totalorder %s32, 0
      %p200 = por %p198, %p199
      %p201 = scmp.ne.s32.totalorder %s189, %s190
      %p202 = scmp.eq.s32.totalorder %s33, 1
      %p203 = por %p201, %p202
      %p205 = scmp.ne.s32.totalorder %s190, %s204
      %p206 = scmp.eq.s32.totalorder %s33, 0
      %p207 = por %p205, %p206
      %s209 = sadd.s32 %s208, 1
      %p212 = scmp.eq.s32.totalorder %s27, 1
      %p213 = scmp.ne.s32.totalorder %s208, %s210
      %p214 = scmp.eq.s32.totalorder %s27, 0
      %p215 = por %p213, %p214
      %p216 = scmp.ne.s32.totalorder %s208, %s210
      %p217 = scmp.eq.s32.totalorder %s32, 1
      %p218 = por %p216, %p217
      %p219 = scmp.ne.s32.totalorder %s210, %s211
      %p220 = scmp.eq.s32.totalorder %s32, 0
      %p221 = por %p219, %p220
      %p222 = scmp.ne.s32.totalorder %s210, %s211
      %p223 = scmp.eq.s32.totalorder %s33, 1
      %p224 = por %p222, %p223
      %p226 = scmp.ne.s32.totalorder %s211, %s225
      %p227 = scmp.eq.s32.totalorder %s33, 0
      %p228 = por %p226, %p227
      %s230 = sadd.s32 %s229, 1
      %p233 = scmp.eq.s32.totalorder %s27, 1
      %p234 = scmp.ne.s32.totalorder %s229, %s231
      %p235 = scmp.eq.s32.totalorder %s27, 0
      %p236 = por %p234, %p235
      %p237 = scmp.ne.s32.totalorder %s229, %s231
      %p238 = scmp.eq.s32.totalorder %s32, 1
      %p239 = por %p237, %p238
      %p240 = scmp.ne.s32.totalorder %s231, %s232
      %p241 = scmp.eq.s32.totalorder %s32, 0
      %p242 = por %p240, %p241
      %p243 = scmp.ne.s32.totalorder %s231, %s232
      %p244 = scmp.eq.s32.totalorder %s33, 1
      %p245 = por %p243, %p244
      %p247 = scmp.ne.s32.totalorder %s232, %s246
      %p248 = scmp.eq.s32.totalorder %s33, 0
      %p249 = por %p247, %p248
      %s251 = sadd.s32 %s250, 1
      %p254 = scmp.eq.s32.totalorder %s27, 1
      %p255 = scmp.ne.s32.totalorder %s250, %s252
      %p256 = scmp.eq.s32.totalorder %s27, 0
      %p257 = por %p255, %p256
      %p258 = scmp.ne.s32.totalorder %s250, %s252
      %p259 = scmp.eq.s32.totalorder %s32, 1
      %p260 = por %p258, %p259
      %p261 = scmp.ne.s32.totalorder %s252, %s253
      %p262 = scmp.eq.s32.totalorder %s32, 0
      %p263 = por %p261, %p262
      %p264 = scmp.ne.s32.totalorder %s252, %s253
      %p265 = scmp.eq.s32.totalorder %s33, 1
      %p266 = por %p264, %p265
      %p268 = scmp.ne.s32.totalorder %s253, %s267
      %p269 = scmp.eq.s32.totalorder %s33, 0
      %p270 = por %p268, %p269
      %s272 = sadd.s32 %s271, 1
      %p275 = scmp.eq.s32.totalorder %s27, 1
      %p276 = scmp.ne.s32.totalorder %s271, %s273
      %p277 = scmp.eq.s32.totalorder %s27, 0
      %p278 = por %p276, %p277
      %p279 = scmp.ne.s32.totalorder %s271, %s273
      %p280 = scmp.eq.s32.totalorder %s32, 1
      %p281 = por %p279, %p280
      %p282 = scmp.ne.s32.totalorder %s273, %s274
      %p283 = scmp.eq.s32.totalorder %s32, 0
      %p284 = por %p282, %p283
      %p285 = scmp.ne.s32.totalorder %s273, %s274
      %p286 = scmp.eq.s32.totalorder %s33, 1
      %p287 = por %p285, %p286
      %p289 = scmp.ne.s32.totalorder %s274, %s288
      %p290 = scmp.eq.s32.totalorder %s33, 0
      %p291 = por %p289, %p290
      %s293 = sadd.s32 %s292, 1
      %p296 = scmp.eq.s32.totalorder %s27, 1
      %p297 = scmp.ne.s32.totalorder %s292, %s294
      %p298 = scmp.eq.s32.totalorder %s27, 0
      %p299 = por %p297, %p298
      %p300 = scmp.ne.s32.totalorder %s292, %s294
      %p301 = scmp.eq.s32.totalorder %s32, 1
      %p302 = por %p300, %p301
      %p303 = scmp.ne.s32.totalorder %s294, %s295
      %p304 = scmp.eq.s32.totalorder %s32, 0
      %p305 = por %p303, %p304
      %p306 = scmp.ne.s32.totalorder %s294, %s295
      %p307 = scmp.eq.s32.totalorder %s33, 1
      %p308 = por %p306, %p307
      %p310 = scmp.ne.s32.totalorder %s295, %s309
      %p311 = scmp.eq.s32.totalorder %s33, 0
      %p312 = por %p310, %p311
      %s314 = sadd.s32 %s313, 1
      %p317 = scmp.eq.s32.totalorder %s27, 1
      %p318 = scmp.ne.s32.totalorder %s313, %s315
      %p319 = scmp.eq.s32.totalorder %s27, 0
      %p320 = por %p318, %p319
      %p321 = scmp.ne.s32.totalorder %s313, %s315
      %p322 = scmp.eq.s32.totalorder %s32, 1
      %p323 = por %p321, %p322
      %p324 = scmp.ne.s32.totalorder %s315, %s316
      %p325 = scmp.eq.s32.totalorder %s32, 0
      %p326 = por %p324, %p325
      %p327 = scmp.ne.s32.totalorder %s315, %s316
      %p328 = scmp.eq.s32.totalorder %s33, 1
      %p329 = por %p327, %p328
      %p331 = scmp.ne.s32.totalorder %s316, %s330
      %p332 = scmp.eq.s32.totalorder %s33, 0
      %p333 = por %p331, %p332
      %s335 = sadd.s32 %s334, 1
      %p338 = scmp.eq.s32.totalorder %s27, 1
      %p339 = scmp.ne.s32.totalorder %s334, %s336
      %p340 = scmp.eq.s32.totalorder %s27, 0
      %p341 = por %p339, %p340
      %p342 = scmp.ne.s32.totalorder %s334, %s336
      %p343 = scmp.eq.s32.totalorder %s32, 1
      %p344 = por %p342, %p343
      %p345 = scmp.ne.s32.totalorder %s336, %s337
      %p346 = scmp.eq.s32.totalorder %s32, 0
      %p347 = por %p345, %p346
      %p348 = scmp.ne.s32.totalorder %s336, %s337
      %p349 = scmp.eq.s32.totalorder %s33, 1
      %p350 = por %p348, %p349
      %p352 = scmp.ne.s32.totalorder %s337, %s351
      %p353 = scmp.eq.s32.totalorder %s33, 0
      %p354 = por %p352, %p353
      %s356 = sadd.s32 %s355, 1
      %p359 = scmp.eq.s32.totalorder %s27, 1
      %p360 = scmp.ne.s32.totalorder %s355, %s357
      %p361 = scmp.eq.s32.totalorder %s27, 0
      %p362 = por %p360, %p361
      %p363 = scmp.ne.s32.totalorder %s355, %s357
      %p364 = scmp.eq.s32.totalorder %s32, 1
      %p365 = por %p363, %p364
      %p366 = scmp.ne.s32.totalorder %s357, %s358
      %p367 = scmp.eq.s32.totalorder %s32, 0
      %p368 = por %p366, %p367
      %p369 = scmp.ne.s32.totalorder %s357, %s358
      %p370 = scmp.eq.s32.totalorder %s33, 1
      %p371 = por %p369, %p370
      %p373 = scmp.ne.s32.totalorder %s358, %s372
      %p374 = scmp.eq.s32.totalorder %s33, 0
      %p375 = por %p373, %p374
      %s377 = sadd.s32 %s376, 1
      %p380 = scmp.eq.s32.totalorder %s27, 1
      %p381 = scmp.ne.s32.totalorder %s376, %s378
      %p382 = scmp.eq.s32.totalorder %s27, 0
      %p383 = por %p381, %p382
      %p384 = scmp.ne.s32.totalorder %s376, %s378
      %p385 = scmp.eq.s32.totalorder %s32, 1
      %p386 = por %p384, %p385
      %p387 = scmp.ne.s32.totalorder %s378, %s379
      %p388 = scmp.eq.s32.totalorder %s32, 0
      %p389 = por %p387, %p388
      %p390 = scmp.ne.s32.totalorder %s378, %s379
      %p391 = scmp.eq.s32.totalorder %s33, 1
      %p392 = por %p390, %p391
      %p394 = scmp.ne.s32.totalorder %s379, %s393
      %p395 = scmp.eq.s32.totalorder %s33, 0
      %p396 = por %p394, %p395
      %s397 = ssub.s32 %s27, %s34
      %p398 = scmp.eq.s32.totalorder %s397, 0
      %s400 = sadd.s32 %s399, 1
      %s401 = scalar_select %p398, %s399, %s400
      %p404 = pneg %p398
      %p405 = scmp.eq.s32.totalorder %s27, 1
      %p406 = por %p404, %p405
      %p407 = scmp.ne.s32.totalorder %s399, %s402
      %p408 = scmp.eq.s32.totalorder %s27, 0
      %p409 = por %p407, %p408
      %p410 = scmp.ne.s32.totalorder %s399, %s402
      %p411 = scmp.eq.s32.totalorder %s32, 1
      %p412 = por %p410, %p411
      %p413 = scmp.ne.s32.totalorder %s402, %s403
      %p414 = scmp.eq.s32.totalorder %s32, 0
      %p415 = por %p413, %p414
      %p416 = scmp.ne.s32.totalorder %s402, %s403
      %p417 = scmp.eq.s32.totalorder %s33, 1
      %p418 = por %p416, %p417
      %p420 = scmp.ne.s32.totalorder %s403, %s419
      %p421 = scmp.eq.s32.totalorder %s33, 0
      %p422 = por %p420, %p421
      %s423 = ssub.s32 %s27, %s34
      %p424 = scmp.eq.s32.totalorder %s423, 0
      %s426 = sadd.s32 %s425, 1
      %s427 = scalar_select %p424, %s425, %s426
      %p430 = pneg %p424
      %p431 = scmp.eq.s32.totalorder %s27, 1
      %p432 = por %p430, %p431
      %p433 = scmp.ne.s32.totalorder %s425, %s428
      %p434 = scmp.eq.s32.totalorder %s27, 0
      %p435 = por %p433, %p434
      %p436 = scmp.ne.s32.totalorder %s425, %s428
      %p437 = scmp.eq.s32.totalorder %s32, 1
      %p438 = por %p436, %p437
      %p439 = scmp.ne.s32.totalorder %s428, %s429
      %p440 = scmp.eq.s32.totalorder %s32, 0
      %p441 = por %p439, %p440
      %p442 = scmp.ne.s32.totalorder %s428, %s429
      %p443 = scmp.eq.s32.totalorder %s33, 1
      %p444 = por %p442, %p443
      %p446 = scmp.ne.s32.totalorder %s429, %s445
      %p447 = scmp.eq.s32.totalorder %s33, 0
      %p448 = por %p446, %p447
      %p449 = scmp.le.s32.totalorder 1, %s27
      %p450 = scmp.lt.s32.totalorder %s27, 3
      %p451 = pnand %p449, %p450
      %p452 = pneg %p451
      // Predicated region
      $region9: #{multi_input_net2.1} parent=5 // pred_check
        _
      $region10: #{multi_input_net2.1} parent=5 // pred_check_branch
        %454 = sbr.rel (%p451) target = $region12
      $region11: #{multi_input_net2.1} parent=5 // pred_region
        %s455 = ssub.s32 %s27, 1
        // Predicated region
        $region13: #{multi_input_net2.1} parent=11 // pred_check
          %p456 = pneg %p74
        $region14: #{multi_input_net2.1} parent=11 // pred_check_branch
          %458 = sbr.rel (%p456) target = $region16
        $region15: #{multi_input_net2.1} parent=11 // pred_region
          _
        $region16: #{multi_input_net2.1} parent=11 // pred_fallthru
          _
        // Predicated region
        $region17: #{multi_input_net2.1} parent=11 // pred_check
          %p459 = pneg %p95
        $region18: #{multi_input_net2.1} parent=11 // pred_check_branch
          %461 = sbr.rel (%p459) target = $region20
        $region19: #{multi_input_net2.1} parent=11 // pred_region
          _
        $region20: #{multi_input_net2.1} parent=11 // pred_fallthru
          _
        // Predicated region
        $region21: #{multi_input_net2.1} parent=11 // pred_check
          %p462 = pneg %p116
        $region22: #{multi_input_net2.1} parent=11 // pred_check_branch
          %464 = sbr.rel (%p462) target = $region24
        $region23: #{multi_input_net2.1} parent=11 // pred_region
          _
        $region24: #{multi_input_net2.1} parent=11 // pred_fallthru
          _
        // Predicated region
        $region25: #{multi_input_net2.1} parent=11 // pred_check
          %p465 = pneg %p137
        $region26: #{multi_input_net2.1} parent=11 // pred_check_branch
          %467 = sbr.rel (%p465) target = $region28
        $region27: #{multi_input_net2.1} parent=11 // pred_region
          _
        $region28: #{multi_input_net2.1} parent=11 // pred_fallthru
          _
        // Predicated region
        $region29: #{multi_input_net2.1} parent=11 // pred_check
          %p468 = pneg %p158
        $region30: #{multi_input_net2.1} parent=11 // pred_check_branch
          %470 = sbr.rel (%p468) target = $region32
        $region31: #{multi_input_net2.1} parent=11 // pred_region
          _
        $region32: #{multi_input_net2.1} parent=11 // pred_fallthru
          _
        // Predicated region
        $region33: #{multi_input_net2.1} parent=11 // pred_check
          %p471 = pneg %p179
        $region34: #{multi_input_net2.1} parent=11 // pred_check_branch
          %473 = sbr.rel (%p471) target = $region36
        $region35: #{multi_input_net2.1} parent=11 // pred_region
          _
        $region36: #{multi_input_net2.1} parent=11 // pred_fallthru
          _
        // Predicated region
        $region37: #{multi_input_net2.1} parent=11 // pred_check
          %p474 = pneg %p200
        $region38: #{multi_input_net2.1} parent=11 // pred_check_branch
          %476 = sbr.rel (%p474) target = $region40
        $region39: #{multi_input_net2.1} parent=11 // pred_region
          _
        $region40: #{multi_input_net2.1} parent=11 // pred_fallthru
          _
        // Predicated region
        $region41: #{multi_input_net2.1} parent=11 // pred_check
          %p477 = pneg %p221
        $region42: #{multi_input_net2.1} parent=11 // pred_check_branch
          %479 = sbr.rel (%p477) target = $region44
        $region43: #{multi_input_net2.1} parent=11 // pred_region
          _
        $region44: #{multi_input_net2.1} parent=11 // pred_fallthru
          _
        // Predicated region
        $region45: #{multi_input_net2.1} parent=11 // pred_check
          %p480 = pneg %p242
        $region46: #{multi_input_net2.1} parent=11 // pred_check_branch
          %482 = sbr.rel (%p480) target = $region48
        $region47: #{multi_input_net2.1} parent=11 // pred_region
          _
        $region48: #{multi_input_net2.1} parent=11 // pred_fallthru
          _
        // Predicated region
        $region49: #{multi_input_net2.1} parent=11 // pred_check
          %p483 = pneg %p263
        $region50: #{multi_input_net2.1} parent=11 // pred_check_branch
          %485 = sbr.rel (%p483) target = $region52
        $region51: #{multi_input_net2.1} parent=11 // pred_region
          _
        $region52: #{multi_input_net2.1} parent=11 // pred_fallthru
          _
        // Predicated region
        $region53: #{multi_input_net2.1} parent=11 // pred_check
          %p486 = pneg %p284
        $region54: #{multi_input_net2.1} parent=11 // pred_check_branch
          %488 = sbr.rel (%p486) target = $region56
        $region55: #{multi_input_net2.1} parent=11 // pred_region
          _
        $region56: #{multi_input_net2.1} parent=11 // pred_fallthru
          _
        // Predicated region
        $region57: #{multi_input_net2.1} parent=11 // pred_check
          %p489 = pneg %p305
        $region58: #{multi_input_net2.1} parent=11 // pred_check_branch
          %491 = sbr.rel (%p489) target = $region60
        $region59: #{multi_input_net2.1} parent=11 // pred_region
          _
        $region60: #{multi_input_net2.1} parent=11 // pred_fallthru
          _
        // Predicated region
        $region61: #{multi_input_net2.1} parent=11 // pred_check
          %p492 = pneg %p326
        $region62: #{multi_input_net2.1} parent=11 // pred_check_branch
          %494 = sbr.rel (%p492) target = $region64
        $region63: #{multi_input_net2.1} parent=11 // pred_region
          _
        $region64: #{multi_input_net2.1} parent=11 // pred_fallthru
          _
        // Predicated region
        $region65: #{multi_input_net2.1} parent=11 // pred_check
          %p495 = pneg %p347
        $region66: #{multi_input_net2.1} parent=11 // pred_check_branch
          %497 = sbr.rel (%p495) target = $region68
        $region67: #{multi_input_net2.1} parent=11 // pred_region
          _
        $region68: #{multi_input_net2.1} parent=11 // pred_fallthru
          _
        // Predicated region
        $region69: #{multi_input_net2.1} parent=11 // pred_check
          %p498 = pneg %p368
        $region70: #{multi_input_net2.1} parent=11 // pred_check_branch
          %500 = sbr.rel (%p498) target = $region72
        $region71: #{multi_input_net2.1} parent=11 // pred_region
          _
        $region72: #{multi_input_net2.1} parent=11 // pred_fallthru
          _
        // Predicated region
        $region73: #{multi_input_net2.1} parent=11 // pred_check
          %p501 = pneg %p389
        $region74: #{multi_input_net2.1} parent=11 // pred_check_branch
          %503 = sbr.rel (%p501) target = $region76
        $region75: #{multi_input_net2.1} parent=11 // pred_region
          _
        $region76: #{multi_input_net2.1} parent=11 // pred_fallthru
          _
      $region12: #{multi_input_net2.1} parent=5 // pred_fallthru
        _
      %p504 = scmp.lt.s32.totalorder %s27, 2
      // Predicated region
      $region77: #{multi_input_net2.1} parent=5 // pred_check
        %p505 = pneg %p504
      $region78: #{multi_input_net2.1} parent=5 // pred_check_branch
        %507 = sbr.rel (%p505) target = $region80
      $region79: #{multi_input_net2.1} parent=5 // pred_region
        // Predicated region
        $region81: #{multi_input_net2.1} parent=79 // pred_check
          %p508 = pneg %p47
        $region82: #{multi_input_net2.1} parent=79 // pred_check_branch
          %510 = sbr.rel (%p508) target = $region84
        $region83: #{multi_input_net2.1} parent=79 // pred_region
          %p511 = scmp.lt.s32.totalorder %s27, 1
          %s512 = scalar_select %p511, %s27, 1
          %s513 = smul.addr %s512, 41
          %s514 = smul.addr %s513, 8
          %s515 = scalar_lea.vmem %s0, %s514
        $region84: #{multi_input_net2.1} parent=79 // pred_fallthru
          _
        // Predicated region
        $region85: #{multi_input_net2.1} parent=79 // pred_check
          %p516 = pneg %p409
        $region86: #{multi_input_net2.1} parent=79 // pred_check_branch
          %518 = sbr.rel (%p516) target = $region88
        $region87: #{multi_input_net2.1} parent=79 // pred_region
          %p519 = scmp.lt.s32.totalorder %s27, 1
          %s520 = scalar_select %p519, %s27, 1
          %s521 = scalar_lea.vmem %s17, %s520
        $region88: #{multi_input_net2.1} parent=79 // pred_fallthru
          _
      $region80: #{multi_input_net2.1} parent=5 // pred_fallthru
        _
      %p522 = scmp.le.s32.totalorder 1, %s27
      %p523 = scmp.lt.s32.totalorder %s27, 3
      %p524 = pnand %p522, %p523
      %p525 = pneg %p524
      // Predicated region
      $region89: #{multi_input_net2.1} parent=5 // pred_check
        _
      $region90: #{multi_input_net2.1} parent=5 // pred_check_branch
        %527 = sbr.rel (%p524) target = $region92
      $region91: #{multi_input_net2.1} parent=5 // pred_region
        %s528 = ssub.s32 %s27, 1
        %p529 = scmp.lt.s32.totalorder %s32, 1
        %s530 = scalar_select %p529, %s32, 1
        %s531 = smul.addr %s530, 41
        %s532 = smul.addr %s531, 8
        %s533 = scalar_lea.vmem %s0, %s532
        %p534 = pneg %p53
        %p535 = pneg %p50
        %p536 = pneg %p74
        %p537 = pneg %p71
        %p538 = pneg %p95
        %p539 = pneg %p92
        %p540 = pneg %p116
        %p541 = pneg %p113
        %p542 = pneg %p137
        %p543 = pneg %p134
        %p544 = pneg %p158
        %p545 = pneg %p155
        %p546 = pneg %p179
        %p547 = pneg %p176
        %p548 = pneg %p200
        %p549 = pneg %p197
        %p550 = pneg %p221
        %p551 = pneg %p218
        %p552 = pneg %p242
        %p553 = pneg %p239
        %p554 = pneg %p263
        %p555 = pneg %p260
        %p556 = pneg %p284
        %p557 = pneg %p281
        %p558 = pneg %p305
        %p559 = pneg %p302
        %p560 = pneg %p326
        %p561 = pneg %p323
        %p562 = pneg %p347
        %p563 = pneg %p344
        %p564 = pneg %p368
        %p565 = pneg %p365
        %p566 = pneg %p389
        %p567 = pneg %p386
        %p568 = scmp.lt.s32.totalorder %s32, 1
        %s569 = scalar_select %p568, %s32, 1
        %s570 = scalar_lea.vmem %s17, %s569
        %p571 = pneg %p415
        %p572 = pneg %p412
        %p573 = pneg %p441
        %p574 = pneg %p438
        %s575 = sand.u32 %s428, 1
        %s576 = scalar_lea.sflag [#allocation6], %s575
        %s577 = sand.u32 %s428, 1
        %s578 = scalar_lea.vmem [#allocation5], %s577
        %p579 = scmp.lt.s32.totalorder %s32, 1
        %s580 = scalar_select %p579, %s32, 1
        %s581 = smul.addr %s580, 41
        %s582 = smul.addr %s581, 8
        %s583 = scalar_lea.vmem %s0, %s582
        %p584 = scmp.lt.s32.totalorder %s32, 1
        %s585 = scalar_select %p584, %s32, 1
        %s586 = scalar_lea.vmem %s17, %s585
        %v587 = vld [vmem:[%s583] sm:$0xff]
        %v588 = vld [vmem:[%s583 + $0x8] sm:$0xff]
        %v589 = vld [vmem:[%s583 + $0x10] sm:$0xff]
        %v590 = vld [vmem:[%s583 + $0x18] sm:$0xff]
        %v591 = vld [vmem:[%s583 + $0x20] sm:$0xff]
        %v592 = vld [vmem:[%s583 + $0x28] sm:$0xff]
        %v593 = vld [vmem:[%s583 + $0x30] sm:$0xff]
        %v594 = vld [vmem:[%s583 + $0x38] sm:$0xff]
        %v595 = vld [vmem:[%s583 + $0x40] sm:$0xff]
        %v596 = vld [vmem:[%s583 + $0x48] sm:$0xff]
        %v597 = vld [vmem:[%s583 + $0x50] sm:$0xff]
        %v598 = vld [vmem:[%s583 + $0x58] sm:$0xff]
        %v599 = vld [vmem:[%s583 + $0x60] sm:$0xff]
        %v600 = vld [vmem:[%s583 + $0x68] sm:$0xff]
        %v601 = vld [vmem:[%s583 + $0x70] sm:$0xff]
        %v602 = vld [vmem:[%s583 + $0x78] sm:$0xff]
        %v603 = vld [vmem:[%s583 + $0x80] sm:$0xff]
        %v604 = vld [vmem:[%s583 + $0x88] sm:$0xff]
        %v605 = vld [vmem:[%s583 + $0x90] sm:$0xff]
        %v606 = vld [vmem:[%s583 + $0x98] sm:$0xff]
        %v607 = vld [vmem:[%s583 + $0xa0] sm:$0xff]
        %v608 = vld [vmem:[%s583 + $0xa8] sm:$0xff]
        %v609 = vld [vmem:[%s583 + $0xb0] sm:$0xff]
        %v610 = vld [vmem:[%s583 + $0xb8] sm:$0xff]
        %v611 = vld [vmem:[%s583 + $0xc0] sm:$0xff]
        %v612 = vld [vmem:[%s583 + $0xc8] sm:$0xff]
        %v613 = vld [vmem:[%s583 + $0xd0] sm:$0xff]
        %v614 = vld [vmem:[%s583 + $0xd8] sm:$0xff]
        %v615 = vld [vmem:[%s583 + $0xe0] sm:$0xff]
        %v616 = vld [vmem:[%s583 + $0xe8] sm:$0xff]
        %v617 = vld [vmem:[%s583 + $0xf0] sm:$0xff]
        %v618 = vld [vmem:[%s583 + $0xf8] sm:$0xff]
        %v619 = vld [vmem:[%s583 + $0x100] sm:$0xff]
        %v620 = vld [vmem:[%s583 + $0x108] sm:$0xff]
        %v621 = vld [vmem:[%s583 + $0x110] sm:$0xff]
        %v622 = vld [vmem:[%s583 + $0x118] sm:$0xff]
        %v623 = vld [vmem:[%s1] sm:$0x7]
        %v624 = vld [vmem:[%s583 + $0x1] sm:$0xff]
        %v625 = vld [vmem:[%s583 + $0x9] sm:$0xff]
        %v626 = vld [vmem:[%s583 + $0x11] sm:$0xff]
        %v627 = vld [vmem:[%s583 + $0x19] sm:$0xff]
        %v628 = vld [vmem:[%s583 + $0x21] sm:$0xff]
        %v629 = vld [vmem:[%s583 + $0x29] sm:$0xff]
        %v630 = vld [vmem:[%s583 + $0x31] sm:$0xff]
        %v631 = vld [vmem:[%s583 + $0x39] sm:$0xff]
        %v632 = vld [vmem:[%s583 + $0x41] sm:$0xff]
        %v633 = vld [vmem:[%s583 + $0x49] sm:$0xff]
        %v634 = vld [vmem:[%s583 + $0x51] sm:$0xff]
        %v635 = vld [vmem:[%s583 + $0x59] sm:$0xff]
        %v636 = vld [vmem:[%s583 + $0x61] sm:$0xff]
        %v637 = vld [vmem:[%s583 + $0x69] sm:$0xff]
        %v638 = vld [vmem:[%s583 + $0x71] sm:$0xff]
        %v639 = vld [vmem:[%s583 + $0x79] sm:$0xff]
        %v640 = vld [vmem:[%s583 + $0x81] sm:$0xff]
        %v641 = vld [vmem:[%s583 + $0x89] sm:$0xff]
        %v642 = vld [vmem:[%s583 + $0x91] sm:$0xff]
        %v643 = vld [vmem:[%s583 + $0x99] sm:$0xff]
        %v644 = vld [vmem:[%s583 + $0xa1] sm:$0xff]
        %v645 = vld [vmem:[%s583 + $0xa9] sm:$0xff]
        %v646 = vld [vmem:[%s583 + $0xb1] sm:$0xff]
        %v647 = vld [vmem:[%s583 + $0xb9] sm:$0xff]
        %v648 = vld [vmem:[%s583 + $0xc1] sm:$0xff]
        %v649 = vld [vmem:[%s583 + $0xc9] sm:$0xff]
        %v650 = vld [vmem:[%s583 + $0xd1] sm:$0xff]
        %v651 = vld [vmem:[%s583 + $0xd9] sm:$0xff]
        %v652 = vld [vmem:[%s583 + $0xe1] sm:$0xff]
        %v653 = vld [vmem:[%s583 + $0xe9] sm:$0xff]
        %v654 = vld [vmem:[%s583 + $0xf1] sm:$0xff]
        %v655 = vld [vmem:[%s583 + $0xf9] sm:$0xff]
        %v656 = vld [vmem:[%s583 + $0x101] sm:$0xff]
        %v657 = vld [vmem:[%s583 + $0x109] sm:$0xff]
        %v658 = vld [vmem:[%s583 + $0x111] sm:$0xff]
        %v659 = vld [vmem:[%s583 + $0x119] sm:$0xff]
        %s660 = scalar_lea.vmem %s1, 4
        %v661 = vld [vmem:[%s660] sm:$0x7]
        %vm662 = vcmask 23552
        %v664 = vsel %vm662, %v624, 0
        %v667 = vsel %vm662, %v625, 0
        %v670 = vsel %vm662, %v626, 0
        %v673 = vsel %vm662, %v627, 0
        %v676 = vsel %vm662, %v628, 0
        %v679 = vsel %vm662, %v629, 0
        %v682 = vsel %vm662, %v630, 0
        %v685 = vsel %vm662, %v631, 0
        %v688 = vsel %vm662, %v632, 0
        %v691 = vsel %vm662, %v633, 0
        %v694 = vsel %vm662, %v634, 0
        %v697 = vsel %vm662, %v635, 0
        %v700 = vsel %vm662, %v636, 0
        %v703 = vsel %vm662, %v637, 0
        %v706 = vsel %vm662, %v638, 0
        %v709 = vsel %vm662, %v639, 0
        %v712 = vsel %vm662, %v640, 0
        %v715 = vsel %vm662, %v641, 0
        %v718 = vsel %vm662, %v642, 0
        %v721 = vsel %vm662, %v643, 0
        %v724 = vsel %vm662, %v644, 0
        %v727 = vsel %vm662, %v645, 0
        %v730 = vsel %vm662, %v646, 0
        %v733 = vsel %vm662, %v647, 0
        %v736 = vsel %vm662, %v648, 0
        %v739 = vsel %vm662, %v649, 0
        %v742 = vsel %vm662, %v650, 0
        %v745 = vsel %vm662, %v651, 0
        %v748 = vsel %vm662, %v652, 0
        %v751 = vsel %vm662, %v653, 0
        %v754 = vsel %vm662, %v654, 0
        %v757 = vsel %vm662, %v655, 0
        %v760 = vsel %vm662, %v656, 0
        %v763 = vsel %vm662, %v657, 0
        %v766 = vsel %vm662, %v658, 0
        %v769 = vsel %vm662, %v659, 0
        %vm771 = vcmask 1042432
        %v773 = vsel %vm771, %v661, 0
        %775 = vmatprep.subr.mxu0 0.0
        %776 = vmatpush1.msra.mxu0 %v773
        %777 = vmatprep.subr.mxu0 0.0
        %778 = vmatpush1.msra.mxu0 0.0
        %779 = vmatprep.subr.mxu0 0.0
        %780 = vmatpush1.msra.mxu0 0.0
        %781 = vmatprep.subr.mxu0 0.0
        %782 = vmatpush1.msra.mxu0 0.0
        %783 = vmatprep.subr.mxu0 0.0
        %784 = vmatpush1.msra.mxu0 0.0
        %785 = vmatprep.subr.mxu0 0.0
        %786 = vmatpush1.msra.mxu0 0.0
        %787 = vmatprep.subr.mxu0 0.0
        %788 = vmatpush1.msra.mxu0 0.0
        %789 = vmatprep.subr.mxu0 0.0
        %790 = vmatpush1.msra.mxu0 0.0
        %791 = vmatprep.subr.mxu0 0.0
        %792 = vmatpush1.msra.mxu0 0.0
        %793 = vmatprep.subr.mxu0 0.0
        %794 = vmatpush1.msra.mxu0 0.0
        %795 = vmatprep.subr.mxu0 0.0
        %796 = vmatpush1.msra.mxu0 0.0
        %797 = vmatprep.subr.mxu0 0.0
        %798 = vmatpush1.msra.mxu0 0.0
        %799 = vmatprep.subr.mxu0 0.0
        %800 = vmatpush1.msra.mxu0 0.0
        %801 = vmatprep.subr.mxu0 0.0
        %802 = vmatpush1.msra.mxu0 0.0
        %803 = vmatprep.subr.mxu0 0.0
        %804 = vmatpush1.msra.mxu0 0.0
        %805 = vmatprep.subr.mxu0 0.0
        %806 = vmatpush1.msra.mxu0 0.0
        %807 = vmatprep.subr.mxu0 0.0
        %808 = vmatpush1.msra.mxu0 0.0
        %809 = vmatprep.subr.mxu0 0.0
        %810 = vmatpush1.msra.mxu0 0.0
        %811 = vmatprep.subr.mxu0 0.0
        %812 = vmatpush1.msra.mxu0 0.0
        %813 = vmatprep.subr.mxu0 0.0
        %814 = vmatpush1.msra.mxu0 0.0
        %815 = vmatprep.subr.mxu0 0.0
        %816 = vmatpush1.msra.mxu0 0.0
        %817 = vmatprep.subr.mxu0 0.0
        %818 = vmatpush1.msra.mxu0 0.0
        %819 = vmatprep.subr.mxu0 0.0
        %820 = vmatpush1.msra.mxu0 0.0
        %821 = vmatprep.subr.mxu0 0.0
        %822 = vmatpush1.msra.mxu0 0.0
        %823 = vmatprep.subr.mxu0 0.0
        %824 = vmatpush1.msra.mxu0 0.0
        %825 = vmatprep.subr.mxu0 0.0
        %826 = vmatpush1.msra.mxu0 0.0
        %827 = vmatprep.subr.mxu0 0.0
        %828 = vmatpush1.msra.mxu0 0.0
        %829 = vmatprep.subr.mxu0 0.0
        %830 = vmatpush1.msra.mxu0 0.0
        %831 = vmatprep.subr.mxu0 0.0
        %832 = vmatpush1.msra.mxu0 0.0
        %833 = vmatprep.subr.mxu0 0.0
        %834 = vmatpush1.msra.mxu0 0.0
        %835 = vmatprep.subr.mxu0 0.0
        %836 = vmatpush1.msra.mxu0 0.0
        %837 = vmatprep.subr.mxu0 0.0
        %838 = vmatpush1.msra.mxu0 0.0
        %839 = vmatprep.mubr.f32.mxu0 0.0
        %840 = vmatmul.mubr.f32.gmra.mrb[0].mxu0 %v664
        %v841 = vpop.f32.mrb[0].mxu0
        %v842 = vadd.f32 0.0, %v841
        %v843 = vpop.f32.mrb[0].mxu0
        %844 = vmatprep.mubr.f32.mxu0 0.0
        %845 = vmatmul.mubr.f32.gmra.mrb[0].mxu0 %v667
        %v846 = vpop.f32.mrb[0].mxu0
        %v847 = vadd.f32 0.0, %v846
        %v848 = vpop.f32.mrb[0].mxu0
        %849 = vmatprep.mubr.f32.mxu0 0.0
        %850 = vmatmul.mubr.f32.gmra.mrb[0].mxu0 %v670
        %v851 = vpop.f32.mrb[0].mxu0
        %v852 = vadd.f32 0.0, %v851
        %v853 = vpop.f32.mrb[0].mxu0
        %854 = vmatprep.mubr.f32.mxu0 0.0
        %855 = vmatmul.mubr.f32.gmra.mrb[0].mxu0 %v673
        %v856 = vpop.f32.mrb[0].mxu0
        %v857 = vadd.f32 0.0, %v856
        %v858 = vpop.f32.mrb[0].mxu0
        %859 = vmatprep.mubr.f32.mxu0 0.0
        %860 = vmatmul.mubr.f32.gmra.mrb[0].mxu0 %v676
        %v861 = vpop.f32.mrb[0].mxu0
        %v862 = vadd.f32 0.0, %v861
        %v863 = vpop.f32.mrb[0].mxu0
        %864 = vmatprep.mubr.f32.mxu0 0.0
        %865 = vmatmul.mubr.f32.gmra.mrb[0].mxu0 %v679
        %v866 = vpop.f32.mrb[0].mxu0
        %v867 = vadd.f32 0.0, %v866
        %v868 = vpop.f32.mrb[0].mxu0
        %869 = vmatprep.mubr.f32.mxu0 0.0
        %870 = vmatmul.mubr.f32.gmra.mrb[0].mxu0 %v682
        %v871 = vpop.f32.mrb[0].mxu0
        %v872 = vadd.f32 0.0, %v871
        %v873 = vpop.f32.mrb[0].mxu0
        %874 = vmatprep.mubr.f32.mxu0 0.0
        %875 = vmatmul.mubr.f32.gmra.mrb[0].mxu0 %v685
        %v876 = vpop.f32.mrb[0].mxu0
        %v877 = vadd.f32 0.0, %v876
        %v878 = vpop.f32.mrb[0].mxu0
        %879 = vmatprep.mubr.f32.mxu0 0.0
        %880 = vmatmul.mubr.f32.gmra.mrb[0].mxu0 %v688
        %v881 = vpop.f32.mrb[0].mxu0
        %v882 = vadd.f32 0.0, %v881
        %v883 = vpop.f32.mrb[0].mxu0
        %884 = vmatprep.mubr.f32.mxu0 0.0
        %885 = vmatmul.mubr.f32.gmra.mrb[0].mxu0 %v691
        %v886 = vpop.f32.mrb[0].mxu0
        %v887 = vadd.f32 0.0, %v886
        %v888 = vpop.f32.mrb[0].mxu0
        %889 = vmatprep.mubr.f32.mxu0 0.0
        %890 = vmatmul.mubr.f32.gmra.mrb[0].mxu0 %v694
        %v891 = vpop.f32.mrb[0].mxu0
        %v892 = vadd.f32 0.0, %v891
        %v893 = vpop.f32.mrb[0].mxu0
        %894 = vmatprep.mubr.f32.mxu0 0.0
        %895 = vmatmul.mubr.f32.gmra.mrb[0].mxu0 %v697
        %v896 = vpop.f32.mrb[0].mxu0
        %v897 = vadd.f32 0.0, %v896
        %v898 = vpop.f32.mrb[0].mxu0
        %899 = vmatprep.mubr.f32.mxu0 0.0
        %900 = vmatmul.mubr.f32.gmra.mrb[0].mxu0 %v700
        %v901 = vpop.f32.mrb[0].mxu0
        %v902 = vadd.f32 0.0, %v901
        %v903 = vpop.f32.mrb[0].mxu0
        %904 = vmatprep.mubr.f32.mxu0 0.0
        %905 = vmatmul.mubr.f32.gmra.mrb[0].mxu0 %v703
        %v906 = vpop.f32.mrb[0].mxu0
        %v907 = vadd.f32 0.0, %v906
        %v908 = vpop.f32.mrb[0].mxu0
        %909 = vmatprep.mubr.f32.mxu0 0.0
        %910 = vmatmul.mubr.f32.gmra.mrb[0].mxu0 %v706
        %v911 = vpop.f32.mrb[0].mxu0
        %v912 = vadd.f32 0.0, %v911
        %v913 = vpop.f32.mrb[0].mxu0
        %914 = vmatprep.mubr.f32.mxu0 0.0
        %915 = vmatmul.mubr.f32.gmra.mrb[0].mxu0 %v709
        %v916 = vpop.f32.mrb[0].mxu0
        %v917 = vadd.f32 0.0, %v916
        %v918 = vpop.f32.mrb[0].mxu0
        %919 = vmatprep.mubr.f32.mxu0 0.0
        %920 = vmatmul.mubr.f32.gmra.mrb[0].mxu0 %v712
        %v921 = vpop.f32.mrb[0].mxu0
        %v922 = vadd.f32 0.0, %v921
        %v923 = vpop.f32.mrb[0].mxu0
        %924 = vmatprep.mubr.f32.mxu0 0.0
        %925 = vmatmul.mubr.f32.gmra.mrb[0].mxu0 %v715
        %v926 = vpop.f32.mrb[0].mxu0
        %v927 = vadd.f32 0.0, %v926
        %v928 = vpop.f32.mrb[0].mxu0
        %929 = vmatprep.mubr.f32.mxu0 0.0
        %930 = vmatmul.mubr.f32.gmra.mrb[0].mxu0 %v718
        %v931 = vpop.f32.mrb[0].mxu0
        %v932 = vadd.f32 0.0, %v931
        %v933 = vpop.f32.mrb[0].mxu0
        %934 = vmatprep.mubr.f32.mxu0 0.0
        %935 = vmatmul.mubr.f32.gmra.mrb[0].mxu0 %v721
        %v936 = vpop.f32.mrb[0].mxu0
        %v937 = vadd.f32 0.0, %v936
        %v938 = vpop.f32.mrb[0].mxu0
        %939 = vmatprep.mubr.f32.mxu0 0.0
        %940 = vmatmul.mubr.f32.gmra.mrb[0].mxu0 %v724
        %v941 = vpop.f32.mrb[0].mxu0
        %v942 = vadd.f32 0.0, %v941
        %v943 = vpop.f32.mrb[0].mxu0
        %944 = vmatprep.mubr.f32.mxu0 0.0
        %945 = vmatmul.mubr.f32.gmra.mrb[0].mxu0 %v727
        %v946 = vpop.f32.mrb[0].mxu0
        %v947 = vadd.f32 0.0, %v946
        %v948 = vpop.f32.mrb[0].mxu0
        %949 = vmatprep.mubr.f32.mxu0 0.0
        %950 = vmatmul.mubr.f32.gmra.mrb[0].mxu0 %v730
        %v951 = vpop.f32.mrb[0].mxu0
        %v952 = vadd.f32 0.0, %v951
        %v953 = vpop.f32.mrb[0].mxu0
        %954 = vmatprep.mubr.f32.mxu0 0.0
        %955 = vmatmul.mubr.f32.gmra.mrb[0].mxu0 %v733
        %v956 = vpop.f32.mrb[0].mxu0
        %v957 = vadd.f32 0.0, %v956
        %v958 = vpop.f32.mrb[0].mxu0
        %959 = vmatprep.mubr.f32.mxu0 0.0
        %960 = vmatmul.mubr.f32.gmra.mrb[0].mxu0 %v736
        %v961 = vpop.f32.mrb[0].mxu0
        %v962 = vadd.f32 0.0, %v961
        %v963 = vpop.f32.mrb[0].mxu0
        %964 = vmatprep.mubr.f32.mxu0 0.0
        %965 = vmatmul.mubr.f32.gmra.mrb[0].mxu0 %v739
        %v966 = vpop.f32.mrb[0].mxu0
        %v967 = vadd.f32 0.0, %v966
        %v968 = vpop.f32.mrb[0].mxu0
        %969 = vmatprep.mubr.f32.mxu0 0.0
        %970 = vmatmul.mubr.f32.gmra.mrb[0].mxu0 %v742
        %v971 = vpop.f32.mrb[0].mxu0
        %v972 = vadd.f32 0.0, %v971
        %v973 = vpop.f32.mrb[0].mxu0
        %974 = vmatprep.mubr.f32.mxu0 0.0
        %975 = vmatmul.mubr.f32.gmra.mrb[0].mxu0 %v745
        %v976 = vpop.f32.mrb[0].mxu0
        %v977 = vadd.f32 0.0, %v976
        %v978 = vpop.f32.mrb[0].mxu0
        %979 = vmatprep.mubr.f32.mxu0 0.0
        %980 = vmatmul.mubr.f32.gmra.mrb[0].mxu0 %v748
        %v981 = vpop.f32.mrb[0].mxu0
        %v982 = vadd.f32 0.0, %v981
        %v983 = vpop.f32.mrb[0].mxu0
        %984 = vmatprep.mubr.f32.mxu0 0.0
        %985 = vmatmul.mubr.f32.gmra.mrb[0].mxu0 %v751
        %v986 = vpop.f32.mrb[0].mxu0
        %v987 = vadd.f32 0.0, %v986
        %v988 = vpop.f32.mrb[0].mxu0
        %989 = vmatprep.mubr.f32.mxu0 0.0
        %990 = vmatmul.mubr.f32.gmra.mrb[0].mxu0 %v754
        %v991 = vpop.f32.mrb[0].mxu0
        %v992 = vadd.f32 0.0, %v991
        %v993 = vpop.f32.mrb[0].mxu0
        %994 = vmatprep.mubr.f32.mxu0 0.0
        %995 = vmatmul.mubr.f32.gmra.mrb[0].mxu0 %v757
        %v996 = vpop.f32.mrb[0].mxu0
        %v997 = vadd.f32 0.0, %v996
        %v998 = vpop.f32.mrb[0].mxu0
        %999 = vmatprep.mubr.f32.mxu0 0.0
        %1000 = vmatmul.mubr.f32.gmra.mrb[0].mxu0 %v760
        %v1001 = vpop.f32.mrb[0].mxu0
        %v1002 = vadd.f32 0.0, %v1001
        %v1003 = vpop.f32.mrb[0].mxu0
        %1004 = vmatprep.mubr.f32.mxu0 0.0
        %1005 = vmatmul.mubr.f32.gmra.mrb[0].mxu0 %v763
        %v1006 = vpop.f32.mrb[0].mxu0
        %v1007 = vadd.f32 0.0, %v1006
        %v1008 = vpop.f32.mrb[0].mxu0
        %1009 = vmatprep.mubr.f32.mxu0 0.0
        %1010 = vmatmul.mubr.f32.gmra.mrb[0].mxu0 %v766
        %v1011 = vpop.f32.mrb[0].mxu0
        %v1012 = vadd.f32 0.0, %v1011
        %v1013 = vpop.f32.mrb[0].mxu0
        %1014 = vmatprep.mubr.f32.mxu0 0.0
        %1015 = vmatmul.mubr.f32.gmra.mrb[0].mxu0 %v769
        %v1016 = vpop.f32.mrb[0].mxu0
        %v1017 = vadd.f32 0.0, %v1016
        %v1018 = vpop.f32.mrb[0].mxu0
        %1019 = vdwg.mxu0
        %v1021 = vsel %vm662, %v587, 0
        %v1024 = vsel %vm662, %v588, 0
        %v1027 = vsel %vm662, %v589, 0
        %v1030 = vsel %vm662, %v590, 0
        %v1033 = vsel %vm662, %v591, 0
        %v1036 = vsel %vm662, %v592, 0
        %v1039 = vsel %vm662, %v593, 0
        %v1042 = vsel %vm662, %v594, 0
        %v1045 = vsel %vm662, %v595, 0
        %v1048 = vsel %vm662, %v596, 0
        %v1051 = vsel %vm662, %v597, 0
        %v1054 = vsel %vm662, %v598, 0
        %v1057 = vsel %vm662, %v599, 0
        %v1060 = vsel %vm662, %v600, 0
        %v1063 = vsel %vm662, %v601, 0
        %v1066 = vsel %vm662, %v602, 0
        %v1069 = vsel %vm662, %v603, 0
        %v1072 = vsel %vm662, %v604, 0
        %v1075 = vsel %vm662, %v605, 0
        %v1078 = vsel %vm662, %v606, 0
        %v1081 = vsel %vm662, %v607, 0
        %v1084 = vsel %vm662, %v608, 0
        %v1087 = vsel %vm662, %v609, 0
        %v1090 = vsel %vm662, %v610, 0
        %v1093 = vsel %vm662, %v611, 0
        %v1096 = vsel %vm662, %v612, 0
        %v1099 = vsel %vm662, %v613, 0
        %v1102 = vsel %vm662, %v614, 0
        %v1105 = vsel %vm662, %v615, 0
        %v1108 = vsel %vm662, %v616, 0
        %v1111 = vsel %vm662, %v617, 0
        %v1114 = vsel %vm662, %v618, 0
        %v1117 = vsel %vm662, %v619, 0
        %v1120 = vsel %vm662, %v620, 0
        %v1123 = vsel %vm662, %v621, 0
        %v1126 = vsel %vm662, %v622, 0
        %v1129 = vsel %vm771, %v623, 0
        %1131 = vmatprep.subr.mxu0 0.0
        %1132 = vmatpush1.msra.mxu0 %v1129
        %1133 = vmatprep.subr.mxu0 0.0
        %1134 = vmatpush1.msra.mxu0 0.0
        %1135 = vmatprep.subr.mxu0 0.0
        %1136 = vmatpush1.msra.mxu0 0.0
        %1137 = vmatprep.subr.mxu0 0.0
        %1138 = vmatpush1.msra.mxu0 0.0
        %1139 = vmatprep.subr.mxu0 0.0
        %1140 = vmatpush1.msra.mxu0 0.0
        %1141 = vmatprep.subr.mxu0 0.0
        %1142 = vmatpush1.msra.mxu0 0.0
        %1143 = vmatprep.subr.mxu0 0.0
        %1144 = vmatpush1.msra.mxu0 0.0
        %1145 = vmatprep.subr.mxu0 0.0
        %1146 = vmatpush1.msra.mxu0 0.0
        %1147 = vmatprep.subr.mxu0 0.0
        %1148 = vmatpush1.msra.mxu0 0.0
        %1149 = vmatprep.subr.mxu0 0.0
        %1150 = vmatpush1.msra.mxu0 0.0
        %1151 = vmatprep.subr.mxu0 0.0
        %1152 = vmatpush1.msra.mxu0 0.0
        %1153 = vmatprep.subr.mxu0 0.0
        %1154 = vmatpush1.msra.mxu0 0.0
        %1155 = vmatprep.subr.mxu0 0.0
        %1156 = vmatpush1.msra.mxu0 0.0
        %1157 = vmatprep.subr.mxu0 0.0
        %1158 = vmatpush1.msra.mxu0 0.0
        %1159 = vmatprep.subr.mxu0 0.0
        %1160 = vmatpush1.msra.mxu0 0.0
        %1161 = vmatprep.subr.mxu0 0.0
        %1162 = vmatpush1.msra.mxu0 0.0
        %1163 = vmatprep.subr.mxu0 0.0
        %1164 = vmatpush1.msra.mxu0 0.0
        %1165 = vmatprep.subr.mxu0 0.0
        %1166 = vmatpush1.msra.mxu0 0.0
        %1167 = vmatprep.subr.mxu0 0.0
        %1168 = vmatpush1.msra.mxu0 0.0
        %1169 = vmatprep.subr.mxu0 0.0
        %1170 = vmatpush1.msra.mxu0 0.0
        %1171 = vmatprep.subr.mxu0 0.0
        %1172 = vmatpush1.msra.mxu0 0.0
        %1173 = vmatprep.subr.mxu0 0.0
        %1174 = vmatpush1.msra.mxu0 0.0
        %1175 = vmatprep.subr.mxu0 0.0
        %1176 = vmatpush1.msra.mxu0 0.0
        %1177 = vmatprep.subr.mxu0 0.0
        %1178 = vmatpush1.msra.mxu0 0.0
        %1179 = vmatprep.subr.mxu0 0.0
        %1180 = vmatpush1.msra.mxu0 0.0
        %1181 = vmatprep.subr.mxu0 0.0
        %1182 = vmatpush1.msra.mxu0 0.0
        %1183 = vmatprep.subr.mxu0 0.0
        %1184 = vmatpush1.msra.mxu0 0.0
        %1185 = vmatprep.subr.mxu0 0.0
        %1186 = vmatpush1.msra.mxu0 0.0
        %1187 = vmatprep.subr.mxu0 0.0
        %1188 = vmatpush1.msra.mxu0 0.0
        %1189 = vmatprep.subr.mxu0 0.0
        %1190 = vmatpush1.msra.mxu0 0.0
        %1191 = vmatprep.subr.mxu0 0.0
        %1192 = vmatpush1.msra.mxu0 0.0
        %1193 = vmatprep.subr.mxu0 0.0
        %1194 = vmatpush1.msra.mxu0 0.0
        %1195 = vmatprep.mubr.f32.mxu0 0.0
        %1196 = vmatmul.mubr.f32.gmra.mrb[0].mxu0 %v1021
        %v1197 = vpop.f32.mrb[0].mxu0
        %v1198 = vadd.f32 %v842, %v1197
        %v1199 = vpop.f32.mrb[0].mxu0
        %1200 = vmatprep.mubr.f32.mxu0 0.0
        %1201 = vmatmul.mubr.f32.gmra.mrb[0].mxu0 %v1024
        %v1202 = vpop.f32.mrb[0].mxu0
        %v1203 = vadd.f32 %v847, %v1202
        %v1204 = vpop.f32.mrb[0].mxu0
        %1205 = vmatprep.mubr.f32.mxu0 0.0
        %1206 = vmatmul.mubr.f32.gmra.mrb[0].mxu0 %v1027
        %v1207 = vpop.f32.mrb[0].mxu0
        %v1208 = vadd.f32 %v852, %v1207
        %v1209 = vpop.f32.mrb[0].mxu0
        %1210 = vmatprep.mubr.f32.mxu0 0.0
        %1211 = vmatmul.mubr.f32.gmra.mrb[0].mxu0 %v1030
        %v1212 = vpop.f32.mrb[0].mxu0
        %v1213 = vadd.f32 %v857, %v1212
        %v1214 = vpop.f32.mrb[0].mxu0
        %1215 = vmatprep.mubr.f32.mxu0 0.0
        %1216 = vmatmul.mubr.f32.gmra.mrb[0].mxu0 %v1033
        %v1217 = vpop.f32.mrb[0].mxu0
        %v1218 = vadd.f32 %v862, %v1217
        %v1219 = vpop.f32.mrb[0].mxu0
        %1220 = vmatprep.mubr.f32.mxu0 0.0
        %1221 = vmatmul.mubr.f32.gmra.mrb[0].mxu0 %v1036
        %v1222 = vpop.f32.mrb[0].mxu0
        %v1223 = vadd.f32 %v867, %v1222
        %v1224 = vpop.f32.mrb[0].mxu0
        %1225 = vmatprep.mubr.f32.mxu0 0.0
        %1226 = vmatmul.mubr.f32.gmra.mrb[0].mxu0 %v1039
        %v1227 = vpop.f32.mrb[0].mxu0
        %v1228 = vadd.f32 %v872, %v1227
        %v1229 = vpop.f32.mrb[0].mxu0
        %1230 = vmatprep.mubr.f32.mxu0 0.0
        %1231 = vmatmul.mubr.f32.gmra.mrb[0].mxu0 %v1042
        %v1232 = vpop.f32.mrb[0].mxu0
        %v1233 = vadd.f32 %v877, %v1232
        %v1234 = vpop.f32.mrb[0].mxu0
        %1235 = vmatprep.mubr.f32.mxu0 0.0
        %1236 = vmatmul.mubr.f32.gmra.mrb[0].mxu0 %v1045
        %v1237 = vpop.f32.mrb[0].mxu0
        %v1238 = vadd.f32 %v882, %v1237
        %v1239 = vpop.f32.mrb[0].mxu0
        %1240 = vmatprep.mubr.f32.mxu0 0.0
        %1241 = vmatmul.mubr.f32.gmra.mrb[0].mxu0 %v1048
        %v1242 = vpop.f32.mrb[0].mxu0
        %v1243 = vadd.f32 %v887, %v1242
        %v1244 = vpop.f32.mrb[0].mxu0
        %1245 = vmatprep.mubr.f32.mxu0 0.0
        %1246 = vmatmul.mubr.f32.gmra.mrb[0].mxu0 %v1051
        %v1247 = vpop.f32.mrb[0].mxu0
        %v1248 = vadd.f32 %v892, %v1247
        %v1249 = vpop.f32.mrb[0].mxu0
        %1250 = vmatprep.mubr.f32.mxu0 0.0
        %1251 = vmatmul.mubr.f32.gmra.mrb[0].mxu0 %v1054
        %v1252 = vpop.f32.mrb[0].mxu0
        %v1253 = vadd.f32 %v897, %v1252
        %v1254 = vpop.f32.mrb[0].mxu0
        %1255 = vmatprep.mubr.f32.mxu0 0.0
        %1256 = vmatmul.mubr.f32.gmra.mrb[0].mxu0 %v1057
        %v1257 = vpop.f32.mrb[0].mxu0
        %v1258 = vadd.f32 %v902, %v1257
        %v1259 = vpop.f32.mrb[0].mxu0
        %1260 = vmatprep.mubr.f32.mxu0 0.0
        %1261 = vmatmul.mubr.f32.gmra.mrb[0].mxu0 %v1060
        %v1262 = vpop.f32.mrb[0].mxu0
        %v1263 = vadd.f32 %v907, %v1262
        %v1264 = vpop.f32.mrb[0].mxu0
        %1265 = vmatprep.mubr.f32.mxu0 0.0
        %1266 = vmatmul.mubr.f32.gmra.mrb[0].mxu0 %v1063
        %v1267 = vpop.f32.mrb[0].mxu0
        %v1268 = vadd.f32 %v912, %v1267
        %v1269 = vpop.f32.mrb[0].mxu0
        %1270 = vmatprep.mubr.f32.mxu0 0.0
        %1271 = vmatmul.mubr.f32.gmra.mrb[0].mxu0 %v1066
        %v1272 = vpop.f32.mrb[0].mxu0
        %v1273 = vadd.f32 %v917, %v1272
        %v1274 = vpop.f32.mrb[0].mxu0
        %1275 = vmatprep.mubr.f32.mxu0 0.0
        %1276 = vmatmul.mubr.f32.gmra.mrb[0].mxu0 %v1069
        %v1277 = vpop.f32.mrb[0].mxu0
        %v1278 = vadd.f32 %v922, %v1277
        %v1279 = vpop.f32.mrb[0].mxu0
        %1280 = vmatprep.mubr.f32.mxu0 0.0
        %1281 = vmatmul.mubr.f32.gmra.mrb[0].mxu0 %v1072
        %v1282 = vpop.f32.mrb[0].mxu0
        %v1283 = vadd.f32 %v927, %v1282
        %v1284 = vpop.f32.mrb[0].mxu0
        %1285 = vmatprep.mubr.f32.mxu0 0.0
        %1286 = vmatmul.mubr.f32.gmra.mrb[0].mxu0 %v1075
        %v1287 = vpop.f32.mrb[0].mxu0
        %v1288 = vadd.f32 %v932, %v1287
        %v1289 = vpop.f32.mrb[0].mxu0
        %1290 = vmatprep.mubr.f32.mxu0 0.0
        %1291 = vmatmul.mubr.f32.gmra.mrb[0].mxu0 %v1078
        %v1292 = vpop.f32.mrb[0].mxu0
        %v1293 = vadd.f32 %v937, %v1292
        %v1294 = vpop.f32.mrb[0].mxu0
        %1295 = vmatprep.mubr.f32.mxu0 0.0
        %1296 = vmatmul.mubr.f32.gmra.mrb[0].mxu0 %v1081
        %v1297 = vpop.f32.mrb[0].mxu0
        %v1298 = vadd.f32 %v942, %v1297
        %v1299 = vpop.f32.mrb[0].mxu0
        %1300 = vmatprep.mubr.f32.mxu0 0.0
        %1301 = vmatmul.mubr.f32.gmra.mrb[0].mxu0 %v1084
        %v1302 = vpop.f32.mrb[0].mxu0
        %v1303 = vadd.f32 %v947, %v1302
        %v1304 = vpop.f32.mrb[0].mxu0
        %1305 = vmatprep.mubr.f32.mxu0 0.0
        %1306 = vmatmul.mubr.f32.gmra.mrb[0].mxu0 %v1087
        %v1307 = vpop.f32.mrb[0].mxu0
        %v1308 = vadd.f32 %v952, %v1307
        %v1309 = vpop.f32.mrb[0].mxu0
        %1310 = vmatprep.mubr.f32.mxu0 0.0
        %1311 = vmatmul.mubr.f32.gmra.mrb[0].mxu0 %v1090
        %v1312 = vpop.f32.mrb[0].mxu0
        %v1313 = vadd.f32 %v957, %v1312
        %v1314 = vpop.f32.mrb[0].mxu0
        %1315 = vmatprep.mubr.f32.mxu0 0.0
        %1316 = vmatmul.mubr.f32.gmra.mrb[0].mxu0 %v1093
        %v1317 = vpop.f32.mrb[0].mxu0
        %v1318 = vadd.f32 %v962, %v1317
        %v1319 = vpop.f32.mrb[0].mxu0
        %1320 = vmatprep.mubr.f32.mxu0 0.0
        %1321 = vmatmul.mubr.f32.gmra.mrb[0].mxu0 %v1096
        %v1322 = vpop.f32.mrb[0].mxu0
        %v1323 = vadd.f32 %v967, %v1322
        %v1324 = vpop.f32.mrb[0].mxu0
        %1325 = vmatprep.mubr.f32.mxu0 0.0
        %1326 = vmatmul.mubr.f32.gmra.mrb[0].mxu0 %v1099
        %v1327 = vpop.f32.mrb[0].mxu0
        %v1328 = vadd.f32 %v972, %v1327
        %v1329 = vpop.f32.mrb[0].mxu0
        %1330 = vmatprep.mubr.f32.mxu0 0.0
        %1331 = vmatmul.mubr.f32.gmra.mrb[0].mxu0 %v1102
        %v1332 = vpop.f32.mrb[0].mxu0
        %v1333 = vadd.f32 %v977, %v1332
        %v1334 = vpop.f32.mrb[0].mxu0
        %1335 = vmatprep.mubr.f32.mxu0 0.0
        %1336 = vmatmul.mubr.f32.gmra.mrb[0].mxu0 %v1105
        %v1337 = vpop.f32.mrb[0].mxu0
        %v1338 = vadd.f32 %v982, %v1337
        %v1339 = vpop.f32.mrb[0].mxu0
        %1340 = vmatprep.mubr.f32.mxu0 0.0
        %1341 = vmatmul.mubr.f32.gmra.mrb[0].mxu0 %v1108
        %v1342 = vpop.f32.mrb[0].mxu0
        %v1343 = vadd.f32 %v987, %v1342
        %v1344 = vpop.f32.mrb[0].mxu0
        %1345 = vmatprep.mubr.f32.mxu0 0.0
        %1346 = vmatmul.mubr.f32.gmra.mrb[0].mxu0 %v1111
        %v1347 = vpop.f32.mrb[0].mxu0
        %v1348 = vadd.f32 %v992, %v1347
        %v1349 = vpop.f32.mrb[0].mxu0
        %1350 = vmatprep.mubr.f32.mxu0 0.0
        %1351 = vmatmul.mubr.f32.gmra.mrb[0].mxu0 %v1114
        %v1352 = vpop.f32.mrb[0].mxu0
        %v1353 = vadd.f32 %v997, %v1352
        %v1354 = vpop.f32.mrb[0].mxu0
        %1355 = vmatprep.mubr.f32.mxu0 0.0
        %1356 = vmatmul.mubr.f32.gmra.mrb[0].mxu0 %v1117
        %v1357 = vpop.f32.mrb[0].mxu0
        %v1358 = vadd.f32 %v1002, %v1357
        %v1359 = vpop.f32.mrb[0].mxu0
        %1360 = vmatprep.mubr.f32.mxu0 0.0
        %1361 = vmatmul.mubr.f32.gmra.mrb[0].mxu0 %v1120
        %v1362 = vpop.f32.mrb[0].mxu0
        %v1363 = vadd.f32 %v1007, %v1362
        %v1364 = vpop.f32.mrb[0].mxu0
        %1365 = vmatprep.mubr.f32.mxu0 0.0
        %1366 = vmatmul.mubr.f32.gmra.mrb[0].mxu0 %v1123
        %v1367 = vpop.f32.mrb[0].mxu0
        %v1368 = vadd.f32 %v1012, %v1367
        %v1369 = vpop.f32.mrb[0].mxu0
        %1370 = vmatprep.mubr.f32.mxu0 0.0
        %1371 = vmatmul.mubr.f32.gmra.mrb[0].mxu0 %v1126
        %v1372 = vpop.f32.mrb[0].mxu0
        %v1373 = vadd.f32 %v1017, %v1372
        %v1374 = vpop.f32.mrb[0].mxu0
        %1375 = vdwg.mxu0
        %v1376 = vld [vmem:[%s583 + $0x2] sm:$0xff]
        %v1377 = vld [vmem:[%s583 + $0xa] sm:$0xff]
        %v1378 = vld [vmem:[%s583 + $0x12] sm:$0xff]
        %v1379 = vld [vmem:[%s583 + $0x1a] sm:$0xff]
        %v1380 = vld [vmem:[%s583 + $0x22] sm:$0xff]
        %v1381 = vld [vmem:[%s583 + $0x2a] sm:$0xff]
        %v1382 = vld [vmem:[%s583 + $0x32] sm:$0xff]
        %v1383 = vld [vmem:[%s583 + $0x3a] sm:$0xff]
        %v1384 = vld [vmem:[%s583 + $0x42] sm:$0xff]
        %v1385 = vld [vmem:[%s583 + $0x4a] sm:$0xff]
        %v1386 = vld [vmem:[%s583 + $0x52] sm:$0xff]
        %v1387 = vld [vmem:[%s583 + $0x5a] sm:$0xff]
        %v1388 = vld [vmem:[%s583 + $0x62] sm:$0xff]
        %v1389 = vld [vmem:[%s583 + $0x6a] sm:$0xff]
        %v1390 = vld [vmem:[%s583 + $0x72] sm:$0xff]
        %v1391 = vld [vmem:[%s583 + $0x7a] sm:$0xff]
        %v1392 = vld [vmem:[%s583 + $0x82] sm:$0xff]
        %v1393 = vld [vmem:[%s583 + $0x8a] sm:$0xff]
        %v1394 = vld [vmem:[%s583 + $0x92] sm:$0xff]
        %v1395 = vld [vmem:[%s583 + $0x9a] sm:$0xff]
        %v1396 = vld [vmem:[%s583 + $0xa2] sm:$0xff]
        %v1397 = vld [vmem:[%s583 + $0xaa] sm:$0xff]
        %v1398 = vld [vmem:[%s583 + $0xb2] sm:$0xff]
        %v1399 = vld [vmem:[%s583 + $0xba] sm:$0xff]
        %v1400 = vld [vmem:[%s583 + $0xc2] sm:$0xff]
        %v1401 = vld [vmem:[%s583 + $0xca] sm:$0xff]
        %v1402 = vld [vmem:[%s583 + $0xd2] sm:$0xff]
        %v1403 = vld [vmem:[%s583 + $0xda] sm:$0xff]
        %v1404 = vld [vmem:[%s583 + $0xe2] sm:$0xff]
        %v1405 = vld [vmem:[%s583 + $0xea] sm:$0xff]
        %v1406 = vld [vmem:[%s583 + $0xf2] sm:$0xff]
        %v1407 = vld [vmem:[%s583 + $0xfa] sm:$0xff]
        %v1408 = vld [vmem:[%s583 + $0x102] sm:$0xff]
        %v1409 = vld [vmem:[%s583 + $0x10a] sm:$0xff]
        %v1410 = vld [vmem:[%s583 + $0x112] sm:$0xff]
        %v1411 = vld [vmem:[%s583 + $0x11a] sm:$0xff]
        %s1412 = scalar_lea.vmem %s1, 8
        %v1413 = vld [vmem:[%s1412] sm:$0x7]
        %v1415 = vsel %vm662, %v1376, 0
        %v1418 = vsel %vm662, %v1377, 0
        %v1421 = vsel %vm662, %v1378, 0
        %v1424 = vsel %vm662, %v1379, 0
        %v1427 = vsel %vm662, %v1380, 0
        %v1430 = vsel %vm662, %v1381, 0
        %v1433 = vsel %vm662, %v1382, 0
        %v1436 = vsel %vm662, %v1383, 0
        %v1439 = vsel %vm662, %v1384, 0
        %v1442 = vsel %vm662, %v1385, 0
        %v1445 = vsel %vm662, %v1386, 0
        %v1448 = vsel %vm662, %v1387, 0
        %v1451 = vsel %vm662, %v1388, 0
        %v1454 = vsel %vm662, %v1389, 0
        %v1457 = vsel %vm662, %v1390, 0
        %v1460 = vsel %vm662, %v1391, 0
        %v1463 = vsel %vm662, %v1392, 0
        %v1466 = vsel %vm662, %v1393, 0
        %v1469 = vsel %vm662, %v1394, 0
        %v1472 = vsel %vm662, %v1395, 0
        %v1475 = vsel %vm662, %v1396, 0
        %v1478 = vsel %vm662, %v1397, 0
        %v1481 = vsel %vm662, %v1398, 0
        %v1484 = vsel %vm662, %v1399, 0
        %v1487 = vsel %vm662, %v1400, 0
        %v1490 = vsel %vm662, %v1401, 0
        %v1493 = vsel %vm662, %v1402, 0
        %v1496 = vsel %vm662, %v1403, 0
        %v1499 = vsel %vm662, %v1404, 0
        %v1502 = vsel %vm662, %v1405, 0
        %v1505 = vsel %vm662, %v1406, 0
        %v1508 = vsel %vm662, %v1407, 0
        %v1511 = vsel %vm662, %v1408, 0
        %v1514 = vsel %vm662, %v1409, 0
        %v1517 = vsel %vm662, %v1410, 0
        %v1520 = vsel %vm662, %v1411, 0
        %v1523 = vsel %vm771, %v1413, 0
        %1525 = vmatprep.subr.mxu0 0.0
        %1526 = vmatpush1.msra.mxu0 %v1523
        %1527 = vmatprep.subr.mxu0 0.0
        %1528 = vmatpush1.msra.mxu0 0.0
        %1529 = vmatprep.subr.mxu0 0.0
        %1530 = vmatpush1.msra.mxu0 0.0
        %1531 = vmatprep.subr.mxu0 0.0
        %1532 = vmatpush1.msra.mxu0 0.0
        %1533 = vmatprep.subr.mxu0 0.0
        %1534 = vmatpush1.msra.mxu0 0.0
        %1535 = vmatprep.subr.mxu0 0.0
        %1536 = vmatpush1.msra.mxu0 0.0
        %1537 = vmatprep.subr.mxu0 0.0
        %1538 = vmatpush1.msra.mxu0 0.0
        %1539 = vmatprep.subr.mxu0 0.0
        %1540 = vmatpush1.msra.mxu0 0.0
        %1541 = vmatprep.subr.mxu0 0.0
        %1542 = vmatpush1.msra.mxu0 0.0
        %1543 = vmatprep.subr.mxu0 0.0
        %1544 = vmatpush1.msra.mxu0 0.0
        %1545 = vmatprep.subr.mxu0 0.0
        %1546 = vmatpush1.msra.mxu0 0.0
        %1547 = vmatprep.subr.mxu0 0.0
        %1548 = vmatpush1.msra.mxu0 0.0
        %1549 = vmatprep.subr.mxu0 0.0
        %1550 = vmatpush1.msra.mxu0 0.0
        %1551 = vmatprep.subr.mxu0 0.0
        %1552 = vmatpush1.msra.mxu0 0.0
        %1553 = vmatprep.subr.mxu0 0.0
        %1554 = vmatpush1.msra.mxu0 0.0
        %1555 = vmatprep.subr.mxu0 0.0
        %1556 = vmatpush1.msra.mxu0 0.0
        %1557 = vmatprep.subr.mxu0 0.0
        %1558 = vmatpush1.msra.mxu0 0.0
        %1559 = vmatprep.subr.mxu0 0.0
        %1560 = vmatpush1.msra.mxu0 0.0
        %1561 = vmatprep.subr.mxu0 0.0
        %1562 = vmatpush1.msra.mxu0 0.0
        %1563 = vmatprep.subr.mxu0 0.0
        %1564 = vmatpush1.msra.mxu0 0.0
        %1565 = vmatprep.subr.mxu0 0.0
        %1566 = vmatpush1.msra.mxu0 0.0
        %1567 = vmatprep.subr.mxu0 0.0
        %1568 = vmatpush1.msra.mxu0 0.0
        %1569 = vmatprep.subr.mxu0 0.0
        %1570 = vmatpush1.msra.mxu0 0.0
        %1571 = vmatprep.subr.mxu0 0.0
        %1572 = vmatpush1.msra.mxu0 0.0
        %1573 = vmatprep.subr.mxu0 0.0
        %1574 = vmatpush1.msra.mxu0 0.0
        %1575 = vmatprep.subr.mxu0 0.0
        %1576 = vmatpush1.msra.mxu0 0.0
        %1577 = vmatprep.subr.mxu0 0.0
        %1578 = vmatpush1.msra.mxu0 0.0
        %1579 = vmatprep.subr.mxu0 0.0
        %1580 = vmatpush1.msra.mxu0 0.0
        %1581 = vmatprep.subr.mxu0 0.0
        %1582 = vmatpush1.msra.mxu0 0.0
        %1583 = vmatprep.subr.mxu0 0.0
        %1584 = vmatpush1.msra.mxu0 0.0
        %1585 = vmatprep.subr.mxu0 0.0
        %1586 = vmatpush1.msra.mxu0 0.0
        %1587 = vmatprep.subr.mxu0 0.0
        %1588 = vmatpush1.msra.mxu0 0.0
        %1589 = vmatprep.mubr.f32.mxu0 0.0
        %1590 = vmatmul.mubr.f32.gmra.mrb[0].mxu0 %v1415
        %v1591 = vpop.f32.mrb[0].mxu0
        %v1592 = vadd.f32 0.0, %v1591
        %v1593 = vpop.f32.mrb[0].mxu0
        %1594 = vmatprep.mubr.f32.mxu0 0.0
        %1595 = vmatmul.mubr.f32.gmra.mrb[0].mxu0 %v1418
        %v1596 = vpop.f32.mrb[0].mxu0
        %v1597 = vadd.f32 0.0, %v1596
        %v1598 = vpop.f32.mrb[0].mxu0
        %1599 = vmatprep.mubr.f32.mxu0 0.0
        %1600 = vmatmul.mubr.f32.gmra.mrb[0].mxu0 %v1421
        %v1601 = vpop.f32.mrb[0].mxu0
        %v1602 = vadd.f32 0.0, %v1601
        %v1603 = vpop.f32.mrb[0].mxu0
        %1604 = vmatprep.mubr.f32.mxu0 0.0
        %1605 = vmatmul.mubr.f32.gmra.mrb[0].mxu0 %v1424
        %v1606 = vpop.f32.mrb[0].mxu0
        %v1607 = vadd.f32 0.0, %v1606
        %v1608 = vpop.f32.mrb[0].mxu0
        %1609 = vmatprep.mubr.f32.mxu0 0.0
        %1610 = vmatmul.mubr.f32.gmra.mrb[0].mxu0 %v1427
        %v1611 = vpop.f32.mrb[0].mxu0
        %v1612 = vadd.f32 0.0, %v1611
        %v1613 = vpop.f32.mrb[0].mxu0
        %1614 = vmatprep.mubr.f32.mxu0 0.0
        %1615 = vmatmul.mubr.f32.gmra.mrb[0].mxu0 %v1430
        %v1616 = vpop.f32.mrb[0].mxu0
        %v1617 = vadd.f32 0.0, %v1616
        %v1618 = vpop.f32.mrb[0].mxu0
        %1619 = vmatprep.mubr.f32.mxu0 0.0
        %1620 = vmatmul.mubr.f32.gmra.mrb[0].mxu0 %v1433
        %v1621 = vpop.f32.mrb[0].mxu0
        %v1622 = vadd.f32 0.0, %v1621
        %v1623 = vpop.f32.mrb[0].mxu0
        %1624 = vmatprep.mubr.f32.mxu0 0.0
        %1625 = vmatmul.mubr.f32.gmra.mrb[0].mxu0 %v1436
        %v1626 = vpop.f32.mrb[0].mxu0
        %v1627 = vadd.f32 0.0, %v1626
        %v1628 = vpop.f32.mrb[0].mxu0
        %1629 = vmatprep.mubr.f32.mxu0 0.0
        %1630 = vmatmul.mubr.f32.gmra.mrb[0].mxu0 %v1439
        %v1631 = vpop.f32.mrb[0].mxu0
        %v1632 = vadd.f32 0.0, %v1631
        %v1633 = vpop.f32.mrb[0].mxu0
        %1634 = vmatprep.mubr.f32.mxu0 0.0
        %1635 = vmatmul.mubr.f32.gmra.mrb[0].mxu0 %v1442
        %v1636 = vpop.f32.mrb[0].mxu0
        %v1637 = vadd.f32 0.0, %v1636
        %v1638 = vpop.f32.mrb[0].mxu0
        %1639 = vmatprep.mubr.f32.mxu0 0.0
        %1640 = vmatmul.mubr.f32.gmra.mrb[0].mxu0 %v1445
        %v1641 = vpop.f32.mrb[0].mxu0
        %v1642 = vadd.f32 0.0, %v1641
        %v1643 = vpop.f32.mrb[0].mxu0
        %1644 = vmatprep.mubr.f32.mxu0 0.0
        %1645 = vmatmul.mubr.f32.gmra.mrb[0].mxu0 %v1448
        %v1646 = vpop.f32.mrb[0].mxu0
        %v1647 = vadd.f32 0.0, %v1646
        %v1648 = vpop.f32.mrb[0].mxu0
        %1649 = vmatprep.mubr.f32.mxu0 0.0
        %1650 = vmatmul.mubr.f32.gmra.mrb[0].mxu0 %v1451
        %v1651 = vpop.f32.mrb[0].mxu0
        %v1652 = vadd.f32 0.0, %v1651
        %v1653 = vpop.f32.mrb[0].mxu0
        %1654 = vmatprep.mubr.f32.mxu0 0.0
        %1655 = vmatmul.mubr.f32.gmra.mrb[0].mxu0 %v1454
        %v1656 = vpop.f32.mrb[0].mxu0
        %v1657 = vadd.f32 0.0, %v1656
        %v1658 = vpop.f32.mrb[0].mxu0
        %1659 = vmatprep.mubr.f32.mxu0 0.0
        %1660 = vmatmul.mubr.f32.gmra.mrb[0].mxu0 %v1457
        %v1661 = vpop.f32.mrb[0].mxu0
        %v1662 = vadd.f32 0.0, %v1661
        %v1663 = vpop.f32.mrb[0].mxu0
        %1664 = vmatprep.mubr.f32.mxu0 0.0
        %1665 = vmatmul.mubr.f32.gmra.mrb[0].mxu0 %v1460
        %v1666 = vpop.f32.mrb[0].mxu0
        %v1667 = vadd.f32 0.0, %v1666
        %v1668 = vpop.f32.mrb[0].mxu0
        %1669 = vmatprep.mubr.f32.mxu0 0.0
        %1670 = vmatmul.mubr.f32.gmra.mrb[0].mxu0 %v1463
        %v1671 = vpop.f32.mrb[0].mxu0
        %v1672 = vadd.f32 0.0, %v1671
        %v1673 = vpop.f32.mrb[0].mxu0
        %1674 = vmatprep.mubr.f32.mxu0 0.0
        %1675 = vmatmul.mubr.f32.gmra.mrb[0].mxu0 %v1466
        %v1676 = vpop.f32.mrb[0].mxu0
        %v1677 = vadd.f32 0.0, %v1676
        %v1678 = vpop.f32.mrb[0].mxu0
        %1679 = vmatprep.mubr.f32.mxu0 0.0
        %1680 = vmatmul.mubr.f32.gmra.mrb[0].mxu0 %v1469
        %v1681 = vpop.f32.mrb[0].mxu0
        %v1682 = vadd.f32 0.0, %v1681
        %v1683 = vpop.f32.mrb[0].mxu0
        %1684 = vmatprep.mubr.f32.mxu0 0.0
        %1685 = vmatmul.mubr.f32.gmra.mrb[0].mxu0 %v1472
        %v1686 = vpop.f32.mrb[0].mxu0
        %v1687 = vadd.f32 0.0, %v1686
        %v1688 = vpop.f32.mrb[0].mxu0
        %1689 = vmatprep.mubr.f32.mxu0 0.0
        %1690 = vmatmul.mubr.f32.gmra.mrb[0].mxu0 %v1475
        %v1691 = vpop.f32.mrb[0].mxu0
        %v1692 = vadd.f32 0.0, %v1691
        %v1693 = vpop.f32.mrb[0].mxu0
        %1694 = vmatprep.mubr.f32.mxu0 0.0
        %1695 = vmatmul.mubr.f32.gmra.mrb[0].mxu0 %v1478
        %v1696 = vpop.f32.mrb[0].mxu0
        %v1697 = vadd.f32 0.0, %v1696
        %v1698 = vpop.f32.mrb[0].mxu0
        %1699 = vmatprep.mubr.f32.mxu0 0.0
        %1700 = vmatmul.mubr.f32.gmra.mrb[0].mxu0 %v1481
        %v1701 = vpop.f32.mrb[0].mxu0
        %v1702 = vadd.f32 0.0, %v1701
        %v1703 = vpop.f32.mrb[0].mxu0
        %1704 = vmatprep.mubr.f32.mxu0 0.0
        %1705 = vmatmul.mubr.f32.gmra.mrb[0].mxu0 %v1484
        %v1706 = vpop.f32.mrb[0].mxu0
        %v1707 = vadd.f32 0.0, %v1706
        %v1708 = vpop.f32.mrb[0].mxu0
        %1709 = vmatprep.mubr.f32.mxu0 0.0
        %1710 = vmatmul.mubr.f32.gmra.mrb[0].mxu0 %v1487
        %v1711 = vpop.f32.mrb[0].mxu0
        %v1712 = vadd.f32 0.0, %v1711
        %v1713 = vpop.f32.mrb[0].mxu0
        %1714 = vmatprep.mubr.f32.mxu0 0.0
        %1715 = vmatmul.mubr.f32.gmra.mrb[0].mxu0 %v1490
        %v1716 = vpop.f32.mrb[0].mxu0
        %v1717 = vadd.f32 0.0, %v1716
        %v1718 = vpop.f32.mrb[0].mxu0
        %1719 = vmatprep.mubr.f32.mxu0 0.0
        %1720 = vmatmul.mubr.f32.gmra.mrb[0].mxu0 %v1493
        %v1721 = vpop.f32.mrb[0].mxu0
        %v1722 = vadd.f32 0.0, %v1721
        %v1723 = vpop.f32.mrb[0].mxu0
        %1724 = vmatprep.mubr.f32.mxu0 0.0
        %1725 = vmatmul.mubr.f32.gmra.mrb[0].mxu0 %v1496
        %v1726 = vpop.f32.mrb[0].mxu0
        %v1727 = vadd.f32 0.0, %v1726
        %v1728 = vpop.f32.mrb[0].mxu0
        %1729 = vmatprep.mubr.f32.mxu0 0.0
        %1730 = vmatmul.mubr.f32.gmra.mrb[0].mxu0 %v1499
        %v1731 = vpop.f32.mrb[0].mxu0
        %v1732 = vadd.f32 0.0, %v1731
        %v1733 = vpop.f32.mrb[0].mxu0
        %1734 = vmatprep.mubr.f32.mxu0 0.0
        %1735 = vmatmul.mubr.f32.gmra.mrb[0].mxu0 %v1502
        %v1736 = vpop.f32.mrb[0].mxu0
        %v1737 = vadd.f32 0.0, %v1736
        %v1738 = vpop.f32.mrb[0].mxu0
        %1739 = vmatprep.mubr.f32.mxu0 0.0
        %1740 = vmatmul.mubr.f32.gmra.mrb[0].mxu0 %v1505
        %v1741 = vpop.f32.mrb[0].mxu0
        %v1742 = vadd.f32 0.0, %v1741
        %v1743 = vpop.f32.mrb[0].mxu0
        %1744 = vmatprep.mubr.f32.mxu0 0.0
        %1745 = vmatmul.mubr.f32.gmra.mrb[0].mxu0 %v1508
        %v1746 = vpop.f32.mrb[0].mxu0
        %v1747 = vadd.f32 0.0, %v1746
        %v1748 = vpop.f32.mrb[0].mxu0
        %1749 = vmatprep.mubr.f32.mxu0 0.0
        %1750 = vmatmul.mubr.f32.gmra.mrb[0].mxu0 %v1511
        %v1751 = vpop.f32.mrb[0].mxu0
        %v1752 = vadd.f32 0.0, %v1751
        %v1753 = vpop.f32.mrb[0].mxu0
        %1754 = vmatprep.mubr.f32.mxu0 0.0
        %1755 = vmatmul.mubr.f32.gmra.mrb[0].mxu0 %v1514
        %v1756 = vpop.f32.mrb[0].mxu0
        %v1757 = vadd.f32 0.0, %v1756
        %v1758 = vpop.f32.mrb[0].mxu0
        %1759 = vmatprep.mubr.f32.mxu0 0.0
        %1760 = vmatmul.mubr.f32.gmra.mrb[0].mxu0 %v1517
        %v1761 = vpop.f32.mrb[0].mxu0
        %v1762 = vadd.f32 0.0, %v1761
        %v1763 = vpop.f32.mrb[0].mxu0
        %1764 = vmatprep.mubr.f32.mxu0 0.0
        %1765 = vmatmul.mubr.f32.gmra.mrb[0].mxu0 %v1520
        %v1766 = vpop.f32.mrb[0].mxu0
        %v1767 = vadd.f32 0.0, %v1766
        %v1768 = vpop.f32.mrb[0].mxu0
        %1769 = vdwg.mxu0
        %v1770 = vadd.f32 %v1198, %v1592
        %v1771 = vadd.f32 %v1203, %v1597
        %v1772 = vadd.f32 %v1208, %v1602
        %v1773 = vadd.f32 %v1213, %v1607
        %v1774 = vadd.f32 %v1218, %v1612
        %v1775 = vadd.f32 %v1223, %v1617
        %v1776 = vadd.f32 %v1228, %v1622
        %v1777 = vadd.f32 %v1233, %v1627
        %v1778 = vadd.f32 %v1238, %v1632
        %v1779 = vadd.f32 %v1243, %v1637
        %v1780 = vadd.f32 %v1248, %v1642
        %v1781 = vadd.f32 %v1253, %v1647
        %v1782 = vadd.f32 %v1258, %v1652
        %v1783 = vadd.f32 %v1263, %v1657
        %v1784 = vadd.f32 %v1268, %v1662
        %v1785 = vadd.f32 %v1273, %v1667
        %v1786 = vadd.f32 %v1278, %v1672
        %v1787 = vadd.f32 %v1283, %v1677
        %v1788 = vadd.f32 %v1288, %v1682
        %v1789 = vadd.f32 %v1293, %v1687
        %v1790 = vadd.f32 %v1298, %v1692
        %v1791 = vadd.f32 %v1303, %v1697
        %v1792 = vadd.f32 %v1308, %v1702
        %v1793 = vadd.f32 %v1313, %v1707
        %v1794 = vadd.f32 %v1318, %v1712
        %v1795 = vadd.f32 %v1323, %v1717
        %v1796 = vadd.f32 %v1328, %v1722
        %v1797 = vadd.f32 %v1333, %v1727
        %v1798 = vadd.f32 %v1338, %v1732
        %v1799 = vadd.f32 %v1343, %v1737
        %v1800 = vadd.f32 %v1348, %v1742
        %v1801 = vadd.f32 %v1353, %v1747
        %v1802 = vadd.f32 %v1358, %v1752
        %v1803 = vadd.f32 %v1363, %v1757
        %v1804 = vadd.f32 %v1368, %v1762
        %v1805 = vadd.f32 %v1373, %v1767
        %v1806 = vld [vmem:[%s583 + $0x12] sm:$0xff]
        %v1807 = vld [vmem:[%s583 + $0x1a] sm:$0xff]
        %v1808 = vld [vmem:[%s583 + $0x22] sm:$0xff]
        %v1809 = vld [vmem:[%s583 + $0x2a] sm:$0xff]
        %v1810 = vld [vmem:[%s583 + $0x32] sm:$0xff]
        %v1811 = vld [vmem:[%s583 + $0x3a] sm:$0xff]
        %v1812 = vld [vmem:[%s583 + $0x42] sm:$0xff]
        %v1813 = vld [vmem:[%s583 + $0x4a] sm:$0xff]
        %v1814 = vld [vmem:[%s583 + $0x52] sm:$0xff]
        %v1815 = vld [vmem:[%s583 + $0x5a] sm:$0xff]
        %v1816 = vld [vmem:[%s583 + $0x62] sm:$0xff]
        %v1817 = vld [vmem:[%s583 + $0x6a] sm:$0xff]
        %v1818 = vld [vmem:[%s583 + $0x72] sm:$0xff]
        %v1819 = vld [vmem:[%s583 + $0x7a] sm:$0xff]
        %v1820 = vld [vmem:[%s583 + $0x82] sm:$0xff]
        %v1821 = vld [vmem:[%s583 + $0x8a] sm:$0xff]
        %v1822 = vld [vmem:[%s583 + $0x92] sm:$0xff]
        %v1823 = vld [vmem:[%s583 + $0x9a] sm:$0xff]
        %v1824 = vld [vmem:[%s583 + $0xa2] sm:$0xff]
        %v1825 = vld [vmem:[%s583 + $0xaa] sm:$0xff]
        %v1826 = vld [vmem:[%s583 + $0xb2] sm:$0xff]
        %v1827 = vld [vmem:[%s583 + $0xba] sm:$0xff]
        %v1828 = vld [vmem:[%s583 + $0xc2] sm:$0xff]
        %v1829 = vld [vmem:[%s583 + $0xca] sm:$0xff]
        %v1830 = vld [vmem:[%s583 + $0xd2] sm:$0xff]
        %v1831 = vld [vmem:[%s583 + $0xda] sm:$0xff]
        %v1832 = vld [vmem:[%s583 + $0xe2] sm:$0xff]
        %v1833 = vld [vmem:[%s583 + $0xea] sm:$0xff]
        %v1834 = vld [vmem:[%s583 + $0xf2] sm:$0xff]
        %v1835 = vld [vmem:[%s583 + $0xfa] sm:$0xff]
        %v1836 = vld [vmem:[%s583 + $0x102] sm:$0xff]
        %v1837 = vld [vmem:[%s583 + $0x10a] sm:$0xff]
        %v1838 = vld [vmem:[%s583 + $0x112] sm:$0xff]
        %v1839 = vld [vmem:[%s583 + $0x11a] sm:$0xff]
        %v1840 = vld [vmem:[%s583 + $0x122] sm:$0xff]
        %v1841 = vld [vmem:[%s583 + $0x12a] sm:$0xff]
        %s1842 = scalar_lea.vmem %s1, 12
        %v1843 = vld [vmem:[%s1842] sm:$0x7]
        %v1845 = vsel %vm662, %v1806, 0
        %v1848 = vsel %vm662, %v1807, 0
        %v1851 = vsel %vm662, %v1808, 0
        %v1854 = vsel %vm662, %v1809, 0
        %v1857 = vsel %vm662, %v1810, 0
        %v1860 = vsel %vm662, %v1811, 0
        %v1863 = vsel %vm662, %v1812, 0
        %v1866 = vsel %vm662, %v1813, 0
        %v1869 = vsel %vm662, %v1814, 0
        %v1872 = vsel %vm662, %v1815, 0
        %v1875 = vsel %vm662, %v1816, 0
        %v1878 = vsel %vm662, %v1817, 0
        %v1881 = vsel %vm662, %v1818, 0
        %v1884 = vsel %vm662, %v1819, 0
        %v1887 = vsel %vm662, %v1820, 0
        %v1890 = vsel %vm662, %v1821, 0
        %v1893 = vsel %vm662, %v1822, 0
        %v1896 = vsel %vm662, %v1823, 0
        %v1899 = vsel %vm662, %v1824, 0
        %v1902 = vsel %vm662, %v1825, 0
        %v1905 = vsel %vm662, %v1826, 0
        %v1908 = vsel %vm662, %v1827, 0
        %v1911 = vsel %vm662, %v1828, 0
        %v1914 = vsel %vm662, %v1829, 0
        %v1917 = vsel %vm662, %v1830, 0
        %v1920 = vsel %vm662, %v1831, 0
        %v1923 = vsel %vm662, %v1832, 0
        %v1926 = vsel %vm662, %v1833, 0
        %v1929 = vsel %vm662, %v1834, 0
        %v1932 = vsel %vm662, %v1835, 0
        %v1935 = vsel %vm662, %v1836, 0
        %v1938 = vsel %vm662, %v1837, 0
        %v1941 = vsel %vm662, %v1838, 0
        %v1944 = vsel %vm662, %v1839, 0
        %v1947 = vsel %vm662, %v1840, 0
        %v1950 = vsel %vm662, %v1841, 0
        %v1953 = vsel %vm771, %v1843, 0
        %1955 = vmatprep.subr.mxu0 0.0
        %1956 = vmatpush1.msra.mxu0 %v1953
        %1957 = vmatprep.subr.mxu0 0.0
        %1958 = vmatpush1.msra.mxu0 0.0
        %1959 = vmatprep.subr.mxu0 0.0
        %1960 = vmatpush1.msra.mxu0 0.0
        %1961 = vmatprep.subr.mxu0 0.0
        %1962 = vmatpush1.msra.mxu0 0.0
        %1963 = vmatprep.subr.mxu0 0.0
        %1964 = vmatpush1.msra.mxu0 0.0
        %1965 = vmatprep.subr.mxu0 0.0
        %1966 = vmatpush1.msra.mxu0 0.0
        %1967 = vmatprep.subr.mxu0 0.0
        %1968 = vmatpush1.msra.mxu0 0.0
        %1969 = vmatprep.subr.mxu0 0.0
        %1970 = vmatpush1.msra.mxu0 0.0
        %1971 = vmatprep.subr.mxu0 0.0
        %1972 = vmatpush1.msra.mxu0 0.0
        %1973 = vmatprep.subr.mxu0 0.0
        %1974 = vmatpush1.msra.mxu0 0.0
        %1975 = vmatprep.subr.mxu0 0.0
        %1976 = vmatpush1.msra.mxu0 0.0
        %1977 = vmatprep.subr.mxu0 0.0
        %1978 = vmatpush1.msra.mxu0 0.0
        %1979 = vmatprep.subr.mxu0 0.0
        %1980 = vmatpush1.msra.mxu0 0.0
        %1981 = vmatprep.subr.mxu0 0.0
        %1982 = vmatpush1.msra.mxu0 0.0
        %1983 = vmatprep.subr.mxu0 0.0
        %1984 = vmatpush1.msra.mxu0 0.0
        %1985 = vmatprep.subr.mxu0 0.0
        %1986 = vmatpush1.msra.mxu0 0.0
        %1987 = vmatprep.subr.mxu0 0.0
        %1988 = vmatpush1.msra.mxu0 0.0
        %1989 = vmatprep.subr.mxu0 0.0
        %1990 = vmatpush1.msra.mxu0 0.0
        %1991 = vmatprep.subr.mxu0 0.0
        %1992 = vmatpush1.msra.mxu0 0.0
        %1993 = vmatprep.subr.mxu0 0.0
        %1994 = vmatpush1.msra.mxu0 0.0
        %1995 = vmatprep.subr.mxu0 0.0
        %1996 = vmatpush1.msra.mxu0 0.0
        %1997 = vmatprep.subr.mxu0 0.0
        %1998 = vmatpush1.msra.mxu0 0.0
        %1999 = vmatprep.subr.mxu0 0.0
        %2000 = vmatpush1.msra.mxu0 0.0
        %2001 = vmatprep.subr.mxu0 0.0
        %2002 = vmatpush1.msra.mxu0 0.0
        %2003 = vmatprep.subr.mxu0 0.0
        %2004 = vmatpush1.msra.mxu0 0.0
        %2005 = vmatprep.subr.mxu0 0.0
        %2006 = vmatpush1.msra.mxu0 0.0
        %2007 = vmatprep.subr.mxu0 0.0
        %2008 = vmatpush1.msra.mxu0 0.0
        %2009 = vmatprep.subr.mxu0 0.0
        %2010 = vmatpush1.msra.mxu0 0.0
        %2011 = vmatprep.subr.mxu0 0.0
        %2012 = vmatpush1.msra.mxu0 0.0
        %2013 = vmatprep.subr.mxu0 0.0
        %2014 = vmatpush1.msra.mxu0 0.0
        %2015 = vmatprep.subr.mxu0 0.0
        %2016 = vmatpush1.msra.mxu0 0.0
        %2017 = vmatprep.subr.mxu0 0.0
        %2018 = vmatpush1.msra.mxu0 0.0
        %2019 = vmatprep.mubr.f32.mxu0 0.0
        %2020 = vmatmul.mubr.f32.gmra.mrb[0].mxu0 %v1845
        %v2021 = vpop.f32.mrb[0].mxu0
        %v2022 = vadd.f32 0.0, %v2021
        %v2023 = vpop.f32.mrb[0].mxu0
        %2024 = vmatprep.mubr.f32.mxu0 0.0
        %2025 = vmatmul.mubr.f32.gmra.mrb[0].mxu0 %v1848
        %v2026 = vpop.f32.mrb[0].mxu0
        %v2027 = vadd.f32 0.0, %v2026
        %v2028 = vpop.f32.mrb[0].mxu0
        %2029 = vmatprep.mubr.f32.mxu0 0.0
        %2030 = vmatmul.mubr.f32.gmra.mrb[0].mxu0 %v1851
        %v2031 = vpop.f32.mrb[0].mxu0
        %v2032 = vadd.f32 0.0, %v2031
        %v2033 = vpop.f32.mrb[0].mxu0
        %2034 = vmatprep.mubr.f32.mxu0 0.0
        %2035 = vmatmul.mubr.f32.gmra.mrb[0].mxu0 %v1854
        %v2036 = vpop.f32.mrb[0].mxu0
        %v2037 = vadd.f32 0.0, %v2036
        %v2038 = vpop.f32.mrb[0].mxu0
        %2039 = vmatprep.mubr.f32.mxu0 0.0
        %2040 = vmatmul.mubr.f32.gmra.mrb[0].mxu0 %v1857
        %v2041 = vpop.f32.mrb[0].mxu0
        %v2042 = vadd.f32 0.0, %v2041
        %v2043 = vpop.f32.mrb[0].mxu0
        %2044 = vmatprep.mubr.f32.mxu0 0.0
        %2045 = vmatmul.mubr.f32.gmra.mrb[0].mxu0 %v1860
        %v2046 = vpop.f32.mrb[0].mxu0
        %v2047 = vadd.f32 0.0, %v2046
        %v2048 = vpop.f32.mrb[0].mxu0
        %2049 = vmatprep.mubr.f32.mxu0 0.0
        %2050 = vmatmul.mubr.f32.gmra.mrb[0].mxu0 %v1863
        %v2051 = vpop.f32.mrb[0].mxu0
        %v2052 = vadd.f32 0.0, %v2051
        %v2053 = vpop.f32.mrb[0].mxu0
        %2054 = vmatprep.mubr.f32.mxu0 0.0
        %2055 = vmatmul.mubr.f32.gmra.mrb[0].mxu0 %v1866
        %v2056 = vpop.f32.mrb[0].mxu0
        %v2057 = vadd.f32 0.0, %v2056
        %v2058 = vpop.f32.mrb[0].mxu0
        %2059 = vmatprep.mubr.f32.mxu0 0.0
        %2060 = vmatmul.mubr.f32.gmra.mrb[0].mxu0 %v1869
        %v2061 = vpop.f32.mrb[0].mxu0
        %v2062 = vadd.f32 0.0, %v2061
        %v2063 = vpop.f32.mrb[0].mxu0
        %2064 = vmatprep.mubr.f32.mxu0 0.0
        %2065 = vmatmul.mubr.f32.gmra.mrb[0].mxu0 %v1872
        %v2066 = vpop.f32.mrb[0].mxu0
        %v2067 = vadd.f32 0.0, %v2066
        %v2068 = vpop.f32.mrb[0].mxu0
        %2069 = vmatprep.mubr.f32.mxu0 0.0
        %2070 = vmatmul.mubr.f32.gmra.mrb[0].mxu0 %v1875
        %v2071 = vpop.f32.mrb[0].mxu0
        %v2072 = vadd.f32 0.0, %v2071
        %v2073 = vpop.f32.mrb[0].mxu0
        %2074 = vmatprep.mubr.f32.mxu0 0.0
        %2075 = vmatmul.mubr.f32.gmra.mrb[0].mxu0 %v1878
        %v2076 = vpop.f32.mrb[0].mxu0
        %v2077 = vadd.f32 0.0, %v2076
        %v2078 = vpop.f32.mrb[0].mxu0
        %2079 = vmatprep.mubr.f32.mxu0 0.0
        %2080 = vmatmul.mubr.f32.gmra.mrb[0].mxu0 %v1881
        %v2081 = vpop.f32.mrb[0].mxu0
        %v2082 = vadd.f32 0.0, %v2081
        %v2083 = vpop.f32.mrb[0].mxu0
        %2084 = vmatprep.mubr.f32.mxu0 0.0
        %2085 = vmatmul.mubr.f32.gmra.mrb[0].mxu0 %v1884
        %v2086 = vpop.f32.mrb[0].mxu0
        %v2087 = vadd.f32 0.0, %v2086
        %v2088 = vpop.f32.mrb[0].mxu0
        %2089 = vmatprep.mubr.f32.mxu0 0.0
        %2090 = vmatmul.mubr.f32.gmra.mrb[0].mxu0 %v1887
        %v2091 = vpop.f32.mrb[0].mxu0
        %v2092 = vadd.f32 0.0, %v2091
        %v2093 = vpop.f32.mrb[0].mxu0
        %2094 = vmatprep.mubr.f32.mxu0 0.0
        %2095 = vmatmul.mubr.f32.gmra.mrb[0].mxu0 %v1890
        %v2096 = vpop.f32.mrb[0].mxu0
        %v2097 = vadd.f32 0.0, %v2096
        %v2098 = vpop.f32.mrb[0].mxu0
        %2099 = vmatprep.mubr.f32.mxu0 0.0
        %2100 = vmatmul.mubr.f32.gmra.mrb[0].mxu0 %v1893
        %v2101 = vpop.f32.mrb[0].mxu0
        %v2102 = vadd.f32 0.0, %v2101
        %v2103 = vpop.f32.mrb[0].mxu0
        %2104 = vmatprep.mubr.f32.mxu0 0.0
        %2105 = vmatmul.mubr.f32.gmra.mrb[0].mxu0 %v1896
        %v2106 = vpop.f32.mrb[0].mxu0
        %v2107 = vadd.f32 0.0, %v2106
        %v2108 = vpop.f32.mrb[0].mxu0
        %2109 = vmatprep.mubr.f32.mxu0 0.0
        %2110 = vmatmul.mubr.f32.gmra.mrb[0].mxu0 %v1899
        %v2111 = vpop.f32.mrb[0].mxu0
        %v2112 = vadd.f32 0.0, %v2111
        %v2113 = vpop.f32.mrb[0].mxu0
        %2114 = vmatprep.mubr.f32.mxu0 0.0
        %2115 = vmatmul.mubr.f32.gmra.mrb[0].mxu0 %v1902
        %v2116 = vpop.f32.mrb[0].mxu0
        %v2117 = vadd.f32 0.0, %v2116
        %v2118 = vpop.f32.mrb[0].mxu0
        %2119 = vmatprep.mubr.f32.mxu0 0.0
        %2120 = vmatmul.mubr.f32.gmra.mrb[0].mxu0 %v1905
        %v2121 = vpop.f32.mrb[0].mxu0
        %v2122 = vadd.f32 0.0, %v2121
        %v2123 = vpop.f32.mrb[0].mxu0
        %2124 = vmatprep.mubr.f32.mxu0 0.0
        %2125 = vmatmul.mubr.f32.gmra.mrb[0].mxu0 %v1908
        %v2126 = vpop.f32.mrb[0].mxu0
        %v2127 = vadd.f32 0.0, %v2126
        %v2128 = vpop.f32.mrb[0].mxu0
        %2129 = vmatprep.mubr.f32.mxu0 0.0
        %2130 = vmatmul.mubr.f32.gmra.mrb[0].mxu0 %v1911
        %v2131 = vpop.f32.mrb[0].mxu0
        %v2132 = vadd.f32 0.0, %v2131
        %v2133 = vpop.f32.mrb[0].mxu0
        %2134 = vmatprep.mubr.f32.mxu0 0.0
        %2135 = vmatmul.mubr.f32.gmra.mrb[0].mxu0 %v1914
        %v2136 = vpop.f32.mrb[0].mxu0
        %v2137 = vadd.f32 0.0, %v2136
        %v2138 = vpop.f32.mrb[0].mxu0
        %2139 = vmatprep.mubr.f32.mxu0 0.0
        %2140 = vmatmul.mubr.f32.gmra.mrb[0].mxu0 %v1917
        %v2141 = vpop.f32.mrb[0].mxu0
        %v2142 = vadd.f32 0.0, %v2141
        %v2143 = vpop.f32.mrb[0].mxu0
        %2144 = vmatprep.mubr.f32.mxu0 0.0
        %2145 = vmatmul.mubr.f32.gmra.mrb[0].mxu0 %v1920
        %v2146 = vpop.f32.mrb[0].mxu0
        %v2147 = vadd.f32 0.0, %v2146
        %v2148 = vpop.f32.mrb[0].mxu0
        %2149 = vmatprep.mubr.f32.mxu0 0.0
        %2150 = vmatmul.mubr.f32.gmra.mrb[0].mxu0 %v1923
        %v2151 = vpop.f32.mrb[0].mxu0
        %v2152 = vadd.f32 0.0, %v2151
        %v2153 = vpop.f32.mrb[0].mxu0
        %2154 = vmatprep.mubr.f32.mxu0 0.0
        %2155 = vmatmul.mubr.f32.gmra.mrb[0].mxu0 %v1926
        %v2156 = vpop.f32.mrb[0].mxu0
        %v2157 = vadd.f32 0.0, %v2156
        %v2158 = vpop.f32.mrb[0].mxu0
        %2159 = vmatprep.mubr.f32.mxu0 0.0
        %2160 = vmatmul.mubr.f32.gmra.mrb[0].mxu0 %v1929
        %v2161 = vpop.f32.mrb[0].mxu0
        %v2162 = vadd.f32 0.0, %v2161
        %v2163 = vpop.f32.mrb[0].mxu0
        %2164 = vmatprep.mubr.f32.mxu0 0.0
        %2165 = vmatmul.mubr.f32.gmra.mrb[0].mxu0 %v1932
        %v2166 = vpop.f32.mrb[0].mxu0
        %v2167 = vadd.f32 0.0, %v2166
        %v2168 = vpop.f32.mrb[0].mxu0
        %2169 = vmatprep.mubr.f32.mxu0 0.0
        %2170 = vmatmul.mubr.f32.gmra.mrb[0].mxu0 %v1935
        %v2171 = vpop.f32.mrb[0].mxu0
        %v2172 = vadd.f32 0.0, %v2171
        %v2173 = vpop.f32.mrb[0].mxu0
        %2174 = vmatprep.mubr.f32.mxu0 0.0
        %2175 = vmatmul.mubr.f32.gmra.mrb[0].mxu0 %v1938
        %v2176 = vpop.f32.mrb[0].mxu0
        %v2177 = vadd.f32 0.0, %v2176
        %v2178 = vpop.f32.mrb[0].mxu0
        %2179 = vmatprep.mubr.f32.mxu0 0.0
        %2180 = vmatmul.mubr.f32.gmra.mrb[0].mxu0 %v1941
        %v2181 = vpop.f32.mrb[0].mxu0
        %v2182 = vadd.f32 0.0, %v2181
        %v2183 = vpop.f32.mrb[0].mxu0
        %2184 = vmatprep.mubr.f32.mxu0 0.0
        %2185 = vmatmul.mubr.f32.gmra.mrb[0].mxu0 %v1944
        %v2186 = vpop.f32.mrb[0].mxu0
        %v2187 = vadd.f32 0.0, %v2186
        %v2188 = vpop.f32.mrb[0].mxu0
        %2189 = vmatprep.mubr.f32.mxu0 0.0
        %2190 = vmatmul.mubr.f32.gmra.mrb[0].mxu0 %v1947
        %v2191 = vpop.f32.mrb[0].mxu0
        %v2192 = vadd.f32 0.0, %v2191
        %v2193 = vpop.f32.mrb[0].mxu0
        %2194 = vmatprep.mubr.f32.mxu0 0.0
        %2195 = vmatmul.mubr.f32.gmra.mrb[0].mxu0 %v1950
        %v2196 = vpop.f32.mrb[0].mxu0
        %v2197 = vadd.f32 0.0, %v2196
        %v2198 = vpop.f32.mrb[0].mxu0
        %2199 = vdwg.mxu0
        %v2200 = vadd.f32 %v1770, %v2022
        %v2201 = vadd.f32 %v1771, %v2027
        %v2202 = vadd.f32 %v1772, %v2032
        %v2203 = vadd.f32 %v1773, %v2037
        %v2204 = vadd.f32 %v1774, %v2042
        %v2205 = vadd.f32 %v1775, %v2047
        %v2206 = vadd.f32 %v1776, %v2052
        %v2207 = vadd.f32 %v1777, %v2057
        %v2208 = vadd.f32 %v1778, %v2062
        %v2209 = vadd.f32 %v1779, %v2067
        %v2210 = vadd.f32 %v1780, %v2072
        %v2211 = vadd.f32 %v1781, %v2077
        %v2212 = vadd.f32 %v1782, %v2082
        %v2213 = vadd.f32 %v1783, %v2087
        %v2214 = vadd.f32 %v1784, %v2092
        %v2215 = vadd.f32 %v1785, %v2097
        %v2216 = vadd.f32 %v1786, %v2102
        %v2217 = vadd.f32 %v1787, %v2107
        %v2218 = vadd.f32 %v1788, %v2112
        %v2219 = vadd.f32 %v1789, %v2117
        %v2220 = vadd.f32 %v1790, %v2122
        %v2221 = vadd.f32 %v1791, %v2127
        %v2222 = vadd.f32 %v1792, %v2132
        %v2223 = vadd.f32 %v1793, %v2137
        %v2224 = vadd.f32 %v1794, %v2142
        %v2225 = vadd.f32 %v1795, %v2147
        %v2226 = vadd.f32 %v1796, %v2152
        %v2227 = vadd.f32 %v1797, %v2157
        %v2228 = vadd.f32 %v1798, %v2162
        %v2229 = vadd.f32 %v1799, %v2167
        %v2230 = vadd.f32 %v1800, %v2172
        %v2231 = vadd.f32 %v1801, %v2177
        %v2232 = vadd.f32 %v1802, %v2182
        %v2233 = vadd.f32 %v1803, %v2187
        %v2234 = vadd.f32 %v1804, %v2192
        %v2235 = vadd.f32 %v1805, %v2197
        %v2236 = vld [vmem:[%s583 + $0x13] sm:$0xff]
        %v2237 = vld [vmem:[%s583 + $0x1b] sm:$0xff]
        %v2238 = vld [vmem:[%s583 + $0x23] sm:$0xff]
        %v2239 = vld [vmem:[%s583 + $0x2b] sm:$0xff]
        %v2240 = vld [vmem:[%s583 + $0x33] sm:$0xff]
        %v2241 = vld [vmem:[%s583 + $0x3b] sm:$0xff]
        %v2242 = vld [vmem:[%s583 + $0x43] sm:$0xff]
        %v2243 = vld [vmem:[%s583 + $0x4b] sm:$0xff]
        %v2244 = vld [vmem:[%s583 + $0x53] sm:$0xff]
        %v2245 = vld [vmem:[%s583 + $0x5b] sm:$0xff]
        %v2246 = vld [vmem:[%s583 + $0x63] sm:$0xff]
        %v2247 = vld [vmem:[%s583 + $0x6b] sm:$0xff]
        %v2248 = vld [vmem:[%s583 + $0x73] sm:$0xff]
        %v2249 = vld [vmem:[%s583 + $0x7b] sm:$0xff]
        %v2250 = vld [vmem:[%s583 + $0x83] sm:$0xff]
        %v2251 = vld [vmem:[%s583 + $0x8b] sm:$0xff]
        %v2252 = vld [vmem:[%s583 + $0x93] sm:$0xff]
        %v2253 = vld [vmem:[%s583 + $0x9b] sm:$0xff]
        %v2254 = vld [vmem:[%s583 + $0xa3] sm:$0xff]
        %v2255 = vld [vmem:[%s583 + $0xab] sm:$0xff]
        %v2256 = vld [vmem:[%s583 + $0xb3] sm:$0xff]
        %v2257 = vld [vmem:[%s583 + $0xbb] sm:$0xff]
        %v2258 = vld [vmem:[%s583 + $0xc3] sm:$0xff]
        %v2259 = vld [vmem:[%s583 + $0xcb] sm:$0xff]
        %v2260 = vld [vmem:[%s583 + $0xd3] sm:$0xff]
        %v2261 = vld [vmem:[%s583 + $0xdb] sm:$0xff]
        %v2262 = vld [vmem:[%s583 + $0xe3] sm:$0xff]
        %v2263 = vld [vmem:[%s583 + $0xeb] sm:$0xff]
        %v2264 = vld [vmem:[%s583 + $0xf3] sm:$0xff]
        %v2265 = vld [vmem:[%s583 + $0xfb] sm:$0xff]
        %v2266 = vld [vmem:[%s583 + $0x103] sm:$0xff]
        %v2267 = vld [vmem:[%s583 + $0x10b] sm:$0xff]
        %v2268 = vld [vmem:[%s583 + $0x113] sm:$0xff]
        %v2269 = vld [vmem:[%s583 + $0x11b] sm:$0xff]
        %v2270 = vld [vmem:[%s583 + $0x123] sm:$0xff]
        %v2271 = vld [vmem:[%s583 + $0x12b] sm:$0xff]
        %s2272 = scalar_lea.vmem %s1, 16
        %v2273 = vld [vmem:[%s2272] sm:$0x7]
        %v2275 = vsel %vm662, %v2236, 0
        %v2278 = vsel %vm662, %v2237, 0
        %v2281 = vsel %vm662, %v2238, 0
        %v2284 = vsel %vm662, %v2239, 0
        %v2287 = vsel %vm662, %v2240, 0
        %v2290 = vsel %vm662, %v2241, 0
        %v2293 = vsel %vm662, %v2242, 0
        %v2296 = vsel %vm662, %v2243, 0
        %v2299 = vsel %vm662, %v2244, 0
        %v2302 = vsel %vm662, %v2245, 0
        %v2305 = vsel %vm662, %v2246, 0
        %v2308 = vsel %vm662, %v2247, 0
        %v2311 = vsel %vm662, %v2248, 0
        %v2314 = vsel %vm662, %v2249, 0
        %v2317 = vsel %vm662, %v2250, 0
        %v2320 = vsel %vm662, %v2251, 0
        %v2323 = vsel %vm662, %v2252, 0
        %v2326 = vsel %vm662, %v2253, 0
        %v2329 = vsel %vm662, %v2254, 0
        %v2332 = vsel %vm662, %v2255, 0
        %v2335 = vsel %vm662, %v2256, 0
        %v2338 = vsel %vm662, %v2257, 0
        %v2341 = vsel %vm662, %v2258, 0
        %v2344 = vsel %vm662, %v2259, 0
        %v2347 = vsel %vm662, %v2260, 0
        %v2350 = vsel %vm662, %v2261, 0
        %v2353 = vsel %vm662, %v2262, 0
        %v2356 = vsel %vm662, %v2263, 0
        %v2359 = vsel %vm662, %v2264, 0
        %v2362 = vsel %vm662, %v2265, 0
        %v2365 = vsel %vm662, %v2266, 0
        %v2368 = vsel %vm662, %v2267, 0
        %v2371 = vsel %vm662, %v2268, 0
        %v2374 = vsel %vm662, %v2269, 0
        %v2377 = vsel %vm662, %v2270, 0
        %v2380 = vsel %vm662, %v2271, 0
        %v2383 = vsel %vm771, %v2273, 0
        %2385 = vmatprep.subr.mxu0 0.0
        %2386 = vmatpush1.msra.mxu0 %v2383
        %2387 = vmatprep.subr.mxu0 0.0
        %2388 = vmatpush1.msra.mxu0 0.0
        %2389 = vmatprep.subr.mxu0 0.0
        %2390 = vmatpush1.msra.mxu0 0.0
        %2391 = vmatprep.subr.mxu0 0.0
        %2392 = vmatpush1.msra.mxu0 0.0
        %2393 = vmatprep.subr.mxu0 0.0
        %2394 = vmatpush1.msra.mxu0 0.0
        %2395 = vmatprep.subr.mxu0 0.0
        %2396 = vmatpush1.msra.mxu0 0.0
        %2397 = vmatprep.subr.mxu0 0.0
        %2398 = vmatpush1.msra.mxu0 0.0
        %2399 = vmatprep.subr.mxu0 0.0
        %2400 = vmatpush1.msra.mxu0 0.0
        %2401 = vmatprep.subr.mxu0 0.0
        %2402 = vmatpush1.msra.mxu0 0.0
        %2403 = vmatprep.subr.mxu0 0.0
        %2404 = vmatpush1.msra.mxu0 0.0
        %2405 = vmatprep.subr.mxu0 0.0
        %2406 = vmatpush1.msra.mxu0 0.0
        %2407 = vmatprep.subr.mxu0 0.0
        %2408 = vmatpush1.msra.mxu0 0.0
        %2409 = vmatprep.subr.mxu0 0.0
        %2410 = vmatpush1.msra.mxu0 0.0
        %2411 = vmatprep.subr.mxu0 0.0
        %2412 = vmatpush1.msra.mxu0 0.0
        %2413 = vmatprep.subr.mxu0 0.0
        %2414 = vmatpush1.msra.mxu0 0.0
        %2415 = vmatprep.subr.mxu0 0.0
        %2416 = vmatpush1.msra.mxu0 0.0
        %2417 = vmatprep.subr.mxu0 0.0
        %2418 = vmatpush1.msra.mxu0 0.0
        %2419 = vmatprep.subr.mxu0 0.0
        %2420 = vmatpush1.msra.mxu0 0.0
        %2421 = vmatprep.subr.mxu0 0.0
        %2422 = vmatpush1.msra.mxu0 0.0
        %2423 = vmatprep.subr.mxu0 0.0
        %2424 = vmatpush1.msra.mxu0 0.0
        %2425 = vmatprep.subr.mxu0 0.0
        %2426 = vmatpush1.msra.mxu0 0.0
        %2427 = vmatprep.subr.mxu0 0.0
        %2428 = vmatpush1.msra.mxu0 0.0
        %2429 = vmatprep.subr.mxu0 0.0
        %2430 = vmatpush1.msra.mxu0 0.0
        %2431 = vmatprep.subr.mxu0 0.0
        %2432 = vmatpush1.msra.mxu0 0.0
        %2433 = vmatprep.subr.mxu0 0.0
        %2434 = vmatpush1.msra.mxu0 0.0
        %2435 = vmatprep.subr.mxu0 0.0
        %2436 = vmatpush1.msra.mxu0 0.0
        %2437 = vmatprep.subr.mxu0 0.0
        %2438 = vmatpush1.msra.mxu0 0.0
        %2439 = vmatprep.subr.mxu0 0.0
        %2440 = vmatpush1.msra.mxu0 0.0
        %2441 = vmatprep.subr.mxu0 0.0
        %2442 = vmatpush1.msra.mxu0 0.0
        %2443 = vmatprep.subr.mxu0 0.0
        %2444 = vmatpush1.msra.mxu0 0.0
        %2445 = vmatprep.subr.mxu0 0.0
        %2446 = vmatpush1.msra.mxu0 0.0
        %2447 = vmatprep.subr.mxu0 0.0
        %2448 = vmatpush1.msra.mxu0 0.0
        %2449 = vmatprep.mubr.f32.mxu0 0.0
        %2450 = vmatmul.mubr.f32.gmra.mrb[0].mxu0 %v2275
        %v2451 = vpop.f32.mrb[0].mxu0
        %v2452 = vadd.f32 0.0, %v2451
        %v2453 = vpop.f32.mrb[0].mxu0
        %2454 = vmatprep.mubr.f32.mxu0 0.0
        %2455 = vmatmul.mubr.f32.gmra.mrb[0].mxu0 %v2278
        %v2456 = vpop.f32.mrb[0].mxu0
        %v2457 = vadd.f32 0.0, %v2456
        %v2458 = vpop.f32.mrb[0].mxu0
        %2459 = vmatprep.mubr.f32.mxu0 0.0
        %2460 = vmatmul.mubr.f32.gmra.mrb[0].mxu0 %v2281
        %v2461 = vpop.f32.mrb[0].mxu0
        %v2462 = vadd.f32 0.0, %v2461
        %v2463 = vpop.f32.mrb[0].mxu0
        %2464 = vmatprep.mubr.f32.mxu0 0.0
        %2465 = vmatmul.mubr.f32.gmra.mrb[0].mxu0 %v2284
        %v2466 = vpop.f32.mrb[0].mxu0
        %v2467 = vadd.f32 0.0, %v2466
        %v2468 = vpop.f32.mrb[0].mxu0
        %2469 = vmatprep.mubr.f32.mxu0 0.0
        %2470 = vmatmul.mubr.f32.gmra.mrb[0].mxu0 %v2287
        %v2471 = vpop.f32.mrb[0].mxu0
        %v2472 = vadd.f32 0.0, %v2471
        %v2473 = vpop.f32.mrb[0].mxu0
        %2474 = vmatprep.mubr.f32.mxu0 0.0
        %2475 = vmatmul.mubr.f32.gmra.mrb[0].mxu0 %v2290
        %v2476 = vpop.f32.mrb[0].mxu0
        %v2477 = vadd.f32 0.0, %v2476
        %v2478 = vpop.f32.mrb[0].mxu0
        %2479 = vmatprep.mubr.f32.mxu0 0.0
        %2480 = vmatmul.mubr.f32.gmra.mrb[0].mxu0 %v2293
        %v2481 = vpop.f32.mrb[0].mxu0
        %v2482 = vadd.f32 0.0, %v2481
        %v2483 = vpop.f32.mrb[0].mxu0
        %2484 = vmatprep.mubr.f32.mxu0 0.0
        %2485 = vmatmul.mubr.f32.gmra.mrb[0].mxu0 %v2296
        %v2486 = vpop.f32.mrb[0].mxu0
        %v2487 = vadd.f32 0.0, %v2486
        %v2488 = vpop.f32.mrb[0].mxu0
        %2489 = vmatprep.mubr.f32.mxu0 0.0
        %2490 = vmatmul.mubr.f32.gmra.mrb[0].mxu0 %v2299
        %v2491 = vpop.f32.mrb[0].mxu0
        %v2492 = vadd.f32 0.0, %v2491
        %v2493 = vpop.f32.mrb[0].mxu0
        %2494 = vmatprep.mubr.f32.mxu0 0.0
        %2495 = vmatmul.mubr.f32.gmra.mrb[0].mxu0 %v2302
        %v2496 = vpop.f32.mrb[0].mxu0
        %v2497 = vadd.f32 0.0, %v2496
        %v2498 = vpop.f32.mrb[0].mxu0
        %2499 = vmatprep.mubr.f32.mxu0 0.0
        %2500 = vmatmul.mubr.f32.gmra.mrb[0].mxu0 %v2305
        %v2501 = vpop.f32.mrb[0].mxu0
        %v2502 = vadd.f32 0.0, %v2501
        %v2503 = vpop.f32.mrb[0].mxu0
        %2504 = vmatprep.mubr.f32.mxu0 0.0
        %2505 = vmatmul.mubr.f32.gmra.mrb[0].mxu0 %v2308
        %v2506 = vpop.f32.mrb[0].mxu0
        %v2507 = vadd.f32 0.0, %v2506
        %v2508 = vpop.f32.mrb[0].mxu0
        %2509 = vmatprep.mubr.f32.mxu0 0.0
        %2510 = vmatmul.mubr.f32.gmra.mrb[0].mxu0 %v2311
        %v2511 = vpop.f32.mrb[0].mxu0
        %v2512 = vadd.f32 0.0, %v2511
        %v2513 = vpop.f32.mrb[0].mxu0
        %2514 = vmatprep.mubr.f32.mxu0 0.0
        %2515 = vmatmul.mubr.f32.gmra.mrb[0].mxu0 %v2314
        %v2516 = vpop.f32.mrb[0].mxu0
        %v2517 = vadd.f32 0.0, %v2516
        %v2518 = vpop.f32.mrb[0].mxu0
        %2519 = vmatprep.mubr.f32.mxu0 0.0
        %2520 = vmatmul.mubr.f32.gmra.mrb[0].mxu0 %v2317
        %v2521 = vpop.f32.mrb[0].mxu0
        %v2522 = vadd.f32 0.0, %v2521
        %v2523 = vpop.f32.mrb[0].mxu0
        %2524 = vmatprep.mubr.f32.mxu0 0.0
        %2525 = vmatmul.mubr.f32.gmra.mrb[0].mxu0 %v2320
        %v2526 = vpop.f32.mrb[0].mxu0
        %v2527 = vadd.f32 0.0, %v2526
        %v2528 = vpop.f32.mrb[0].mxu0
        %2529 = vmatprep.mubr.f32.mxu0 0.0
        %2530 = vmatmul.mubr.f32.gmra.mrb[0].mxu0 %v2323
        %v2531 = vpop.f32.mrb[0].mxu0
        %v2532 = vadd.f32 0.0, %v2531
        %v2533 = vpop.f32.mrb[0].mxu0
        %2534 = vmatprep.mubr.f32.mxu0 0.0
        %2535 = vmatmul.mubr.f32.gmra.mrb[0].mxu0 %v2326
        %v2536 = vpop.f32.mrb[0].mxu0
        %v2537 = vadd.f32 0.0, %v2536
        %v2538 = vpop.f32.mrb[0].mxu0
        %2539 = vmatprep.mubr.f32.mxu0 0.0
        %2540 = vmatmul.mubr.f32.gmra.mrb[0].mxu0 %v2329
        %v2541 = vpop.f32.mrb[0].mxu0
        %v2542 = vadd.f32 0.0, %v2541
        %v2543 = vpop.f32.mrb[0].mxu0
        %2544 = vmatprep.mubr.f32.mxu0 0.0
        %2545 = vmatmul.mubr.f32.gmra.mrb[0].mxu0 %v2332
        %v2546 = vpop.f32.mrb[0].mxu0
        %v2547 = vadd.f32 0.0, %v2546
        %v2548 = vpop.f32.mrb[0].mxu0
        %2549 = vmatprep.mubr.f32.mxu0 0.0
        %2550 = vmatmul.mubr.f32.gmra.mrb[0].mxu0 %v2335
        %v2551 = vpop.f32.mrb[0].mxu0
        %v2552 = vadd.f32 0.0, %v2551
        %v2553 = vpop.f32.mrb[0].mxu0
        %2554 = vmatprep.mubr.f32.mxu0 0.0
        %2555 = vmatmul.mubr.f32.gmra.mrb[0].mxu0 %v2338
        %v2556 = vpop.f32.mrb[0].mxu0
        %v2557 = vadd.f32 0.0, %v2556
        %v2558 = vpop.f32.mrb[0].mxu0
        %2559 = vmatprep.mubr.f32.mxu0 0.0
        %2560 = vmatmul.mubr.f32.gmra.mrb[0].mxu0 %v2341
        %v2561 = vpop.f32.mrb[0].mxu0
        %v2562 = vadd.f32 0.0, %v2561
        %v2563 = vpop.f32.mrb[0].mxu0
        %2564 = vmatprep.mubr.f32.mxu0 0.0
        %2565 = vmatmul.mubr.f32.gmra.mrb[0].mxu0 %v2344
        %v2566 = vpop.f32.mrb[0].mxu0
        %v2567 = vadd.f32 0.0, %v2566
        %v2568 = vpop.f32.mrb[0].mxu0
        %2569 = vmatprep.mubr.f32.mxu0 0.0
        %2570 = vmatmul.mubr.f32.gmra.mrb[0].mxu0 %v2347
        %v2571 = vpop.f32.mrb[0].mxu0
        %v2572 = vadd.f32 0.0, %v2571
        %v2573 = vpop.f32.mrb[0].mxu0
        %2574 = vmatprep.mubr.f32.mxu0 0.0
        %2575 = vmatmul.mubr.f32.gmra.mrb[0].mxu0 %v2350
        %v2576 = vpop.f32.mrb[0].mxu0
        %v2577 = vadd.f32 0.0, %v2576
        %v2578 = vpop.f32.mrb[0].mxu0
        %2579 = vmatprep.mubr.f32.mxu0 0.0
        %2580 = vmatmul.mubr.f32.gmra.mrb[0].mxu0 %v2353
        %v2581 = vpop.f32.mrb[0].mxu0
        %v2582 = vadd.f32 0.0, %v2581
        %v2583 = vpop.f32.mrb[0].mxu0
        %2584 = vmatprep.mubr.f32.mxu0 0.0
        %2585 = vmatmul.mubr.f32.gmra.mrb[0].mxu0 %v2356
        %v2586 = vpop.f32.mrb[0].mxu0
        %v2587 = vadd.f32 0.0, %v2586
        %v2588 = vpop.f32.mrb[0].mxu0
        %2589 = vmatprep.mubr.f32.mxu0 0.0
        %2590 = vmatmul.mubr.f32.gmra.mrb[0].mxu0 %v2359
        %v2591 = vpop.f32.mrb[0].mxu0
        %v2592 = vadd.f32 0.0, %v2591
        %v2593 = vpop.f32.mrb[0].mxu0
        %2594 = vmatprep.mubr.f32.mxu0 0.0
        %2595 = vmatmul.mubr.f32.gmra.mrb[0].mxu0 %v2362
        %v2596 = vpop.f32.mrb[0].mxu0
        %v2597 = vadd.f32 0.0, %v2596
        %v2598 = vpop.f32.mrb[0].mxu0
        %2599 = vmatprep.mubr.f32.mxu0 0.0
        %2600 = vmatmul.mubr.f32.gmra.mrb[0].mxu0 %v2365
        %v2601 = vpop.f32.mrb[0].mxu0
        %v2602 = vadd.f32 0.0, %v2601
        %v2603 = vpop.f32.mrb[0].mxu0
        %2604 = vmatprep.mubr.f32.mxu0 0.0
        %2605 = vmatmul.mubr.f32.gmra.mrb[0].mxu0 %v2368
        %v2606 = vpop.f32.mrb[0].mxu0
        %v2607 = vadd.f32 0.0, %v2606
        %v2608 = vpop.f32.mrb[0].mxu0
        %2609 = vmatprep.mubr.f32.mxu0 0.0
        %2610 = vmatmul.mubr.f32.gmra.mrb[0].mxu0 %v2371
        %v2611 = vpop.f32.mrb[0].mxu0
        %v2612 = vadd.f32 0.0, %v2611
        %v2613 = vpop.f32.mrb[0].mxu0
        %2614 = vmatprep.mubr.f32.mxu0 0.0
        %2615 = vmatmul.mubr.f32.gmra.mrb[0].mxu0 %v2374
        %v2616 = vpop.f32.mrb[0].mxu0
        %v2617 = vadd.f32 0.0, %v2616
        %v2618 = vpop.f32.mrb[0].mxu0
        %2619 = vmatprep.mubr.f32.mxu0 0.0
        %2620 = vmatmul.mubr.f32.gmra.mrb[0].mxu0 %v2377
        %v2621 = vpop.f32.mrb[0].mxu0
        %v2622 = vadd.f32 0.0, %v2621
        %v2623 = vpop.f32.mrb[0].mxu0
        %2624 = vmatprep.mubr.f32.mxu0 0.0
        %2625 = vmatmul.mubr.f32.gmra.mrb[0].mxu0 %v2380
        %v2626 = vpop.f32.mrb[0].mxu0
        %v2627 = vadd.f32 0.0, %v2626
        %v2628 = vpop.f32.mrb[0].mxu0
        %2629 = vdwg.mxu0
        %v2630 = vadd.f32 %v2200, %v2452
        %v2631 = vadd.f32 %v2201, %v2457
        %v2632 = vadd.f32 %v2202, %v2462
        %v2633 = vadd.f32 %v2203, %v2467
        %v2634 = vadd.f32 %v2204, %v2472
        %v2635 = vadd.f32 %v2205, %v2477
        %v2636 = vadd.f32 %v2206, %v2482
        %v2637 = vadd.f32 %v2207, %v2487
        %v2638 = vadd.f32 %v2208, %v2492
        %v2639 = vadd.f32 %v2209, %v2497
        %v2640 = vadd.f32 %v2210, %v2502
        %v2641 = vadd.f32 %v2211, %v2507
        %v2642 = vadd.f32 %v2212, %v2512
        %v2643 = vadd.f32 %v2213, %v2517
        %v2644 = vadd.f32 %v2214, %v2522
        %v2645 = vadd.f32 %v2215, %v2527
        %v2646 = vadd.f32 %v2216, %v2532
        %v2647 = vadd.f32 %v2217, %v2537
        %v2648 = vadd.f32 %v2218, %v2542
        %v2649 = vadd.f32 %v2219, %v2547
        %v2650 = vadd.f32 %v2220, %v2552
        %v2651 = vadd.f32 %v2221, %v2557
        %v2652 = vadd.f32 %v2222, %v2562
        %v2653 = vadd.f32 %v2223, %v2567
        %v2654 = vadd.f32 %v2224, %v2572
        %v2655 = vadd.f32 %v2225, %v2577
        %v2656 = vadd.f32 %v2226, %v2582
        %v2657 = vadd.f32 %v2227, %v2587
        %v2658 = vadd.f32 %v2228, %v2592
        %v2659 = vadd.f32 %v2229, %v2597
        %v2660 = vadd.f32 %v2230, %v2602
        %v2661 = vadd.f32 %v2231, %v2607
        %v2662 = vadd.f32 %v2232, %v2612
        %v2663 = vadd.f32 %v2233, %v2617
        %v2664 = vadd.f32 %v2234, %v2622
        %v2665 = vadd.f32 %v2235, %v2627
        %v2666 = vld [vmem:[%s583 + $0x14] sm:$0xff]
        %v2667 = vld [vmem:[%s583 + $0x1c] sm:$0xff]
        %v2668 = vld [vmem:[%s583 + $0x24] sm:$0xff]
        %v2669 = vld [vmem:[%s583 + $0x2c] sm:$0xff]
        %v2670 = vld [vmem:[%s583 + $0x34] sm:$0xff]
        %v2671 = vld [vmem:[%s583 + $0x3c] sm:$0xff]
        %v2672 = vld [vmem:[%s583 + $0x44] sm:$0xff]
        %v2673 = vld [vmem:[%s583 + $0x4c] sm:$0xff]
        %v2674 = vld [vmem:[%s583 + $0x54] sm:$0xff]
        %v2675 = vld [vmem:[%s583 + $0x5c] sm:$0xff]
        %v2676 = vld [vmem:[%s583 + $0x64] sm:$0xff]
        %v2677 = vld [vmem:[%s583 + $0x6c] sm:$0xff]
        %v2678 = vld [vmem:[%s583 + $0x74] sm:$0xff]
        %v2679 = vld [vmem:[%s583 + $0x7c] sm:$0xff]
        %v2680 = vld [vmem:[%s583 + $0x84] sm:$0xff]
        %v2681 = vld [vmem:[%s583 + $0x8c] sm:$0xff]
        %v2682 = vld [vmem:[%s583 + $0x94] sm:$0xff]
        %v2683 = vld [vmem:[%s583 + $0x9c] sm:$0xff]
        %v2684 = vld [vmem:[%s583 + $0xa4] sm:$0xff]
        %v2685 = vld [vmem:[%s583 + $0xac] sm:$0xff]
        %v2686 = vld [vmem:[%s583 + $0xb4] sm:$0xff]
        %v2687 = vld [vmem:[%s583 + $0xbc] sm:$0xff]
        %v2688 = vld [vmem:[%s583 + $0xc4] sm:$0xff]
        %v2689 = vld [vmem:[%s583 + $0xcc] sm:$0xff]
        %v2690 = vld [vmem:[%s583 + $0xd4] sm:$0xff]
        %v2691 = vld [vmem:[%s583 + $0xdc] sm:$0xff]
        %v2692 = vld [vmem:[%s583 + $0xe4] sm:$0xff]
        %v2693 = vld [vmem:[%s583 + $0xec] sm:$0xff]
        %v2694 = vld [vmem:[%s583 + $0xf4] sm:$0xff]
        %v2695 = vld [vmem:[%s583 + $0xfc] sm:$0xff]
        %v2696 = vld [vmem:[%s583 + $0x104] sm:$0xff]
        %v2697 = vld [vmem:[%s583 + $0x10c] sm:$0xff]
        %v2698 = vld [vmem:[%s583 + $0x114] sm:$0xff]
        %v2699 = vld [vmem:[%s583 + $0x11c] sm:$0xff]
        %v2700 = vld [vmem:[%s583 + $0x124] sm:$0xff]
        %v2701 = vld [vmem:[%s583 + $0x12c] sm:$0xff]
        %s2702 = scalar_lea.vmem %s1, 20
        %v2703 = vld [vmem:[%s2702] sm:$0x7]
        %v2705 = vsel %vm662, %v2666, 0
        %v2708 = vsel %vm662, %v2667, 0
        %v2711 = vsel %vm662, %v2668, 0
        %v2714 = vsel %vm662, %v2669, 0
        %v2717 = vsel %vm662, %v2670, 0
        %v2720 = vsel %vm662, %v2671, 0
        %v2723 = vsel %vm662, %v2672, 0
        %v2726 = vsel %vm662, %v2673, 0
        %v2729 = vsel %vm662, %v2674, 0
        %v2732 = vsel %vm662, %v2675, 0
        %v2735 = vsel %vm662, %v2676, 0
        %v2738 = vsel %vm662, %v2677, 0
        %v2741 = vsel %vm662, %v2678, 0
        %v2744 = vsel %vm662, %v2679, 0
        %v2747 = vsel %vm662, %v2680, 0
        %v2750 = vsel %vm662, %v2681, 0
        %v2753 = vsel %vm662, %v2682, 0
        %v2756 = vsel %vm662, %v2683, 0
        %v2759 = vsel %vm662, %v2684, 0
        %v2762 = vsel %vm662, %v2685, 0
        %v2765 = vsel %vm662, %v2686, 0
        %v2768 = vsel %vm662, %v2687, 0
        %v2771 = vsel %vm662, %v2688, 0
        %v2774 = vsel %vm662, %v2689, 0
        %v2777 = vsel %vm662, %v2690, 0
        %v2780 = vsel %vm662, %v2691, 0
        %v2783 = vsel %vm662, %v2692, 0
        %v2786 = vsel %vm662, %v2693, 0
        %v2789 = vsel %vm662, %v2694, 0
        %v2792 = vsel %vm662, %v2695, 0
        %v2795 = vsel %vm662, %v2696, 0
        %v2798 = vsel %vm662, %v2697, 0
        %v2801 = vsel %vm662, %v2698, 0
        %v2804 = vsel %vm662, %v2699, 0
        %v2807 = vsel %vm662, %v2700, 0
        %v2810 = vsel %vm662, %v2701, 0
        %v2813 = vsel %vm771, %v2703, 0
        %2815 = vmatprep.subr.mxu0 0.0
        %2816 = vmatpush1.msra.mxu0 %v2813
        %2817 = vmatprep.subr.mxu0 0.0
        %2818 = vmatpush1.msra.mxu0 0.0
        %2819 = vmatprep.subr.mxu0 0.0
        %2820 = vmatpush1.msra.mxu0 0.0
        %2821 = vmatprep.subr.mxu0 0.0
        %2822 = vmatpush1.msra.mxu0 0.0
        %2823 = vmatprep.subr.mxu0 0.0
        %2824 = vmatpush1.msra.mxu0 0.0
        %2825 = vmatprep.subr.mxu0 0.0
        %2826 = vmatpush1.msra.mxu0 0.0
        %2827 = vmatprep.subr.mxu0 0.0
        %2828 = vmatpush1.msra.mxu0 0.0
        %2829 = vmatprep.subr.mxu0 0.0
        %2830 = vmatpush1.msra.mxu0 0.0
        %2831 = vmatprep.subr.mxu0 0.0
        %2832 = vmatpush1.msra.mxu0 0.0
        %2833 = vmatprep.subr.mxu0 0.0
        %2834 = vmatpush1.msra.mxu0 0.0
        %2835 = vmatprep.subr.mxu0 0.0
        %2836 = vmatpush1.msra.mxu0 0.0
        %2837 = vmatprep.subr.mxu0 0.0
        %2838 = vmatpush1.msra.mxu0 0.0
        %2839 = vmatprep.subr.mxu0 0.0
        %2840 = vmatpush1.msra.mxu0 0.0
        %2841 = vmatprep.subr.mxu0 0.0
        %2842 = vmatpush1.msra.mxu0 0.0
        %2843 = vmatprep.subr.mxu0 0.0
        %2844 = vmatpush1.msra.mxu0 0.0
        %2845 = vmatprep.subr.mxu0 0.0
        %2846 = vmatpush1.msra.mxu0 0.0
        %2847 = vmatprep.subr.mxu0 0.0
        %2848 = vmatpush1.msra.mxu0 0.0
        %2849 = vmatprep.subr.mxu0 0.0
        %2850 = vmatpush1.msra.mxu0 0.0
        %2851 = vmatprep.subr.mxu0 0.0
        %2852 = vmatpush1.msra.mxu0 0.0
        %2853 = vmatprep.subr.mxu0 0.0
        %2854 = vmatpush1.msra.mxu0 0.0
        %2855 = vmatprep.subr.mxu0 0.0
        %2856 = vmatpush1.msra.mxu0 0.0
        %2857 = vmatprep.subr.mxu0 0.0
        %2858 = vmatpush1.msra.mxu0 0.0
        %2859 = vmatprep.subr.mxu0 0.0
        %2860 = vmatpush1.msra.mxu0 0.0
        %2861 = vmatprep.subr.mxu0 0.0
        %2862 = vmatpush1.msra.mxu0 0.0
        %2863 = vmatprep.subr.mxu0 0.0
        %2864 = vmatpush1.msra.mxu0 0.0
        %2865 = vmatprep.subr.mxu0 0.0
        %2866 = vmatpush1.msra.mxu0 0.0
        %2867 = vmatprep.subr.mxu0 0.0
        %2868 = vmatpush1.msra.mxu0 0.0
        %2869 = vmatprep.subr.mxu0 0.0
        %2870 = vmatpush1.msra.mxu0 0.0
        %2871 = vmatprep.subr.mxu0 0.0
        %2872 = vmatpush1.msra.mxu0 0.0
        %2873 = vmatprep.subr.mxu0 0.0
        %2874 = vmatpush1.msra.mxu0 0.0
        %2875 = vmatprep.subr.mxu0 0.0
        %2876 = vmatpush1.msra.mxu0 0.0
        %2877 = vmatprep.subr.mxu0 0.0
        %2878 = vmatpush1.msra.mxu0 0.0
        %2879 = vmatprep.mubr.f32.mxu0 0.0
        %2880 = vmatmul.mubr.f32.gmra.mrb[0].mxu0 %v2705
        %v2881 = vpop.f32.mrb[0].mxu0
        %v2882 = vadd.f32 0.0, %v2881
        %v2883 = vpop.f32.mrb[0].mxu0
        %2884 = vmatprep.mubr.f32.mxu0 0.0
        %2885 = vmatmul.mubr.f32.gmra.mrb[0].mxu0 %v2708
        %v2886 = vpop.f32.mrb[0].mxu0
        %v2887 = vadd.f32 0.0, %v2886
        %v2888 = vpop.f32.mrb[0].mxu0
        %2889 = vmatprep.mubr.f32.mxu0 0.0
        %2890 = vmatmul.mubr.f32.gmra.mrb[0].mxu0 %v2711
        %v2891 = vpop.f32.mrb[0].mxu0
        %v2892 = vadd.f32 0.0, %v2891
        %v2893 = vpop.f32.mrb[0].mxu0
        %2894 = vmatprep.mubr.f32.mxu0 0.0
        %2895 = vmatmul.mubr.f32.gmra.mrb[0].mxu0 %v2714
        %v2896 = vpop.f32.mrb[0].mxu0
        %v2897 = vadd.f32 0.0, %v2896
        %v2898 = vpop.f32.mrb[0].mxu0
        %2899 = vmatprep.mubr.f32.mxu0 0.0
        %2900 = vmatmul.mubr.f32.gmra.mrb[0].mxu0 %v2717
        %v2901 = vpop.f32.mrb[0].mxu0
        %v2902 = vadd.f32 0.0, %v2901
        %v2903 = vpop.f32.mrb[0].mxu0
        %2904 = vmatprep.mubr.f32.mxu0 0.0
        %2905 = vmatmul.mubr.f32.gmra.mrb[0].mxu0 %v2720
        %v2906 = vpop.f32.mrb[0].mxu0
        %v2907 = vadd.f32 0.0, %v2906
        %v2908 = vpop.f32.mrb[0].mxu0
        %2909 = vmatprep.mubr.f32.mxu0 0.0
        %2910 = vmatmul.mubr.f32.gmra.mrb[0].mxu0 %v2723
        %v2911 = vpop.f32.mrb[0].mxu0
        %v2912 = vadd.f32 0.0, %v2911
        %v2913 = vpop.f32.mrb[0].mxu0
        %2914 = vmatprep.mubr.f32.mxu0 0.0
        %2915 = vmatmul.mubr.f32.gmra.mrb[0].mxu0 %v2726
        %v2916 = vpop.f32.mrb[0].mxu0
        %v2917 = vadd.f32 0.0, %v2916
        %v2918 = vpop.f32.mrb[0].mxu0
        %2919 = vmatprep.mubr.f32.mxu0 0.0
        %2920 = vmatmul.mubr.f32.gmra.mrb[0].mxu0 %v2729
        %v2921 = vpop.f32.mrb[0].mxu0
        %v2922 = vadd.f32 0.0, %v2921
        %v2923 = vpop.f32.mrb[0].mxu0
        %2924 = vmatprep.mubr.f32.mxu0 0.0
        %2925 = vmatmul.mubr.f32.gmra.mrb[0].mxu0 %v2732
        %v2926 = vpop.f32.mrb[0].mxu0
        %v2927 = vadd.f32 0.0, %v2926
        %v2928 = vpop.f32.mrb[0].mxu0
        %2929 = vmatprep.mubr.f32.mxu0 0.0
        %2930 = vmatmul.mubr.f32.gmra.mrb[0].mxu0 %v2735
        %v2931 = vpop.f32.mrb[0].mxu0
        %v2932 = vadd.f32 0.0, %v2931
        %v2933 = vpop.f32.mrb[0].mxu0
        %2934 = vmatprep.mubr.f32.mxu0 0.0
        %2935 = vmatmul.mubr.f32.gmra.mrb[0].mxu0 %v2738
        %v2936 = vpop.f32.mrb[0].mxu0
        %v2937 = vadd.f32 0.0, %v2936
        %v2938 = vpop.f32.mrb[0].mxu0
        %2939 = vmatprep.mubr.f32.mxu0 0.0
        %2940 = vmatmul.mubr.f32.gmra.mrb[0].mxu0 %v2741
        %v2941 = vpop.f32.mrb[0].mxu0
        %v2942 = vadd.f32 0.0, %v2941
        %v2943 = vpop.f32.mrb[0].mxu0
        %2944 = vmatprep.mubr.f32.mxu0 0.0
        %2945 = vmatmul.mubr.f32.gmra.mrb[0].mxu0 %v2744
        %v2946 = vpop.f32.mrb[0].mxu0
        %v2947 = vadd.f32 0.0, %v2946
        %v2948 = vpop.f32.mrb[0].mxu0
        %2949 = vmatprep.mubr.f32.mxu0 0.0
        %2950 = vmatmul.mubr.f32.gmra.mrb[0].mxu0 %v2747
        %v2951 = vpop.f32.mrb[0].mxu0
        %v2952 = vadd.f32 0.0, %v2951
        %v2953 = vpop.f32.mrb[0].mxu0
        %2954 = vmatprep.mubr.f32.mxu0 0.0
        %2955 = vmatmul.mubr.f32.gmra.mrb[0].mxu0 %v2750
        %v2956 = vpop.f32.mrb[0].mxu0
        %v2957 = vadd.f32 0.0, %v2956
        %v2958 = vpop.f32.mrb[0].mxu0
        %2959 = vmatprep.mubr.f32.mxu0 0.0
        %2960 = vmatmul.mubr.f32.gmra.mrb[0].mxu0 %v2753
        %v2961 = vpop.f32.mrb[0].mxu0
        %v2962 = vadd.f32 0.0, %v2961
        %v2963 = vpop.f32.mrb[0].mxu0
        %2964 = vmatprep.mubr.f32.mxu0 0.0
        %2965 = vmatmul.mubr.f32.gmra.mrb[0].mxu0 %v2756
        %v2966 = vpop.f32.mrb[0].mxu0
        %v2967 = vadd.f32 0.0, %v2966
        %v2968 = vpop.f32.mrb[0].mxu0
        %2969 = vmatprep.mubr.f32.mxu0 0.0
        %2970 = vmatmul.mubr.f32.gmra.mrb[0].mxu0 %v2759
        %v2971 = vpop.f32.mrb[0].mxu0
        %v2972 = vadd.f32 0.0, %v2971
        %v2973 = vpop.f32.mrb[0].mxu0
        %2974 = vmatprep.mubr.f32.mxu0 0.0
        %2975 = vmatmul.mubr.f32.gmra.mrb[0].mxu0 %v2762
        %v2976 = vpop.f32.mrb[0].mxu0
        %v2977 = vadd.f32 0.0, %v2976
        %v2978 = vpop.f32.mrb[0].mxu0
        %2979 = vmatprep.mubr.f32.mxu0 0.0
        %2980 = vmatmul.mubr.f32.gmra.mrb[0].mxu0 %v2765
        %v2981 = vpop.f32.mrb[0].mxu0
        %v2982 = vadd.f32 0.0, %v2981
        %v2983 = vpop.f32.mrb[0].mxu0
        %2984 = vmatprep.mubr.f32.mxu0 0.0
        %2985 = vmatmul.mubr.f32.gmra.mrb[0].mxu0 %v2768
        %v2986 = vpop.f32.mrb[0].mxu0
        %v2987 = vadd.f32 0.0, %v2986
        %v2988 = vpop.f32.mrb[0].mxu0
        %2989 = vmatprep.mubr.f32.mxu0 0.0
        %2990 = vmatmul.mubr.f32.gmra.mrb[0].mxu0 %v2771
        %v2991 = vpop.f32.mrb[0].mxu0
        %v2992 = vadd.f32 0.0, %v2991
        %v2993 = vpop.f32.mrb[0].mxu0
        %2994 = vmatprep.mubr.f32.mxu0 0.0
        %2995 = vmatmul.mubr.f32.gmra.mrb[0].mxu0 %v2774
        %v2996 = vpop.f32.mrb[0].mxu0
        %v2997 = vadd.f32 0.0, %v2996
        %v2998 = vpop.f32.mrb[0].mxu0
        %2999 = vmatprep.mubr.f32.mxu0 0.0
        %3000 = vmatmul.mubr.f32.gmra.mrb[0].mxu0 %v2777
        %v3001 = vpop.f32.mrb[0].mxu0
        %v3002 = vadd.f32 0.0, %v3001
        %v3003 = vpop.f32.mrb[0].mxu0
        %3004 = vmatprep.mubr.f32.mxu0 0.0
        %3005 = vmatmul.mubr.f32.gmra.mrb[0].mxu0 %v2780
        %v3006 = vpop.f32.mrb[0].mxu0
        %v3007 = vadd.f32 0.0, %v3006
        %v3008 = vpop.f32.mrb[0].mxu0
        %3009 = vmatprep.mubr.f32.mxu0 0.0
        %3010 = vmatmul.mubr.f32.gmra.mrb[0].mxu0 %v2783
        %v3011 = vpop.f32.mrb[0].mxu0
        %v3012 = vadd.f32 0.0, %v3011
        %v3013 = vpop.f32.mrb[0].mxu0
        %3014 = vmatprep.mubr.f32.mxu0 0.0
        %3015 = vmatmul.mubr.f32.gmra.mrb[0].mxu0 %v2786
        %v3016 = vpop.f32.mrb[0].mxu0
        %v3017 = vadd.f32 0.0, %v3016
        %v3018 = vpop.f32.mrb[0].mxu0
        %3019 = vmatprep.mubr.f32.mxu0 0.0
        %3020 = vmatmul.mubr.f32.gmra.mrb[0].mxu0 %v2789
        %v3021 = vpop.f32.mrb[0].mxu0
        %v3022 = vadd.f32 0.0, %v3021
        %v3023 = vpop.f32.mrb[0].mxu0
        %3024 = vmatprep.mubr.f32.mxu0 0.0
        %3025 = vmatmul.mubr.f32.gmra.mrb[0].mxu0 %v2792
        %v3026 = vpop.f32.mrb[0].mxu0
        %v3027 = vadd.f32 0.0, %v3026
        %v3028 = vpop.f32.mrb[0].mxu0
        %3029 = vmatprep.mubr.f32.mxu0 0.0
        %3030 = vmatmul.mubr.f32.gmra.mrb[0].mxu0 %v2795
        %v3031 = vpop.f32.mrb[0].mxu0
        %v3032 = vadd.f32 0.0, %v3031
        %v3033 = vpop.f32.mrb[0].mxu0
        %3034 = vmatprep.mubr.f32.mxu0 0.0
        %3035 = vmatmul.mubr.f32.gmra.mrb[0].mxu0 %v2798
        %v3036 = vpop.f32.mrb[0].mxu0
        %v3037 = vadd.f32 0.0, %v3036
        %v3038 = vpop.f32.mrb[0].mxu0
        %3039 = vmatprep.mubr.f32.mxu0 0.0
        %3040 = vmatmul.mubr.f32.gmra.mrb[0].mxu0 %v2801
        %v3041 = vpop.f32.mrb[0].mxu0
        %v3042 = vadd.f32 0.0, %v3041
        %v3043 = vpop.f32.mrb[0].mxu0
        %3044 = vmatprep.mubr.f32.mxu0 0.0
        %3045 = vmatmul.mubr.f32.gmra.mrb[0].mxu0 %v2804
        %v3046 = vpop.f32.mrb[0].mxu0
        %v3047 = vadd.f32 0.0, %v3046
        %v3048 = vpop.f32.mrb[0].mxu0
        %3049 = vmatprep.mubr.f32.mxu0 0.0
        %3050 = vmatmul.mubr.f32.gmra.mrb[0].mxu0 %v2807
        %v3051 = vpop.f32.mrb[0].mxu0
        %v3052 = vadd.f32 0.0, %v3051
        %v3053 = vpop.f32.mrb[0].mxu0
        %3054 = vmatprep.mubr.f32.mxu0 0.0
        %3055 = vmatmul.mubr.f32.gmra.mrb[0].mxu0 %v2810
        %v3056 = vpop.f32.mrb[0].mxu0
        %v3057 = vadd.f32 0.0, %v3056
        %v3058 = vpop.f32.mrb[0].mxu0
        %3059 = vdwg.mxu0
        %v3060 = vadd.f32 %v2630, %v2882
        %v3061 = vadd.f32 %v2631, %v2887
        %v3062 = vadd.f32 %v2632, %v2892
        %v3063 = vadd.f32 %v2633, %v2897
        %v3064 = vadd.f32 %v2634, %v2902
        %v3065 = vadd.f32 %v2635, %v2907
        %v3066 = vadd.f32 %v2636, %v2912
        %v3067 = vadd.f32 %v2637, %v2917
        %v3068 = vadd.f32 %v2638, %v2922
        %v3069 = vadd.f32 %v2639, %v2927
        %v3070 = vadd.f32 %v2640, %v2932
        %v3071 = vadd.f32 %v2641, %v2937
        %v3072 = vadd.f32 %v2642, %v2942
        %v3073 = vadd.f32 %v2643, %v2947
        %v3074 = vadd.f32 %v2644, %v2952
        %v3075 = vadd.f32 %v2645, %v2957
        %v3076 = vadd.f32 %v2646, %v2962
        %v3077 = vadd.f32 %v2647, %v2967
        %v3078 = vadd.f32 %v2648, %v2972
        %v3079 = vadd.f32 %v2649, %v2977
        %v3080 = vadd.f32 %v2650, %v2982
        %v3081 = vadd.f32 %v2651, %v2987
        %v3082 = vadd.f32 %v2652, %v2992
        %v3083 = vadd.f32 %v2653, %v2997
        %v3084 = vadd.f32 %v2654, %v3002
        %v3085 = vadd.f32 %v2655, %v3007
        %v3086 = vadd.f32 %v2656, %v3012
        %v3087 = vadd.f32 %v2657, %v3017
        %v3088 = vadd.f32 %v2658, %v3022
        %v3089 = vadd.f32 %v2659, %v3027
        %v3090 = vadd.f32 %v2660, %v3032
        %v3091 = vadd.f32 %v2661, %v3037
        %v3092 = vadd.f32 %v2662, %v3042
        %v3093 = vadd.f32 %v2663, %v3047
        %v3094 = vadd.f32 %v2664, %v3052
        %v3095 = vadd.f32 %v2665, %v3057
        %v3096 = vld [vmem:[%s583 + $0x24] sm:$0xff]
        %v3097 = vld [vmem:[%s583 + $0x2c] sm:$0xff]
        %v3098 = vld [vmem:[%s583 + $0x34] sm:$0xff]
        %v3099 = vld [vmem:[%s583 + $0x3c] sm:$0xff]
        %v3100 = vld [vmem:[%s583 + $0x44] sm:$0xff]
        %v3101 = vld [vmem:[%s583 + $0x4c] sm:$0xff]
        %v3102 = vld [vmem:[%s583 + $0x54] sm:$0xff]
        %v3103 = vld [vmem:[%s583 + $0x5c] sm:$0xff]
        %v3104 = vld [vmem:[%s583 + $0x64] sm:$0xff]
        %v3105 = vld [vmem:[%s583 + $0x6c] sm:$0xff]
        %v3106 = vld [vmem:[%s583 + $0x74] sm:$0xff]
        %v3107 = vld [vmem:[%s583 + $0x7c] sm:$0xff]
        %v3108 = vld [vmem:[%s583 + $0x84] sm:$0xff]
        %v3109 = vld [vmem:[%s583 + $0x8c] sm:$0xff]
        %v3110 = vld [vmem:[%s583 + $0x94] sm:$0xff]
        %v3111 = vld [vmem:[%s583 + $0x9c] sm:$0xff]
        %v3112 = vld [vmem:[%s583 + $0xa4] sm:$0xff]
        %v3113 = vld [vmem:[%s583 + $0xac] sm:$0xff]
        %v3114 = vld [vmem:[%s583 + $0xb4] sm:$0xff]
        %v3115 = vld [vmem:[%s583 + $0xbc] sm:$0xff]
        %v3116 = vld [vmem:[%s583 + $0xc4] sm:$0xff]
        %v3117 = vld [vmem:[%s583 + $0xcc] sm:$0xff]
        %v3118 = vld [vmem:[%s583 + $0xd4] sm:$0xff]
        %v3119 = vld [vmem:[%s583 + $0xdc] sm:$0xff]
        %v3120 = vld [vmem:[%s583 + $0xe4] sm:$0xff]
        %v3121 = vld [vmem:[%s583 + $0xec] sm:$0xff]
        %v3122 = vld [vmem:[%s583 + $0xf4] sm:$0xff]
        %v3123 = vld [vmem:[%s583 + $0xfc] sm:$0xff]
        %v3124 = vld [vmem:[%s583 + $0x104] sm:$0xff]
        %v3125 = vld [vmem:[%s583 + $0x10c] sm:$0xff]
        %v3126 = vld [vmem:[%s583 + $0x114] sm:$0xff]
        %v3127 = vld [vmem:[%s583 + $0x11c] sm:$0xff]
        %v3128 = vld [vmem:[%s583 + $0x124] sm:$0xff]
        %v3129 = vld [vmem:[%s583 + $0x12c] sm:$0xff]
        %v3130 = vld [vmem:[%s583 + $0x134] sm:$0xff]
        %v3131 = vld [vmem:[%s583 + $0x13c] sm:$0xff]
        %s3132 = scalar_lea.vmem %s1, 24
        %v3133 = vld [vmem:[%s3132] sm:$0x7]
        %v3135 = vsel %vm662, %v3096, 0
        %v3138 = vsel %vm662, %v3097, 0
        %v3141 = vsel %vm662, %v3098, 0
        %v3144 = vsel %vm662, %v3099, 0
        %v3147 = vsel %vm662, %v3100, 0
        %v3150 = vsel %vm662, %v3101, 0
        %v3153 = vsel %vm662, %v3102, 0
        %v3156 = vsel %vm662, %v3103, 0
        %v3159 = vsel %vm662, %v3104, 0
        %v3162 = vsel %vm662, %v3105, 0
        %v3165 = vsel %vm662, %v3106, 0
        %v3168 = vsel %vm662, %v3107, 0
        %v3171 = vsel %vm662, %v3108, 0
        %v3174 = vsel %vm662, %v3109, 0
        %v3177 = vsel %vm662, %v3110, 0
        %v3180 = vsel %vm662, %v3111, 0
        %v3183 = vsel %vm662, %v3112, 0
        %v3186 = vsel %vm662, %v3113, 0
        %v3189 = vsel %vm662, %v3114, 0
        %v3192 = vsel %vm662, %v3115, 0
        %v3195 = vsel %vm662, %v3116, 0
        %v3198 = vsel %vm662, %v3117, 0
        %v3201 = vsel %vm662, %v3118, 0
        %v3204 = vsel %vm662, %v3119, 0
        %v3207 = vsel %vm662, %v3120, 0
        %v3210 = vsel %vm662, %v3121, 0
        %v3213 = vsel %vm662, %v3122, 0
        %v3216 = vsel %vm662, %v3123, 0
        %v3219 = vsel %vm662, %v3124, 0
        %v3222 = vsel %vm662, %v3125, 0
        %v3225 = vsel %vm662, %v3126, 0
        %v3228 = vsel %vm662, %v3127, 0
        %v3231 = vsel %vm662, %v3128, 0
        %v3234 = vsel %vm662, %v3129, 0
        %v3237 = vsel %vm662, %v3130, 0
        %v3240 = vsel %vm662, %v3131, 0
        %v3243 = vsel %vm771, %v3133, 0
        %3245 = vmatprep.subr.mxu0 0.0
        %3246 = vmatpush1.msra.mxu0 %v3243
        %3247 = vmatprep.subr.mxu0 0.0
        %3248 = vmatpush1.msra.mxu0 0.0
        %3249 = vmatprep.subr.mxu0 0.0
        %3250 = vmatpush1.msra.mxu0 0.0
        %3251 = vmatprep.subr.mxu0 0.0
        %3252 = vmatpush1.msra.mxu0 0.0
        %3253 = vmatprep.subr.mxu0 0.0
        %3254 = vmatpush1.msra.mxu0 0.0
        %3255 = vmatprep.subr.mxu0 0.0
        %3256 = vmatpush1.msra.mxu0 0.0
        %3257 = vmatprep.subr.mxu0 0.0
        %3258 = vmatpush1.msra.mxu0 0.0
        %3259 = vmatprep.subr.mxu0 0.0
        %3260 = vmatpush1.msra.mxu0 0.0
        %3261 = vmatprep.subr.mxu0 0.0
        %3262 = vmatpush1.msra.mxu0 0.0
        %3263 = vmatprep.subr.mxu0 0.0
        %3264 = vmatpush1.msra.mxu0 0.0
        %3265 = vmatprep.subr.mxu0 0.0
        %3266 = vmatpush1.msra.mxu0 0.0
        %3267 = vmatprep.subr.mxu0 0.0
        %3268 = vmatpush1.msra.mxu0 0.0
        %3269 = vmatprep.subr.mxu0 0.0
        %3270 = vmatpush1.msra.mxu0 0.0
        %3271 = vmatprep.subr.mxu0 0.0
        %3272 = vmatpush1.msra.mxu0 0.0
        %3273 = vmatprep.subr.mxu0 0.0
        %3274 = vmatpush1.msra.mxu0 0.0
        %3275 = vmatprep.subr.mxu0 0.0
        %3276 = vmatpush1.msra.mxu0 0.0
        %3277 = vmatprep.subr.mxu0 0.0
        %3278 = vmatpush1.msra.mxu0 0.0
        %3279 = vmatprep.subr.mxu0 0.0
        %3280 = vmatpush1.msra.mxu0 0.0
        %3281 = vmatprep.subr.mxu0 0.0
        %3282 = vmatpush1.msra.mxu0 0.0
        %3283 = vmatprep.subr.mxu0 0.0
        %3284 = vmatpush1.msra.mxu0 0.0
        %3285 = vmatprep.subr.mxu0 0.0
        %3286 = vmatpush1.msra.mxu0 0.0
        %3287 = vmatprep.subr.mxu0 0.0
        %3288 = vmatpush1.msra.mxu0 0.0
        %3289 = vmatprep.subr.mxu0 0.0
        %3290 = vmatpush1.msra.mxu0 0.0
        %3291 = vmatprep.subr.mxu0 0.0
        %3292 = vmatpush1.msra.mxu0 0.0
        %3293 = vmatprep.subr.mxu0 0.0
        %3294 = vmatpush1.msra.mxu0 0.0
        %3295 = vmatprep.subr.mxu0 0.0
        %3296 = vmatpush1.msra.mxu0 0.0
        %3297 = vmatprep.subr.mxu0 0.0
        %3298 = vmatpush1.msra.mxu0 0.0
        %3299 = vmatprep.subr.mxu0 0.0
        %3300 = vmatpush1.msra.mxu0 0.0
        %3301 = vmatprep.subr.mxu0 0.0
        %3302 = vmatpush1.msra.mxu0 0.0
        %3303 = vmatprep.subr.mxu0 0.0
        %3304 = vmatpush1.msra.mxu0 0.0
        %3305 = vmatprep.subr.mxu0 0.0
        %3306 = vmatpush1.msra.mxu0 0.0
        %3307 = vmatprep.subr.mxu0 0.0
        %3308 = vmatpush1.msra.mxu0 0.0
        %3309 = vmatprep.mubr.f32.mxu0 0.0
        %3310 = vmatmul.mubr.f32.gmra.mrb[0].mxu0 %v3135
        %v3311 = vpop.f32.mrb[0].mxu0
        %v3312 = vadd.f32 0.0, %v3311
        %v3313 = vpop.f32.mrb[0].mxu0
        %3314 = vmatprep.mubr.f32.mxu0 0.0
        %3315 = vmatmul.mubr.f32.gmra.mrb[0].mxu0 %v3138
        %v3316 = vpop.f32.mrb[0].mxu0
        %v3317 = vadd.f32 0.0, %v3316
        %v3318 = vpop.f32.mrb[0].mxu0
        %3319 = vmatprep.mubr.f32.mxu0 0.0
        %3320 = vmatmul.mubr.f32.gmra.mrb[0].mxu0 %v3141
        %v3321 = vpop.f32.mrb[0].mxu0
        %v3322 = vadd.f32 0.0, %v3321
        %v3323 = vpop.f32.mrb[0].mxu0
        %3324 = vmatprep.mubr.f32.mxu0 0.0
        %3325 = vmatmul.mubr.f32.gmra.mrb[0].mxu0 %v3144
        %v3326 = vpop.f32.mrb[0].mxu0
        %v3327 = vadd.f32 0.0, %v3326
        %v3328 = vpop.f32.mrb[0].mxu0
        %3329 = vmatprep.mubr.f32.mxu0 0.0
        %3330 = vmatmul.mubr.f32.gmra.mrb[0].mxu0 %v3147
        %v3331 = vpop.f32.mrb[0].mxu0
        %v3332 = vadd.f32 0.0, %v3331
        %v3333 = vpop.f32.mrb[0].mxu0
        %3334 = vmatprep.mubr.f32.mxu0 0.0
        %3335 = vmatmul.mubr.f32.gmra.mrb[0].mxu0 %v3150
        %v3336 = vpop.f32.mrb[0].mxu0
        %v3337 = vadd.f32 0.0, %v3336
        %v3338 = vpop.f32.mrb[0].mxu0
        %3339 = vmatprep.mubr.f32.mxu0 0.0
        %3340 = vmatmul.mubr.f32.gmra.mrb[0].mxu0 %v3153
        %v3341 = vpop.f32.mrb[0].mxu0
        %v3342 = vadd.f32 0.0, %v3341
        %v3343 = vpop.f32.mrb[0].mxu0
        %3344 = vmatprep.mubr.f32.mxu0 0.0
        %3345 = vmatmul.mubr.f32.gmra.mrb[0].mxu0 %v3156
        %v3346 = vpop.f32.mrb[0].mxu0
        %v3347 = vadd.f32 0.0, %v3346
        %v3348 = vpop.f32.mrb[0].mxu0
        %3349 = vmatprep.mubr.f32.mxu0 0.0
        %3350 = vmatmul.mubr.f32.gmra.mrb[0].mxu0 %v3159
        %v3351 = vpop.f32.mrb[0].mxu0
        %v3352 = vadd.f32 0.0, %v3351
        %v3353 = vpop.f32.mrb[0].mxu0
        %3354 = vmatprep.mubr.f32.mxu0 0.0
        %3355 = vmatmul.mubr.f32.gmra.mrb[0].mxu0 %v3162
        %v3356 = vpop.f32.mrb[0].mxu0
        %v3357 = vadd.f32 0.0, %v3356
        %v3358 = vpop.f32.mrb[0].mxu0
        %3359 = vmatprep.mubr.f32.mxu0 0.0
        %3360 = vmatmul.mubr.f32.gmra.mrb[0].mxu0 %v3165
        %v3361 = vpop.f32.mrb[0].mxu0
        %v3362 = vadd.f32 0.0, %v3361
        %v3363 = vpop.f32.mrb[0].mxu0
        %3364 = vmatprep.mubr.f32.mxu0 0.0
        %3365 = vmatmul.mubr.f32.gmra.mrb[0].mxu0 %v3168
        %v3366 = vpop.f32.mrb[0].mxu0
        %v3367 = vadd.f32 0.0, %v3366
        %v3368 = vpop.f32.mrb[0].mxu0
        %3369 = vmatprep.mubr.f32.mxu0 0.0
        %3370 = vmatmul.mubr.f32.gmra.mrb[0].mxu0 %v3171
        %v3371 = vpop.f32.mrb[0].mxu0
        %v3372 = vadd.f32 0.0, %v3371
        %v3373 = vpop.f32.mrb[0].mxu0
        %3374 = vmatprep.mubr.f32.mxu0 0.0
        %3375 = vmatmul.mubr.f32.gmra.mrb[0].mxu0 %v3174
        %v3376 = vpop.f32.mrb[0].mxu0
        %v3377 = vadd.f32 0.0, %v3376
        %v3378 = vpop.f32.mrb[0].mxu0
        %3379 = vmatprep.mubr.f32.mxu0 0.0
        %3380 = vmatmul.mubr.f32.gmra.mrb[0].mxu0 %v3177
        %v3381 = vpop.f32.mrb[0].mxu0
        %v3382 = vadd.f32 0.0, %v3381
        %v3383 = vpop.f32.mrb[0].mxu0
        %3384 = vmatprep.mubr.f32.mxu0 0.0
        %3385 = vmatmul.mubr.f32.gmra.mrb[0].mxu0 %v3180
        %v3386 = vpop.f32.mrb[0].mxu0
        %v3387 = vadd.f32 0.0, %v3386
        %v3388 = vpop.f32.mrb[0].mxu0
        %3389 = vmatprep.mubr.f32.mxu0 0.0
        %3390 = vmatmul.mubr.f32.gmra.mrb[0].mxu0 %v3183
        %v3391 = vpop.f32.mrb[0].mxu0
        %v3392 = vadd.f32 0.0, %v3391
        %v3393 = vpop.f32.mrb[0].mxu0
        %3394 = vmatprep.mubr.f32.mxu0 0.0
        %3395 = vmatmul.mubr.f32.gmra.mrb[0].mxu0 %v3186
        %v3396 = vpop.f32.mrb[0].mxu0
        %v3397 = vadd.f32 0.0, %v3396
        %v3398 = vpop.f32.mrb[0].mxu0
        %3399 = vmatprep.mubr.f32.mxu0 0.0
        %3400 = vmatmul.mubr.f32.gmra.mrb[0].mxu0 %v3189
        %v3401 = vpop.f32.mrb[0].mxu0
        %v3402 = vadd.f32 0.0, %v3401
        %v3403 = vpop.f32.mrb[0].mxu0
        %3404 = vmatprep.mubr.f32.mxu0 0.0
        %3405 = vmatmul.mubr.f32.gmra.mrb[0].mxu0 %v3192
        %v3406 = vpop.f32.mrb[0].mxu0
        %v3407 = vadd.f32 0.0, %v3406
        %v3408 = vpop.f32.mrb[0].mxu0
        %3409 = vmatprep.mubr.f32.mxu0 0.0
        %3410 = vmatmul.mubr.f32.gmra.mrb[0].mxu0 %v3195
        %v3411 = vpop.f32.mrb[0].mxu0
        %v3412 = vadd.f32 0.0, %v3411
        %v3413 = vpop.f32.mrb[0].mxu0
        %3414 = vmatprep.mubr.f32.mxu0 0.0
        %3415 = vmatmul.mubr.f32.gmra.mrb[0].mxu0 %v3198
        %v3416 = vpop.f32.mrb[0].mxu0
        %v3417 = vadd.f32 0.0, %v3416
        %v3418 = vpop.f32.mrb[0].mxu0
        %3419 = vmatprep.mubr.f32.mxu0 0.0
        %3420 = vmatmul.mubr.f32.gmra.mrb[0].mxu0 %v3201
        %v3421 = vpop.f32.mrb[0].mxu0
        %v3422 = vadd.f32 0.0, %v3421
        %v3423 = vpop.f32.mrb[0].mxu0
        %3424 = vmatprep.mubr.f32.mxu0 0.0
        %3425 = vmatmul.mubr.f32.gmra.mrb[0].mxu0 %v3204
        %v3426 = vpop.f32.mrb[0].mxu0
        %v3427 = vadd.f32 0.0, %v3426
        %v3428 = vpop.f32.mrb[0].mxu0
        %3429 = vmatprep.mubr.f32.mxu0 0.0
        %3430 = vmatmul.mubr.f32.gmra.mrb[0].mxu0 %v3207
        %v3431 = vpop.f32.mrb[0].mxu0
        %v3432 = vadd.f32 0.0, %v3431
        %v3433 = vpop.f32.mrb[0].mxu0
        %3434 = vmatprep.mubr.f32.mxu0 0.0
        %3435 = vmatmul.mubr.f32.gmra.mrb[0].mxu0 %v3210
        %v3436 = vpop.f32.mrb[0].mxu0
        %v3437 = vadd.f32 0.0, %v3436
        %v3438 = vpop.f32.mrb[0].mxu0
        %3439 = vmatprep.mubr.f32.mxu0 0.0
        %3440 = vmatmul.mubr.f32.gmra.mrb[0].mxu0 %v3213
        %v3441 = vpop.f32.mrb[0].mxu0
        %v3442 = vadd.f32 0.0, %v3441
        %v3443 = vpop.f32.mrb[0].mxu0
        %3444 = vmatprep.mubr.f32.mxu0 0.0
        %3445 = vmatmul.mubr.f32.gmra.mrb[0].mxu0 %v3216
        %v3446 = vpop.f32.mrb[0].mxu0
        %v3447 = vadd.f32 0.0, %v3446
        %v3448 = vpop.f32.mrb[0].mxu0
        %3449 = vmatprep.mubr.f32.mxu0 0.0
        %3450 = vmatmul.mubr.f32.gmra.mrb[0].mxu0 %v3219
        %v3451 = vpop.f32.mrb[0].mxu0
        %v3452 = vadd.f32 0.0, %v3451
        %v3453 = vpop.f32.mrb[0].mxu0
        %3454 = vmatprep.mubr.f32.mxu0 0.0
        %3455 = vmatmul.mubr.f32.gmra.mrb[0].mxu0 %v3222
        %v3456 = vpop.f32.mrb[0].mxu0
        %v3457 = vadd.f32 0.0, %v3456
        %v3458 = vpop.f32.mrb[0].mxu0
        %3459 = vmatprep.mubr.f32.mxu0 0.0
        %3460 = vmatmul.mubr.f32.gmra.mrb[0].mxu0 %v3225
        %v3461 = vpop.f32.mrb[0].mxu0
        %v3462 = vadd.f32 0.0, %v3461
        %v3463 = vpop.f32.mrb[0].mxu0
        %3464 = vmatprep.mubr.f32.mxu0 0.0
        %3465 = vmatmul.mubr.f32.gmra.mrb[0].mxu0 %v3228
        %v3466 = vpop.f32.mrb[0].mxu0
        %v3467 = vadd.f32 0.0, %v3466
        %v3468 = vpop.f32.mrb[0].mxu0
        %3469 = vmatprep.mubr.f32.mxu0 0.0
        %3470 = vmatmul.mubr.f32.gmra.mrb[0].mxu0 %v3231
        %v3471 = vpop.f32.mrb[0].mxu0
        %v3472 = vadd.f32 0.0, %v3471
        %v3473 = vpop.f32.mrb[0].mxu0
        %3474 = vmatprep.mubr.f32.mxu0 0.0
        %3475 = vmatmul.mubr.f32.gmra.mrb[0].mxu0 %v3234
        %v3476 = vpop.f32.mrb[0].mxu0
        %v3477 = vadd.f32 0.0, %v3476
        %v3478 = vpop.f32.mrb[0].mxu0
        %3479 = vmatprep.mubr.f32.mxu0 0.0
        %3480 = vmatmul.mubr.f32.gmra.mrb[0].mxu0 %v3237
        %v3481 = vpop.f32.mrb[0].mxu0
        %v3482 = vadd.f32 0.0, %v3481
        %v3483 = vpop.f32.mrb[0].mxu0
        %3484 = vmatprep.mubr.f32.mxu0 0.0
        %3485 = vmatmul.mubr.f32.gmra.mrb[0].mxu0 %v3240
        %v3486 = vpop.f32.mrb[0].mxu0
        %v3487 = vadd.f32 0.0, %v3486
        %v3488 = vpop.f32.mrb[0].mxu0
        %3489 = vdwg.mxu0
        %v3490 = vadd.f32 %v3060, %v3312
        %v3491 = vadd.f32 %v3061, %v3317
        %v3492 = vadd.f32 %v3062, %v3322
        %v3493 = vadd.f32 %v3063, %v3327
        %v3494 = vadd.f32 %v3064, %v3332
        %v3495 = vadd.f32 %v3065, %v3337
        %v3496 = vadd.f32 %v3066, %v3342
        %v3497 = vadd.f32 %v3067, %v3347
        %v3498 = vadd.f32 %v3068, %v3352
        %v3499 = vadd.f32 %v3069, %v3357
        %v3500 = vadd.f32 %v3070, %v3362
        %v3501 = vadd.f32 %v3071, %v3367
        %v3502 = vadd.f32 %v3072, %v3372
        %v3503 = vadd.f32 %v3073, %v3377
        %v3504 = vadd.f32 %v3074, %v3382
        %v3505 = vadd.f32 %v3075, %v3387
        %v3506 = vadd.f32 %v3076, %v3392
        %v3507 = vadd.f32 %v3077, %v3397
        %v3508 = vadd.f32 %v3078, %v3402
        %v3509 = vadd.f32 %v3079, %v3407
        %v3510 = vadd.f32 %v3080, %v3412
        %v3511 = vadd.f32 %v3081, %v3417
        %v3512 = vadd.f32 %v3082, %v3422
        %v3513 = vadd.f32 %v3083, %v3427
        %v3514 = vadd.f32 %v3084, %v3432
        %v3515 = vadd.f32 %v3085, %v3437
        %v3516 = vadd.f32 %v3086, %v3442
        %v3517 = vadd.f32 %v3087, %v3447
        %v3518 = vadd.f32 %v3088, %v3452
        %v3519 = vadd.f32 %v3089, %v3457
        %v3520 = vadd.f32 %v3090, %v3462
        %v3521 = vadd.f32 %v3091, %v3467
        %v3522 = vadd.f32 %v3092, %v3472
        %v3523 = vadd.f32 %v3093, %v3477
        %v3524 = vadd.f32 %v3094, %v3482
        %v3525 = vadd.f32 %v3095, %v3487
        %v3526 = vld [vmem:[%s583 + $0x25] sm:$0xff]
        %v3527 = vld [vmem:[%s583 + $0x2d] sm:$0xff]
        %v3528 = vld [vmem:[%s583 + $0x35] sm:$0xff]
        %v3529 = vld [vmem:[%s583 + $0x3d] sm:$0xff]
        %v3530 = vld [vmem:[%s583 + $0x45] sm:$0xff]
        %v3531 = vld [vmem:[%s583 + $0x4d] sm:$0xff]
        %v3532 = vld [vmem:[%s583 + $0x55] sm:$0xff]
        %v3533 = vld [vmem:[%s583 + $0x5d] sm:$0xff]
        %v3534 = vld [vmem:[%s583 + $0x65] sm:$0xff]
        %v3535 = vld [vmem:[%s583 + $0x6d] sm:$0xff]
        %v3536 = vld [vmem:[%s583 + $0x75] sm:$0xff]
        %v3537 = vld [vmem:[%s583 + $0x7d] sm:$0xff]
        %v3538 = vld [vmem:[%s583 + $0x85] sm:$0xff]
        %v3539 = vld [vmem:[%s583 + $0x8d] sm:$0xff]
        %v3540 = vld [vmem:[%s583 + $0x95] sm:$0xff]
        %v3541 = vld [vmem:[%s583 + $0x9d] sm:$0xff]
        %v3542 = vld [vmem:[%s583 + $0xa5] sm:$0xff]
        %v3543 = vld [vmem:[%s583 + $0xad] sm:$0xff]
        %v3544 = vld [vmem:[%s583 + $0xb5] sm:$0xff]
        %v3545 = vld [vmem:[%s583 + $0xbd] sm:$0xff]
        %v3546 = vld [vmem:[%s583 + $0xc5] sm:$0xff]
        %v3547 = vld [vmem:[%s583 + $0xcd] sm:$0xff]
        %v3548 = vld [vmem:[%s583 + $0xd5] sm:$0xff]
        %v3549 = vld [vmem:[%s583 + $0xdd] sm:$0xff]
        %v3550 = vld [vmem:[%s583 + $0xe5] sm:$0xff]
        %v3551 = vld [vmem:[%s583 + $0xed] sm:$0xff]
        %v3552 = vld [vmem:[%s583 + $0xf5] sm:$0xff]
        %v3553 = vld [vmem:[%s583 + $0xfd] sm:$0xff]
        %v3554 = vld [vmem:[%s583 + $0x105] sm:$0xff]
        %v3555 = vld [vmem:[%s583 + $0x10d] sm:$0xff]
        %v3556 = vld [vmem:[%s583 + $0x115] sm:$0xff]
        %v3557 = vld [vmem:[%s583 + $0x11d] sm:$0xff]
        %v3558 = vld [vmem:[%s583 + $0x125] sm:$0xff]
        %v3559 = vld [vmem:[%s583 + $0x12d] sm:$0xff]
        %v3560 = vld [vmem:[%s583 + $0x135] sm:$0xff]
        %v3561 = vld [vmem:[%s583 + $0x13d] sm:$0xff]
        %s3562 = scalar_lea.vmem %s1, 28
        %v3563 = vld [vmem:[%s3562] sm:$0x7]
        %v3565 = vsel %vm662, %v3526, 0
        %v3568 = vsel %vm662, %v3527, 0
        %v3571 = vsel %vm662, %v3528, 0
        %v3574 = vsel %vm662, %v3529, 0
        %v3577 = vsel %vm662, %v3530, 0
        %v3580 = vsel %vm662, %v3531, 0
        %v3583 = vsel %vm662, %v3532, 0
        %v3586 = vsel %vm662, %v3533, 0
        %v3589 = vsel %vm662, %v3534, 0
        %v3592 = vsel %vm662, %v3535, 0
        %v3595 = vsel %vm662, %v3536, 0
        %v3598 = vsel %vm662, %v3537, 0
        %v3601 = vsel %vm662, %v3538, 0
        %v3604 = vsel %vm662, %v3539, 0
        %v3607 = vsel %vm662, %v3540, 0
        %v3610 = vsel %vm662, %v3541, 0
        %v3613 = vsel %vm662, %v3542, 0
        %v3616 = vsel %vm662, %v3543, 0
        %v3619 = vsel %vm662, %v3544, 0
        %v3622 = vsel %vm662, %v3545, 0
        %v3625 = vsel %vm662, %v3546, 0
        %v3628 = vsel %vm662, %v3547, 0
        %v3631 = vsel %vm662, %v3548, 0
        %v3634 = vsel %vm662, %v3549, 0
        %v3637 = vsel %vm662, %v3550, 0
        %v3640 = vsel %vm662, %v3551, 0
        %v3643 = vsel %vm662, %v3552, 0
        %v3646 = vsel %vm662, %v3553, 0
        %v3649 = vsel %vm662, %v3554, 0
        %v3652 = vsel %vm662, %v3555, 0
        %v3655 = vsel %vm662, %v3556, 0
        %v3658 = vsel %vm662, %v3557, 0
        %v3661 = vsel %vm662, %v3558, 0
        %v3664 = vsel %vm662, %v3559, 0
        %v3667 = vsel %vm662, %v3560, 0
        %v3670 = vsel %vm662, %v3561, 0
        %v3673 = vsel %vm771, %v3563, 0
        %3675 = vmatprep.subr.mxu0 0.0
        %3676 = vmatpush1.msra.mxu0 %v3673
        %3677 = vmatprep.subr.mxu0 0.0
        %3678 = vmatpush1.msra.mxu0 0.0
        %3679 = vmatprep.subr.mxu0 0.0
        %3680 = vmatpush1.msra.mxu0 0.0
        %3681 = vmatprep.subr.mxu0 0.0
        %3682 = vmatpush1.msra.mxu0 0.0
        %3683 = vmatprep.subr.mxu0 0.0
        %3684 = vmatpush1.msra.mxu0 0.0
        %3685 = vmatprep.subr.mxu0 0.0
        %3686 = vmatpush1.msra.mxu0 0.0
        %3687 = vmatprep.subr.mxu0 0.0
        %3688 = vmatpush1.msra.mxu0 0.0
        %3689 = vmatprep.subr.mxu0 0.0
        %3690 = vmatpush1.msra.mxu0 0.0
        %3691 = vmatprep.subr.mxu0 0.0
        %3692 = vmatpush1.msra.mxu0 0.0
        %3693 = vmatprep.subr.mxu0 0.0
        %3694 = vmatpush1.msra.mxu0 0.0
        %3695 = vmatprep.subr.mxu0 0.0
        %3696 = vmatpush1.msra.mxu0 0.0
        %3697 = vmatprep.subr.mxu0 0.0
        %3698 = vmatpush1.msra.mxu0 0.0
        %3699 = vmatprep.subr.mxu0 0.0
        %3700 = vmatpush1.msra.mxu0 0.0
        %3701 = vmatprep.subr.mxu0 0.0
        %3702 = vmatpush1.msra.mxu0 0.0
        %3703 = vmatprep.subr.mxu0 0.0
        %3704 = vmatpush1.msra.mxu0 0.0
        %3705 = vmatprep.subr.mxu0 0.0
        %3706 = vmatpush1.msra.mxu0 0.0
        %3707 = vmatprep.subr.mxu0 0.0
        %3708 = vmatpush1.msra.mxu0 0.0
        %3709 = vmatprep.subr.mxu0 0.0
        %3710 = vmatpush1.msra.mxu0 0.0
        %3711 = vmatprep.subr.mxu0 0.0
        %3712 = vmatpush1.msra.mxu0 0.0
        %3713 = vmatprep.subr.mxu0 0.0
        %3714 = vmatpush1.msra.mxu0 0.0
        %3715 = vmatprep.subr.mxu0 0.0
        %3716 = vmatpush1.msra.mxu0 0.0
        %3717 = vmatprep.subr.mxu0 0.0
        %3718 = vmatpush1.msra.mxu0 0.0
        %3719 = vmatprep.subr.mxu0 0.0
        %3720 = vmatpush1.msra.mxu0 0.0
        %3721 = vmatprep.subr.mxu0 0.0
        %3722 = vmatpush1.msra.mxu0 0.0
        %3723 = vmatprep.subr.mxu0 0.0
        %3724 = vmatpush1.msra.mxu0 0.0
        %3725 = vmatprep.subr.mxu0 0.0
        %3726 = vmatpush1.msra.mxu0 0.0
        %3727 = vmatprep.subr.mxu0 0.0
        %3728 = vmatpush1.msra.mxu0 0.0
        %3729 = vmatprep.subr.mxu0 0.0
        %3730 = vmatpush1.msra.mxu0 0.0
        %3731 = vmatprep.subr.mxu0 0.0
        %3732 = vmatpush1.msra.mxu0 0.0
        %3733 = vmatprep.subr.mxu0 0.0
        %3734 = vmatpush1.msra.mxu0 0.0
        %3735 = vmatprep.subr.mxu0 0.0
        %3736 = vmatpush1.msra.mxu0 0.0
        %3737 = vmatprep.subr.mxu0 0.0
        %3738 = vmatpush1.msra.mxu0 0.0
        %3739 = vmatprep.mubr.f32.mxu0 0.0
        %3740 = vmatmul.mubr.f32.gmra.mrb[0].mxu0 %v3565
        %v3741 = vpop.f32.mrb[0].mxu0
        %v3742 = vadd.f32 0.0, %v3741
        %v3743 = vpop.f32.mrb[0].mxu0
        %3744 = vmatprep.mubr.f32.mxu0 0.0
        %3745 = vmatmul.mubr.f32.gmra.mrb[0].mxu0 %v3568
        %v3746 = vpop.f32.mrb[0].mxu0
        %v3747 = vadd.f32 0.0, %v3746
        %v3748 = vpop.f32.mrb[0].mxu0
        %3749 = vmatprep.mubr.f32.mxu0 0.0
        %3750 = vmatmul.mubr.f32.gmra.mrb[0].mxu0 %v3571
        %v3751 = vpop.f32.mrb[0].mxu0
        %v3752 = vadd.f32 0.0, %v3751
        %v3753 = vpop.f32.mrb[0].mxu0
        %3754 = vmatprep.mubr.f32.mxu0 0.0
        %3755 = vmatmul.mubr.f32.gmra.mrb[0].mxu0 %v3574
        %v3756 = vpop.f32.mrb[0].mxu0
        %v3757 = vadd.f32 0.0, %v3756
        %v3758 = vpop.f32.mrb[0].mxu0
        %3759 = vmatprep.mubr.f32.mxu0 0.0
        %3760 = vmatmul.mubr.f32.gmra.mrb[0].mxu0 %v3577
        %v3761 = vpop.f32.mrb[0].mxu0
        %v3762 = vadd.f32 0.0, %v3761
        %v3763 = vpop.f32.mrb[0].mxu0
        %3764 = vmatprep.mubr.f32.mxu0 0.0
        %3765 = vmatmul.mubr.f32.gmra.mrb[0].mxu0 %v3580
        %v3766 = vpop.f32.mrb[0].mxu0
        %v3767 = vadd.f32 0.0, %v3766
        %v3768 = vpop.f32.mrb[0].mxu0
        %3769 = vmatprep.mubr.f32.mxu0 0.0
        %3770 = vmatmul.mubr.f32.gmra.mrb[0].mxu0 %v3583
        %v3771 = vpop.f32.mrb[0].mxu0
        %v3772 = vadd.f32 0.0, %v3771
        %v3773 = vpop.f32.mrb[0].mxu0
        %3774 = vmatprep.mubr.f32.mxu0 0.0
        %3775 = vmatmul.mubr.f32.gmra.mrb[0].mxu0 %v3586
        %v3776 = vpop.f32.mrb[0].mxu0
        %v3777 = vadd.f32 0.0, %v3776
        %v3778 = vpop.f32.mrb[0].mxu0
        %3779 = vmatprep.mubr.f32.mxu0 0.0
        %3780 = vmatmul.mubr.f32.gmra.mrb[0].mxu0 %v3589
        %v3781 = vpop.f32.mrb[0].mxu0
        %v3782 = vadd.f32 0.0, %v3781
        %v3783 = vpop.f32.mrb[0].mxu0
        %3784 = vmatprep.mubr.f32.mxu0 0.0
        %3785 = vmatmul.mubr.f32.gmra.mrb[0].mxu0 %v3592
        %v3786 = vpop.f32.mrb[0].mxu0
        %v3787 = vadd.f32 0.0, %v3786
        %v3788 = vpop.f32.mrb[0].mxu0
        %3789 = vmatprep.mubr.f32.mxu0 0.0
        %3790 = vmatmul.mubr.f32.gmra.mrb[0].mxu0 %v3595
        %v3791 = vpop.f32.mrb[0].mxu0
        %v3792 = vadd.f32 0.0, %v3791
        %v3793 = vpop.f32.mrb[0].mxu0
        %3794 = vmatprep.mubr.f32.mxu0 0.0
        %3795 = vmatmul.mubr.f32.gmra.mrb[0].mxu0 %v3598
        %v3796 = vpop.f32.mrb[0].mxu0
        %v3797 = vadd.f32 0.0, %v3796
        %v3798 = vpop.f32.mrb[0].mxu0
        %3799 = vmatprep.mubr.f32.mxu0 0.0
        %3800 = vmatmul.mubr.f32.gmra.mrb[0].mxu0 %v3601
        %v3801 = vpop.f32.mrb[0].mxu0
        %v3802 = vadd.f32 0.0, %v3801
        %v3803 = vpop.f32.mrb[0].mxu0
        %3804 = vmatprep.mubr.f32.mxu0 0.0
        %3805 = vmatmul.mubr.f32.gmra.mrb[0].mxu0 %v3604
        %v3806 = vpop.f32.mrb[0].mxu0
        %v3807 = vadd.f32 0.0, %v3806
        %v3808 = vpop.f32.mrb[0].mxu0
        %3809 = vmatprep.mubr.f32.mxu0 0.0
        %3810 = vmatmul.mubr.f32.gmra.mrb[0].mxu0 %v3607
        %v3811 = vpop.f32.mrb[0].mxu0
        %v3812 = vadd.f32 0.0, %v3811
        %v3813 = vpop.f32.mrb[0].mxu0
        %3814 = vmatprep.mubr.f32.mxu0 0.0
        %3815 = vmatmul.mubr.f32.gmra.mrb[0].mxu0 %v3610
        %v3816 = vpop.f32.mrb[0].mxu0
        %v3817 = vadd.f32 0.0, %v3816
        %v3818 = vpop.f32.mrb[0].mxu0
        %3819 = vmatprep.mubr.f32.mxu0 0.0
        %3820 = vmatmul.mubr.f32.gmra.mrb[0].mxu0 %v3613
        %v3821 = vpop.f32.mrb[0].mxu0
        %v3822 = vadd.f32 0.0, %v3821
        %v3823 = vpop.f32.mrb[0].mxu0
        %3824 = vmatprep.mubr.f32.mxu0 0.0
        %3825 = vmatmul.mubr.f32.gmra.mrb[0].mxu0 %v3616
        %v3826 = vpop.f32.mrb[0].mxu0
        %v3827 = vadd.f32 0.0, %v3826
        %v3828 = vpop.f32.mrb[0].mxu0
        %3829 = vmatprep.mubr.f32.mxu0 0.0
        %3830 = vmatmul.mubr.f32.gmra.mrb[0].mxu0 %v3619
        %v3831 = vpop.f32.mrb[0].mxu0
        %v3832 = vadd.f32 0.0, %v3831
        %v3833 = vpop.f32.mrb[0].mxu0
        %3834 = vmatprep.mubr.f32.mxu0 0.0
        %3835 = vmatmul.mubr.f32.gmra.mrb[0].mxu0 %v3622
        %v3836 = vpop.f32.mrb[0].mxu0
        %v3837 = vadd.f32 0.0, %v3836
        %v3838 = vpop.f32.mrb[0].mxu0
        %3839 = vmatprep.mubr.f32.mxu0 0.0
        %3840 = vmatmul.mubr.f32.gmra.mrb[0].mxu0 %v3625
        %v3841 = vpop.f32.mrb[0].mxu0
        %v3842 = vadd.f32 0.0, %v3841
        %v3843 = vpop.f32.mrb[0].mxu0
        %3844 = vmatprep.mubr.f32.mxu0 0.0
        %3845 = vmatmul.mubr.f32.gmra.mrb[0].mxu0 %v3628
        %v3846 = vpop.f32.mrb[0].mxu0
        %v3847 = vadd.f32 0.0, %v3846
        %v3848 = vpop.f32.mrb[0].mxu0
        %3849 = vmatprep.mubr.f32.mxu0 0.0
        %3850 = vmatmul.mubr.f32.gmra.mrb[0].mxu0 %v3631
        %v3851 = vpop.f32.mrb[0].mxu0
        %v3852 = vadd.f32 0.0, %v3851
        %v3853 = vpop.f32.mrb[0].mxu0
        %3854 = vmatprep.mubr.f32.mxu0 0.0
        %3855 = vmatmul.mubr.f32.gmra.mrb[0].mxu0 %v3634
        %v3856 = vpop.f32.mrb[0].mxu0
        %v3857 = vadd.f32 0.0, %v3856
        %v3858 = vpop.f32.mrb[0].mxu0
        %3859 = vmatprep.mubr.f32.mxu0 0.0
        %3860 = vmatmul.mubr.f32.gmra.mrb[0].mxu0 %v3637
        %v3861 = vpop.f32.mrb[0].mxu0
        %v3862 = vadd.f32 0.0, %v3861
        %v3863 = vpop.f32.mrb[0].mxu0
        %3864 = vmatprep.mubr.f32.mxu0 0.0
        %3865 = vmatmul.mubr.f32.gmra.mrb[0].mxu0 %v3640
        %v3866 = vpop.f32.mrb[0].mxu0
        %v3867 = vadd.f32 0.0, %v3866
        %v3868 = vpop.f32.mrb[0].mxu0
        %3869 = vmatprep.mubr.f32.mxu0 0.0
        %3870 = vmatmul.mubr.f32.gmra.mrb[0].mxu0 %v3643
        %v3871 = vpop.f32.mrb[0].mxu0
        %v3872 = vadd.f32 0.0, %v3871
        %v3873 = vpop.f32.mrb[0].mxu0
        %3874 = vmatprep.mubr.f32.mxu0 0.0
        %3875 = vmatmul.mubr.f32.gmra.mrb[0].mxu0 %v3646
        %v3876 = vpop.f32.mrb[0].mxu0
        %v3877 = vadd.f32 0.0, %v3876
        %v3878 = vpop.f32.mrb[0].mxu0
        %3879 = vmatprep.mubr.f32.mxu0 0.0
        %3880 = vmatmul.mubr.f32.gmra.mrb[0].mxu0 %v3649
        %v3881 = vpop.f32.mrb[0].mxu0
        %v3882 = vadd.f32 0.0, %v3881
        %v3883 = vpop.f32.mrb[0].mxu0
        %3884 = vmatprep.mubr.f32.mxu0 0.0
        %3885 = vmatmul.mubr.f32.gmra.mrb[0].mxu0 %v3652
        %v3886 = vpop.f32.mrb[0].mxu0
        %v3887 = vadd.f32 0.0, %v3886
        %v3888 = vpop.f32.mrb[0].mxu0
        %3889 = vmatprep.mubr.f32.mxu0 0.0
        %3890 = vmatmul.mubr.f32.gmra.mrb[0].mxu0 %v3655
        %v3891 = vpop.f32.mrb[0].mxu0
        %v3892 = vadd.f32 0.0, %v3891
        %v3893 = vpop.f32.mrb[0].mxu0
        %3894 = vmatprep.mubr.f32.mxu0 0.0
        %3895 = vmatmul.mubr.f32.gmra.mrb[0].mxu0 %v3658
        %v3896 = vpop.f32.mrb[0].mxu0
        %v3897 = vadd.f32 0.0, %v3896
        %v3898 = vpop.f32.mrb[0].mxu0
        %3899 = vmatprep.mubr.f32.mxu0 0.0
        %3900 = vmatmul.mubr.f32.gmra.mrb[0].mxu0 %v3661
        %v3901 = vpop.f32.mrb[0].mxu0
        %v3902 = vadd.f32 0.0, %v3901
        %v3903 = vpop.f32.mrb[0].mxu0
        %3904 = vmatprep.mubr.f32.mxu0 0.0
        %3905 = vmatmul.mubr.f32.gmra.mrb[0].mxu0 %v3664
        %v3906 = vpop.f32.mrb[0].mxu0
        %v3907 = vadd.f32 0.0, %v3906
        %v3908 = vpop.f32.mrb[0].mxu0
        %3909 = vmatprep.mubr.f32.mxu0 0.0
        %3910 = vmatmul.mubr.f32.gmra.mrb[0].mxu0 %v3667
        %v3911 = vpop.f32.mrb[0].mxu0
        %v3912 = vadd.f32 0.0, %v3911
        %v3913 = vpop.f32.mrb[0].mxu0
        %3914 = vmatprep.mubr.f32.mxu0 0.0
        %3915 = vmatmul.mubr.f32.gmra.mrb[0].mxu0 %v3670
        %v3916 = vpop.f32.mrb[0].mxu0
        %v3917 = vadd.f32 0.0, %v3916
        %v3918 = vpop.f32.mrb[0].mxu0
        %3919 = vdwg.mxu0
        %v3920 = vadd.f32 %v3490, %v3742
        %v3921 = vadd.f32 %v3491, %v3747
        %v3922 = vadd.f32 %v3492, %v3752
        %v3923 = vadd.f32 %v3493, %v3757
        %v3924 = vadd.f32 %v3494, %v3762
        %v3925 = vadd.f32 %v3495, %v3767
        %v3926 = vadd.f32 %v3496, %v3772
        %v3927 = vadd.f32 %v3497, %v3777
        %v3928 = vadd.f32 %v3498, %v3782
        %v3929 = vadd.f32 %v3499, %v3787
        %v3930 = vadd.f32 %v3500, %v3792
        %v3931 = vadd.f32 %v3501, %v3797
        %v3932 = vadd.f32 %v3502, %v3802
        %v3933 = vadd.f32 %v3503, %v3807
        %v3934 = vadd.f32 %v3504, %v3812
        %v3935 = vadd.f32 %v3505, %v3817
        %v3936 = vadd.f32 %v3506, %v3822
        %v3937 = vadd.f32 %v3507, %v3827
        %v3938 = vadd.f32 %v3508, %v3832
        %v3939 = vadd.f32 %v3509, %v3837
        %v3940 = vadd.f32 %v3510, %v3842
        %v3941 = vadd.f32 %v3511, %v3847
        %v3942 = vadd.f32 %v3512, %v3852
        %v3943 = vadd.f32 %v3513, %v3857
        %v3944 = vadd.f32 %v3514, %v3862
        %v3945 = vadd.f32 %v3515, %v3867
        %v3946 = vadd.f32 %v3516, %v3872
        %v3947 = vadd.f32 %v3517, %v3877
        %v3948 = vadd.f32 %v3518, %v3882
        %v3949 = vadd.f32 %v3519, %v3887
        %v3950 = vadd.f32 %v3520, %v3892
        %v3951 = vadd.f32 %v3521, %v3897
        %v3952 = vadd.f32 %v3522, %v3902
        %v3953 = vadd.f32 %v3523, %v3907
        %v3954 = vadd.f32 %v3524, %v3912
        %v3955 = vadd.f32 %v3525, %v3917
        %v3956 = vld [vmem:[%s583 + $0x26] sm:$0xff]
        %v3957 = vld [vmem:[%s583 + $0x2e] sm:$0xff]
        %v3958 = vld [vmem:[%s583 + $0x36] sm:$0xff]
        %v3959 = vld [vmem:[%s583 + $0x3e] sm:$0xff]
        %v3960 = vld [vmem:[%s583 + $0x46] sm:$0xff]
        %v3961 = vld [vmem:[%s583 + $0x4e] sm:$0xff]
        %v3962 = vld [vmem:[%s583 + $0x56] sm:$0xff]
        %v3963 = vld [vmem:[%s583 + $0x5e] sm:$0xff]
        %v3964 = vld [vmem:[%s583 + $0x66] sm:$0xff]
        %v3965 = vld [vmem:[%s583 + $0x6e] sm:$0xff]
        %v3966 = vld [vmem:[%s583 + $0x76] sm:$0xff]
        %v3967 = vld [vmem:[%s583 + $0x7e] sm:$0xff]
        %v3968 = vld [vmem:[%s583 + $0x86] sm:$0xff]
        %v3969 = vld [vmem:[%s583 + $0x8e] sm:$0xff]
        %v3970 = vld [vmem:[%s583 + $0x96] sm:$0xff]
        %v3971 = vld [vmem:[%s583 + $0x9e] sm:$0xff]
        %v3972 = vld [vmem:[%s583 + $0xa6] sm:$0xff]
        %v3973 = vld [vmem:[%s583 + $0xae] sm:$0xff]
        %v3974 = vld [vmem:[%s583 + $0xb6] sm:$0xff]
        %v3975 = vld [vmem:[%s583 + $0xbe] sm:$0xff]
        %v3976 = vld [vmem:[%s583 + $0xc6] sm:$0xff]
        %v3977 = vld [vmem:[%s583 + $0xce] sm:$0xff]
        %v3978 = vld [vmem:[%s583 + $0xd6] sm:$0xff]
        %v3979 = vld [vmem:[%s583 + $0xde] sm:$0xff]
        %v3980 = vld [vmem:[%s583 + $0xe6] sm:$0xff]
        %v3981 = vld [vmem:[%s583 + $0xee] sm:$0xff]
        %v3982 = vld [vmem:[%s583 + $0xf6] sm:$0xff]
        %v3983 = vld [vmem:[%s583 + $0xfe] sm:$0xff]
        %v3984 = vld [vmem:[%s583 + $0x106] sm:$0xff]
        %v3985 = vld [vmem:[%s583 + $0x10e] sm:$0xff]
        %v3986 = vld [vmem:[%s583 + $0x116] sm:$0xff]
        %v3987 = vld [vmem:[%s583 + $0x11e] sm:$0xff]
        %v3988 = vld [vmem:[%s583 + $0x126] sm:$0xff]
        %v3989 = vld [vmem:[%s583 + $0x12e] sm:$0xff]
        %v3990 = vld [vmem:[%s583 + $0x136] sm:$0xff]
        %v3991 = vld [vmem:[%s583 + $0x13e] sm:$0xff]
        %s3992 = scalar_lea.vmem %s1, 32
        %v3993 = vld [vmem:[%s3992] sm:$0x7]
        %v3995 = vsel %vm662, %v3956, 0
        %v3998 = vsel %vm662, %v3957, 0
        %v4001 = vsel %vm662, %v3958, 0
        %v4004 = vsel %vm662, %v3959, 0
        %v4007 = vsel %vm662, %v3960, 0
        %v4010 = vsel %vm662, %v3961, 0
        %v4013 = vsel %vm662, %v3962, 0
        %v4016 = vsel %vm662, %v3963, 0
        %v4019 = vsel %vm662, %v3964, 0
        %v4022 = vsel %vm662, %v3965, 0
        %v4025 = vsel %vm662, %v3966, 0
        %v4028 = vsel %vm662, %v3967, 0
        %v4031 = vsel %vm662, %v3968, 0
        %v4034 = vsel %vm662, %v3969, 0
        %v4037 = vsel %vm662, %v3970, 0
        %v4040 = vsel %vm662, %v3971, 0
        %v4043 = vsel %vm662, %v3972, 0
        %v4046 = vsel %vm662, %v3973, 0
        %v4049 = vsel %vm662, %v3974, 0
        %v4052 = vsel %vm662, %v3975, 0
        %v4055 = vsel %vm662, %v3976, 0
        %v4058 = vsel %vm662, %v3977, 0
        %v4061 = vsel %vm662, %v3978, 0
        %v4064 = vsel %vm662, %v3979, 0
        %v4067 = vsel %vm662, %v3980, 0
        %v4070 = vsel %vm662, %v3981, 0
        %v4073 = vsel %vm662, %v3982, 0
        %v4076 = vsel %vm662, %v3983, 0
        %v4079 = vsel %vm662, %v3984, 0
        %v4082 = vsel %vm662, %v3985, 0
        %v4085 = vsel %vm662, %v3986, 0
        %v4088 = vsel %vm662, %v3987, 0
        %v4091 = vsel %vm662, %v3988, 0
        %v4094 = vsel %vm662, %v3989, 0
        %v4097 = vsel %vm662, %v3990, 0
        %v4100 = vsel %vm662, %v3991, 0
        %v4103 = vsel %vm771, %v3993, 0
        %4105 = vmatprep.subr.mxu0 0.0
        %4106 = vmatpush1.msra.mxu0 %v4103
        %4107 = vmatprep.subr.mxu0 0.0
        %4108 = vmatpush1.msra.mxu0 0.0
        %4109 = vmatprep.subr.mxu0 0.0
        %4110 = vmatpush1.msra.mxu0 0.0
        %4111 = vmatprep.subr.mxu0 0.0
        %4112 = vmatpush1.msra.mxu0 0.0
        %4113 = vmatprep.subr.mxu0 0.0
        %4114 = vmatpush1.msra.mxu0 0.0
        %4115 = vmatprep.subr.mxu0 0.0
        %4116 = vmatpush1.msra.mxu0 0.0
        %4117 = vmatprep.subr.mxu0 0.0
        %4118 = vmatpush1.msra.mxu0 0.0
        %4119 = vmatprep.subr.mxu0 0.0
        %4120 = vmatpush1.msra.mxu0 0.0
        %4121 = vmatprep.subr.mxu0 0.0
        %4122 = vmatpush1.msra.mxu0 0.0
        %4123 = vmatprep.subr.mxu0 0.0
        %4124 = vmatpush1.msra.mxu0 0.0
        %4125 = vmatprep.subr.mxu0 0.0
        %4126 = vmatpush1.msra.mxu0 0.0
        %4127 = vmatprep.subr.mxu0 0.0
        %4128 = vmatpush1.msra.mxu0 0.0
        %4129 = vmatprep.subr.mxu0 0.0
        %4130 = vmatpush1.msra.mxu0 0.0
        %4131 = vmatprep.subr.mxu0 0.0
        %4132 = vmatpush1.msra.mxu0 0.0
        %4133 = vmatprep.subr.mxu0 0.0
        %4134 = vmatpush1.msra.mxu0 0.0
        %4135 = vmatprep.subr.mxu0 0.0
        %4136 = vmatpush1.msra.mxu0 0.0
        %4137 = vmatprep.subr.mxu0 0.0
        %4138 = vmatpush1.msra.mxu0 0.0
        %4139 = vmatprep.subr.mxu0 0.0
        %4140 = vmatpush1.msra.mxu0 0.0
        %4141 = vmatprep.subr.mxu0 0.0
        %4142 = vmatpush1.msra.mxu0 0.0
        %4143 = vmatprep.subr.mxu0 0.0
        %4144 = vmatpush1.msra.mxu0 0.0
        %4145 = vmatprep.subr.mxu0 0.0
        %4146 = vmatpush1.msra.mxu0 0.0
        %4147 = vmatprep.subr.mxu0 0.0
        %4148 = vmatpush1.msra.mxu0 0.0
        %4149 = vmatprep.subr.mxu0 0.0
        %4150 = vmatpush1.msra.mxu0 0.0
        %4151 = vmatprep.subr.mxu0 0.0
        %4152 = vmatpush1.msra.mxu0 0.0
        %4153 = vmatprep.subr.mxu0 0.0
        %4154 = vmatpush1.msra.mxu0 0.0
        %4155 = vmatprep.subr.mxu0 0.0
        %4156 = vmatpush1.msra.mxu0 0.0
        %4157 = vmatprep.subr.mxu0 0.0
        %4158 = vmatpush1.msra.mxu0 0.0
        %4159 = vmatprep.subr.mxu0 0.0
        %4160 = vmatpush1.msra.mxu0 0.0
        %4161 = vmatprep.subr.mxu0 0.0
        %4162 = vmatpush1.msra.mxu0 0.0
        %4163 = vmatprep.subr.mxu0 0.0
        %4164 = vmatpush1.msra.mxu0 0.0
        %4165 = vmatprep.subr.mxu0 0.0
        %4166 = vmatpush1.msra.mxu0 0.0
        %4167 = vmatprep.subr.mxu0 0.0
        %4168 = vmatpush1.msra.mxu0 0.0
        %4169 = vmatprep.mubr.f32.mxu0 0.0
        %4170 = vmatmul.mubr.f32.gmra.mrb[0].mxu0 %v3995
        %v4171 = vpop.f32.mrb[0].mxu0
        %v4172 = vadd.f32 0.0, %v4171
        %v4173 = vpop.f32.mrb[0].mxu0
        %4174 = vmatprep.mubr.f32.mxu0 0.0
        %4175 = vmatmul.mubr.f32.gmra.mrb[0].mxu0 %v3998
        %v4176 = vpop.f32.mrb[0].mxu0
        %v4177 = vadd.f32 0.0, %v4176
        %v4178 = vpop.f32.mrb[0].mxu0
        %4179 = vmatprep.mubr.f32.mxu0 0.0
        %4180 = vmatmul.mubr.f32.gmra.mrb[0].mxu0 %v4001
        %v4181 = vpop.f32.mrb[0].mxu0
        %v4182 = vadd.f32 0.0, %v4181
        %v4183 = vpop.f32.mrb[0].mxu0
        %4184 = vmatprep.mubr.f32.mxu0 0.0
        %4185 = vmatmul.mubr.f32.gmra.mrb[0].mxu0 %v4004
        %v4186 = vpop.f32.mrb[0].mxu0
        %v4187 = vadd.f32 0.0, %v4186
        %v4188 = vpop.f32.mrb[0].mxu0
        %4189 = vmatprep.mubr.f32.mxu0 0.0
        %4190 = vmatmul.mubr.f32.gmra.mrb[0].mxu0 %v4007
        %v4191 = vpop.f32.mrb[0].mxu0
        %v4192 = vadd.f32 0.0, %v4191
        %v4193 = vpop.f32.mrb[0].mxu0
        %4194 = vmatprep.mubr.f32.mxu0 0.0
        %4195 = vmatmul.mubr.f32.gmra.mrb[0].mxu0 %v4010
        %v4196 = vpop.f32.mrb[0].mxu0
        %v4197 = vadd.f32 0.0, %v4196
        %v4198 = vpop.f32.mrb[0].mxu0
        %4199 = vmatprep.mubr.f32.mxu0 0.0
        %4200 = vmatmul.mubr.f32.gmra.mrb[0].mxu0 %v4013
        %v4201 = vpop.f32.mrb[0].mxu0
        %v4202 = vadd.f32 0.0, %v4201
        %v4203 = vpop.f32.mrb[0].mxu0
        %4204 = vmatprep.mubr.f32.mxu0 0.0
        %4205 = vmatmul.mubr.f32.gmra.mrb[0].mxu0 %v4016
        %v4206 = vpop.f32.mrb[0].mxu0
        %v4207 = vadd.f32 0.0, %v4206
        %v4208 = vpop.f32.mrb[0].mxu0
        %4209 = vmatprep.mubr.f32.mxu0 0.0
        %4210 = vmatmul.mubr.f32.gmra.mrb[0].mxu0 %v4019
        %v4211 = vpop.f32.mrb[0].mxu0
        %v4212 = vadd.f32 0.0, %v4211
        %v4213 = vpop.f32.mrb[0].mxu0
        %4214 = vmatprep.mubr.f32.mxu0 0.0
        %4215 = vmatmul.mubr.f32.gmra.mrb[0].mxu0 %v4022
        %v4216 = vpop.f32.mrb[0].mxu0
        %v4217 = vadd.f32 0.0, %v4216
        %v4218 = vpop.f32.mrb[0].mxu0
        %4219 = vmatprep.mubr.f32.mxu0 0.0
        %4220 = vmatmul.mubr.f32.gmra.mrb[0].mxu0 %v4025
        %v4221 = vpop.f32.mrb[0].mxu0
        %v4222 = vadd.f32 0.0, %v4221
        %v4223 = vpop.f32.mrb[0].mxu0
        %4224 = vmatprep.mubr.f32.mxu0 0.0
        %4225 = vmatmul.mubr.f32.gmra.mrb[0].mxu0 %v4028
        %v4226 = vpop.f32.mrb[0].mxu0
        %v4227 = vadd.f32 0.0, %v4226
        %v4228 = vpop.f32.mrb[0].mxu0
        %4229 = vmatprep.mubr.f32.mxu0 0.0
        %4230 = vmatmul.mubr.f32.gmra.mrb[0].mxu0 %v4031
        %v4231 = vpop.f32.mrb[0].mxu0
        %v4232 = vadd.f32 0.0, %v4231
        %v4233 = vpop.f32.mrb[0].mxu0
        %4234 = vmatprep.mubr.f32.mxu0 0.0
        %4235 = vmatmul.mubr.f32.gmra.mrb[0].mxu0 %v4034
        %v4236 = vpop.f32.mrb[0].mxu0
        %v4237 = vadd.f32 0.0, %v4236
        %v4238 = vpop.f32.mrb[0].mxu0
        %4239 = vmatprep.mubr.f32.mxu0 0.0
        %4240 = vmatmul.mubr.f32.gmra.mrb[0].mxu0 %v4037
        %v4241 = vpop.f32.mrb[0].mxu0
        %v4242 = vadd.f32 0.0, %v4241
        %v4243 = vpop.f32.mrb[0].mxu0
        %4244 = vmatprep.mubr.f32.mxu0 0.0
        %4245 = vmatmul.mubr.f32.gmra.mrb[0].mxu0 %v4040
        %v4246 = vpop.f32.mrb[0].mxu0
        %v4247 = vadd.f32 0.0, %v4246
        %v4248 = vpop.f32.mrb[0].mxu0
        %4249 = vmatprep.mubr.f32.mxu0 0.0
        %4250 = vmatmul.mubr.f32.gmra.mrb[0].mxu0 %v4043
        %v4251 = vpop.f32.mrb[0].mxu0
        %v4252 = vadd.f32 0.0, %v4251
        %v4253 = vpop.f32.mrb[0].mxu0
        %4254 = vmatprep.mubr.f32.mxu0 0.0
        %4255 = vmatmul.mubr.f32.gmra.mrb[0].mxu0 %v4046
        %v4256 = vpop.f32.mrb[0].mxu0
        %v4257 = vadd.f32 0.0, %v4256
        %v4258 = vpop.f32.mrb[0].mxu0
        %4259 = vmatprep.mubr.f32.mxu0 0.0
        %4260 = vmatmul.mubr.f32.gmra.mrb[0].mxu0 %v4049
        %v4261 = vpop.f32.mrb[0].mxu0
        %v4262 = vadd.f32 0.0, %v4261
        %v4263 = vpop.f32.mrb[0].mxu0
        %4264 = vmatprep.mubr.f32.mxu0 0.0
        %4265 = vmatmul.mubr.f32.gmra.mrb[0].mxu0 %v4052
        %v4266 = vpop.f32.mrb[0].mxu0
        %v4267 = vadd.f32 0.0, %v4266
        %v4268 = vpop.f32.mrb[0].mxu0
        %4269 = vmatprep.mubr.f32.mxu0 0.0
        %4270 = vmatmul.mubr.f32.gmra.mrb[0].mxu0 %v4055
        %v4271 = vpop.f32.mrb[0].mxu0
        %v4272 = vadd.f32 0.0, %v4271
        %v4273 = vpop.f32.mrb[0].mxu0
        %4274 = vmatprep.mubr.f32.mxu0 0.0
        %4275 = vmatmul.mubr.f32.gmra.mrb[0].mxu0 %v4058
        %v4276 = vpop.f32.mrb[0].mxu0
        %v4277 = vadd.f32 0.0, %v4276
        %v4278 = vpop.f32.mrb[0].mxu0
        %4279 = vmatprep.mubr.f32.mxu0 0.0
        %4280 = vmatmul.mubr.f32.gmra.mrb[0].mxu0 %v4061
        %v4281 = vpop.f32.mrb[0].mxu0
        %v4282 = vadd.f32 0.0, %v4281
        %v4283 = vpop.f32.mrb[0].mxu0
        %4284 = vmatprep.mubr.f32.mxu0 0.0
        %4285 = vmatmul.mubr.f32.gmra.mrb[0].mxu0 %v4064
        %v4286 = vpop.f32.mrb[0].mxu0
        %v4287 = vadd.f32 0.0, %v4286
        %v4288 = vpop.f32.mrb[0].mxu0
        %4289 = vmatprep.mubr.f32.mxu0 0.0
        %4290 = vmatmul.mubr.f32.gmra.mrb[0].mxu0 %v4067
        %v4291 = vpop.f32.mrb[0].mxu0
        %v4292 = vadd.f32 0.0, %v4291
        %v4293 = vpop.f32.mrb[0].mxu0
        %4294 = vmatprep.mubr.f32.mxu0 0.0
        %4295 = vmatmul.mubr.f32.gmra.mrb[0].mxu0 %v4070
        %v4296 = vpop.f32.mrb[0].mxu0
        %v4297 = vadd.f32 0.0, %v4296
        %v4298 = vpop.f32.mrb[0].mxu0
        %4299 = vmatprep.mubr.f32.mxu0 0.0
        %4300 = vmatmul.mubr.f32.gmra.mrb[0].mxu0 %v4073
        %v4301 = vpop.f32.mrb[0].mxu0
        %v4302 = vadd.f32 0.0, %v4301
        %v4303 = vpop.f32.mrb[0].mxu0
        %4304 = vmatprep.mubr.f32.mxu0 0.0
        %4305 = vmatmul.mubr.f32.gmra.mrb[0].mxu0 %v4076
        %v4306 = vpop.f32.mrb[0].mxu0
        %v4307 = vadd.f32 0.0, %v4306
        %v4308 = vpop.f32.mrb[0].mxu0
        %4309 = vmatprep.mubr.f32.mxu0 0.0
        %4310 = vmatmul.mubr.f32.gmra.mrb[0].mxu0 %v4079
        %v4311 = vpop.f32.mrb[0].mxu0
        %v4312 = vadd.f32 0.0, %v4311
        %v4313 = vpop.f32.mrb[0].mxu0
        %4314 = vmatprep.mubr.f32.mxu0 0.0
        %4315 = vmatmul.mubr.f32.gmra.mrb[0].mxu0 %v4082
        %v4316 = vpop.f32.mrb[0].mxu0
        %v4317 = vadd.f32 0.0, %v4316
        %v4318 = vpop.f32.mrb[0].mxu0
        %4319 = vmatprep.mubr.f32.mxu0 0.0
        %4320 = vmatmul.mubr.f32.gmra.mrb[0].mxu0 %v4085
        %v4321 = vpop.f32.mrb[0].mxu0
        %v4322 = vadd.f32 0.0, %v4321
        %v4323 = vpop.f32.mrb[0].mxu0
        %4324 = vmatprep.mubr.f32.mxu0 0.0
        %4325 = vmatmul.mubr.f32.gmra.mrb[0].mxu0 %v4088
        %v4326 = vpop.f32.mrb[0].mxu0
        %v4327 = vadd.f32 0.0, %v4326
        %v4328 = vpop.f32.mrb[0].mxu0
        %4329 = vmatprep.mubr.f32.mxu0 0.0
        %4330 = vmatmul.mubr.f32.gmra.mrb[0].mxu0 %v4091
        %v4331 = vpop.f32.mrb[0].mxu0
        %v4332 = vadd.f32 0.0, %v4331
        %v4333 = vpop.f32.mrb[0].mxu0
        %4334 = vmatprep.mubr.f32.mxu0 0.0
        %4335 = vmatmul.mubr.f32.gmra.mrb[0].mxu0 %v4094
        %v4336 = vpop.f32.mrb[0].mxu0
        %v4337 = vadd.f32 0.0, %v4336
        %v4338 = vpop.f32.mrb[0].mxu0
        %4339 = vmatprep.mubr.f32.mxu0 0.0
        %4340 = vmatmul.mubr.f32.gmra.mrb[0].mxu0 %v4097
        %v4341 = vpop.f32.mrb[0].mxu0
        %v4342 = vadd.f32 0.0, %v4341
        %v4343 = vpop.f32.mrb[0].mxu0
        %4344 = vmatprep.mubr.f32.mxu0 0.0
        %4345 = vmatmul.mubr.f32.gmra.mrb[0].mxu0 %v4100
        %v4346 = vpop.f32.mrb[0].mxu0
        %v4347 = vadd.f32 0.0, %v4346
        %v4348 = vpop.f32.mrb[0].mxu0
        %4349 = vdwg.mxu0
        %v4350 = vadd.f32 %v3920, %v4172
        %v4351 = vadd.f32 %v3921, %v4177
        %v4352 = vadd.f32 %v3922, %v4182
        %v4353 = vadd.f32 %v3923, %v4187
        %v4354 = vadd.f32 %v3924, %v4192
        %v4355 = vadd.f32 %v3925, %v4197
        %v4356 = vadd.f32 %v3926, %v4202
        %v4357 = vadd.f32 %v3927, %v4207
        %v4358 = vadd.f32 %v3928, %v4212
        %v4359 = vadd.f32 %v3929, %v4217
        %v4360 = vadd.f32 %v3930, %v4222
        %v4361 = vadd.f32 %v3931, %v4227
        %v4362 = vadd.f32 %v3932, %v4232
        %v4363 = vadd.f32 %v3933, %v4237
        %v4364 = vadd.f32 %v3934, %v4242
        %v4365 = vadd.f32 %v3935, %v4247
        %v4366 = vadd.f32 %v3936, %v4252
        %v4367 = vadd.f32 %v3937, %v4257
        %v4368 = vadd.f32 %v3938, %v4262
        %v4369 = vadd.f32 %v3939, %v4267
        %v4370 = vadd.f32 %v3940, %v4272
        %v4371 = vadd.f32 %v3941, %v4277
        %v4372 = vadd.f32 %v3942, %v4282
        %v4373 = vadd.f32 %v3943, %v4287
        %v4374 = vadd.f32 %v3944, %v4292
        %v4375 = vadd.f32 %v3945, %v4297
        %v4376 = vadd.f32 %v3946, %v4302
        %v4377 = vadd.f32 %v3947, %v4307
        %v4378 = vadd.f32 %v3948, %v4312
        %v4379 = vadd.f32 %v3949, %v4317
        %v4380 = vadd.f32 %v3950, %v4322
        %v4381 = vadd.f32 %v3951, %v4327
        %v4382 = vadd.f32 %v3952, %v4332
        %v4383 = vadd.f32 %v3953, %v4337
        %v4384 = vadd.f32 %v3954, %v4342
        %v4385 = vadd.f32 %v3955, %v4347
        %v4386 = vld [vmem:[%s2] sm:$0x1]
        %v4388 = vlaneseq
        %v4389 = vshrl.u32 %v4388, 7
        %v4390 = vsub.s32 0, %v4389
        %v4391 = vrot.slane %v4386, %v4390
        %v4393 = vadd.f32 %v4350, %v4391
        %v4394 = vadd.f32 %v4351, %v4391
        %v4395 = vadd.f32 %v4352, %v4391
        %v4396 = vadd.f32 %v4353, %v4391
        %v4397 = vadd.f32 %v4354, %v4391
        %v4398 = vadd.f32 %v4355, %v4391
        %v4399 = vadd.f32 %v4356, %v4391
        %v4400 = vadd.f32 %v4357, %v4391
        %v4401 = vadd.f32 %v4358, %v4391
        %v4402 = vadd.f32 %v4359, %v4391
        %v4403 = vadd.f32 %v4360, %v4391
        %v4404 = vadd.f32 %v4361, %v4391
        %v4405 = vadd.f32 %v4362, %v4391
        %v4406 = vadd.f32 %v4363, %v4391
        %v4407 = vadd.f32 %v4364, %v4391
        %v4408 = vadd.f32 %v4365, %v4391
        %v4409 = vadd.f32 %v4366, %v4391
        %v4410 = vadd.f32 %v4367, %v4391
        %v4411 = vadd.f32 %v4368, %v4391
        %v4412 = vadd.f32 %v4369, %v4391
        %v4413 = vadd.f32 %v4370, %v4391
        %v4414 = vadd.f32 %v4371, %v4391
        %v4415 = vadd.f32 %v4372, %v4391
        %v4416 = vadd.f32 %v4373, %v4391
        %v4417 = vadd.f32 %v4374, %v4391
        %v4418 = vadd.f32 %v4375, %v4391
        %v4419 = vadd.f32 %v4376, %v4391
        %v4420 = vadd.f32 %v4377, %v4391
        %v4421 = vadd.f32 %v4378, %v4391
        %v4422 = vadd.f32 %v4379, %v4391
        %v4423 = vadd.f32 %v4380, %v4391
        %v4424 = vadd.f32 %v4381, %v4391
        %v4425 = vadd.f32 %v4382, %v4391
        %v4426 = vadd.f32 %v4383, %v4391
        %v4427 = vadd.f32 %v4384, %v4391
        %v4428 = vadd.f32 %v4385, %v4391
        %v4429 = vmax.f32 %v4393, 0.0
        %v4430 = vmax.f32 %v4394, 0.0
        %v4431 = vmax.f32 %v4395, 0.0
        %v4432 = vmax.f32 %v4396, 0.0
        %v4433 = vmax.f32 %v4397, 0.0
        %v4434 = vmax.f32 %v4398, 0.0
        %v4435 = vmax.f32 %v4399, 0.0
        %v4436 = vmax.f32 %v4400, 0.0
        %v4437 = vmax.f32 %v4401, 0.0
        %v4438 = vmax.f32 %v4402, 0.0
        %v4439 = vmax.f32 %v4403, 0.0
        %v4440 = vmax.f32 %v4404, 0.0
        %v4441 = vmax.f32 %v4405, 0.0
        %v4442 = vmax.f32 %v4406, 0.0
        %v4443 = vmax.f32 %v4407, 0.0
        %v4444 = vmax.f32 %v4408, 0.0
        %v4445 = vmax.f32 %v4409, 0.0
        %v4446 = vmax.f32 %v4410, 0.0
        %v4447 = vmax.f32 %v4411, 0.0
        %v4448 = vmax.f32 %v4412, 0.0
        %v4449 = vmax.f32 %v4413, 0.0
        %v4450 = vmax.f32 %v4414, 0.0
        %v4451 = vmax.f32 %v4415, 0.0
        %v4452 = vmax.f32 %v4416, 0.0
        %v4453 = vmax.f32 %v4417, 0.0
        %v4454 = vmax.f32 %v4418, 0.0
        %v4455 = vmax.f32 %v4419, 0.0
        %v4456 = vmax.f32 %v4420, 0.0
        %v4457 = vmax.f32 %v4421, 0.0
        %v4458 = vmax.f32 %v4422, 0.0
        %v4459 = vmax.f32 %v4423, 0.0
        %v4460 = vmax.f32 %v4424, 0.0
        %v4461 = vmax.f32 %v4425, 0.0
        %v4462 = vmax.f32 %v4426, 0.0
        %v4463 = vmax.f32 %v4427, 0.0
        %v4464 = vmax.f32 %v4428, 0.0
        %v4465 = vld [vmem:[%s3] sm:$0xff]
        %v4466 = vld [vmem:[%s3 + $0x8] sm:$0xff]
        %v4467 = vld [vmem:[%s3 + $0x10] sm:$0xff]
        %v4468 = vld [vmem:[%s3 + $0x18] sm:$0xff]
        %v4469 = vld [vmem:[%s3 + $0x20] sm:$0xff]
        %v4470 = vld [vmem:[%s3 + $0x28] sm:$0xff]
        %v4471 = vld [vmem:[%s3 + $0x30] sm:$0xff]
        %v4472 = vld [vmem:[%s3 + $0x38] sm:$0xff]
        %v4473 = vld [vmem:[%s3 + $0x40] sm:$0xff]
        %v4474 = vld [vmem:[%s3 + $0x48] sm:$0xff]
        %v4475 = vld [vmem:[%s3 + $0x50] sm:$0xff]
        %v4476 = vld [vmem:[%s3 + $0x58] sm:$0xff]
        %v4477 = vld [vmem:[%s3 + $0x60] sm:$0xff]
        %v4478 = vld [vmem:[%s3 + $0x68] sm:$0xff]
        %v4479 = vld [vmem:[%s3 + $0x70] sm:$0xff]
        %v4480 = vld [vmem:[%s3 + $0x78] sm:$0xff]
        %v4481 = vld [vmem:[%s3 + $0x80] sm:$0xff]
        %v4482 = vld [vmem:[%s3 + $0x88] sm:$0xff]
        %v4483 = vld [vmem:[%s3 + $0x90] sm:$0xff]
        %v4484 = vld [vmem:[%s3 + $0x98] sm:$0xff]
        %v4485 = vld [vmem:[%s3 + $0xa0] sm:$0xff]
        %v4486 = vld [vmem:[%s3 + $0xa8] sm:$0xff]
        %v4487 = vld [vmem:[%s3 + $0xb0] sm:$0xff]
        %v4488 = vld [vmem:[%s3 + $0xb8] sm:$0xff]
        %v4489 = vld [vmem:[%s3 + $0xc0] sm:$0xff]
        %v4490 = vld [vmem:[%s3 + $0xc8] sm:$0xff]
        %v4491 = vld [vmem:[%s3 + $0xd0] sm:$0xff]
        %v4492 = vld [vmem:[%s3 + $0xd8] sm:$0xff]
        %v4493 = vld [vmem:[%s3 + $0xe0] sm:$0xff]
        %v4494 = vld [vmem:[%s3 + $0xe8] sm:$0xff]
        %v4495 = vld [vmem:[%s3 + $0xf0] sm:$0xff]
        %v4496 = vld [vmem:[%s3 + $0xf8] sm:$0xff]
        %v4497 = vld [vmem:[%s3 + $0x100] sm:$0xff]
        %v4498 = vld [vmem:[%s3 + $0x108] sm:$0xff]
        %v4499 = vld [vmem:[%s3 + $0x110] sm:$0xff]
        %v4500 = vld [vmem:[%s3 + $0x118] sm:$0xff]
        %v4501 = vld [vmem:[%s3 + $0x120] sm:$0x3f]
        %v4502 = vld [vmem:[%s3 + $0x128] sm:$0x3f]
        %v4503 = vld [vmem:[%s3 + $0x130] sm:$0x3f]
        %vm4504 = vcmask 261120
        %v4506 = vsel %vm4504, %v4467, 0
        %v4509 = vsel %vm4504, %v4470, 0
        %v4512 = vsel %vm4504, %v4473, 0
        %v4515 = vsel %vm4504, %v4476, 0
        %v4518 = vsel %vm4504, %v4479, 0
        %v4521 = vsel %vm4504, %v4482, 0
        %v4524 = vsel %vm4504, %v4485, 0
        %v4527 = vsel %vm4504, %v4488, 0
        %v4530 = vsel %vm4504, %v4491, 0
        %v4533 = vsel %vm4504, %v4494, 0
        %v4536 = vsel %vm4504, %v4497, 0
        %v4539 = vsel %vm4504, %v4500, 0
        %v4542 = vsel %vm4504, %v4503, 0
        %4544 = vmatprep.subr.mxu0 0.0
        %4545 = vmatpush1.msra.mxu0 %v4429
        %4546 = vmatprep.subr.mxu0 0.0
        %4547 = vmatpush1.msra.mxu0 %v4430
        %4548 = vmatprep.subr.mxu0 0.0
        %4549 = vmatpush1.msra.mxu0 %v4431
        %4550 = vmatprep.subr.mxu0 0.0
        %4551 = vmatpush1.msra.mxu0 %v4432
        %4552 = vmatprep.subr.mxu0 0.0
        %4553 = vmatpush1.msra.mxu0 %v4433
        %4554 = vmatprep.subr.mxu0 0.0
        %4555 = vmatpush1.msra.mxu0 %v4434
        %4556 = vmatprep.subr.mxu0 0.0
        %4557 = vmatpush1.msra.mxu0 %v4435
        %4558 = vmatprep.subr.mxu0 0.0
        %4559 = vmatpush1.msra.mxu0 %v4436
        %4560 = vmatprep.subr.mxu0 0.0
        %4561 = vmatpush1.msra.mxu0 %v4437
        %4562 = vmatprep.subr.mxu0 0.0
        %4563 = vmatpush1.msra.mxu0 %v4438
        %4564 = vmatprep.subr.mxu0 0.0
        %4565 = vmatpush1.msra.mxu0 %v4439
        %4566 = vmatprep.subr.mxu0 0.0
        %4567 = vmatpush1.msra.mxu0 %v4440
        %4568 = vmatprep.subr.mxu0 0.0
        %4569 = vmatpush1.msra.mxu0 %v4441
        %4570 = vmatprep.subr.mxu0 0.0
        %4571 = vmatpush1.msra.mxu0 %v4442
        %4572 = vmatprep.subr.mxu0 0.0
        %4573 = vmatpush1.msra.mxu0 %v4443
        %4574 = vmatprep.subr.mxu0 0.0
        %4575 = vmatpush1.msra.mxu0 %v4444
        %4576 = vmatprep.subr.mxu0 0.0
        %4577 = vmatpush1.msra.mxu0 %v4445
        %4578 = vmatprep.subr.mxu0 0.0
        %4579 = vmatpush1.msra.mxu0 %v4446
        %4580 = vmatprep.subr.mxu0 0.0
        %4581 = vmatpush1.msra.mxu0 %v4447
        %4582 = vmatprep.subr.mxu0 0.0
        %4583 = vmatpush1.msra.mxu0 %v4448
        %4584 = vmatprep.subr.mxu0 0.0
        %4585 = vmatpush1.msra.mxu0 %v4449
        %4586 = vmatprep.subr.mxu0 0.0
        %4587 = vmatpush1.msra.mxu0 %v4450
        %4588 = vmatprep.subr.mxu0 0.0
        %4589 = vmatpush1.msra.mxu0 %v4451
        %4590 = vmatprep.subr.mxu0 0.0
        %4591 = vmatpush1.msra.mxu0 %v4452
        %4592 = vmatprep.subr.mxu0 0.0
        %4593 = vmatpush1.msra.mxu0 %v4453
        %4594 = vmatprep.subr.mxu0 0.0
        %4595 = vmatpush1.msra.mxu0 %v4454
        %4596 = vmatprep.subr.mxu0 0.0
        %4597 = vmatpush1.msra.mxu0 %v4455
        %4598 = vmatprep.subr.mxu0 0.0
        %4599 = vmatpush1.msra.mxu0 %v4456
        %4600 = vmatprep.subr.mxu0 0.0
        %4601 = vmatpush1.msra.mxu0 %v4457
        %4602 = vmatprep.subr.mxu0 0.0
        %4603 = vmatpush1.msra.mxu0 %v4458
        %4604 = vmatprep.subr.mxu0 0.0
        %4605 = vmatpush1.msra.mxu0 %v4459
        %4606 = vmatprep.subr.mxu0 0.0
        %4607 = vmatpush1.msra.mxu0 %v4460
        %4608 = vmatprep.mubr.f32.mxu0 %v4466
        %4609 = vmatmul.mubr.f32.gmra.mrb[0].mxu0 %v4465
        %v4610 = vpop.f32.mrb[0].mxu0
        %v4611 = vadd.f32 0.0, %v4610
        %v4612 = vpop.f32.mrb[0].mxu0
        %4613 = vmatprep.mubr.f32.mxu0 %v4469
        %4614 = vmatmul.mubr.f32.gmra.mrb[0].mxu0 %v4468
        %v4615 = vpop.f32.mrb[0].mxu0
        %v4616 = vadd.f32 0.0, %v4615
        %v4617 = vpop.f32.mrb[0].mxu0
        %4618 = vmatprep.mubr.f32.mxu0 %v4472
        %4619 = vmatmul.mubr.f32.gmra.mrb[0].mxu0 %v4471
        %v4620 = vpop.f32.mrb[0].mxu0
        %v4621 = vadd.f32 0.0, %v4620
        %v4622 = vpop.f32.mrb[0].mxu0
        %4623 = vmatprep.mubr.f32.mxu0 %v4475
        %4624 = vmatmul.mubr.f32.gmra.mrb[0].mxu0 %v4474
        %v4625 = vpop.f32.mrb[0].mxu0
        %v4626 = vadd.f32 0.0, %v4625
        %v4627 = vpop.f32.mrb[0].mxu0
        %4628 = vmatprep.mubr.f32.mxu0 %v4478
        %4629 = vmatmul.mubr.f32.gmra.mrb[0].mxu0 %v4477
        %v4630 = vpop.f32.mrb[0].mxu0
        %v4631 = vadd.f32 0.0, %v4630
        %v4632 = vpop.f32.mrb[0].mxu0
        %4633 = vmatprep.mubr.f32.mxu0 %v4481
        %4634 = vmatmul.mubr.f32.gmra.mrb[0].mxu0 %v4480
        %v4635 = vpop.f32.mrb[0].mxu0
        %v4636 = vadd.f32 0.0, %v4635
        %v4637 = vpop.f32.mrb[0].mxu0
        %4638 = vmatprep.mubr.f32.mxu0 %v4484
        %4639 = vmatmul.mubr.f32.gmra.mrb[0].mxu0 %v4483
        %v4640 = vpop.f32.mrb[0].mxu0
        %v4641 = vadd.f32 0.0, %v4640
        %v4642 = vpop.f32.mrb[0].mxu0
        %4643 = vmatprep.mubr.f32.mxu0 %v4487
        %4644 = vmatmul.mubr.f32.gmra.mrb[0].mxu0 %v4486
        %v4645 = vpop.f32.mrb[0].mxu0
        %v4646 = vadd.f32 0.0, %v4645
        %v4647 = vpop.f32.mrb[0].mxu0
        %4648 = vmatprep.mubr.f32.mxu0 %v4490
        %4649 = vmatmul.mubr.f32.gmra.mrb[0].mxu0 %v4489
        %v4650 = vpop.f32.mrb[0].mxu0
        %v4651 = vadd.f32 0.0, %v4650
        %v4652 = vpop.f32.mrb[0].mxu0
        %4653 = vmatprep.mubr.f32.mxu0 %v4493
        %4654 = vmatmul.mubr.f32.gmra.mrb[0].mxu0 %v4492
        %v4655 = vpop.f32.mrb[0].mxu0
        %v4656 = vadd.f32 0.0, %v4655
        %v4657 = vpop.f32.mrb[0].mxu0
        %4658 = vmatprep.mubr.f32.mxu0 %v4496
        %4659 = vmatmul.mubr.f32.gmra.mrb[0].mxu0 %v4495
        %v4660 = vpop.f32.mrb[0].mxu0
        %v4661 = vadd.f32 0.0, %v4660
        %v4662 = vpop.f32.mrb[0].mxu0
        %4663 = vmatprep.mubr.f32.mxu0 %v4499
        %4664 = vmatmul.mubr.f32.gmra.mrb[0].mxu0 %v4498
        %v4665 = vpop.f32.mrb[0].mxu0
        %v4666 = vadd.f32 0.0, %v4665
        %v4667 = vpop.f32.mrb[0].mxu0
        %4668 = vmatprep.mubr.f32.mxu0 %v4502
        %4669 = vmatmul.mubr.f32.gmra.mrb[0].mxu0 %v4501
        %v4670 = vpop.f32.mrb[0].mxu0
        %v4671 = vadd.f32 0.0, %v4670
        %v4672 = vpop.f32.mrb[0].mxu0
        %4673 = vdwg.mxu0
        %4674 = vmatprep.subr.mxu0 0.0
        %4675 = vmatpush1.msra.mxu0 %v4461
        %4676 = vmatprep.subr.mxu0 0.0
        %4677 = vmatpush1.msra.mxu0 %v4462
        %4678 = vmatprep.subr.mxu0 0.0
        %4679 = vmatpush1.msra.mxu0 %v4463
        %4680 = vmatprep.subr.mxu0 0.0
        %4681 = vmatpush1.msra.mxu0 %v4464
        %4682 = vmatprep.subr.mxu0 0.0
        %4683 = vmatpush1.msra.mxu0 0.0
        %4684 = vmatprep.subr.mxu0 0.0
        %4685 = vmatpush1.msra.mxu0 0.0
        %4686 = vmatprep.subr.mxu0 0.0
        %4687 = vmatpush1.msra.mxu0 0.0
        %4688 = vmatprep.subr.mxu0 0.0
        %4689 = vmatpush1.msra.mxu0 0.0
        %4690 = vmatprep.subr.mxu0 0.0
        %4691 = vmatpush1.msra.mxu0 0.0
        %4692 = vmatprep.subr.mxu0 0.0
        %4693 = vmatpush1.msra.mxu0 0.0
        %4694 = vmatprep.subr.mxu0 0.0
        %4695 = vmatpush1.msra.mxu0 0.0
        %4696 = vmatprep.subr.mxu0 0.0
        %4697 = vmatpush1.msra.mxu0 0.0
        %4698 = vmatprep.subr.mxu0 0.0
        %4699 = vmatpush1.msra.mxu0 0.0
        %4700 = vmatprep.subr.mxu0 0.0
        %4701 = vmatpush1.msra.mxu0 0.0
        %4702 = vmatprep.subr.mxu0 0.0
        %4703 = vmatpush1.msra.mxu0 0.0
        %4704 = vmatprep.subr.mxu0 0.0
        %4705 = vmatpush1.msra.mxu0 0.0
        %4706 = vmatprep.subr.mxu0 0.0
        %4707 = vmatpush1.msra.mxu0 0.0
        %4708 = vmatprep.subr.mxu0 0.0
        %4709 = vmatpush1.msra.mxu0 0.0
        %4710 = vmatprep.subr.mxu0 0.0
        %4711 = vmatpush1.msra.mxu0 0.0
        %4712 = vmatprep.subr.mxu0 0.0
        %4713 = vmatpush1.msra.mxu0 0.0
        %4714 = vmatprep.subr.mxu0 0.0
        %4715 = vmatpush1.msra.mxu0 0.0
        %4716 = vmatprep.subr.mxu0 0.0
        %4717 = vmatpush1.msra.mxu0 0.0
        %4718 = vmatprep.subr.mxu0 0.0
        %4719 = vmatpush1.msra.mxu0 0.0
        %4720 = vmatprep.subr.mxu0 0.0
        %4721 = vmatpush1.msra.mxu0 0.0
        %4722 = vmatprep.subr.mxu0 0.0
        %4723 = vmatpush1.msra.mxu0 0.0
        %4724 = vmatprep.subr.mxu0 0.0
        %4725 = vmatpush1.msra.mxu0 0.0
        %4726 = vmatprep.subr.mxu0 0.0
        %4727 = vmatpush1.msra.mxu0 0.0
        %4728 = vmatprep.subr.mxu0 0.0
        %4729 = vmatpush1.msra.mxu0 0.0
        %4730 = vmatprep.subr.mxu0 0.0
        %4731 = vmatpush1.msra.mxu0 0.0
        %4732 = vmatprep.subr.mxu0 0.0
        %4733 = vmatpush1.msra.mxu0 0.0
        %4734 = vmatprep.subr.mxu0 0.0
        %4735 = vmatpush1.msra.mxu0 0.0
        %4736 = vmatprep.subr.mxu0 0.0
        %4737 = vmatpush1.msra.mxu0 0.0
        %4738 = vmatprep.mubr.f32.mxu0 0.0
        %4739 = vmatmul.mubr.f32.gmra.mrb[0].mxu0 %v4506
        %v4740 = vpop.f32.mrb[0].mxu0
        %v4741 = vadd.f32 %v4611, %v4740
        %v4742 = vpop.f32.mrb[0].mxu0
        %4743 = vmatprep.mubr.f32.mxu0 0.0
        %4744 = vmatmul.mubr.f32.gmra.mrb[0].mxu0 %v4509
        %v4745 = vpop.f32.mrb[0].mxu0
        %v4746 = vadd.f32 %v4616, %v4745
        %v4747 = vpop.f32.mrb[0].mxu0
        %4748 = vmatprep.mubr.f32.mxu0 0.0
        %4749 = vmatmul.mubr.f32.gmra.mrb[0].mxu0 %v4512
        %v4750 = vpop.f32.mrb[0].mxu0
        %v4751 = vadd.f32 %v4621, %v4750
        %v4752 = vpop.f32.mrb[0].mxu0
        %4753 = vmatprep.mubr.f32.mxu0 0.0
        %4754 = vmatmul.mubr.f32.gmra.mrb[0].mxu0 %v4515
        %v4755 = vpop.f32.mrb[0].mxu0
        %v4756 = vadd.f32 %v4626, %v4755
        %v4757 = vpop.f32.mrb[0].mxu0
        %4758 = vmatprep.mubr.f32.mxu0 0.0
        %4759 = vmatmul.mubr.f32.gmra.mrb[0].mxu0 %v4518
        %v4760 = vpop.f32.mrb[0].mxu0
        %v4761 = vadd.f32 %v4631, %v4760
        %v4762 = vpop.f32.mrb[0].mxu0
        %4763 = vmatprep.mubr.f32.mxu0 0.0
        %4764 = vmatmul.mubr.f32.gmra.mrb[0].mxu0 %v4521
        %v4765 = vpop.f32.mrb[0].mxu0
        %v4766 = vadd.f32 %v4636, %v4765
        %v4767 = vpop.f32.mrb[0].mxu0
        %4768 = vmatprep.mubr.f32.mxu0 0.0
        %4769 = vmatmul.mubr.f32.gmra.mrb[0].mxu0 %v4524
        %v4770 = vpop.f32.mrb[0].mxu0
        %v4771 = vadd.f32 %v4641, %v4770
        %v4772 = vpop.f32.mrb[0].mxu0
        %4773 = vmatprep.mubr.f32.mxu0 0.0
        %4774 = vmatmul.mubr.f32.gmra.mrb[0].mxu0 %v4527
        %v4775 = vpop.f32.mrb[0].mxu0
        %v4776 = vadd.f32 %v4646, %v4775
        %v4777 = vpop.f32.mrb[0].mxu0
        %4778 = vmatprep.mubr.f32.mxu0 0.0
        %4779 = vmatmul.mubr.f32.gmra.mrb[0].mxu0 %v4530
        %v4780 = vpop.f32.mrb[0].mxu0
        %v4781 = vadd.f32 %v4651, %v4780
        %v4782 = vpop.f32.mrb[0].mxu0
        %4783 = vmatprep.mubr.f32.mxu0 0.0
        %4784 = vmatmul.mubr.f32.gmra.mrb[0].mxu0 %v4533
        %v4785 = vpop.f32.mrb[0].mxu0
        %v4786 = vadd.f32 %v4656, %v4785
        %v4787 = vpop.f32.mrb[0].mxu0
        %4788 = vmatprep.mubr.f32.mxu0 0.0
        %4789 = vmatmul.mubr.f32.gmra.mrb[0].mxu0 %v4536
        %v4790 = vpop.f32.mrb[0].mxu0
        %v4791 = vadd.f32 %v4661, %v4790
        %v4792 = vpop.f32.mrb[0].mxu0
        %4793 = vmatprep.mubr.f32.mxu0 0.0
        %4794 = vmatmul.mubr.f32.gmra.mrb[0].mxu0 %v4539
        %v4795 = vpop.f32.mrb[0].mxu0
        %v4796 = vadd.f32 %v4666, %v4795
        %v4797 = vpop.f32.mrb[0].mxu0
        %4798 = vmatprep.mubr.f32.mxu0 0.0
        %4799 = vmatmul.mubr.f32.gmra.mrb[0].mxu0 %v4542
        %v4800 = vpop.f32.mrb[0].mxu0
        %v4801 = vadd.f32 %v4671, %v4800
        %v4802 = vpop.f32.mrb[0].mxu0
        %4803 = vdwg.mxu0
        %s4804 = scalar_lea.vmem %s3, 312
        %v4805 = vld [vmem:[%s4804] sm:$0xff]
        %v4806 = vld [vmem:[%s4804 + $0x8] sm:$0xff]
        %v4807 = vld [vmem:[%s4804 + $0x10] sm:$0xff]
        %v4808 = vld [vmem:[%s4804 + $0x18] sm:$0xff]
        %v4809 = vld [vmem:[%s4804 + $0x20] sm:$0xff]
        %v4810 = vld [vmem:[%s4804 + $0x28] sm:$0xff]
        %v4811 = vld [vmem:[%s4804 + $0x30] sm:$0xff]
        %v4812 = vld [vmem:[%s4804 + $0x38] sm:$0xff]
        %v4813 = vld [vmem:[%s4804 + $0x40] sm:$0xff]
        %v4814 = vld [vmem:[%s4804 + $0x48] sm:$0xff]
        %v4815 = vld [vmem:[%s4804 + $0x50] sm:$0xff]
        %v4816 = vld [vmem:[%s4804 + $0x58] sm:$0xff]
        %v4817 = vld [vmem:[%s4804 + $0x60] sm:$0xff]
        %v4818 = vld [vmem:[%s4804 + $0x68] sm:$0xff]
        %v4819 = vld [vmem:[%s4804 + $0x70] sm:$0xff]
        %v4820 = vld [vmem:[%s4804 + $0x78] sm:$0xff]
        %v4821 = vld [vmem:[%s4804 + $0x80] sm:$0xff]
        %v4822 = vld [vmem:[%s4804 + $0x88] sm:$0xff]
        %v4823 = vld [vmem:[%s4804 + $0x90] sm:$0xff]
        %v4824 = vld [vmem:[%s4804 + $0x98] sm:$0xff]
        %v4825 = vld [vmem:[%s4804 + $0xa0] sm:$0xff]
        %v4826 = vld [vmem:[%s4804 + $0xa8] sm:$0xff]
        %v4827 = vld [vmem:[%s4804 + $0xb0] sm:$0xff]
        %v4828 = vld [vmem:[%s4804 + $0xb8] sm:$0xff]
        %v4829 = vld [vmem:[%s4804 + $0xc0] sm:$0xff]
        %v4830 = vld [vmem:[%s4804 + $0xc8] sm:$0xff]
        %v4831 = vld [vmem:[%s4804 + $0xd0] sm:$0xff]
        %v4832 = vld [vmem:[%s4804 + $0xd8] sm:$0xff]
        %v4833 = vld [vmem:[%s4804 + $0xe0] sm:$0xff]
        %v4834 = vld [vmem:[%s4804 + $0xe8] sm:$0xff]
        %v4835 = vld [vmem:[%s4804 + $0xf0] sm:$0xff]
        %v4836 = vld [vmem:[%s4804 + $0xf8] sm:$0xff]
        %v4837 = vld [vmem:[%s4804 + $0x100] sm:$0xff]
        %v4838 = vld [vmem:[%s4804 + $0x108] sm:$0xff]
        %v4839 = vld [vmem:[%s4804 + $0x110] sm:$0xff]
        %v4840 = vld [vmem:[%s4804 + $0x118] sm:$0xff]
        %v4841 = vld [vmem:[%s4804 + $0x120] sm:$0x3f]
        %v4842 = vld [vmem:[%s4804 + $0x128] sm:$0x3f]
        %v4843 = vld [vmem:[%s4804 + $0x130] sm:$0x3f]
        %v4845 = vsel %vm4504, %v4807, 0
        %v4848 = vsel %vm4504, %v4810, 0
        %v4851 = vsel %vm4504, %v4813, 0
        %v4854 = vsel %vm4504, %v4816, 0
        %v4857 = vsel %vm4504, %v4819, 0
        %v4860 = vsel %vm4504, %v4822, 0
        %v4863 = vsel %vm4504, %v4825, 0
        %v4866 = vsel %vm4504, %v4828, 0
        %v4869 = vsel %vm4504, %v4831, 0
        %v4872 = vsel %vm4504, %v4834, 0
        %v4875 = vsel %vm4504, %v4837, 0
        %v4878 = vsel %vm4504, %v4840, 0
        %v4881 = vsel %vm4504, %v4843, 0
        %4883 = vmatprep.subr.mxu0 0.0
        %4884 = vmatpush1.msra.mxu0 %v4429
        %4885 = vmatprep.subr.mxu0 0.0
        %4886 = vmatpush1.msra.mxu0 %v4430
        %4887 = vmatprep.subr.mxu0 0.0
        %4888 = vmatpush1.msra.mxu0 %v4431
        %4889 = vmatprep.subr.mxu0 0.0
        %4890 = vmatpush1.msra.mxu0 %v4432
        %4891 = vmatprep.subr.mxu0 0.0
        %4892 = vmatpush1.msra.mxu0 %v4433
        %4893 = vmatprep.subr.mxu0 0.0
        %4894 = vmatpush1.msra.mxu0 %v4434
        %4895 = vmatprep.subr.mxu0 0.0
        %4896 = vmatpush1.msra.mxu0 %v4435
        %4897 = vmatprep.subr.mxu0 0.0
        %4898 = vmatpush1.msra.mxu0 %v4436
        %4899 = vmatprep.subr.mxu0 0.0
        %4900 = vmatpush1.msra.mxu0 %v4437
        %4901 = vmatprep.subr.mxu0 0.0
        %4902 = vmatpush1.msra.mxu0 %v4438
        %4903 = vmatprep.subr.mxu0 0.0
        %4904 = vmatpush1.msra.mxu0 %v4439
        %4905 = vmatprep.subr.mxu0 0.0
        %4906 = vmatpush1.msra.mxu0 %v4440
        %4907 = vmatprep.subr.mxu0 0.0
        %4908 = vmatpush1.msra.mxu0 %v4441
        %4909 = vmatprep.subr.mxu0 0.0
        %4910 = vmatpush1.msra.mxu0 %v4442
        %4911 = vmatprep.subr.mxu0 0.0
        %4912 = vmatpush1.msra.mxu0 %v4443
        %4913 = vmatprep.subr.mxu0 0.0
        %4914 = vmatpush1.msra.mxu0 %v4444
        %4915 = vmatprep.subr.mxu0 0.0
        %4916 = vmatpush1.msra.mxu0 %v4445
        %4917 = vmatprep.subr.mxu0 0.0
        %4918 = vmatpush1.msra.mxu0 %v4446
        %4919 = vmatprep.subr.mxu0 0.0
        %4920 = vmatpush1.msra.mxu0 %v4447
        %4921 = vmatprep.subr.mxu0 0.0
        %4922 = vmatpush1.msra.mxu0 %v4448
        %4923 = vmatprep.subr.mxu0 0.0
        %4924 = vmatpush1.msra.mxu0 %v4449
        %4925 = vmatprep.subr.mxu0 0.0
        %4926 = vmatpush1.msra.mxu0 %v4450
        %4927 = vmatprep.subr.mxu0 0.0
        %4928 = vmatpush1.msra.mxu0 %v4451
        %4929 = vmatprep.subr.mxu0 0.0
        %4930 = vmatpush1.msra.mxu0 %v4452
        %4931 = vmatprep.subr.mxu0 0.0
        %4932 = vmatpush1.msra.mxu0 %v4453
        %4933 = vmatprep.subr.mxu0 0.0
        %4934 = vmatpush1.msra.mxu0 %v4454
        %4935 = vmatprep.subr.mxu0 0.0
        %4936 = vmatpush1.msra.mxu0 %v4455
        %4937 = vmatprep.subr.mxu0 0.0
        %4938 = vmatpush1.msra.mxu0 %v4456
        %4939 = vmatprep.subr.mxu0 0.0
        %4940 = vmatpush1.msra.mxu0 %v4457
        %4941 = vmatprep.subr.mxu0 0.0
        %4942 = vmatpush1.msra.mxu0 %v4458
        %4943 = vmatprep.subr.mxu0 0.0
        %4944 = vmatpush1.msra.mxu0 %v4459
        %4945 = vmatprep.subr.mxu0 0.0
        %4946 = vmatpush1.msra.mxu0 %v4460
        %4947 = vmatprep.mubr.f32.mxu0 %v4806
        %4948 = vmatmul.mubr.f32.gmra.mrb[0].mxu0 %v4805
        %v4949 = vpop.f32.mrb[0].mxu0
        %v4950 = vadd.f32 0.0, %v4949
        %v4951 = vpop.f32.mrb[0].mxu0
        %4952 = vmatprep.mubr.f32.mxu0 %v4809
        %4953 = vmatmul.mubr.f32.gmra.mrb[0].mxu0 %v4808
        %v4954 = vpop.f32.mrb[0].mxu0
        %v4955 = vadd.f32 0.0, %v4954
        %v4956 = vpop.f32.mrb[0].mxu0
        %4957 = vmatprep.mubr.f32.mxu0 %v4812
        %4958 = vmatmul.mubr.f32.gmra.mrb[0].mxu0 %v4811
        %v4959 = vpop.f32.mrb[0].mxu0
        %v4960 = vadd.f32 0.0, %v4959
        %v4961 = vpop.f32.mrb[0].mxu0
        %4962 = vmatprep.mubr.f32.mxu0 %v4815
        %4963 = vmatmul.mubr.f32.gmra.mrb[0].mxu0 %v4814
        %v4964 = vpop.f32.mrb[0].mxu0
        %v4965 = vadd.f32 0.0, %v4964
        %v4966 = vpop.f32.mrb[0].mxu0
        %4967 = vmatprep.mubr.f32.mxu0 %v4818
        %4968 = vmatmul.mubr.f32.gmra.mrb[0].mxu0 %v4817
        %v4969 = vpop.f32.mrb[0].mxu0
        %v4970 = vadd.f32 0.0, %v4969
        %v4971 = vpop.f32.mrb[0].mxu0
        %4972 = vmatprep.mubr.f32.mxu0 %v4821
        %4973 = vmatmul.mubr.f32.gmra.mrb[0].mxu0 %v4820
        %v4974 = vpop.f32.mrb[0].mxu0
        %v4975 = vadd.f32 0.0, %v4974
        %v4976 = vpop.f32.mrb[0].mxu0
        %4977 = vmatprep.mubr.f32.mxu0 %v4824
        %4978 = vmatmul.mubr.f32.gmra.mrb[0].mxu0 %v4823
        %v4979 = vpop.f32.mrb[0].mxu0
        %v4980 = vadd.f32 0.0, %v4979
        %v4981 = vpop.f32.mrb[0].mxu0
        %4982 = vmatprep.mubr.f32.mxu0 %v4827
        %4983 = vmatmul.mubr.f32.gmra.mrb[0].mxu0 %v4826
        %v4984 = vpop.f32.mrb[0].mxu0
        %v4985 = vadd.f32 0.0, %v4984
        %v4986 = vpop.f32.mrb[0].mxu0
        %4987 = vmatprep.mubr.f32.mxu0 %v4830
        %4988 = vmatmul.mubr.f32.gmra.mrb[0].mxu0 %v4829
        %v4989 = vpop.f32.mrb[0].mxu0
        %v4990 = vadd.f32 0.0, %v4989
        %v4991 = vpop.f32.mrb[0].mxu0
        %4992 = vmatprep.mubr.f32.mxu0 %v4833
        %4993 = vmatmul.mubr.f32.gmra.mrb[0].mxu0 %v4832
        %v4994 = vpop.f32.mrb[0].mxu0
        %v4995 = vadd.f32 0.0, %v4994
        %v4996 = vpop.f32.mrb[0].mxu0
        %4997 = vmatprep.mubr.f32.mxu0 %v4836
        %4998 = vmatmul.mubr.f32.gmra.mrb[0].mxu0 %v4835
        %v4999 = vpop.f32.mrb[0].mxu0
        %v5000 = vadd.f32 0.0, %v4999
        %v5001 = vpop.f32.mrb[0].mxu0
        %5002 = vmatprep.mubr.f32.mxu0 %v4839
        %5003 = vmatmul.mubr.f32.gmra.mrb[0].mxu0 %v4838
        %v5004 = vpop.f32.mrb[0].mxu0
        %v5005 = vadd.f32 0.0, %v5004
        %v5006 = vpop.f32.mrb[0].mxu0
        %5007 = vmatprep.mubr.f32.mxu0 %v4842
        %5008 = vmatmul.mubr.f32.gmra.mrb[0].mxu0 %v4841
        %v5009 = vpop.f32.mrb[0].mxu0
        %v5010 = vadd.f32 0.0, %v5009
        %v5011 = vpop.f32.mrb[0].mxu0
        %5012 = vdwg.mxu0
        %5013 = vmatprep.subr.mxu0 0.0
        %5014 = vmatpush1.msra.mxu0 %v4461
        %5015 = vmatprep.subr.mxu0 0.0
        %5016 = vmatpush1.msra.mxu0 %v4462
        %5017 = vmatprep.subr.mxu0 0.0
        %5018 = vmatpush1.msra.mxu0 %v4463
        %5019 = vmatprep.subr.mxu0 0.0
        %5020 = vmatpush1.msra.mxu0 %v4464
        %5021 = vmatprep.subr.mxu0 0.0
        %5022 = vmatpush1.msra.mxu0 0.0
        %5023 = vmatprep.subr.mxu0 0.0
        %5024 = vmatpush1.msra.mxu0 0.0
        %5025 = vmatprep.subr.mxu0 0.0
        %5026 = vmatpush1.msra.mxu0 0.0
        %5027 = vmatprep.subr.mxu0 0.0
        %5028 = vmatpush1.msra.mxu0 0.0
        %5029 = vmatprep.subr.mxu0 0.0
        %5030 = vmatpush1.msra.mxu0 0.0
        %5031 = vmatprep.subr.mxu0 0.0
        %5032 = vmatpush1.msra.mxu0 0.0
        %5033 = vmatprep.subr.mxu0 0.0
        %5034 = vmatpush1.msra.mxu0 0.0
        %5035 = vmatprep.subr.mxu0 0.0
        %5036 = vmatpush1.msra.mxu0 0.0
        %5037 = vmatprep.subr.mxu0 0.0
        %5038 = vmatpush1.msra.mxu0 0.0
        %5039 = vmatprep.subr.mxu0 0.0
        %5040 = vmatpush1.msra.mxu0 0.0
        %5041 = vmatprep.subr.mxu0 0.0
        %5042 = vmatpush1.msra.mxu0 0.0
        %5043 = vmatprep.subr.mxu0 0.0
        %5044 = vmatpush1.msra.mxu0 0.0
        %5045 = vmatprep.subr.mxu0 0.0
        %5046 = vmatpush1.msra.mxu0 0.0
        %5047 = vmatprep.subr.mxu0 0.0
        %5048 = vmatpush1.msra.mxu0 0.0
        %5049 = vmatprep.subr.mxu0 0.0
        %5050 = vmatpush1.msra.mxu0 0.0
        %5051 = vmatprep.subr.mxu0 0.0
        %5052 = vmatpush1.msra.mxu0 0.0
        %5053 = vmatprep.subr.mxu0 0.0
        %5054 = vmatpush1.msra.mxu0 0.0
        %5055 = vmatprep.subr.mxu0 0.0
        %5056 = vmatpush1.msra.mxu0 0.0
        %5057 = vmatprep.subr.mxu0 0.0
        %5058 = vmatpush1.msra.mxu0 0.0
        %5059 = vmatprep.subr.mxu0 0.0
        %5060 = vmatpush1.msra.mxu0 0.0
        %5061 = vmatprep.subr.mxu0 0.0
        %5062 = vmatpush1.msra.mxu0 0.0
        %5063 = vmatprep.subr.mxu0 0.0
        %5064 = vmatpush1.msra.mxu0 0.0
        %5065 = vmatprep.subr.mxu0 0.0
        %5066 = vmatpush1.msra.mxu0 0.0
        %5067 = vmatprep.subr.mxu0 0.0
        %5068 = vmatpush1.msra.mxu0 0.0
        %5069 = vmatprep.subr.mxu0 0.0
        %5070 = vmatpush1.msra.mxu0 0.0
        %5071 = vmatprep.subr.mxu0 0.0
        %5072 = vmatpush1.msra.mxu0 0.0
        %5073 = vmatprep.subr.mxu0 0.0
        %5074 = vmatpush1.msra.mxu0 0.0
        %5075 = vmatprep.subr.mxu0 0.0
        %5076 = vmatpush1.msra.mxu0 0.0
        %5077 = vmatprep.mubr.f32.mxu0 0.0
        %5078 = vmatmul.mubr.f32.gmra.mrb[0].mxu0 %v4845
        %v5079 = vpop.f32.mrb[0].mxu0
        %v5080 = vadd.f32 %v4950, %v5079
        %v5081 = vpop.f32.mrb[0].mxu0
        %5082 = vmatprep.mubr.f32.mxu0 0.0
        %5083 = vmatmul.mubr.f32.gmra.mrb[0].mxu0 %v4848
        %v5084 = vpop.f32.mrb[0].mxu0
        %v5085 = vadd.f32 %v4955, %v5084
        %v5086 = vpop.f32.mrb[0].mxu0
        %5087 = vmatprep.mubr.f32.mxu0 0.0
        %5088 = vmatmul.mubr.f32.gmra.mrb[0].mxu0 %v4851
        %v5089 = vpop.f32.mrb[0].mxu0
        %v5090 = vadd.f32 %v4960, %v5089
        %v5091 = vpop.f32.mrb[0].mxu0
        %5092 = vmatprep.mubr.f32.mxu0 0.0
        %5093 = vmatmul.mubr.f32.gmra.mrb[0].mxu0 %v4854
        %v5094 = vpop.f32.mrb[0].mxu0
        %v5095 = vadd.f32 %v4965, %v5094
        %v5096 = vpop.f32.mrb[0].mxu0
        %5097 = vmatprep.mubr.f32.mxu0 0.0
        %5098 = vmatmul.mubr.f32.gmra.mrb[0].mxu0 %v4857
        %v5099 = vpop.f32.mrb[0].mxu0
        %v5100 = vadd.f32 %v4970, %v5099
        %v5101 = vpop.f32.mrb[0].mxu0
        %5102 = vmatprep.mubr.f32.mxu0 0.0
        %5103 = vmatmul.mubr.f32.gmra.mrb[0].mxu0 %v4860
        %v5104 = vpop.f32.mrb[0].mxu0
        %v5105 = vadd.f32 %v4975, %v5104
        %v5106 = vpop.f32.mrb[0].mxu0
        %5107 = vmatprep.mubr.f32.mxu0 0.0
        %5108 = vmatmul.mubr.f32.gmra.mrb[0].mxu0 %v4863
        %v5109 = vpop.f32.mrb[0].mxu0
        %v5110 = vadd.f32 %v4980, %v5109
        %v5111 = vpop.f32.mrb[0].mxu0
        %5112 = vmatprep.mubr.f32.mxu0 0.0
        %5113 = vmatmul.mubr.f32.gmra.mrb[0].mxu0 %v4866
        %v5114 = vpop.f32.mrb[0].mxu0
        %v5115 = vadd.f32 %v4985, %v5114
        %v5116 = vpop.f32.mrb[0].mxu0
        %5117 = vmatprep.mubr.f32.mxu0 0.0
        %5118 = vmatmul.mubr.f32.gmra.mrb[0].mxu0 %v4869
        %v5119 = vpop.f32.mrb[0].mxu0
        %v5120 = vadd.f32 %v4990, %v5119
        %v5121 = vpop.f32.mrb[0].mxu0
        %5122 = vmatprep.mubr.f32.mxu0 0.0
        %5123 = vmatmul.mubr.f32.gmra.mrb[0].mxu0 %v4872
        %v5124 = vpop.f32.mrb[0].mxu0
        %v5125 = vadd.f32 %v4995, %v5124
        %v5126 = vpop.f32.mrb[0].mxu0
        %5127 = vmatprep.mubr.f32.mxu0 0.0
        %5128 = vmatmul.mubr.f32.gmra.mrb[0].mxu0 %v4875
        %v5129 = vpop.f32.mrb[0].mxu0
        %v5130 = vadd.f32 %v5000, %v5129
        %v5131 = vpop.f32.mrb[0].mxu0
        %5132 = vmatprep.mubr.f32.mxu0 0.0
        %5133 = vmatmul.mubr.f32.gmra.mrb[0].mxu0 %v4878
        %v5134 = vpop.f32.mrb[0].mxu0
        %v5135 = vadd.f32 %v5005, %v5134
        %v5136 = vpop.f32.mrb[0].mxu0
        %5137 = vmatprep.mubr.f32.mxu0 0.0
        %5138 = vmatmul.mubr.f32.gmra.mrb[0].mxu0 %v4881
        %v5139 = vpop.f32.mrb[0].mxu0
        %v5140 = vadd.f32 %v5010, %v5139
        %v5141 = vpop.f32.mrb[0].mxu0
        %5142 = vdwg.mxu0
        %v5143 = vmax.f32 %v4741, %v5080
        %v5144 = vmax.f32 %v4746, %v5085
        %v5145 = vmax.f32 %v4751, %v5090
        %v5146 = vmax.f32 %v4756, %v5095
        %v5147 = vmax.f32 %v4761, %v5100
        %v5148 = vmax.f32 %v4766, %v5105
        %v5149 = vmax.f32 %v4771, %v5110
        %v5150 = vmax.f32 %v4776, %v5115
        %v5151 = vmax.f32 %v4781, %v5120
        %v5152 = vmax.f32 %v4786, %v5125
        %v5153 = vmax.f32 %v4791, %v5130
        %v5154 = vmax.f32 %v4796, %v5135
        %v5155 = vmax.f32 %v4801, %v5140
        %s5156 = scalar_lea.vmem %s3, 624
        %v5157 = vld [vmem:[%s5156] sm:$0xff]
        %v5158 = vld [vmem:[%s5156 + $0x8] sm:$0xff]
        %v5159 = vld [vmem:[%s5156 + $0x10] sm:$0xff]
        %v5160 = vld [vmem:[%s5156 + $0x18] sm:$0xff]
        %v5161 = vld [vmem:[%s5156 + $0x20] sm:$0xff]
        %v5162 = vld [vmem:[%s5156 + $0x28] sm:$0xff]
        %v5163 = vld [vmem:[%s5156 + $0x30] sm:$0xff]
        %v5164 = vld [vmem:[%s5156 + $0x38] sm:$0xff]
        %v5165 = vld [vmem:[%s5156 + $0x40] sm:$0xff]
        %v5166 = vld [vmem:[%s5156 + $0x48] sm:$0xff]
        %v5167 = vld [vmem:[%s5156 + $0x50] sm:$0xff]
        %v5168 = vld [vmem:[%s5156 + $0x58] sm:$0xff]
        %v5169 = vld [vmem:[%s5156 + $0x60] sm:$0xff]
        %v5170 = vld [vmem:[%s5156 + $0x68] sm:$0xff]
        %v5171 = vld [vmem:[%s5156 + $0x70] sm:$0xff]
        %v5172 = vld [vmem:[%s5156 + $0x78] sm:$0xff]
        %v5173 = vld [vmem:[%s5156 + $0x80] sm:$0xff]
        %v5174 = vld [vmem:[%s5156 + $0x88] sm:$0xff]
        %v5175 = vld [vmem:[%s5156 + $0x90] sm:$0xff]
        %v5176 = vld [vmem:[%s5156 + $0x98] sm:$0xff]
        %v5177 = vld [vmem:[%s5156 + $0xa0] sm:$0xff]
        %v5178 = vld [vmem:[%s5156 + $0xa8] sm:$0xff]
        %v5179 = vld [vmem:[%s5156 + $0xb0] sm:$0xff]
        %v5180 = vld [vmem:[%s5156 + $0xb8] sm:$0xff]
        %v5181 = vld [vmem:[%s5156 + $0xc0] sm:$0xff]
        %v5182 = vld [vmem:[%s5156 + $0xc8] sm:$0xff]
        %v5183 = vld [vmem:[%s5156 + $0xd0] sm:$0xff]
        %v5184 = vld [vmem:[%s5156 + $0xd8] sm:$0xff]
        %v5185 = vld [vmem:[%s5156 + $0xe0] sm:$0xff]
        %v5186 = vld [vmem:[%s5156 + $0xe8] sm:$0xff]
        %v5187 = vld [vmem:[%s5156 + $0xf0] sm:$0xff]
        %v5188 = vld [vmem:[%s5156 + $0xf8] sm:$0xff]
        %v5189 = vld [vmem:[%s5156 + $0x100] sm:$0xff]
        %v5190 = vld [vmem:[%s5156 + $0x108] sm:$0xff]
        %v5191 = vld [vmem:[%s5156 + $0x110] sm:$0xff]
        %v5192 = vld [vmem:[%s5156 + $0x118] sm:$0xff]
        %v5193 = vld [vmem:[%s5156 + $0x120] sm:$0x3f]
        %v5194 = vld [vmem:[%s5156 + $0x128] sm:$0x3f]
        %v5195 = vld [vmem:[%s5156 + $0x130] sm:$0x3f]
        %v5197 = vsel %vm4504, %v5159, 0
        %v5200 = vsel %vm4504, %v5162, 0
        %v5203 = vsel %vm4504, %v5165, 0
        %v5206 = vsel %vm4504, %v5168, 0
        %v5209 = vsel %vm4504, %v5171, 0
        %v5212 = vsel %vm4504, %v5174, 0
        %v5215 = vsel %vm4504, %v5177, 0
        %v5218 = vsel %vm4504, %v5180, 0
        %v5221 = vsel %vm4504, %v5183, 0
        %v5224 = vsel %vm4504, %v5186, 0
        %v5227 = vsel %vm4504, %v5189, 0
        %v5230 = vsel %vm4504, %v5192, 0
        %v5233 = vsel %vm4504, %v5195, 0
        %5235 = vmatprep.subr.mxu0 0.0
        %5236 = vmatpush1.msra.mxu0 %v4429
        %5237 = vmatprep.subr.mxu0 0.0
        %5238 = vmatpush1.msra.mxu0 %v4430
        %5239 = vmatprep.subr.mxu0 0.0
        %5240 = vmatpush1.msra.mxu0 %v4431
        %5241 = vmatprep.subr.mxu0 0.0
        %5242 = vmatpush1.msra.mxu0 %v4432
        %5243 = vmatprep.subr.mxu0 0.0
        %5244 = vmatpush1.msra.mxu0 %v4433
        %5245 = vmatprep.subr.mxu0 0.0
        %5246 = vmatpush1.msra.mxu0 %v4434
        %5247 = vmatprep.subr.mxu0 0.0
        %5248 = vmatpush1.msra.mxu0 %v4435
        %5249 = vmatprep.subr.mxu0 0.0
        %5250 = vmatpush1.msra.mxu0 %v4436
        %5251 = vmatprep.subr.mxu0 0.0
        %5252 = vmatpush1.msra.mxu0 %v4437
        %5253 = vmatprep.subr.mxu0 0.0
        %5254 = vmatpush1.msra.mxu0 %v4438
        %5255 = vmatprep.subr.mxu0 0.0
        %5256 = vmatpush1.msra.mxu0 %v4439
        %5257 = vmatprep.subr.mxu0 0.0
        %5258 = vmatpush1.msra.mxu0 %v4440
        %5259 = vmatprep.subr.mxu0 0.0
        %5260 = vmatpush1.msra.mxu0 %v4441
        %5261 = vmatprep.subr.mxu0 0.0
        %5262 = vmatpush1.msra.mxu0 %v4442
        %5263 = vmatprep.subr.mxu0 0.0
        %5264 = vmatpush1.msra.mxu0 %v4443
        %5265 = vmatprep.subr.mxu0 0.0
        %5266 = vmatpush1.msra.mxu0 %v4444
        %5267 = vmatprep.subr.mxu0 0.0
        %5268 = vmatpush1.msra.mxu0 %v4445
        %5269 = vmatprep.subr.mxu0 0.0
        %5270 = vmatpush1.msra.mxu0 %v4446
        %5271 = vmatprep.subr.mxu0 0.0
        %5272 = vmatpush1.msra.mxu0 %v4447
        %5273 = vmatprep.subr.mxu0 0.0
        %5274 = vmatpush1.msra.mxu0 %v4448
        %5275 = vmatprep.subr.mxu0 0.0
        %5276 = vmatpush1.msra.mxu0 %v4449
        %5277 = vmatprep.subr.mxu0 0.0
        %5278 = vmatpush1.msra.mxu0 %v4450
        %5279 = vmatprep.subr.mxu0 0.0
        %5280 = vmatpush1.msra.mxu0 %v4451
        %5281 = vmatprep.subr.mxu0 0.0
        %5282 = vmatpush1.msra.mxu0 %v4452
        %5283 = vmatprep.subr.mxu0 0.0
        %5284 = vmatpush1.msra.mxu0 %v4453
        %5285 = vmatprep.subr.mxu0 0.0
        %5286 = vmatpush1.msra.mxu0 %v4454
        %5287 = vmatprep.subr.mxu0 0.0
        %5288 = vmatpush1.msra.mxu0 %v4455
        %5289 = vmatprep.subr.mxu0 0.0
        %5290 = vmatpush1.msra.mxu0 %v4456
        %5291 = vmatprep.subr.mxu0 0.0
        %5292 = vmatpush1.msra.mxu0 %v4457
        %5293 = vmatprep.subr.mxu0 0.0
        %5294 = vmatpush1.msra.mxu0 %v4458
        %5295 = vmatprep.subr.mxu0 0.0
        %5296 = vmatpush1.msra.mxu0 %v4459
        %5297 = vmatprep.subr.mxu0 0.0
        %5298 = vmatpush1.msra.mxu0 %v4460
        %5299 = vmatprep.mubr.f32.mxu0 %v5158
        %5300 = vmatmul.mubr.f32.gmra.mrb[0].mxu0 %v5157
        %v5301 = vpop.f32.mrb[0].mxu0
        %v5302 = vadd.f32 0.0, %v5301
        %v5303 = vpop.f32.mrb[0].mxu0
        %5304 = vmatprep.mubr.f32.mxu0 %v5161
        %5305 = vmatmul.mubr.f32.gmra.mrb[0].mxu0 %v5160
        %v5306 = vpop.f32.mrb[0].mxu0
        %v5307 = vadd.f32 0.0, %v5306
        %v5308 = vpop.f32.mrb[0].mxu0
        %5309 = vmatprep.mubr.f32.mxu0 %v5164
        %5310 = vmatmul.mubr.f32.gmra.mrb[0].mxu0 %v5163
        %v5311 = vpop.f32.mrb[0].mxu0
        %v5312 = vadd.f32 0.0, %v5311
        %v5313 = vpop.f32.mrb[0].mxu0
        %5314 = vmatprep.mubr.f32.mxu0 %v5167
        %5315 = vmatmul.mubr.f32.gmra.mrb[0].mxu0 %v5166
        %v5316 = vpop.f32.mrb[0].mxu0
        %v5317 = vadd.f32 0.0, %v5316
        %v5318 = vpop.f32.mrb[0].mxu0
        %5319 = vmatprep.mubr.f32.mxu0 %v5170
        %5320 = vmatmul.mubr.f32.gmra.mrb[0].mxu0 %v5169
        %v5321 = vpop.f32.mrb[0].mxu0
        %v5322 = vadd.f32 0.0, %v5321
        %v5323 = vpop.f32.mrb[0].mxu0
        %5324 = vmatprep.mubr.f32.mxu0 %v5173
        %5325 = vmatmul.mubr.f32.gmra.mrb[0].mxu0 %v5172
        %v5326 = vpop.f32.mrb[0].mxu0
        %v5327 = vadd.f32 0.0, %v5326
        %v5328 = vpop.f32.mrb[0].mxu0
        %5329 = vmatprep.mubr.f32.mxu0 %v5176
        %5330 = vmatmul.mubr.f32.gmra.mrb[0].mxu0 %v5175
        %v5331 = vpop.f32.mrb[0].mxu0
        %v5332 = vadd.f32 0.0, %v5331
        %v5333 = vpop.f32.mrb[0].mxu0
        %5334 = vmatprep.mubr.f32.mxu0 %v5179
        %5335 = vmatmul.mubr.f32.gmra.mrb[0].mxu0 %v5178
        %v5336 = vpop.f32.mrb[0].mxu0
        %v5337 = vadd.f32 0.0, %v5336
        %v5338 = vpop.f32.mrb[0].mxu0
        %5339 = vmatprep.mubr.f32.mxu0 %v5182
        %5340 = vmatmul.mubr.f32.gmra.mrb[0].mxu0 %v5181
        %v5341 = vpop.f32.mrb[0].mxu0
        %v5342 = vadd.f32 0.0, %v5341
        %v5343 = vpop.f32.mrb[0].mxu0
        %5344 = vmatprep.mubr.f32.mxu0 %v5185
        %5345 = vmatmul.mubr.f32.gmra.mrb[0].mxu0 %v5184
        %v5346 = vpop.f32.mrb[0].mxu0
        %v5347 = vadd.f32 0.0, %v5346
        %v5348 = vpop.f32.mrb[0].mxu0
        %5349 = vmatprep.mubr.f32.mxu0 %v5188
        %5350 = vmatmul.mubr.f32.gmra.mrb[0].mxu0 %v5187
        %v5351 = vpop.f32.mrb[0].mxu0
        %v5352 = vadd.f32 0.0, %v5351
        %v5353 = vpop.f32.mrb[0].mxu0
        %5354 = vmatprep.mubr.f32.mxu0 %v5191
        %5355 = vmatmul.mubr.f32.gmra.mrb[0].mxu0 %v5190
        %v5356 = vpop.f32.mrb[0].mxu0
        %v5357 = vadd.f32 0.0, %v5356
        %v5358 = vpop.f32.mrb[0].mxu0
        %5359 = vmatprep.mubr.f32.mxu0 %v5194
        %5360 = vmatmul.mubr.f32.gmra.mrb[0].mxu0 %v5193
        %v5361 = vpop.f32.mrb[0].mxu0
        %v5362 = vadd.f32 0.0, %v5361
        %v5363 = vpop.f32.mrb[0].mxu0
        %5364 = vdwg.mxu0
        %5365 = vmatprep.subr.mxu0 0.0
        %5366 = vmatpush1.msra.mxu0 %v4461
        %5367 = vmatprep.subr.mxu0 0.0
        %5368 = vmatpush1.msra.mxu0 %v4462
        %5369 = vmatprep.subr.mxu0 0.0
        %5370 = vmatpush1.msra.mxu0 %v4463
        %5371 = vmatprep.subr.mxu0 0.0
        %5372 = vmatpush1.msra.mxu0 %v4464
        %5373 = vmatprep.subr.mxu0 0.0
        %5374 = vmatpush1.msra.mxu0 0.0
        %5375 = vmatprep.subr.mxu0 0.0
        %5376 = vmatpush1.msra.mxu0 0.0
        %5377 = vmatprep.subr.mxu0 0.0
        %5378 = vmatpush1.msra.mxu0 0.0
        %5379 = vmatprep.subr.mxu0 0.0
        %5380 = vmatpush1.msra.mxu0 0.0
        %5381 = vmatprep.subr.mxu0 0.0
        %5382 = vmatpush1.msra.mxu0 0.0
        %5383 = vmatprep.subr.mxu0 0.0
        %5384 = vmatpush1.msra.mxu0 0.0
        %5385 = vmatprep.subr.mxu0 0.0
        %5386 = vmatpush1.msra.mxu0 0.0
        %5387 = vmatprep.subr.mxu0 0.0
        %5388 = vmatpush1.msra.mxu0 0.0
        %5389 = vmatprep.subr.mxu0 0.0
        %5390 = vmatpush1.msra.mxu0 0.0
        %5391 = vmatprep.subr.mxu0 0.0
        %5392 = vmatpush1.msra.mxu0 0.0
        %5393 = vmatprep.subr.mxu0 0.0
        %5394 = vmatpush1.msra.mxu0 0.0
        %5395 = vmatprep.subr.mxu0 0.0
        %5396 = vmatpush1.msra.mxu0 0.0
        %5397 = vmatprep.subr.mxu0 0.0
        %5398 = vmatpush1.msra.mxu0 0.0
        %5399 = vmatprep.subr.mxu0 0.0
        %5400 = vmatpush1.msra.mxu0 0.0
        %5401 = vmatprep.subr.mxu0 0.0
        %5402 = vmatpush1.msra.mxu0 0.0
        %5403 = vmatprep.subr.mxu0 0.0
        %5404 = vmatpush1.msra.mxu0 0.0
        %5405 = vmatprep.subr.mxu0 0.0
        %5406 = vmatpush1.msra.mxu0 0.0
        %5407 = vmatprep.subr.mxu0 0.0
        %5408 = vmatpush1.msra.mxu0 0.0
        %5409 = vmatprep.subr.mxu0 0.0
        %5410 = vmatpush1.msra.mxu0 0.0
        %5411 = vmatprep.subr.mxu0 0.0
        %5412 = vmatpush1.msra.mxu0 0.0
        %5413 = vmatprep.subr.mxu0 0.0
        %5414 = vmatpush1.msra.mxu0 0.0
        %5415 = vmatprep.subr.mxu0 0.0
        %5416 = vmatpush1.msra.mxu0 0.0
        %5417 = vmatprep.subr.mxu0 0.0
        %5418 = vmatpush1.msra.mxu0 0.0
        %5419 = vmatprep.subr.mxu0 0.0
        %5420 = vmatpush1.msra.mxu0 0.0
        %5421 = vmatprep.subr.mxu0 0.0
        %5422 = vmatpush1.msra.mxu0 0.0
        %5423 = vmatprep.subr.mxu0 0.0
        %5424 = vmatpush1.msra.mxu0 0.0
        %5425 = vmatprep.subr.mxu0 0.0
        %5426 = vmatpush1.msra.mxu0 0.0
        %5427 = vmatprep.subr.mxu0 0.0
        %5428 = vmatpush1.msra.mxu0 0.0
        %5429 = vmatprep.mubr.f32.mxu0 0.0
        %5430 = vmatmul.mubr.f32.gmra.mrb[0].mxu0 %v5197
        %v5431 = vpop.f32.mrb[0].mxu0
        %v5432 = vadd.f32 %v5302, %v5431
        %v5433 = vpop.f32.mrb[0].mxu0
        %5434 = vmatprep.mubr.f32.mxu0 0.0
        %5435 = vmatmul.mubr.f32.gmra.mrb[0].mxu0 %v5200
        %v5436 = vpop.f32.mrb[0].mxu0
        %v5437 = vadd.f32 %v5307, %v5436
        %v5438 = vpop.f32.mrb[0].mxu0
        %5439 = vmatprep.mubr.f32.mxu0 0.0
        %5440 = vmatmul.mubr.f32.gmra.mrb[0].mxu0 %v5203
        %v5441 = vpop.f32.mrb[0].mxu0
        %v5442 = vadd.f32 %v5312, %v5441
        %v5443 = vpop.f32.mrb[0].mxu0
        %5444 = vmatprep.mubr.f32.mxu0 0.0
        %5445 = vmatmul.mubr.f32.gmra.mrb[0].mxu0 %v5206
        %v5446 = vpop.f32.mrb[0].mxu0
        %v5447 = vadd.f32 %v5317, %v5446
        %v5448 = vpop.f32.mrb[0].mxu0
        %5449 = vmatprep.mubr.f32.mxu0 0.0
        %5450 = vmatmul.mubr.f32.gmra.mrb[0].mxu0 %v5209
        %v5451 = vpop.f32.mrb[0].mxu0
        %v5452 = vadd.f32 %v5322, %v5451
        %v5453 = vpop.f32.mrb[0].mxu0
        %5454 = vmatprep.mubr.f32.mxu0 0.0
        %5455 = vmatmul.mubr.f32.gmra.mrb[0].mxu0 %v5212
        %v5456 = vpop.f32.mrb[0].mxu0
        %v5457 = vadd.f32 %v5327, %v5456
        %v5458 = vpop.f32.mrb[0].mxu0
        %5459 = vmatprep.mubr.f32.mxu0 0.0
        %5460 = vmatmul.mubr.f32.gmra.mrb[0].mxu0 %v5215
        %v5461 = vpop.f32.mrb[0].mxu0
        %v5462 = vadd.f32 %v5332, %v5461
        %v5463 = vpop.f32.mrb[0].mxu0
        %5464 = vmatprep.mubr.f32.mxu0 0.0
        %5465 = vmatmul.mubr.f32.gmra.mrb[0].mxu0 %v5218
        %v5466 = vpop.f32.mrb[0].mxu0
        %v5467 = vadd.f32 %v5337, %v5466
        %v5468 = vpop.f32.mrb[0].mxu0
        %5469 = vmatprep.mubr.f32.mxu0 0.0
        %5470 = vmatmul.mubr.f32.gmra.mrb[0].mxu0 %v5221
        %v5471 = vpop.f32.mrb[0].mxu0
        %v5472 = vadd.f32 %v5342, %v5471
        %v5473 = vpop.f32.mrb[0].mxu0
        %5474 = vmatprep.mubr.f32.mxu0 0.0
        %5475 = vmatmul.mubr.f32.gmra.mrb[0].mxu0 %v5224
        %v5476 = vpop.f32.mrb[0].mxu0
        %v5477 = vadd.f32 %v5347, %v5476
        %v5478 = vpop.f32.mrb[0].mxu0
        %5479 = vmatprep.mubr.f32.mxu0 0.0
        %5480 = vmatmul.mubr.f32.gmra.mrb[0].mxu0 %v5227
        %v5481 = vpop.f32.mrb[0].mxu0
        %v5482 = vadd.f32 %v5352, %v5481
        %v5483 = vpop.f32.mrb[0].mxu0
        %5484 = vmatprep.mubr.f32.mxu0 0.0
        %5485 = vmatmul.mubr.f32.gmra.mrb[0].mxu0 %v5230
        %v5486 = vpop.f32.mrb[0].mxu0
        %v5487 = vadd.f32 %v5357, %v5486
        %v5488 = vpop.f32.mrb[0].mxu0
        %5489 = vmatprep.mubr.f32.mxu0 0.0
        %5490 = vmatmul.mubr.f32.gmra.mrb[0].mxu0 %v5233
        %v5491 = vpop.f32.mrb[0].mxu0
        %v5492 = vadd.f32 %v5362, %v5491
        %v5493 = vpop.f32.mrb[0].mxu0
        %5494 = vdwg.mxu0
        %v5495 = vmax.f32 %v5143, %v5432
        %v5496 = vmax.f32 %v5144, %v5437
        %v5497 = vmax.f32 %v5145, %v5442
        %v5498 = vmax.f32 %v5146, %v5447
        %v5499 = vmax.f32 %v5147, %v5452
        %v5500 = vmax.f32 %v5148, %v5457
        %v5501 = vmax.f32 %v5149, %v5462
        %v5502 = vmax.f32 %v5150, %v5467
        %v5503 = vmax.f32 %v5151, %v5472
        %v5504 = vmax.f32 %v5152, %v5477
        %v5505 = vmax.f32 %v5153, %v5482
        %v5506 = vmax.f32 %v5154, %v5487
        %v5507 = vmax.f32 %v5155, %v5492
        %s5508 = scalar_lea.vmem %s3, 936
        %v5509 = vld [vmem:[%s5508] sm:$0xff]
        %v5510 = vld [vmem:[%s5508 + $0x8] sm:$0xff]
        %v5511 = vld [vmem:[%s5508 + $0x10] sm:$0xff]
        %v5512 = vld [vmem:[%s5508 + $0x18] sm:$0xff]
        %v5513 = vld [vmem:[%s5508 + $0x20] sm:$0xff]
        %v5514 = vld [vmem:[%s5508 + $0x28] sm:$0xff]
        %v5515 = vld [vmem:[%s5508 + $0x30] sm:$0xff]
        %v5516 = vld [vmem:[%s5508 + $0x38] sm:$0xff]
        %v5517 = vld [vmem:[%s5508 + $0x40] sm:$0xff]
        %v5518 = vld [vmem:[%s5508 + $0x48] sm:$0xff]
        %v5519 = vld [vmem:[%s5508 + $0x50] sm:$0xff]
        %v5520 = vld [vmem:[%s5508 + $0x58] sm:$0xff]
        %v5521 = vld [vmem:[%s5508 + $0x60] sm:$0xff]
        %v5522 = vld [vmem:[%s5508 + $0x68] sm:$0xff]
        %v5523 = vld [vmem:[%s5508 + $0x70] sm:$0xff]
        %v5524 = vld [vmem:[%s5508 + $0x78] sm:$0xff]
        %v5525 = vld [vmem:[%s5508 + $0x80] sm:$0xff]
        %v5526 = vld [vmem:[%s5508 + $0x88] sm:$0xff]
        %v5527 = vld [vmem:[%s5508 + $0x90] sm:$0xff]
        %v5528 = vld [vmem:[%s5508 + $0x98] sm:$0xff]
        %v5529 = vld [vmem:[%s5508 + $0xa0] sm:$0xff]
        %v5530 = vld [vmem:[%s5508 + $0xa8] sm:$0xff]
        %v5531 = vld [vmem:[%s5508 + $0xb0] sm:$0xff]
        %v5532 = vld [vmem:[%s5508 + $0xb8] sm:$0xff]
        %v5533 = vld [vmem:[%s5508 + $0xc0] sm:$0xff]
        %v5534 = vld [vmem:[%s5508 + $0xc8] sm:$0xff]
        %v5535 = vld [vmem:[%s5508 + $0xd0] sm:$0xff]
        %v5536 = vld [vmem:[%s5508 + $0xd8] sm:$0xff]
        %v5537 = vld [vmem:[%s5508 + $0xe0] sm:$0xff]
        %v5538 = vld [vmem:[%s5508 + $0xe8] sm:$0xff]
        %v5539 = vld [vmem:[%s5508 + $0xf0] sm:$0xff]
        %v5540 = vld [vmem:[%s5508 + $0xf8] sm:$0xff]
        %v5541 = vld [vmem:[%s5508 + $0x100] sm:$0xff]
        %v5542 = vld [vmem:[%s5508 + $0x108] sm:$0xff]
        %v5543 = vld [vmem:[%s5508 + $0x110] sm:$0xff]
        %v5544 = vld [vmem:[%s5508 + $0x118] sm:$0xff]
        %v5545 = vld [vmem:[%s5508 + $0x120] sm:$0x3f]
        %v5546 = vld [vmem:[%s5508 + $0x128] sm:$0x3f]
        %v5547 = vld [vmem:[%s5508 + $0x130] sm:$0x3f]
        %v5549 = vsel %vm4504, %v5511, 0
        %v5552 = vsel %vm4504, %v5514, 0
        %v5555 = vsel %vm4504, %v5517, 0
        %v5558 = vsel %vm4504, %v5520, 0
        %v5561 = vsel %vm4504, %v5523, 0
        %v5564 = vsel %vm4504, %v5526, 0
        %v5567 = vsel %vm4504, %v5529, 0
        %v5570 = vsel %vm4504, %v5532, 0
        %v5573 = vsel %vm4504, %v5535, 0
        %v5576 = vsel %vm4504, %v5538, 0
        %v5579 = vsel %vm4504, %v5541, 0
        %v5582 = vsel %vm4504, %v5544, 0
        %v5585 = vsel %vm4504, %v5547, 0
        %5587 = vmatprep.subr.mxu0 0.0
        %5588 = vmatpush1.msra.mxu0 %v4429
        %5589 = vmatprep.subr.mxu0 0.0
        %5590 = vmatpush1.msra.mxu0 %v4430
        %5591 = vmatprep.subr.mxu0 0.0
        %5592 = vmatpush1.msra.mxu0 %v4431
        %5593 = vmatprep.subr.mxu0 0.0
        %5594 = vmatpush1.msra.mxu0 %v4432
        %5595 = vmatprep.subr.mxu0 0.0
        %5596 = vmatpush1.msra.mxu0 %v4433
        %5597 = vmatprep.subr.mxu0 0.0
        %5598 = vmatpush1.msra.mxu0 %v4434
        %5599 = vmatprep.subr.mxu0 0.0
        %5600 = vmatpush1.msra.mxu0 %v4435
        %5601 = vmatprep.subr.mxu0 0.0
        %5602 = vmatpush1.msra.mxu0 %v4436
        %5603 = vmatprep.subr.mxu0 0.0
        %5604 = vmatpush1.msra.mxu0 %v4437
        %5605 = vmatprep.subr.mxu0 0.0
        %5606 = vmatpush1.msra.mxu0 %v4438
        %5607 = vmatprep.subr.mxu0 0.0
        %5608 = vmatpush1.msra.mxu0 %v4439
        %5609 = vmatprep.subr.mxu0 0.0
        %5610 = vmatpush1.msra.mxu0 %v4440
        %5611 = vmatprep.subr.mxu0 0.0
        %5612 = vmatpush1.msra.mxu0 %v4441
        %5613 = vmatprep.subr.mxu0 0.0
        %5614 = vmatpush1.msra.mxu0 %v4442
        %5615 = vmatprep.subr.mxu0 0.0
        %5616 = vmatpush1.msra.mxu0 %v4443
        %5617 = vmatprep.subr.mxu0 0.0
        %5618 = vmatpush1.msra.mxu0 %v4444
        %5619 = vmatprep.subr.mxu0 0.0
        %5620 = vmatpush1.msra.mxu0 %v4445
        %5621 = vmatprep.subr.mxu0 0.0
        %5622 = vmatpush1.msra.mxu0 %v4446
        %5623 = vmatprep.subr.mxu0 0.0
        %5624 = vmatpush1.msra.mxu0 %v4447
        %5625 = vmatprep.subr.mxu0 0.0
        %5626 = vmatpush1.msra.mxu0 %v4448
        %5627 = vmatprep.subr.mxu0 0.0
        %5628 = vmatpush1.msra.mxu0 %v4449
        %5629 = vmatprep.subr.mxu0 0.0
        %5630 = vmatpush1.msra.mxu0 %v4450
        %5631 = vmatprep.subr.mxu0 0.0
        %5632 = vmatpush1.msra.mxu0 %v4451
        %5633 = vmatprep.subr.mxu0 0.0
        %5634 = vmatpush1.msra.mxu0 %v4452
        %5635 = vmatprep.subr.mxu0 0.0
        %5636 = vmatpush1.msra.mxu0 %v4453
        %5637 = vmatprep.subr.mxu0 0.0
        %5638 = vmatpush1.msra.mxu0 %v4454
        %5639 = vmatprep.subr.mxu0 0.0
        %5640 = vmatpush1.msra.mxu0 %v4455
        %5641 = vmatprep.subr.mxu0 0.0
        %5642 = vmatpush1.msra.mxu0 %v4456
        %5643 = vmatprep.subr.mxu0 0.0
        %5644 = vmatpush1.msra.mxu0 %v4457
        %5645 = vmatprep.subr.mxu0 0.0
        %5646 = vmatpush1.msra.mxu0 %v4458
        %5647 = vmatprep.subr.mxu0 0.0
        %5648 = vmatpush1.msra.mxu0 %v4459
        %5649 = vmatprep.subr.mxu0 0.0
        %5650 = vmatpush1.msra.mxu0 %v4460
        %5651 = vmatprep.mubr.f32.mxu0 %v5510
        %5652 = vmatmul.mubr.f32.gmra.mrb[0].mxu0 %v5509
        %v5653 = vpop.f32.mrb[0].mxu0
        %v5654 = vadd.f32 0.0, %v5653
        %v5655 = vpop.f32.mrb[0].mxu0
        %5656 = vmatprep.mubr.f32.mxu0 %v5513
        %5657 = vmatmul.mubr.f32.gmra.mrb[0].mxu0 %v5512
        %v5658 = vpop.f32.mrb[0].mxu0
        %v5659 = vadd.f32 0.0, %v5658
        %v5660 = vpop.f32.mrb[0].mxu0
        %5661 = vmatprep.mubr.f32.mxu0 %v5516
        %5662 = vmatmul.mubr.f32.gmra.mrb[0].mxu0 %v5515
        %v5663 = vpop.f32.mrb[0].mxu0
        %v5664 = vadd.f32 0.0, %v5663
        %v5665 = vpop.f32.mrb[0].mxu0
        %5666 = vmatprep.mubr.f32.mxu0 %v5519
        %5667 = vmatmul.mubr.f32.gmra.mrb[0].mxu0 %v5518
        %v5668 = vpop.f32.mrb[0].mxu0
        %v5669 = vadd.f32 0.0, %v5668
        %v5670 = vpop.f32.mrb[0].mxu0
        %5671 = vmatprep.mubr.f32.mxu0 %v5522
        %5672 = vmatmul.mubr.f32.gmra.mrb[0].mxu0 %v5521
        %v5673 = vpop.f32.mrb[0].mxu0
        %v5674 = vadd.f32 0.0, %v5673
        %v5675 = vpop.f32.mrb[0].mxu0
        %5676 = vmatprep.mubr.f32.mxu0 %v5525
        %5677 = vmatmul.mubr.f32.gmra.mrb[0].mxu0 %v5524
        %v5678 = vpop.f32.mrb[0].mxu0
        %v5679 = vadd.f32 0.0, %v5678
        %v5680 = vpop.f32.mrb[0].mxu0
        %5681 = vmatprep.mubr.f32.mxu0 %v5528
        %5682 = vmatmul.mubr.f32.gmra.mrb[0].mxu0 %v5527
        %v5683 = vpop.f32.mrb[0].mxu0
        %v5684 = vadd.f32 0.0, %v5683
        %v5685 = vpop.f32.mrb[0].mxu0
        %5686 = vmatprep.mubr.f32.mxu0 %v5531
        %5687 = vmatmul.mubr.f32.gmra.mrb[0].mxu0 %v5530
        %v5688 = vpop.f32.mrb[0].mxu0
        %v5689 = vadd.f32 0.0, %v5688
        %v5690 = vpop.f32.mrb[0].mxu0
        %5691 = vmatprep.mubr.f32.mxu0 %v5534
        %5692 = vmatmul.mubr.f32.gmra.mrb[0].mxu0 %v5533
        %v5693 = vpop.f32.mrb[0].mxu0
        %v5694 = vadd.f32 0.0, %v5693
        %v5695 = vpop.f32.mrb[0].mxu0
        %5696 = vmatprep.mubr.f32.mxu0 %v5537
        %5697 = vmatmul.mubr.f32.gmra.mrb[0].mxu0 %v5536
        %v5698 = vpop.f32.mrb[0].mxu0
        %v5699 = vadd.f32 0.0, %v5698
        %v5700 = vpop.f32.mrb[0].mxu0
        %5701 = vmatprep.mubr.f32.mxu0 %v5540
        %5702 = vmatmul.mubr.f32.gmra.mrb[0].mxu0 %v5539
        %v5703 = vpop.f32.mrb[0].mxu0
        %v5704 = vadd.f32 0.0, %v5703
        %v5705 = vpop.f32.mrb[0].mxu0
        %5706 = vmatprep.mubr.f32.mxu0 %v5543
        %5707 = vmatmul.mubr.f32.gmra.mrb[0].mxu0 %v5542
        %v5708 = vpop.f32.mrb[0].mxu0
        %v5709 = vadd.f32 0.0, %v5708
        %v5710 = vpop.f32.mrb[0].mxu0
        %5711 = vmatprep.mubr.f32.mxu0 %v5546
        %5712 = vmatmul.mubr.f32.gmra.mrb[0].mxu0 %v5545
        %v5713 = vpop.f32.mrb[0].mxu0
        %v5714 = vadd.f32 0.0, %v5713
        %v5715 = vpop.f32.mrb[0].mxu0
        %5716 = vdwg.mxu0
        %5717 = vmatprep.subr.mxu0 0.0
        %5718 = vmatpush1.msra.mxu0 %v4461
        %5719 = vmatprep.subr.mxu0 0.0
        %5720 = vmatpush1.msra.mxu0 %v4462
        %5721 = vmatprep.subr.mxu0 0.0
        %5722 = vmatpush1.msra.mxu0 %v4463
        %5723 = vmatprep.subr.mxu0 0.0
        %5724 = vmatpush1.msra.mxu0 %v4464
        %5725 = vmatprep.subr.mxu0 0.0
        %5726 = vmatpush1.msra.mxu0 0.0
        %5727 = vmatprep.subr.mxu0 0.0
        %5728 = vmatpush1.msra.mxu0 0.0
        %5729 = vmatprep.subr.mxu0 0.0
        %5730 = vmatpush1.msra.mxu0 0.0
        %5731 = vmatprep.subr.mxu0 0.0
        %5732 = vmatpush1.msra.mxu0 0.0
        %5733 = vmatprep.subr.mxu0 0.0
        %5734 = vmatpush1.msra.mxu0 0.0
        %5735 = vmatprep.subr.mxu0 0.0
        %5736 = vmatpush1.msra.mxu0 0.0
        %5737 = vmatprep.subr.mxu0 0.0
        %5738 = vmatpush1.msra.mxu0 0.0
        %5739 = vmatprep.subr.mxu0 0.0
        %5740 = vmatpush1.msra.mxu0 0.0
        %5741 = vmatprep.subr.mxu0 0.0
        %5742 = vmatpush1.msra.mxu0 0.0
        %5743 = vmatprep.subr.mxu0 0.0
        %5744 = vmatpush1.msra.mxu0 0.0
        %5745 = vmatprep.subr.mxu0 0.0
        %5746 = vmatpush1.msra.mxu0 0.0
        %5747 = vmatprep.subr.mxu0 0.0
        %5748 = vmatpush1.msra.mxu0 0.0
        %5749 = vmatprep.subr.mxu0 0.0
        %5750 = vmatpush1.msra.mxu0 0.0
        %5751 = vmatprep.subr.mxu0 0.0
        %5752 = vmatpush1.msra.mxu0 0.0
        %5753 = vmatprep.subr.mxu0 0.0
        %5754 = vmatpush1.msra.mxu0 0.0
        %5755 = vmatprep.subr.mxu0 0.0
        %5756 = vmatpush1.msra.mxu0 0.0
        %5757 = vmatprep.subr.mxu0 0.0
        %5758 = vmatpush1.msra.mxu0 0.0
        %5759 = vmatprep.subr.mxu0 0.0
        %5760 = vmatpush1.msra.mxu0 0.0
        %5761 = vmatprep.subr.mxu0 0.0
        %5762 = vmatpush1.msra.mxu0 0.0
        %5763 = vmatprep.subr.mxu0 0.0
        %5764 = vmatpush1.msra.mxu0 0.0
        %5765 = vmatprep.subr.mxu0 0.0
        %5766 = vmatpush1.msra.mxu0 0.0
        %5767 = vmatprep.subr.mxu0 0.0
        %5768 = vmatpush1.msra.mxu0 0.0
        %5769 = vmatprep.subr.mxu0 0.0
        %5770 = vmatpush1.msra.mxu0 0.0
        %5771 = vmatprep.subr.mxu0 0.0
        %5772 = vmatpush1.msra.mxu0 0.0
        %5773 = vmatprep.subr.mxu0 0.0
        %5774 = vmatpush1.msra.mxu0 0.0
        %5775 = vmatprep.subr.mxu0 0.0
        %5776 = vmatpush1.msra.mxu0 0.0
        %5777 = vmatprep.subr.mxu0 0.0
        %5778 = vmatpush1.msra.mxu0 0.0
        %5779 = vmatprep.subr.mxu0 0.0
        %5780 = vmatpush1.msra.mxu0 0.0
        %5781 = vmatprep.mubr.f32.mxu0 0.0
        %5782 = vmatmul.mubr.f32.gmra.mrb[0].mxu0 %v5549
        %v5783 = vpop.f32.mrb[0].mxu0
        %v5784 = vadd.f32 %v5654, %v5783
        %v5785 = vpop.f32.mrb[0].mxu0
        %5786 = vmatprep.mubr.f32.mxu0 0.0
        %5787 = vmatmul.mubr.f32.gmra.mrb[0].mxu0 %v5552
        %v5788 = vpop.f32.mrb[0].mxu0
        %v5789 = vadd.f32 %v5659, %v5788
        %v5790 = vpop.f32.mrb[0].mxu0
        %5791 = vmatprep.mubr.f32.mxu0 0.0
        %5792 = vmatmul.mubr.f32.gmra.mrb[0].mxu0 %v5555
        %v5793 = vpop.f32.mrb[0].mxu0
        %v5794 = vadd.f32 %v5664, %v5793
        %v5795 = vpop.f32.mrb[0].mxu0
        %5796 = vmatprep.mubr.f32.mxu0 0.0
        %5797 = vmatmul.mubr.f32.gmra.mrb[0].mxu0 %v5558
        %v5798 = vpop.f32.mrb[0].mxu0
        %v5799 = vadd.f32 %v5669, %v5798
        %v5800 = vpop.f32.mrb[0].mxu0
        %5801 = vmatprep.mubr.f32.mxu0 0.0
        %5802 = vmatmul.mubr.f32.gmra.mrb[0].mxu0 %v5561
        %v5803 = vpop.f32.mrb[0].mxu0
        %v5804 = vadd.f32 %v5674, %v5803
        %v5805 = vpop.f32.mrb[0].mxu0
        %5806 = vmatprep.mubr.f32.mxu0 0.0
        %5807 = vmatmul.mubr.f32.gmra.mrb[0].mxu0 %v5564
        %v5808 = vpop.f32.mrb[0].mxu0
        %v5809 = vadd.f32 %v5679, %v5808
        %v5810 = vpop.f32.mrb[0].mxu0
        %5811 = vmatprep.mubr.f32.mxu0 0.0
        %5812 = vmatmul.mubr.f32.gmra.mrb[0].mxu0 %v5567
        %v5813 = vpop.f32.mrb[0].mxu0
        %v5814 = vadd.f32 %v5684, %v5813
        %v5815 = vpop.f32.mrb[0].mxu0
        %5816 = vmatprep.mubr.f32.mxu0 0.0
        %5817 = vmatmul.mubr.f32.gmra.mrb[0].mxu0 %v5570
        %v5818 = vpop.f32.mrb[0].mxu0
        %v5819 = vadd.f32 %v5689, %v5818
        %v5820 = vpop.f32.mrb[0].mxu0
        %5821 = vmatprep.mubr.f32.mxu0 0.0
        %5822 = vmatmul.mubr.f32.gmra.mrb[0].mxu0 %v5573
        %v5823 = vpop.f32.mrb[0].mxu0
        %v5824 = vadd.f32 %v5694, %v5823
        %v5825 = vpop.f32.mrb[0].mxu0
        %5826 = vmatprep.mubr.f32.mxu0 0.0
        %5827 = vmatmul.mubr.f32.gmra.mrb[0].mxu0 %v5576
        %v5828 = vpop.f32.mrb[0].mxu0
        %v5829 = vadd.f32 %v5699, %v5828
        %v5830 = vpop.f32.mrb[0].mxu0
        %5831 = vmatprep.mubr.f32.mxu0 0.0
        %5832 = vmatmul.mubr.f32.gmra.mrb[0].mxu0 %v5579
        %v5833 = vpop.f32.mrb[0].mxu0
        %v5834 = vadd.f32 %v5704, %v5833
        %v5835 = vpop.f32.mrb[0].mxu0
        %5836 = vmatprep.mubr.f32.mxu0 0.0
        %5837 = vmatmul.mubr.f32.gmra.mrb[0].mxu0 %v5582
        %v5838 = vpop.f32.mrb[0].mxu0
        %v5839 = vadd.f32 %v5709, %v5838
        %v5840 = vpop.f32.mrb[0].mxu0
        %5841 = vmatprep.mubr.f32.mxu0 0.0
        %5842 = vmatmul.mubr.f32.gmra.mrb[0].mxu0 %v5585
        %v5843 = vpop.f32.mrb[0].mxu0
        %v5844 = vadd.f32 %v5714, %v5843
        %v5845 = vpop.f32.mrb[0].mxu0
        %5846 = vdwg.mxu0
        %v5847 = vmax.f32 %v5495, %v5784
        %v5848 = vmax.f32 %v5496, %v5789
        %v5849 = vmax.f32 %v5497, %v5794
        %v5850 = vmax.f32 %v5498, %v5799
        %v5851 = vmax.f32 %v5499, %v5804
        %v5852 = vmax.f32 %v5500, %v5809
        %v5853 = vmax.f32 %v5501, %v5814
        %v5854 = vmax.f32 %v5502, %v5819
        %v5855 = vmax.f32 %v5503, %v5824
        %v5856 = vmax.f32 %v5504, %v5829
        %v5857 = vmax.f32 %v5505, %v5834
        %v5858 = vmax.f32 %v5506, %v5839
        %v5859 = vmax.f32 %v5507, %v5844
        %vm5860 = vcmask 523264
        %5861 = vst.msk [vmem:[#allocation2] sm:$0xff] %vm5860, %v5847
        %5862 = vst.msk [vmem:[#allocation2 + $0x8] sm:$0xff] %vm5860, %v5848
        %5863 = vst.msk [vmem:[#allocation2 + $0x10] sm:$0xff] %vm5860, %v5849
        %5864 = vst.msk [vmem:[#allocation2 + $0x18] sm:$0xff] %vm5860, %v5850
        %5865 = vst.msk [vmem:[#allocation2 + $0x20] sm:$0xff] %vm5860, %v5851
        %5866 = vst.msk [vmem:[#allocation2 + $0x28] sm:$0xff] %vm5860, %v5852
        %5867 = vst.msk [vmem:[#allocation2 + $0x30] sm:$0xff] %vm5860, %v5853
        %5868 = vst.msk [vmem:[#allocation2 + $0x38] sm:$0xff] %vm5860, %v5854
        %5869 = vst.msk [vmem:[#allocation2 + $0x40] sm:$0xff] %vm5860, %v5855
        %5870 = vst.msk [vmem:[#allocation2 + $0x48] sm:$0xff] %vm5860, %v5856
        %5871 = vst.msk [vmem:[#allocation2 + $0x50] sm:$0xff] %vm5860, %v5857
        %5872 = vst.msk [vmem:[#allocation2 + $0x58] sm:$0xff] %vm5860, %v5858
        %vm5873 = vcmask 521216
        %5874 = vst.msk [vmem:[#allocation2 + $0x60] sm:$0x3f] %vm5873, %v5859
        %v5875 = vld [vmem:[#allocation2] sm:$0xff]
        %v5876 = vld [vmem:[#allocation2 + $0x8] sm:$0xff]
        %v5877 = vld [vmem:[#allocation2 + $0x10] sm:$0xff]
        %v5878 = vld [vmem:[#allocation2 + $0x18] sm:$0xff]
        %v5879 = vld [vmem:[#allocation2 + $0x20] sm:$0xff]
        %v5880 = vld [vmem:[#allocation2 + $0x28] sm:$0xff]
        %v5881 = vld [vmem:[#allocation2 + $0x30] sm:$0xff]
        %v5882 = vld [vmem:[#allocation2 + $0x38] sm:$0xff]
        %v5883 = vld [vmem:[#allocation2 + $0x40] sm:$0xff]
        %v5884 = vld [vmem:[#allocation2 + $0x48] sm:$0xff]
        %v5885 = vld [vmem:[%s4] sm:$0xff]
        %v5886 = vld [vmem:[%s4 + $0x8] sm:$0xff]
        %v5887 = vld [vmem:[%s4 + $0x10] sm:$0xff]
        %v5888 = vld [vmem:[%s4 + $0x18] sm:$0xff]
        %v5889 = vld [vmem:[%s4 + $0x20] sm:$0xff]
        %v5890 = vld [vmem:[%s4 + $0x28] sm:$0xff]
        %v5891 = vld [vmem:[%s4 + $0x30] sm:$0xff]
        %v5892 = vld [vmem:[%s4 + $0x38] sm:$0xff]
        %v5893 = vld [vmem:[#allocation2 + $0x1] sm:$0xff]
        %v5894 = vld [vmem:[#allocation2 + $0x9] sm:$0xff]
        %v5895 = vld [vmem:[#allocation2 + $0x11] sm:$0xff]
        %v5896 = vld [vmem:[#allocation2 + $0x19] sm:$0xff]
        %v5897 = vld [vmem:[#allocation2 + $0x21] sm:$0xff]
        %v5898 = vld [vmem:[#allocation2 + $0x29] sm:$0xff]
        %v5899 = vld [vmem:[#allocation2 + $0x31] sm:$0xff]
        %v5900 = vld [vmem:[#allocation2 + $0x39] sm:$0xff]
        %v5901 = vld [vmem:[#allocation2 + $0x41] sm:$0xff]
        %v5902 = vld [vmem:[#allocation2 + $0x49] sm:$0xff]
        %s5903 = scalar_lea.vmem %s4, 64
        %v5904 = vld [vmem:[%s5903] sm:$0xff]
        %v5905 = vld [vmem:[%s5903 + $0x8] sm:$0xff]
        %v5906 = vld [vmem:[%s5903 + $0x10] sm:$0xff]
        %v5907 = vld [vmem:[%s5903 + $0x18] sm:$0xff]
        %v5908 = vld [vmem:[%s5903 + $0x20] sm:$0xff]
        %v5909 = vld [vmem:[%s5903 + $0x28] sm:$0xff]
        %v5910 = vld [vmem:[%s5903 + $0x30] sm:$0xff]
        %v5911 = vld [vmem:[%s5903 + $0x38] sm:$0xff]
        %v5913 = vsel %vm5860, %v5893, 0
        %v5916 = vsel %vm5860, %v5894, 0
        %v5919 = vsel %vm5860, %v5895, 0
        %v5922 = vsel %vm5860, %v5896, 0
        %v5925 = vsel %vm5860, %v5897, 0
        %v5928 = vsel %vm5860, %v5898, 0
        %v5931 = vsel %vm5860, %v5899, 0
        %v5934 = vsel %vm5860, %v5900, 0
        %v5937 = vsel %vm5860, %v5901, 0
        %v5940 = vsel %vm5860, %v5902, 0
        %5942 = vmatprep.subr.mxu0 0.0
        %5943 = vmatpush1.msra.mxu0 %v5904
        %5944 = vmatprep.subr.mxu0 0.0
        %5945 = vmatpush1.msra.mxu0 %v5905
        %5946 = vmatprep.subr.mxu0 0.0
        %5947 = vmatpush1.msra.mxu0 %v5906
        %5948 = vmatprep.subr.mxu0 0.0
        %5949 = vmatpush1.msra.mxu0 %v5907
        %5950 = vmatprep.subr.mxu0 0.0
        %5951 = vmatpush1.msra.mxu0 %v5908
        %5952 = vmatprep.subr.mxu0 0.0
        %5953 = vmatpush1.msra.mxu0 %v5909
        %5954 = vmatprep.subr.mxu0 0.0
        %5955 = vmatpush1.msra.mxu0 %v5910
        %5956 = vmatprep.subr.mxu0 0.0
        %5957 = vmatpush1.msra.mxu0 %v5911
        %5958 = vmatprep.subr.mxu0 0.0
        %5959 = vmatpush1.msra.mxu0 0.0
        %5960 = vmatprep.subr.mxu0 0.0
        %5961 = vmatpush1.msra.mxu0 0.0
        %5962 = vmatprep.subr.mxu0 0.0
        %5963 = vmatpush1.msra.mxu0 0.0
        %5964 = vmatprep.subr.mxu0 0.0
        %5965 = vmatpush1.msra.mxu0 0.0
        %5966 = vmatprep.subr.mxu0 0.0
        %5967 = vmatpush1.msra.mxu0 0.0
        %5968 = vmatprep.subr.mxu0 0.0
        %5969 = vmatpush1.msra.mxu0 0.0
        %5970 = vmatprep.subr.mxu0 0.0
        %5971 = vmatpush1.msra.mxu0 0.0
        %5972 = vmatprep.subr.mxu0 0.0
        %5973 = vmatpush1.msra.mxu0 0.0
        %5974 = vmatprep.subr.mxu0 0.0
        %5975 = vmatpush1.msra.mxu0 0.0
        %5976 = vmatprep.subr.mxu0 0.0
        %5977 = vmatpush1.msra.mxu0 0.0
        %5978 = vmatprep.subr.mxu0 0.0
        %5979 = vmatpush1.msra.mxu0 0.0
        %5980 = vmatprep.subr.mxu0 0.0
        %5981 = vmatpush1.msra.mxu0 0.0
        %5982 = vmatprep.subr.mxu0 0.0
        %5983 = vmatpush1.msra.mxu0 0.0
        %5984 = vmatprep.subr.mxu0 0.0
        %5985 = vmatpush1.msra.mxu0 0.0
        %5986 = vmatprep.subr.mxu0 0.0
        %5987 = vmatpush1.msra.mxu0 0.0
        %5988 = vmatprep.subr.mxu0 0.0
        %5989 = vmatpush1.msra.mxu0 0.0
        %5990 = vmatprep.subr.mxu0 0.0
        %5991 = vmatpush1.msra.mxu0 0.0
        %5992 = vmatprep.subr.mxu0 0.0
        %5993 = vmatpush1.msra.mxu0 0.0
        %5994 = vmatprep.subr.mxu0 0.0
        %5995 = vmatpush1.msra.mxu0 0.0
        %5996 = vmatprep.subr.mxu0 0.0
        %5997 = vmatpush1.msra.mxu0 0.0
        %5998 = vmatprep.subr.mxu0 0.0
        %5999 = vmatpush1.msra.mxu0 0.0
        %6000 = vmatprep.subr.mxu0 0.0
        %6001 = vmatpush1.msra.mxu0 0.0
        %6002 = vmatprep.subr.mxu0 0.0
        %6003 = vmatpush1.msra.mxu0 0.0
        %6004 = vmatprep.subr.mxu0 0.0
        %6005 = vmatpush1.msra.mxu0 0.0
        %6006 = vmatprep.mubr.f32.mxu0 0.0
        %6007 = vmatmul.mubr.f32.gmra.mrb[0].mxu0 %v5913
        %v6008 = vpop.f32.mrb[0].mxu0
        %v6009 = vadd.f32 0.0, %v6008
        %v6010 = vpop.f32.mrb[0].mxu0
        %6011 = vmatprep.mubr.f32.mxu0 0.0
        %6012 = vmatmul.mubr.f32.gmra.mrb[0].mxu0 %v5916
        %v6013 = vpop.f32.mrb[0].mxu0
        %v6014 = vadd.f32 0.0, %v6013
        %v6015 = vpop.f32.mrb[0].mxu0
        %6016 = vmatprep.mubr.f32.mxu0 0.0
        %6017 = vmatmul.mubr.f32.gmra.mrb[0].mxu0 %v5919
        %v6018 = vpop.f32.mrb[0].mxu0
        %v6019 = vadd.f32 0.0, %v6018
        %v6020 = vpop.f32.mrb[0].mxu0
        %6021 = vmatprep.mubr.f32.mxu0 0.0
        %6022 = vmatmul.mubr.f32.gmra.mrb[0].mxu0 %v5922
        %v6023 = vpop.f32.mrb[0].mxu0
        %v6024 = vadd.f32 0.0, %v6023
        %v6025 = vpop.f32.mrb[0].mxu0
        %6026 = vmatprep.mubr.f32.mxu0 0.0
        %6027 = vmatmul.mubr.f32.gmra.mrb[0].mxu0 %v5925
        %v6028 = vpop.f32.mrb[0].mxu0
        %v6029 = vadd.f32 0.0, %v6028
        %v6030 = vpop.f32.mrb[0].mxu0
        %6031 = vmatprep.mubr.f32.mxu0 0.0
        %6032 = vmatmul.mubr.f32.gmra.mrb[0].mxu0 %v5928
        %v6033 = vpop.f32.mrb[0].mxu0
        %v6034 = vadd.f32 0.0, %v6033
        %v6035 = vpop.f32.mrb[0].mxu0
        %6036 = vmatprep.mubr.f32.mxu0 0.0
        %6037 = vmatmul.mubr.f32.gmra.mrb[0].mxu0 %v5931
        %v6038 = vpop.f32.mrb[0].mxu0
        %v6039 = vadd.f32 0.0, %v6038
        %v6040 = vpop.f32.mrb[0].mxu0
        %6041 = vmatprep.mubr.f32.mxu0 0.0
        %6042 = vmatmul.mubr.f32.gmra.mrb[0].mxu0 %v5934
        %v6043 = vpop.f32.mrb[0].mxu0
        %v6044 = vadd.f32 0.0, %v6043
        %v6045 = vpop.f32.mrb[0].mxu0
        %6046 = vmatprep.mubr.f32.mxu0 0.0
        %6047 = vmatmul.mubr.f32.gmra.mrb[0].mxu0 %v5937
        %v6048 = vpop.f32.mrb[0].mxu0
        %v6049 = vadd.f32 0.0, %v6048
        %v6050 = vpop.f32.mrb[0].mxu0
        %6051 = vmatprep.mubr.f32.mxu0 0.0
        %6052 = vmatmul.mubr.f32.gmra.mrb[0].mxu0 %v5940
        %v6053 = vpop.f32.mrb[0].mxu0
        %v6054 = vadd.f32 0.0, %v6053
        %v6055 = vpop.f32.mrb[0].mxu0
        %6056 = vdwg.mxu0
        %v6058 = vsel %vm5860, %v5875, 0
        %v6061 = vsel %vm5860, %v5876, 0
        %v6064 = vsel %vm5860, %v5877, 0
        %v6067 = vsel %vm5860, %v5878, 0
        %v6070 = vsel %vm5860, %v5879, 0
        %v6073 = vsel %vm5860, %v5880, 0
        %v6076 = vsel %vm5860, %v5881, 0
        %v6079 = vsel %vm5860, %v5882, 0
        %v6082 = vsel %vm5860, %v5883, 0
        %v6085 = vsel %vm5860, %v5884, 0
        %6087 = vmatprep.subr.mxu0 0.0
        %6088 = vmatpush1.msra.mxu0 %v5885
        %6089 = vmatprep.subr.mxu0 0.0
        %6090 = vmatpush1.msra.mxu0 %v5886
        %6091 = vmatprep.subr.mxu0 0.0
        %6092 = vmatpush1.msra.mxu0 %v5887
        %6093 = vmatprep.subr.mxu0 0.0
        %6094 = vmatpush1.msra.mxu0 %v5888
        %6095 = vmatprep.subr.mxu0 0.0
        %6096 = vmatpush1.msra.mxu0 %v5889
        %6097 = vmatprep.subr.mxu0 0.0
        %6098 = vmatpush1.msra.mxu0 %v5890
        %6099 = vmatprep.subr.mxu0 0.0
        %6100 = vmatpush1.msra.mxu0 %v5891
        %6101 = vmatprep.subr.mxu0 0.0
        %6102 = vmatpush1.msra.mxu0 %v5892
        %6103 = vmatprep.subr.mxu0 0.0
        %6104 = vmatpush1.msra.mxu0 0.0
        %6105 = vmatprep.subr.mxu0 0.0
        %6106 = vmatpush1.msra.mxu0 0.0
        %6107 = vmatprep.subr.mxu0 0.0
        %6108 = vmatpush1.msra.mxu0 0.0
        %6109 = vmatprep.subr.mxu0 0.0
        %6110 = vmatpush1.msra.mxu0 0.0
        %6111 = vmatprep.subr.mxu0 0.0
        %6112 = vmatpush1.msra.mxu0 0.0
        %6113 = vmatprep.subr.mxu0 0.0
        %6114 = vmatpush1.msra.mxu0 0.0
        %6115 = vmatprep.subr.mxu0 0.0
        %6116 = vmatpush1.msra.mxu0 0.0
        %6117 = vmatprep.subr.mxu0 0.0
        %6118 = vmatpush1.msra.mxu0 0.0
        %6119 = vmatprep.subr.mxu0 0.0
        %6120 = vmatpush1.msra.mxu0 0.0
        %6121 = vmatprep.subr.mxu0 0.0
        %6122 = vmatpush1.msra.mxu0 0.0
        %6123 = vmatprep.subr.mxu0 0.0
        %6124 = vmatpush1.msra.mxu0 0.0
        %6125 = vmatprep.subr.mxu0 0.0
        %6126 = vmatpush1.msra.mxu0 0.0
        %6127 = vmatprep.subr.mxu0 0.0
        %6128 = vmatpush1.msra.mxu0 0.0
        %6129 = vmatprep.subr.mxu0 0.0
        %6130 = vmatpush1.msra.mxu0 0.0
        %6131 = vmatprep.subr.mxu0 0.0
        %6132 = vmatpush1.msra.mxu0 0.0
        %6133 = vmatprep.subr.mxu0 0.0
        %6134 = vmatpush1.msra.mxu0 0.0
        %6135 = vmatprep.subr.mxu0 0.0
        %6136 = vmatpush1.msra.mxu0 0.0
        %6137 = vmatprep.subr.mxu0 0.0
        %6138 = vmatpush1.msra.mxu0 0.0
        %6139 = vmatprep.subr.mxu0 0.0
        %6140 = vmatpush1.msra.mxu0 0.0
        %6141 = vmatprep.subr.mxu0 0.0
        %6142 = vmatpush1.msra.mxu0 0.0
        %6143 = vmatprep.subr.mxu0 0.0
        %6144 = vmatpush1.msra.mxu0 0.0
        %6145 = vmatprep.subr.mxu0 0.0
        %6146 = vmatpush1.msra.mxu0 0.0
        %6147 = vmatprep.subr.mxu0 0.0
        %6148 = vmatpush1.msra.mxu0 0.0
        %6149 = vmatprep.subr.mxu0 0.0
        %6150 = vmatpush1.msra.mxu0 0.0
        %6151 = vmatprep.mubr.f32.mxu0 0.0
        %6152 = vmatmul.mubr.f32.gmra.mrb[0].mxu0 %v6058
        %v6153 = vpop.f32.mrb[0].mxu0
        %v6154 = vadd.f32 %v6009, %v6153
        %v6155 = vpop.f32.mrb[0].mxu0
        %6156 = vmatprep.mubr.f32.mxu0 0.0
        %6157 = vmatmul.mubr.f32.gmra.mrb[0].mxu0 %v6061
        %v6158 = vpop.f32.mrb[0].mxu0
        %v6159 = vadd.f32 %v6014, %v6158
        %v6160 = vpop.f32.mrb[0].mxu0
        %6161 = vmatprep.mubr.f32.mxu0 0.0
        %6162 = vmatmul.mubr.f32.gmra.mrb[0].mxu0 %v6064
        %v6163 = vpop.f32.mrb[0].mxu0
        %v6164 = vadd.f32 %v6019, %v6163
        %v6165 = vpop.f32.mrb[0].mxu0
        %6166 = vmatprep.mubr.f32.mxu0 0.0
        %6167 = vmatmul.mubr.f32.gmra.mrb[0].mxu0 %v6067
        %v6168 = vpop.f32.mrb[0].mxu0
        %v6169 = vadd.f32 %v6024, %v6168
        %v6170 = vpop.f32.mrb[0].mxu0
        %6171 = vmatprep.mubr.f32.mxu0 0.0
        %6172 = vmatmul.mubr.f32.gmra.mrb[0].mxu0 %v6070
        %v6173 = vpop.f32.mrb[0].mxu0
        %v6174 = vadd.f32 %v6029, %v6173
        %v6175 = vpop.f32.mrb[0].mxu0
        %6176 = vmatprep.mubr.f32.mxu0 0.0
        %6177 = vmatmul.mubr.f32.gmra.mrb[0].mxu0 %v6073
        %v6178 = vpop.f32.mrb[0].mxu0
        %v6179 = vadd.f32 %v6034, %v6178
        %v6180 = vpop.f32.mrb[0].mxu0
        %6181 = vmatprep.mubr.f32.mxu0 0.0
        %6182 = vmatmul.mubr.f32.gmra.mrb[0].mxu0 %v6076
        %v6183 = vpop.f32.mrb[0].mxu0
        %v6184 = vadd.f32 %v6039, %v6183
        %v6185 = vpop.f32.mrb[0].mxu0
        %6186 = vmatprep.mubr.f32.mxu0 0.0
        %6187 = vmatmul.mubr.f32.gmra.mrb[0].mxu0 %v6079
        %v6188 = vpop.f32.mrb[0].mxu0
        %v6189 = vadd.f32 %v6044, %v6188
        %v6190 = vpop.f32.mrb[0].mxu0
        %6191 = vmatprep.mubr.f32.mxu0 0.0
        %6192 = vmatmul.mubr.f32.gmra.mrb[0].mxu0 %v6082
        %v6193 = vpop.f32.mrb[0].mxu0
        %v6194 = vadd.f32 %v6049, %v6193
        %v6195 = vpop.f32.mrb[0].mxu0
        %6196 = vmatprep.mubr.f32.mxu0 0.0
        %6197 = vmatmul.mubr.f32.gmra.mrb[0].mxu0 %v6085
        %v6198 = vpop.f32.mrb[0].mxu0
        %v6199 = vadd.f32 %v6054, %v6198
        %v6200 = vpop.f32.mrb[0].mxu0
        %6201 = vdwg.mxu0
        %v6202 = vld [vmem:[#allocation2 + $0x2] sm:$0xff]
        %v6203 = vld [vmem:[#allocation2 + $0xa] sm:$0xff]
        %v6204 = vld [vmem:[#allocation2 + $0x12] sm:$0xff]
        %v6205 = vld [vmem:[#allocation2 + $0x1a] sm:$0xff]
        %v6206 = vld [vmem:[#allocation2 + $0x22] sm:$0xff]
        %v6207 = vld [vmem:[#allocation2 + $0x2a] sm:$0xff]
        %v6208 = vld [vmem:[#allocation2 + $0x32] sm:$0xff]
        %v6209 = vld [vmem:[#allocation2 + $0x3a] sm:$0xff]
        %v6210 = vld [vmem:[#allocation2 + $0x42] sm:$0xff]
        %v6211 = vld [vmem:[#allocation2 + $0x4a] sm:$0xff]
        %s6212 = scalar_lea.vmem %s4, 128
        %v6213 = vld [vmem:[%s6212] sm:$0xff]
        %v6214 = vld [vmem:[%s6212 + $0x8] sm:$0xff]
        %v6215 = vld [vmem:[%s6212 + $0x10] sm:$0xff]
        %v6216 = vld [vmem:[%s6212 + $0x18] sm:$0xff]
        %v6217 = vld [vmem:[%s6212 + $0x20] sm:$0xff]
        %v6218 = vld [vmem:[%s6212 + $0x28] sm:$0xff]
        %v6219 = vld [vmem:[%s6212 + $0x30] sm:$0xff]
        %v6220 = vld [vmem:[%s6212 + $0x38] sm:$0xff]
        %v6222 = vsel %vm5860, %v6202, 0
        %v6225 = vsel %vm5860, %v6203, 0
        %v6228 = vsel %vm5860, %v6204, 0
        %v6231 = vsel %vm5860, %v6205, 0
        %v6234 = vsel %vm5860, %v6206, 0
        %v6237 = vsel %vm5860, %v6207, 0
        %v6240 = vsel %vm5860, %v6208, 0
        %v6243 = vsel %vm5860, %v6209, 0
        %v6246 = vsel %vm5860, %v6210, 0
        %v6249 = vsel %vm5860, %v6211, 0
        %6251 = vmatprep.subr.mxu0 0.0
        %6252 = vmatpush1.msra.mxu0 %v6213
        %6253 = vmatprep.subr.mxu0 0.0
        %6254 = vmatpush1.msra.mxu0 %v6214
        %6255 = vmatprep.subr.mxu0 0.0
        %6256 = vmatpush1.msra.mxu0 %v6215
        %6257 = vmatprep.subr.mxu0 0.0
        %6258 = vmatpush1.msra.mxu0 %v6216
        %6259 = vmatprep.subr.mxu0 0.0
        %6260 = vmatpush1.msra.mxu0 %v6217
        %6261 = vmatprep.subr.mxu0 0.0
        %6262 = vmatpush1.msra.mxu0 %v6218
        %6263 = vmatprep.subr.mxu0 0.0
        %6264 = vmatpush1.msra.mxu0 %v6219
        %6265 = vmatprep.subr.mxu0 0.0
        %6266 = vmatpush1.msra.mxu0 %v6220
        %6267 = vmatprep.subr.mxu0 0.0
        %6268 = vmatpush1.msra.mxu0 0.0
        %6269 = vmatprep.subr.mxu0 0.0
        %6270 = vmatpush1.msra.mxu0 0.0
        %6271 = vmatprep.subr.mxu0 0.0
        %6272 = vmatpush1.msra.mxu0 0.0
        %6273 = vmatprep.subr.mxu0 0.0
        %6274 = vmatpush1.msra.mxu0 0.0
        %6275 = vmatprep.subr.mxu0 0.0
        %6276 = vmatpush1.msra.mxu0 0.0
        %6277 = vmatprep.subr.mxu0 0.0
        %6278 = vmatpush1.msra.mxu0 0.0
        %6279 = vmatprep.subr.mxu0 0.0
        %6280 = vmatpush1.msra.mxu0 0.0
        %6281 = vmatprep.subr.mxu0 0.0
        %6282 = vmatpush1.msra.mxu0 0.0
        %6283 = vmatprep.subr.mxu0 0.0
        %6284 = vmatpush1.msra.mxu0 0.0
        %6285 = vmatprep.subr.mxu0 0.0
        %6286 = vmatpush1.msra.mxu0 0.0
        %6287 = vmatprep.subr.mxu0 0.0
        %6288 = vmatpush1.msra.mxu0 0.0
        %6289 = vmatprep.subr.mxu0 0.0
        %6290 = vmatpush1.msra.mxu0 0.0
        %6291 = vmatprep.subr.mxu0 0.0
        %6292 = vmatpush1.msra.mxu0 0.0
        %6293 = vmatprep.subr.mxu0 0.0
        %6294 = vmatpush1.msra.mxu0 0.0
        %6295 = vmatprep.subr.mxu0 0.0
        %6296 = vmatpush1.msra.mxu0 0.0
        %6297 = vmatprep.subr.mxu0 0.0
        %6298 = vmatpush1.msra.mxu0 0.0
        %6299 = vmatprep.subr.mxu0 0.0
        %6300 = vmatpush1.msra.mxu0 0.0
        %6301 = vmatprep.subr.mxu0 0.0
        %6302 = vmatpush1.msra.mxu0 0.0
        %6303 = vmatprep.subr.mxu0 0.0
        %6304 = vmatpush1.msra.mxu0 0.0
        %6305 = vmatprep.subr.mxu0 0.0
        %6306 = vmatpush1.msra.mxu0 0.0
        %6307 = vmatprep.subr.mxu0 0.0
        %6308 = vmatpush1.msra.mxu0 0.0
        %6309 = vmatprep.subr.mxu0 0.0
        %6310 = vmatpush1.msra.mxu0 0.0
        %6311 = vmatprep.subr.mxu0 0.0
        %6312 = vmatpush1.msra.mxu0 0.0
        %6313 = vmatprep.subr.mxu0 0.0
        %6314 = vmatpush1.msra.mxu0 0.0
        %6315 = vmatprep.mubr.f32.mxu0 0.0
        %6316 = vmatmul.mubr.f32.gmra.mrb[0].mxu0 %v6222
        %v6317 = vpop.f32.mrb[0].mxu0
        %v6318 = vadd.f32 0.0, %v6317
        %v6319 = vpop.f32.mrb[0].mxu0
        %6320 = vmatprep.mubr.f32.mxu0 0.0
        %6321 = vmatmul.mubr.f32.gmra.mrb[0].mxu0 %v6225
        %v6322 = vpop.f32.mrb[0].mxu0
        %v6323 = vadd.f32 0.0, %v6322
        %v6324 = vpop.f32.mrb[0].mxu0
        %6325 = vmatprep.mubr.f32.mxu0 0.0
        %6326 = vmatmul.mubr.f32.gmra.mrb[0].mxu0 %v6228
        %v6327 = vpop.f32.mrb[0].mxu0
        %v6328 = vadd.f32 0.0, %v6327
        %v6329 = vpop.f32.mrb[0].mxu0
        %6330 = vmatprep.mubr.f32.mxu0 0.0
        %6331 = vmatmul.mubr.f32.gmra.mrb[0].mxu0 %v6231
        %v6332 = vpop.f32.mrb[0].mxu0
        %v6333 = vadd.f32 0.0, %v6332
        %v6334 = vpop.f32.mrb[0].mxu0
        %6335 = vmatprep.mubr.f32.mxu0 0.0
        %6336 = vmatmul.mubr.f32.gmra.mrb[0].mxu0 %v6234
        %v6337 = vpop.f32.mrb[0].mxu0
        %v6338 = vadd.f32 0.0, %v6337
        %v6339 = vpop.f32.mrb[0].mxu0
        %6340 = vmatprep.mubr.f32.mxu0 0.0
        %6341 = vmatmul.mubr.f32.gmra.mrb[0].mxu0 %v6237
        %v6342 = vpop.f32.mrb[0].mxu0
        %v6343 = vadd.f32 0.0, %v6342
        %v6344 = vpop.f32.mrb[0].mxu0
        %6345 = vmatprep.mubr.f32.mxu0 0.0
        %6346 = vmatmul.mubr.f32.gmra.mrb[0].mxu0 %v6240
        %v6347 = vpop.f32.mrb[0].mxu0
        %v6348 = vadd.f32 0.0, %v6347
        %v6349 = vpop.f32.mrb[0].mxu0
        %6350 = vmatprep.mubr.f32.mxu0 0.0
        %6351 = vmatmul.mubr.f32.gmra.mrb[0].mxu0 %v6243
        %v6352 = vpop.f32.mrb[0].mxu0
        %v6353 = vadd.f32 0.0, %v6352
        %v6354 = vpop.f32.mrb[0].mxu0
        %6355 = vmatprep.mubr.f32.mxu0 0.0
        %6356 = vmatmul.mubr.f32.gmra.mrb[0].mxu0 %v6246
        %v6357 = vpop.f32.mrb[0].mxu0
        %v6358 = vadd.f32 0.0, %v6357
        %v6359 = vpop.f32.mrb[0].mxu0
        %6360 = vmatprep.mubr.f32.mxu0 0.0
        %6361 = vmatmul.mubr.f32.gmra.mrb[0].mxu0 %v6249
        %v6362 = vpop.f32.mrb[0].mxu0
        %v6363 = vadd.f32 0.0, %v6362
        %v6364 = vpop.f32.mrb[0].mxu0
        %6365 = vdwg.mxu0
        %v6366 = vadd.f32 %v6154, %v6318
        %v6367 = vadd.f32 %v6159, %v6323
        %v6368 = vadd.f32 %v6164, %v6328
        %v6369 = vadd.f32 %v6169, %v6333
        %v6370 = vadd.f32 %v6174, %v6338
        %v6371 = vadd.f32 %v6179, %v6343
        %v6372 = vadd.f32 %v6184, %v6348
        %v6373 = vadd.f32 %v6189, %v6353
        %v6374 = vadd.f32 %v6194, %v6358
        %v6375 = vadd.f32 %v6199, %v6363
        %v6376 = vld [vmem:[#allocation2 + $0xa] sm:$0xff]
        %v6377 = vld [vmem:[#allocation2 + $0x12] sm:$0xff]
        %v6378 = vld [vmem:[#allocation2 + $0x1a] sm:$0xff]
        %v6379 = vld [vmem:[#allocation2 + $0x22] sm:$0xff]
        %v6380 = vld [vmem:[#allocation2 + $0x2a] sm:$0xff]
        %v6381 = vld [vmem:[#allocation2 + $0x32] sm:$0xff]
        %v6382 = vld [vmem:[#allocation2 + $0x3a] sm:$0xff]
        %v6383 = vld [vmem:[#allocation2 + $0x42] sm:$0xff]
        %v6384 = vld [vmem:[#allocation2 + $0x4a] sm:$0xff]
        %v6385 = vld [vmem:[#allocation2 + $0x52] sm:$0xff]
        %s6386 = scalar_lea.vmem %s4, 192
        %v6387 = vld [vmem:[%s6386] sm:$0xff]
        %v6388 = vld [vmem:[%s6386 + $0x8] sm:$0xff]
        %v6389 = vld [vmem:[%s6386 + $0x10] sm:$0xff]
        %v6390 = vld [vmem:[%s6386 + $0x18] sm:$0xff]
        %v6391 = vld [vmem:[%s6386 + $0x20] sm:$0xff]
        %v6392 = vld [vmem:[%s6386 + $0x28] sm:$0xff]
        %v6393 = vld [vmem:[%s6386 + $0x30] sm:$0xff]
        %v6394 = vld [vmem:[%s6386 + $0x38] sm:$0xff]
        %v6396 = vsel %vm5860, %v6376, 0
        %v6399 = vsel %vm5860, %v6377, 0
        %v6402 = vsel %vm5860, %v6378, 0
        %v6405 = vsel %vm5860, %v6379, 0
        %v6408 = vsel %vm5860, %v6380, 0
        %v6411 = vsel %vm5860, %v6381, 0
        %v6414 = vsel %vm5860, %v6382, 0
        %v6417 = vsel %vm5860, %v6383, 0
        %v6420 = vsel %vm5860, %v6384, 0
        %v6423 = vsel %vm5860, %v6385, 0
        %6425 = vmatprep.subr.mxu0 0.0
        %6426 = vmatpush1.msra.mxu0 %v6387
        %6427 = vmatprep.subr.mxu0 0.0
        %6428 = vmatpush1.msra.mxu0 %v6388
        %6429 = vmatprep.subr.mxu0 0.0
        %6430 = vmatpush1.msra.mxu0 %v6389
        %6431 = vmatprep.subr.mxu0 0.0
        %6432 = vmatpush1.msra.mxu0 %v6390
        %6433 = vmatprep.subr.mxu0 0.0
        %6434 = vmatpush1.msra.mxu0 %v6391
        %6435 = vmatprep.subr.mxu0 0.0
        %6436 = vmatpush1.msra.mxu0 %v6392
        %6437 = vmatprep.subr.mxu0 0.0
        %6438 = vmatpush1.msra.mxu0 %v6393
        %6439 = vmatprep.subr.mxu0 0.0
        %6440 = vmatpush1.msra.mxu0 %v6394
        %6441 = vmatprep.subr.mxu0 0.0
        %6442 = vmatpush1.msra.mxu0 0.0
        %6443 = vmatprep.subr.mxu0 0.0
        %6444 = vmatpush1.msra.mxu0 0.0
        %6445 = vmatprep.subr.mxu0 0.0
        %6446 = vmatpush1.msra.mxu0 0.0
        %6447 = vmatprep.subr.mxu0 0.0
        %6448 = vmatpush1.msra.mxu0 0.0
        %6449 = vmatprep.subr.mxu0 0.0
        %6450 = vmatpush1.msra.mxu0 0.0
        %6451 = vmatprep.subr.mxu0 0.0
        %6452 = vmatpush1.msra.mxu0 0.0
        %6453 = vmatprep.subr.mxu0 0.0
        %6454 = vmatpush1.msra.mxu0 0.0
        %6455 = vmatprep.subr.mxu0 0.0
        %6456 = vmatpush1.msra.mxu0 0.0
        %6457 = vmatprep.subr.mxu0 0.0
        %6458 = vmatpush1.msra.mxu0 0.0
        %6459 = vmatprep.subr.mxu0 0.0
        %6460 = vmatpush1.msra.mxu0 0.0
        %6461 = vmatprep.subr.mxu0 0.0
        %6462 = vmatpush1.msra.mxu0 0.0
        %6463 = vmatprep.subr.mxu0 0.0
        %6464 = vmatpush1.msra.mxu0 0.0
        %6465 = vmatprep.subr.mxu0 0.0
        %6466 = vmatpush1.msra.mxu0 0.0
        %6467 = vmatprep.subr.mxu0 0.0
        %6468 = vmatpush1.msra.mxu0 0.0
        %6469 = vmatprep.subr.mxu0 0.0
        %6470 = vmatpush1.msra.mxu0 0.0
        %6471 = vmatprep.subr.mxu0 0.0
        %6472 = vmatpush1.msra.mxu0 0.0
        %6473 = vmatprep.subr.mxu0 0.0
        %6474 = vmatpush1.msra.mxu0 0.0
        %6475 = vmatprep.subr.mxu0 0.0
        %6476 = vmatpush1.msra.mxu0 0.0
        %6477 = vmatprep.subr.mxu0 0.0
        %6478 = vmatpush1.msra.mxu0 0.0
        %6479 = vmatprep.subr.mxu0 0.0
        %6480 = vmatpush1.msra.mxu0 0.0
        %6481 = vmatprep.subr.mxu0 0.0
        %6482 = vmatpush1.msra.mxu0 0.0
        %6483 = vmatprep.subr.mxu0 0.0
        %6484 = vmatpush1.msra.mxu0 0.0
        %6485 = vmatprep.subr.mxu0 0.0
        %6486 = vmatpush1.msra.mxu0 0.0
        %6487 = vmatprep.subr.mxu0 0.0
        %6488 = vmatpush1.msra.mxu0 0.0
        %6489 = vmatprep.mubr.f32.mxu0 0.0
        %6490 = vmatmul.mubr.f32.gmra.mrb[0].mxu0 %v6396
        %v6491 = vpop.f32.mrb[0].mxu0
        %v6492 = vadd.f32 0.0, %v6491
        %v6493 = vpop.f32.mrb[0].mxu0
        %6494 = vmatprep.mubr.f32.mxu0 0.0
        %6495 = vmatmul.mubr.f32.gmra.mrb[0].mxu0 %v6399
        %v6496 = vpop.f32.mrb[0].mxu0
        %v6497 = vadd.f32 0.0, %v6496
        %v6498 = vpop.f32.mrb[0].mxu0
        %6499 = vmatprep.mubr.f32.mxu0 0.0
        %6500 = vmatmul.mubr.f32.gmra.mrb[0].mxu0 %v6402
        %v6501 = vpop.f32.mrb[0].mxu0
        %v6502 = vadd.f32 0.0, %v6501
        %v6503 = vpop.f32.mrb[0].mxu0
        %6504 = vmatprep.mubr.f32.mxu0 0.0
        %6505 = vmatmul.mubr.f32.gmra.mrb[0].mxu0 %v6405
        %v6506 = vpop.f32.mrb[0].mxu0
        %v6507 = vadd.f32 0.0, %v6506
        %v6508 = vpop.f32.mrb[0].mxu0
        %6509 = vmatprep.mubr.f32.mxu0 0.0
        %6510 = vmatmul.mubr.f32.gmra.mrb[0].mxu0 %v6408
        %v6511 = vpop.f32.mrb[0].mxu0
        %v6512 = vadd.f32 0.0, %v6511
        %v6513 = vpop.f32.mrb[0].mxu0
        %6514 = vmatprep.mubr.f32.mxu0 0.0
        %6515 = vmatmul.mubr.f32.gmra.mrb[0].mxu0 %v6411
        %v6516 = vpop.f32.mrb[0].mxu0
        %v6517 = vadd.f32 0.0, %v6516
        %v6518 = vpop.f32.mrb[0].mxu0
        %6519 = vmatprep.mubr.f32.mxu0 0.0
        %6520 = vmatmul.mubr.f32.gmra.mrb[0].mxu0 %v6414
        %v6521 = vpop.f32.mrb[0].mxu0
        %v6522 = vadd.f32 0.0, %v6521
        %v6523 = vpop.f32.mrb[0].mxu0
        %6524 = vmatprep.mubr.f32.mxu0 0.0
        %6525 = vmatmul.mubr.f32.gmra.mrb[0].mxu0 %v6417
        %v6526 = vpop.f32.mrb[0].mxu0
        %v6527 = vadd.f32 0.0, %v6526
        %v6528 = vpop.f32.mrb[0].mxu0
        %6529 = vmatprep.mubr.f32.mxu0 0.0
        %6530 = vmatmul.mubr.f32.gmra.mrb[0].mxu0 %v6420
        %v6531 = vpop.f32.mrb[0].mxu0
        %v6532 = vadd.f32 0.0, %v6531
        %v6533 = vpop.f32.mrb[0].mxu0
        %6534 = vmatprep.mubr.f32.mxu0 0.0
        %6535 = vmatmul.mubr.f32.gmra.mrb[0].mxu0 %v6423
        %v6536 = vpop.f32.mrb[0].mxu0
        %v6537 = vadd.f32 0.0, %v6536
        %v6538 = vpop.f32.mrb[0].mxu0
        %6539 = vdwg.mxu0
        %v6540 = vadd.f32 %v6366, %v6492
        %v6541 = vadd.f32 %v6367, %v6497
        %v6542 = vadd.f32 %v6368, %v6502
        %v6543 = vadd.f32 %v6369, %v6507
        %v6544 = vadd.f32 %v6370, %v6512
        %v6545 = vadd.f32 %v6371, %v6517
        %v6546 = vadd.f32 %v6372, %v6522
        %v6547 = vadd.f32 %v6373, %v6527
        %v6548 = vadd.f32 %v6374, %v6532
        %v6549 = vadd.f32 %v6375, %v6537
        %v6550 = vld [vmem:[#allocation2 + $0xb] sm:$0xff]
        %v6551 = vld [vmem:[#allocation2 + $0x13] sm:$0xff]
        %v6552 = vld [vmem:[#allocation2 + $0x1b] sm:$0xff]
        %v6553 = vld [vmem:[#allocation2 + $0x23] sm:$0xff]
        %v6554 = vld [vmem:[#allocation2 + $0x2b] sm:$0xff]
        %v6555 = vld [vmem:[#allocation2 + $0x33] sm:$0xff]
        %v6556 = vld [vmem:[#allocation2 + $0x3b] sm:$0xff]
        %v6557 = vld [vmem:[#allocation2 + $0x43] sm:$0xff]
        %v6558 = vld [vmem:[#allocation2 + $0x4b] sm:$0xff]
        %v6559 = vld [vmem:[#allocation2 + $0x53] sm:$0xff]
        %s6560 = scalar_lea.vmem %s4, 256
        %v6561 = vld [vmem:[%s6560] sm:$0xff]
        %v6562 = vld [vmem:[%s6560 + $0x8] sm:$0xff]
        %v6563 = vld [vmem:[%s6560 + $0x10] sm:$0xff]
        %v6564 = vld [vmem:[%s6560 + $0x18] sm:$0xff]
        %v6565 = vld [vmem:[%s6560 + $0x20] sm:$0xff]
        %v6566 = vld [vmem:[%s6560 + $0x28] sm:$0xff]
        %v6567 = vld [vmem:[%s6560 + $0x30] sm:$0xff]
        %v6568 = vld [vmem:[%s6560 + $0x38] sm:$0xff]
        %v6570 = vsel %vm5860, %v6550, 0
        %v6573 = vsel %vm5860, %v6551, 0
        %v6576 = vsel %vm5860, %v6552, 0
        %v6579 = vsel %vm5860, %v6553, 0
        %v6582 = vsel %vm5860, %v6554, 0
        %v6585 = vsel %vm5860, %v6555, 0
        %v6588 = vsel %vm5860, %v6556, 0
        %v6591 = vsel %vm5860, %v6557, 0
        %v6594 = vsel %vm5860, %v6558, 0
        %v6597 = vsel %vm5860, %v6559, 0
        %6599 = vmatprep.subr.mxu0 0.0
        %6600 = vmatpush1.msra.mxu0 %v6561
        %6601 = vmatprep.subr.mxu0 0.0
        %6602 = vmatpush1.msra.mxu0 %v6562
        %6603 = vmatprep.subr.mxu0 0.0
        %6604 = vmatpush1.msra.mxu0 %v6563
        %6605 = vmatprep.subr.mxu0 0.0
        %6606 = vmatpush1.msra.mxu0 %v6564
        %6607 = vmatprep.subr.mxu0 0.0
        %6608 = vmatpush1.msra.mxu0 %v6565
        %6609 = vmatprep.subr.mxu0 0.0
        %6610 = vmatpush1.msra.mxu0 %v6566
        %6611 = vmatprep.subr.mxu0 0.0
        %6612 = vmatpush1.msra.mxu0 %v6567
        %6613 = vmatprep.subr.mxu0 0.0
        %6614 = vmatpush1.msra.mxu0 %v6568
        %6615 = vmatprep.subr.mxu0 0.0
        %6616 = vmatpush1.msra.mxu0 0.0
        %6617 = vmatprep.subr.mxu0 0.0
        %6618 = vmatpush1.msra.mxu0 0.0
        %6619 = vmatprep.subr.mxu0 0.0
        %6620 = vmatpush1.msra.mxu0 0.0
        %6621 = vmatprep.subr.mxu0 0.0
        %6622 = vmatpush1.msra.mxu0 0.0
        %6623 = vmatprep.subr.mxu0 0.0
        %6624 = vmatpush1.msra.mxu0 0.0
        %6625 = vmatprep.subr.mxu0 0.0
        %6626 = vmatpush1.msra.mxu0 0.0
        %6627 = vmatprep.subr.mxu0 0.0
        %6628 = vmatpush1.msra.mxu0 0.0
        %6629 = vmatprep.subr.mxu0 0.0
        %6630 = vmatpush1.msra.mxu0 0.0
        %6631 = vmatprep.subr.mxu0 0.0
        %6632 = vmatpush1.msra.mxu0 0.0
        %6633 = vmatprep.subr.mxu0 0.0
        %6634 = vmatpush1.msra.mxu0 0.0
        %6635 = vmatprep.subr.mxu0 0.0
        %6636 = vmatpush1.msra.mxu0 0.0
        %6637 = vmatprep.subr.mxu0 0.0
        %6638 = vmatpush1.msra.mxu0 0.0
        %6639 = vmatprep.subr.mxu0 0.0
        %6640 = vmatpush1.msra.mxu0 0.0
        %6641 = vmatprep.subr.mxu0 0.0
        %6642 = vmatpush1.msra.mxu0 0.0
        %6643 = vmatprep.subr.mxu0 0.0
        %6644 = vmatpush1.msra.mxu0 0.0
        %6645 = vmatprep.subr.mxu0 0.0
        %6646 = vmatpush1.msra.mxu0 0.0
        %6647 = vmatprep.subr.mxu0 0.0
        %6648 = vmatpush1.msra.mxu0 0.0
        %6649 = vmatprep.subr.mxu0 0.0
        %6650 = vmatpush1.msra.mxu0 0.0
        %6651 = vmatprep.subr.mxu0 0.0
        %6652 = vmatpush1.msra.mxu0 0.0
        %6653 = vmatprep.subr.mxu0 0.0
        %6654 = vmatpush1.msra.mxu0 0.0
        %6655 = vmatprep.subr.mxu0 0.0
        %6656 = vmatpush1.msra.mxu0 0.0
        %6657 = vmatprep.subr.mxu0 0.0
        %6658 = vmatpush1.msra.mxu0 0.0
        %6659 = vmatprep.subr.mxu0 0.0
        %6660 = vmatpush1.msra.mxu0 0.0
        %6661 = vmatprep.subr.mxu0 0.0
        %6662 = vmatpush1.msra.mxu0 0.0
        %6663 = vmatprep.mubr.f32.mxu0 0.0
        %6664 = vmatmul.mubr.f32.gmra.mrb[0].mxu0 %v6570
        %v6665 = vpop.f32.mrb[0].mxu0
        %v6666 = vadd.f32 0.0, %v6665
        %v6667 = vpop.f32.mrb[0].mxu0
        %6668 = vmatprep.mubr.f32.mxu0 0.0
        %6669 = vmatmul.mubr.f32.gmra.mrb[0].mxu0 %v6573
        %v6670 = vpop.f32.mrb[0].mxu0
        %v6671 = vadd.f32 0.0, %v6670
        %v6672 = vpop.f32.mrb[0].mxu0
        %6673 = vmatprep.mubr.f32.mxu0 0.0
        %6674 = vmatmul.mubr.f32.gmra.mrb[0].mxu0 %v6576
        %v6675 = vpop.f32.mrb[0].mxu0
        %v6676 = vadd.f32 0.0, %v6675
        %v6677 = vpop.f32.mrb[0].mxu0
        %6678 = vmatprep.mubr.f32.mxu0 0.0
        %6679 = vmatmul.mubr.f32.gmra.mrb[0].mxu0 %v6579
        %v6680 = vpop.f32.mrb[0].mxu0
        %v6681 = vadd.f32 0.0, %v6680
        %v6682 = vpop.f32.mrb[0].mxu0
        %6683 = vmatprep.mubr.f32.mxu0 0.0
        %6684 = vmatmul.mubr.f32.gmra.mrb[0].mxu0 %v6582
        %v6685 = vpop.f32.mrb[0].mxu0
        %v6686 = vadd.f32 0.0, %v6685
        %v6687 = vpop.f32.mrb[0].mxu0
        %6688 = vmatprep.mubr.f32.mxu0 0.0
        %6689 = vmatmul.mubr.f32.gmra.mrb[0].mxu0 %v6585
        %v6690 = vpop.f32.mrb[0].mxu0
        %v6691 = vadd.f32 0.0, %v6690
        %v6692 = vpop.f32.mrb[0].mxu0
        %6693 = vmatprep.mubr.f32.mxu0 0.0
        %6694 = vmatmul.mubr.f32.gmra.mrb[0].mxu0 %v6588
        %v6695 = vpop.f32.mrb[0].mxu0
        %v6696 = vadd.f32 0.0, %v6695
        %v6697 = vpop.f32.mrb[0].mxu0
        %6698 = vmatprep.mubr.f32.mxu0 0.0
        %6699 = vmatmul.mubr.f32.gmra.mrb[0].mxu0 %v6591
        %v6700 = vpop.f32.mrb[0].mxu0
        %v6701 = vadd.f32 0.0, %v6700
        %v6702 = vpop.f32.mrb[0].mxu0
        %6703 = vmatprep.mubr.f32.mxu0 0.0
        %6704 = vmatmul.mubr.f32.gmra.mrb[0].mxu0 %v6594
        %v6705 = vpop.f32.mrb[0].mxu0
        %v6706 = vadd.f32 0.0, %v6705
        %v6707 = vpop.f32.mrb[0].mxu0
        %6708 = vmatprep.mubr.f32.mxu0 0.0
        %6709 = vmatmul.mubr.f32.gmra.mrb[0].mxu0 %v6597
        %v6710 = vpop.f32.mrb[0].mxu0
        %v6711 = vadd.f32 0.0, %v6710
        %v6712 = vpop.f32.mrb[0].mxu0
        %6713 = vdwg.mxu0
        %v6714 = vadd.f32 %v6540, %v6666
        %v6715 = vadd.f32 %v6541, %v6671
        %v6716 = vadd.f32 %v6542, %v6676
        %v6717 = vadd.f32 %v6543, %v6681
        %v6718 = vadd.f32 %v6544, %v6686
        %v6719 = vadd.f32 %v6545, %v6691
        %v6720 = vadd.f32 %v6546, %v6696
        %v6721 = vadd.f32 %v6547, %v6701
        %v6722 = vadd.f32 %v6548, %v6706
        %v6723 = vadd.f32 %v6549, %v6711
        %v6724 = vld [vmem:[#allocation2 + $0xc] sm:$0xff]
        %v6725 = vld [vmem:[#allocation2 + $0x14] sm:$0xff]
        %v6726 = vld [vmem:[#allocation2 + $0x1c] sm:$0xff]
        %v6727 = vld [vmem:[#allocation2 + $0x24] sm:$0xff]
        %v6728 = vld [vmem:[#allocation2 + $0x2c] sm:$0xff]
        %v6729 = vld [vmem:[#allocation2 + $0x34] sm:$0xff]
        %v6730 = vld [vmem:[#allocation2 + $0x3c] sm:$0xff]
        %v6731 = vld [vmem:[#allocation2 + $0x44] sm:$0xff]
        %v6732 = vld [vmem:[#allocation2 + $0x4c] sm:$0xff]
        %v6733 = vld [vmem:[#allocation2 + $0x54] sm:$0xff]
        %s6734 = scalar_lea.vmem %s4, 320
        %v6735 = vld [vmem:[%s6734] sm:$0xff]
        %v6736 = vld [vmem:[%s6734 + $0x8] sm:$0xff]
        %v6737 = vld [vmem:[%s6734 + $0x10] sm:$0xff]
        %v6738 = vld [vmem:[%s6734 + $0x18] sm:$0xff]
        %v6739 = vld [vmem:[%s6734 + $0x20] sm:$0xff]
        %v6740 = vld [vmem:[%s6734 + $0x28] sm:$0xff]
        %v6741 = vld [vmem:[%s6734 + $0x30] sm:$0xff]
        %v6742 = vld [vmem:[%s6734 + $0x38] sm:$0xff]
        %v6744 = vsel %vm5860, %v6724, 0
        %v6747 = vsel %vm5860, %v6725, 0
        %v6750 = vsel %vm5860, %v6726, 0
        %v6753 = vsel %vm5860, %v6727, 0
        %v6756 = vsel %vm5860, %v6728, 0
        %v6759 = vsel %vm5860, %v6729, 0
        %v6762 = vsel %vm5860, %v6730, 0
        %v6765 = vsel %vm5860, %v6731, 0
        %v6768 = vsel %vm5860, %v6732, 0
        %v6771 = vsel %vm5860, %v6733, 0
        %6773 = vmatprep.subr.mxu0 0.0
        %6774 = vmatpush1.msra.mxu0 %v6735
        %6775 = vmatprep.subr.mxu0 0.0
        %6776 = vmatpush1.msra.mxu0 %v6736
        %6777 = vmatprep.subr.mxu0 0.0
        %6778 = vmatpush1.msra.mxu0 %v6737
        %6779 = vmatprep.subr.mxu0 0.0
        %6780 = vmatpush1.msra.mxu0 %v6738
        %6781 = vmatprep.subr.mxu0 0.0
        %6782 = vmatpush1.msra.mxu0 %v6739
        %6783 = vmatprep.subr.mxu0 0.0
        %6784 = vmatpush1.msra.mxu0 %v6740
        %6785 = vmatprep.subr.mxu0 0.0
        %6786 = vmatpush1.msra.mxu0 %v6741
        %6787 = vmatprep.subr.mxu0 0.0
        %6788 = vmatpush1.msra.mxu0 %v6742
        %6789 = vmatprep.subr.mxu0 0.0
        %6790 = vmatpush1.msra.mxu0 0.0
        %6791 = vmatprep.subr.mxu0 0.0
        %6792 = vmatpush1.msra.mxu0 0.0
        %6793 = vmatprep.subr.mxu0 0.0
        %6794 = vmatpush1.msra.mxu0 0.0
        %6795 = vmatprep.subr.mxu0 0.0
        %6796 = vmatpush1.msra.mxu0 0.0
        %6797 = vmatprep.subr.mxu0 0.0
        %6798 = vmatpush1.msra.mxu0 0.0
        %6799 = vmatprep.subr.mxu0 0.0
        %6800 = vmatpush1.msra.mxu0 0.0
        %6801 = vmatprep.subr.mxu0 0.0
        %6802 = vmatpush1.msra.mxu0 0.0
        %6803 = vmatprep.subr.mxu0 0.0
        %6804 = vmatpush1.msra.mxu0 0.0
        %6805 = vmatprep.subr.mxu0 0.0
        %6806 = vmatpush1.msra.mxu0 0.0
        %6807 = vmatprep.subr.mxu0 0.0
        %6808 = vmatpush1.msra.mxu0 0.0
        %6809 = vmatprep.subr.mxu0 0.0
        %6810 = vmatpush1.msra.mxu0 0.0
        %6811 = vmatprep.subr.mxu0 0.0
        %6812 = vmatpush1.msra.mxu0 0.0
        %6813 = vmatprep.subr.mxu0 0.0
        %6814 = vmatpush1.msra.mxu0 0.0
        %6815 = vmatprep.subr.mxu0 0.0
        %6816 = vmatpush1.msra.mxu0 0.0
        %6817 = vmatprep.subr.mxu0 0.0
        %6818 = vmatpush1.msra.mxu0 0.0
        %6819 = vmatprep.subr.mxu0 0.0
        %6820 = vmatpush1.msra.mxu0 0.0
        %6821 = vmatprep.subr.mxu0 0.0
        %6822 = vmatpush1.msra.mxu0 0.0
        %6823 = vmatprep.subr.mxu0 0.0
        %6824 = vmatpush1.msra.mxu0 0.0
        %6825 = vmatprep.subr.mxu0 0.0
        %6826 = vmatpush1.msra.mxu0 0.0
        %6827 = vmatprep.subr.mxu0 0.0
        %6828 = vmatpush1.msra.mxu0 0.0
        %6829 = vmatprep.subr.mxu0 0.0
        %6830 = vmatpush1.msra.mxu0 0.0
        %6831 = vmatprep.subr.mxu0 0.0
        %6832 = vmatpush1.msra.mxu0 0.0
        %6833 = vmatprep.subr.mxu0 0.0
        %6834 = vmatpush1.msra.mxu0 0.0
        %6835 = vmatprep.subr.mxu0 0.0
        %6836 = vmatpush1.msra.mxu0 0.0
        %6837 = vmatprep.mubr.f32.mxu0 0.0
        %6838 = vmatmul.mubr.f32.gmra.mrb[0].mxu0 %v6744
        %v6839 = vpop.f32.mrb[0].mxu0
        %v6840 = vadd.f32 0.0, %v6839
        %v6841 = vpop.f32.mrb[0].mxu0
        %6842 = vmatprep.mubr.f32.mxu0 0.0
        %6843 = vmatmul.mubr.f32.gmra.mrb[0].mxu0 %v6747
        %v6844 = vpop.f32.mrb[0].mxu0
        %v6845 = vadd.f32 0.0, %v6844
        %v6846 = vpop.f32.mrb[0].mxu0
        %6847 = vmatprep.mubr.f32.mxu0 0.0
        %6848 = vmatmul.mubr.f32.gmra.mrb[0].mxu0 %v6750
        %v6849 = vpop.f32.mrb[0].mxu0
        %v6850 = vadd.f32 0.0, %v6849
        %v6851 = vpop.f32.mrb[0].mxu0
        %6852 = vmatprep.mubr.f32.mxu0 0.0
        %6853 = vmatmul.mubr.f32.gmra.mrb[0].mxu0 %v6753
        %v6854 = vpop.f32.mrb[0].mxu0
        %v6855 = vadd.f32 0.0, %v6854
        %v6856 = vpop.f32.mrb[0].mxu0
        %6857 = vmatprep.mubr.f32.mxu0 0.0
        %6858 = vmatmul.mubr.f32.gmra.mrb[0].mxu0 %v6756
        %v6859 = vpop.f32.mrb[0].mxu0
        %v6860 = vadd.f32 0.0, %v6859
        %v6861 = vpop.f32.mrb[0].mxu0
        %6862 = vmatprep.mubr.f32.mxu0 0.0
        %6863 = vmatmul.mubr.f32.gmra.mrb[0].mxu0 %v6759
        %v6864 = vpop.f32.mrb[0].mxu0
        %v6865 = vadd.f32 0.0, %v6864
        %v6866 = vpop.f32.mrb[0].mxu0
        %6867 = vmatprep.mubr.f32.mxu0 0.0
        %6868 = vmatmul.mubr.f32.gmra.mrb[0].mxu0 %v6762
        %v6869 = vpop.f32.mrb[0].mxu0
        %v6870 = vadd.f32 0.0, %v6869
        %v6871 = vpop.f32.mrb[0].mxu0
        %6872 = vmatprep.mubr.f32.mxu0 0.0
        %6873 = vmatmul.mubr.f32.gmra.mrb[0].mxu0 %v6765
        %v6874 = vpop.f32.mrb[0].mxu0
        %v6875 = vadd.f32 0.0, %v6874
        %v6876 = vpop.f32.mrb[0].mxu0
        %6877 = vmatprep.mubr.f32.mxu0 0.0
        %6878 = vmatmul.mubr.f32.gmra.mrb[0].mxu0 %v6768
        %v6879 = vpop.f32.mrb[0].mxu0
        %v6880 = vadd.f32 0.0, %v6879
        %v6881 = vpop.f32.mrb[0].mxu0
        %6882 = vmatprep.mubr.f32.mxu0 0.0
        %6883 = vmatmul.mubr.f32.gmra.mrb[0].mxu0 %v6771
        %v6884 = vpop.f32.mrb[0].mxu0
        %v6885 = vadd.f32 0.0, %v6884
        %v6886 = vpop.f32.mrb[0].mxu0
        %6887 = vdwg.mxu0
        %v6888 = vadd.f32 %v6714, %v6840
        %v6889 = vadd.f32 %v6715, %v6845
        %v6890 = vadd.f32 %v6716, %v6850
        %v6891 = vadd.f32 %v6717, %v6855
        %v6892 = vadd.f32 %v6718, %v6860
        %v6893 = vadd.f32 %v6719, %v6865
        %v6894 = vadd.f32 %v6720, %v6870
        %v6895 = vadd.f32 %v6721, %v6875
        %v6896 = vadd.f32 %v6722, %v6880
        %v6897 = vadd.f32 %v6723, %v6885
        %v6898 = vld [vmem:[#allocation2 + $0x14] sm:$0xff]
        %v6899 = vld [vmem:[#allocation2 + $0x1c] sm:$0xff]
        %v6900 = vld [vmem:[#allocation2 + $0x24] sm:$0xff]
        %v6901 = vld [vmem:[#allocation2 + $0x2c] sm:$0xff]
        %v6902 = vld [vmem:[#allocation2 + $0x34] sm:$0xff]
        %v6903 = vld [vmem:[#allocation2 + $0x3c] sm:$0xff]
        %v6904 = vld [vmem:[#allocation2 + $0x44] sm:$0xff]
        %v6905 = vld [vmem:[#allocation2 + $0x4c] sm:$0xff]
        %v6906 = vld [vmem:[#allocation2 + $0x54] sm:$0xff]
        %v6907 = vld [vmem:[#allocation2 + $0x5c] sm:$0xff]
        %s6908 = scalar_lea.vmem %s4, 384
        %v6909 = vld [vmem:[%s6908] sm:$0xff]
        %v6910 = vld [vmem:[%s6908 + $0x8] sm:$0xff]
        %v6911 = vld [vmem:[%s6908 + $0x10] sm:$0xff]
        %v6912 = vld [vmem:[%s6908 + $0x18] sm:$0xff]
        %v6913 = vld [vmem:[%s6908 + $0x20] sm:$0xff]
        %v6914 = vld [vmem:[%s6908 + $0x28] sm:$0xff]
        %v6915 = vld [vmem:[%s6908 + $0x30] sm:$0xff]
        %v6916 = vld [vmem:[%s6908 + $0x38] sm:$0xff]
        %v6918 = vsel %vm5860, %v6898, 0
        %v6921 = vsel %vm5860, %v6899, 0
        %v6924 = vsel %vm5860, %v6900, 0
        %v6927 = vsel %vm5860, %v6901, 0
        %v6930 = vsel %vm5860, %v6902, 0
        %v6933 = vsel %vm5860, %v6903, 0
        %v6936 = vsel %vm5860, %v6904, 0
        %v6939 = vsel %vm5860, %v6905, 0
        %v6942 = vsel %vm5860, %v6906, 0
        %v6945 = vsel %vm5860, %v6907, 0
        %6947 = vmatprep.subr.mxu0 0.0
        %6948 = vmatpush1.msra.mxu0 %v6909
        %6949 = vmatprep.subr.mxu0 0.0
        %6950 = vmatpush1.msra.mxu0 %v6910
        %6951 = vmatprep.subr.mxu0 0.0
        %6952 = vmatpush1.msra.mxu0 %v6911
        %6953 = vmatprep.subr.mxu0 0.0
        %6954 = vmatpush1.msra.mxu0 %v6912
        %6955 = vmatprep.subr.mxu0 0.0
        %6956 = vmatpush1.msra.mxu0 %v6913
        %6957 = vmatprep.subr.mxu0 0.0
        %6958 = vmatpush1.msra.mxu0 %v6914
        %6959 = vmatprep.subr.mxu0 0.0
        %6960 = vmatpush1.msra.mxu0 %v6915
        %6961 = vmatprep.subr.mxu0 0.0
        %6962 = vmatpush1.msra.mxu0 %v6916
        %6963 = vmatprep.subr.mxu0 0.0
        %6964 = vmatpush1.msra.mxu0 0.0
        %6965 = vmatprep.subr.mxu0 0.0
        %6966 = vmatpush1.msra.mxu0 0.0
        %6967 = vmatprep.subr.mxu0 0.0
        %6968 = vmatpush1.msra.mxu0 0.0
        %6969 = vmatprep.subr.mxu0 0.0
        %6970 = vmatpush1.msra.mxu0 0.0
        %6971 = vmatprep.subr.mxu0 0.0
        %6972 = vmatpush1.msra.mxu0 0.0
        %6973 = vmatprep.subr.mxu0 0.0
        %6974 = vmatpush1.msra.mxu0 0.0
        %6975 = vmatprep.subr.mxu0 0.0
        %6976 = vmatpush1.msra.mxu0 0.0
        %6977 = vmatprep.subr.mxu0 0.0
        %6978 = vmatpush1.msra.mxu0 0.0
        %6979 = vmatprep.subr.mxu0 0.0
        %6980 = vmatpush1.msra.mxu0 0.0
        %6981 = vmatprep.subr.mxu0 0.0
        %6982 = vmatpush1.msra.mxu0 0.0
        %6983 = vmatprep.subr.mxu0 0.0
        %6984 = vmatpush1.msra.mxu0 0.0
        %6985 = vmatprep.subr.mxu0 0.0
        %6986 = vmatpush1.msra.mxu0 0.0
        %6987 = vmatprep.subr.mxu0 0.0
        %6988 = vmatpush1.msra.mxu0 0.0
        %6989 = vmatprep.subr.mxu0 0.0
        %6990 = vmatpush1.msra.mxu0 0.0
        %6991 = vmatprep.subr.mxu0 0.0
        %6992 = vmatpush1.msra.mxu0 0.0
        %6993 = vmatprep.subr.mxu0 0.0
        %6994 = vmatpush1.msra.mxu0 0.0
        %6995 = vmatprep.subr.mxu0 0.0
        %6996 = vmatpush1.msra.mxu0 0.0
        %6997 = vmatprep.subr.mxu0 0.0
        %6998 = vmatpush1.msra.mxu0 0.0
        %6999 = vmatprep.subr.mxu0 0.0
        %7000 = vmatpush1.msra.mxu0 0.0
        %7001 = vmatprep.subr.mxu0 0.0
        %7002 = vmatpush1.msra.mxu0 0.0
        %7003 = vmatprep.subr.mxu0 0.0
        %7004 = vmatpush1.msra.mxu0 0.0
        %7005 = vmatprep.subr.mxu0 0.0
        %7006 = vmatpush1.msra.mxu0 0.0
        %7007 = vmatprep.subr.mxu0 0.0
        %7008 = vmatpush1.msra.mxu0 0.0
        %7009 = vmatprep.subr.mxu0 0.0
        %7010 = vmatpush1.msra.mxu0 0.0
        %7011 = vmatprep.mubr.f32.mxu0 0.0
        %7012 = vmatmul.mubr.f32.gmra.mrb[0].mxu0 %v6918
        %v7013 = vpop.f32.mrb[0].mxu0
        %v7014 = vadd.f32 0.0, %v7013
        %v7015 = vpop.f32.mrb[0].mxu0
        %7016 = vmatprep.mubr.f32.mxu0 0.0
        %7017 = vmatmul.mubr.f32.gmra.mrb[0].mxu0 %v6921
        %v7018 = vpop.f32.mrb[0].mxu0
        %v7019 = vadd.f32 0.0, %v7018
        %v7020 = vpop.f32.mrb[0].mxu0
        %7021 = vmatprep.mubr.f32.mxu0 0.0
        %7022 = vmatmul.mubr.f32.gmra.mrb[0].mxu0 %v6924
        %v7023 = vpop.f32.mrb[0].mxu0
        %v7024 = vadd.f32 0.0, %v7023
        %v7025 = vpop.f32.mrb[0].mxu0
        %7026 = vmatprep.mubr.f32.mxu0 0.0
        %7027 = vmatmul.mubr.f32.gmra.mrb[0].mxu0 %v6927
        %v7028 = vpop.f32.mrb[0].mxu0
        %v7029 = vadd.f32 0.0, %v7028
        %v7030 = vpop.f32.mrb[0].mxu0
        %7031 = vmatprep.mubr.f32.mxu0 0.0
        %7032 = vmatmul.mubr.f32.gmra.mrb[0].mxu0 %v6930
        %v7033 = vpop.f32.mrb[0].mxu0
        %v7034 = vadd.f32 0.0, %v7033
        %v7035 = vpop.f32.mrb[0].mxu0
        %7036 = vmatprep.mubr.f32.mxu0 0.0
        %7037 = vmatmul.mubr.f32.gmra.mrb[0].mxu0 %v6933
        %v7038 = vpop.f32.mrb[0].mxu0
        %v7039 = vadd.f32 0.0, %v7038
        %v7040 = vpop.f32.mrb[0].mxu0
        %7041 = vmatprep.mubr.f32.mxu0 0.0
        %7042 = vmatmul.mubr.f32.gmra.mrb[0].mxu0 %v6936
        %v7043 = vpop.f32.mrb[0].mxu0
        %v7044 = vadd.f32 0.0, %v7043
        %v7045 = vpop.f32.mrb[0].mxu0
        %7046 = vmatprep.mubr.f32.mxu0 0.0
        %7047 = vmatmul.mubr.f32.gmra.mrb[0].mxu0 %v6939
        %v7048 = vpop.f32.mrb[0].mxu0
        %v7049 = vadd.f32 0.0, %v7048
        %v7050 = vpop.f32.mrb[0].mxu0
        %7051 = vmatprep.mubr.f32.mxu0 0.0
        %7052 = vmatmul.mubr.f32.gmra.mrb[0].mxu0 %v6942
        %v7053 = vpop.f32.mrb[0].mxu0
        %v7054 = vadd.f32 0.0, %v7053
        %v7055 = vpop.f32.mrb[0].mxu0
        %7056 = vmatprep.mubr.f32.mxu0 0.0
        %7057 = vmatmul.mubr.f32.gmra.mrb[0].mxu0 %v6945
        %v7058 = vpop.f32.mrb[0].mxu0
        %v7059 = vadd.f32 0.0, %v7058
        %v7060 = vpop.f32.mrb[0].mxu0
        %7061 = vdwg.mxu0
        %v7062 = vadd.f32 %v6888, %v7014
        %v7063 = vadd.f32 %v6889, %v7019
        %v7064 = vadd.f32 %v6890, %v7024
        %v7065 = vadd.f32 %v6891, %v7029
        %v7066 = vadd.f32 %v6892, %v7034
        %v7067 = vadd.f32 %v6893, %v7039
        %v7068 = vadd.f32 %v6894, %v7044
        %v7069 = vadd.f32 %v6895, %v7049
        %v7070 = vadd.f32 %v6896, %v7054
        %v7071 = vadd.f32 %v6897, %v7059
        %v7072 = vld [vmem:[#allocation2 + $0x15] sm:$0xff]
        %v7073 = vld [vmem:[#allocation2 + $0x1d] sm:$0xff]
        %v7074 = vld [vmem:[#allocation2 + $0x25] sm:$0xff]
        %v7075 = vld [vmem:[#allocation2 + $0x2d] sm:$0xff]
        %v7076 = vld [vmem:[#allocation2 + $0x35] sm:$0xff]
        %v7077 = vld [vmem:[#allocation2 + $0x3d] sm:$0xff]
        %v7078 = vld [vmem:[#allocation2 + $0x45] sm:$0xff]
        %v7079 = vld [vmem:[#allocation2 + $0x4d] sm:$0xff]
        %v7080 = vld [vmem:[#allocation2 + $0x55] sm:$0xff]
        %v7081 = vld [vmem:[#allocation2 + $0x5d] sm:$0xff]
        %s7082 = scalar_lea.vmem %s4, 448
        %v7083 = vld [vmem:[%s7082] sm:$0xff]
        %v7084 = vld [vmem:[%s7082 + $0x8] sm:$0xff]
        %v7085 = vld [vmem:[%s7082 + $0x10] sm:$0xff]
        %v7086 = vld [vmem:[%s7082 + $0x18] sm:$0xff]
        %v7087 = vld [vmem:[%s7082 + $0x20] sm:$0xff]
        %v7088 = vld [vmem:[%s7082 + $0x28] sm:$0xff]
        %v7089 = vld [vmem:[%s7082 + $0x30] sm:$0xff]
        %v7090 = vld [vmem:[%s7082 + $0x38] sm:$0xff]
        %v7092 = vsel %vm5860, %v7072, 0
        %v7095 = vsel %vm5860, %v7073, 0
        %v7098 = vsel %vm5860, %v7074, 0
        %v7101 = vsel %vm5860, %v7075, 0
        %v7104 = vsel %vm5860, %v7076, 0
        %v7107 = vsel %vm5860, %v7077, 0
        %v7110 = vsel %vm5860, %v7078, 0
        %v7113 = vsel %vm5860, %v7079, 0
        %v7116 = vsel %vm5860, %v7080, 0
        %v7119 = vsel %vm5860, %v7081, 0
        %7121 = vmatprep.subr.mxu0 0.0
        %7122 = vmatpush1.msra.mxu0 %v7083
        %7123 = vmatprep.subr.mxu0 0.0
        %7124 = vmatpush1.msra.mxu0 %v7084
        %7125 = vmatprep.subr.mxu0 0.0
        %7126 = vmatpush1.msra.mxu0 %v7085
        %7127 = vmatprep.subr.mxu0 0.0
        %7128 = vmatpush1.msra.mxu0 %v7086
        %7129 = vmatprep.subr.mxu0 0.0
        %7130 = vmatpush1.msra.mxu0 %v7087
        %7131 = vmatprep.subr.mxu0 0.0
        %7132 = vmatpush1.msra.mxu0 %v7088
        %7133 = vmatprep.subr.mxu0 0.0
        %7134 = vmatpush1.msra.mxu0 %v7089
        %7135 = vmatprep.subr.mxu0 0.0
        %7136 = vmatpush1.msra.mxu0 %v7090
        %7137 = vmatprep.subr.mxu0 0.0
        %7138 = vmatpush1.msra.mxu0 0.0
        %7139 = vmatprep.subr.mxu0 0.0
        %7140 = vmatpush1.msra.mxu0 0.0
        %7141 = vmatprep.subr.mxu0 0.0
        %7142 = vmatpush1.msra.mxu0 0.0
        %7143 = vmatprep.subr.mxu0 0.0
        %7144 = vmatpush1.msra.mxu0 0.0
        %7145 = vmatprep.subr.mxu0 0.0
        %7146 = vmatpush1.msra.mxu0 0.0
        %7147 = vmatprep.subr.mxu0 0.0
        %7148 = vmatpush1.msra.mxu0 0.0
        %7149 = vmatprep.subr.mxu0 0.0
        %7150 = vmatpush1.msra.mxu0 0.0
        %7151 = vmatprep.subr.mxu0 0.0
        %7152 = vmatpush1.msra.mxu0 0.0
        %7153 = vmatprep.subr.mxu0 0.0
        %7154 = vmatpush1.msra.mxu0 0.0
        %7155 = vmatprep.subr.mxu0 0.0
        %7156 = vmatpush1.msra.mxu0 0.0
        %7157 = vmatprep.subr.mxu0 0.0
        %7158 = vmatpush1.msra.mxu0 0.0
        %7159 = vmatprep.subr.mxu0 0.0
        %7160 = vmatpush1.msra.mxu0 0.0
        %7161 = vmatprep.subr.mxu0 0.0
        %7162 = vmatpush1.msra.mxu0 0.0
        %7163 = vmatprep.subr.mxu0 0.0
        %7164 = vmatpush1.msra.mxu0 0.0
        %7165 = vmatprep.subr.mxu0 0.0
        %7166 = vmatpush1.msra.mxu0 0.0
        %7167 = vmatprep.subr.mxu0 0.0
        %7168 = vmatpush1.msra.mxu0 0.0
        %7169 = vmatprep.subr.mxu0 0.0
        %7170 = vmatpush1.msra.mxu0 0.0
        %7171 = vmatprep.subr.mxu0 0.0
        %7172 = vmatpush1.msra.mxu0 0.0
        %7173 = vmatprep.subr.mxu0 0.0
        %7174 = vmatpush1.msra.mxu0 0.0
        %7175 = vmatprep.subr.mxu0 0.0
        %7176 = vmatpush1.msra.mxu0 0.0
        %7177 = vmatprep.subr.mxu0 0.0
        %7178 = vmatpush1.msra.mxu0 0.0
        %7179 = vmatprep.subr.mxu0 0.0
        %7180 = vmatpush1.msra.mxu0 0.0
        %7181 = vmatprep.subr.mxu0 0.0
        %7182 = vmatpush1.msra.mxu0 0.0
        %7183 = vmatprep.subr.mxu0 0.0
        %7184 = vmatpush1.msra.mxu0 0.0
        %7185 = vmatprep.mubr.f32.mxu0 0.0
        %7186 = vmatmul.mubr.f32.gmra.mrb[0].mxu0 %v7092
        %v7187 = vpop.f32.mrb[0].mxu0
        %v7188 = vadd.f32 0.0, %v7187
        %v7189 = vpop.f32.mrb[0].mxu0
        %7190 = vmatprep.mubr.f32.mxu0 0.0
        %7191 = vmatmul.mubr.f32.gmra.mrb[0].mxu0 %v7095
        %v7192 = vpop.f32.mrb[0].mxu0
        %v7193 = vadd.f32 0.0, %v7192
        %v7194 = vpop.f32.mrb[0].mxu0
        %7195 = vmatprep.mubr.f32.mxu0 0.0
        %7196 = vmatmul.mubr.f32.gmra.mrb[0].mxu0 %v7098
        %v7197 = vpop.f32.mrb[0].mxu0
        %v7198 = vadd.f32 0.0, %v7197
        %v7199 = vpop.f32.mrb[0].mxu0
        %7200 = vmatprep.mubr.f32.mxu0 0.0
        %7201 = vmatmul.mubr.f32.gmra.mrb[0].mxu0 %v7101
        %v7202 = vpop.f32.mrb[0].mxu0
        %v7203 = vadd.f32 0.0, %v7202
        %v7204 = vpop.f32.mrb[0].mxu0
        %7205 = vmatprep.mubr.f32.mxu0 0.0
        %7206 = vmatmul.mubr.f32.gmra.mrb[0].mxu0 %v7104
        %v7207 = vpop.f32.mrb[0].mxu0
        %v7208 = vadd.f32 0.0, %v7207
        %v7209 = vpop.f32.mrb[0].mxu0
        %7210 = vmatprep.mubr.f32.mxu0 0.0
        %7211 = vmatmul.mubr.f32.gmra.mrb[0].mxu0 %v7107
        %v7212 = vpop.f32.mrb[0].mxu0
        %v7213 = vadd.f32 0.0, %v7212
        %v7214 = vpop.f32.mrb[0].mxu0
        %7215 = vmatprep.mubr.f32.mxu0 0.0
        %7216 = vmatmul.mubr.f32.gmra.mrb[0].mxu0 %v7110
        %v7217 = vpop.f32.mrb[0].mxu0
        %v7218 = vadd.f32 0.0, %v7217
        %v7219 = vpop.f32.mrb[0].mxu0
        %7220 = vmatprep.mubr.f32.mxu0 0.0
        %7221 = vmatmul.mubr.f32.gmra.mrb[0].mxu0 %v7113
        %v7222 = vpop.f32.mrb[0].mxu0
        %v7223 = vadd.f32 0.0, %v7222
        %v7224 = vpop.f32.mrb[0].mxu0
        %7225 = vmatprep.mubr.f32.mxu0 0.0
        %7226 = vmatmul.mubr.f32.gmra.mrb[0].mxu0 %v7116
        %v7227 = vpop.f32.mrb[0].mxu0
        %v7228 = vadd.f32 0.0, %v7227
        %v7229 = vpop.f32.mrb[0].mxu0
        %7230 = vmatprep.mubr.f32.mxu0 0.0
        %7231 = vmatmul.mubr.f32.gmra.mrb[0].mxu0 %v7119
        %v7232 = vpop.f32.mrb[0].mxu0
        %v7233 = vadd.f32 0.0, %v7232
        %v7234 = vpop.f32.mrb[0].mxu0
        %7235 = vdwg.mxu0
        %v7236 = vadd.f32 %v7062, %v7188
        %v7237 = vadd.f32 %v7063, %v7193
        %v7238 = vadd.f32 %v7064, %v7198
        %v7239 = vadd.f32 %v7065, %v7203
        %v7240 = vadd.f32 %v7066, %v7208
        %v7241 = vadd.f32 %v7067, %v7213
        %v7242 = vadd.f32 %v7068, %v7218
        %v7243 = vadd.f32 %v7069, %v7223
        %v7244 = vadd.f32 %v7070, %v7228
        %v7245 = vadd.f32 %v7071, %v7233
        %v7246 = vld [vmem:[#allocation2 + $0x16] sm:$0xff]
        %v7247 = vld [vmem:[#allocation2 + $0x1e] sm:$0xff]
        %v7248 = vld [vmem:[#allocation2 + $0x26] sm:$0xff]
        %v7249 = vld [vmem:[#allocation2 + $0x2e] sm:$0xff]
        %v7250 = vld [vmem:[#allocation2 + $0x36] sm:$0xff]
        %v7251 = vld [vmem:[#allocation2 + $0x3e] sm:$0xff]
        %v7252 = vld [vmem:[#allocation2 + $0x46] sm:$0xff]
        %v7253 = vld [vmem:[#allocation2 + $0x4e] sm:$0xff]
        %v7254 = vld [vmem:[#allocation2 + $0x56] sm:$0xff]
        %v7255 = vld [vmem:[#allocation2 + $0x5e] sm:$0xff]
        %s7256 = scalar_lea.vmem %s4, 512
        %v7257 = vld [vmem:[%s7256] sm:$0xff]
        %v7258 = vld [vmem:[%s7256 + $0x8] sm:$0xff]
        %v7259 = vld [vmem:[%s7256 + $0x10] sm:$0xff]
        %v7260 = vld [vmem:[%s7256 + $0x18] sm:$0xff]
        %v7261 = vld [vmem:[%s7256 + $0x20] sm:$0xff]
        %v7262 = vld [vmem:[%s7256 + $0x28] sm:$0xff]
        %v7263 = vld [vmem:[%s7256 + $0x30] sm:$0xff]
        %v7264 = vld [vmem:[%s7256 + $0x38] sm:$0xff]
        %v7266 = vsel %vm5860, %v7246, 0
        %v7269 = vsel %vm5860, %v7247, 0
        %v7272 = vsel %vm5860, %v7248, 0
        %v7275 = vsel %vm5860, %v7249, 0
        %v7278 = vsel %vm5860, %v7250, 0
        %v7281 = vsel %vm5860, %v7251, 0
        %v7284 = vsel %vm5860, %v7252, 0
        %v7287 = vsel %vm5860, %v7253, 0
        %v7290 = vsel %vm5860, %v7254, 0
        %v7293 = vsel %vm5860, %v7255, 0
        %7295 = vmatprep.subr.mxu0 0.0
        %7296 = vmatpush1.msra.mxu0 %v7257
        %7297 = vmatprep.subr.mxu0 0.0
        %7298 = vmatpush1.msra.mxu0 %v7258
        %7299 = vmatprep.subr.mxu0 0.0
        %7300 = vmatpush1.msra.mxu0 %v7259
        %7301 = vmatprep.subr.mxu0 0.0
        %7302 = vmatpush1.msra.mxu0 %v7260
        %7303 = vmatprep.subr.mxu0 0.0
        %7304 = vmatpush1.msra.mxu0 %v7261
        %7305 = vmatprep.subr.mxu0 0.0
        %7306 = vmatpush1.msra.mxu0 %v7262
        %7307 = vmatprep.subr.mxu0 0.0
        %7308 = vmatpush1.msra.mxu0 %v7263
        %7309 = vmatprep.subr.mxu0 0.0
        %7310 = vmatpush1.msra.mxu0 %v7264
        %7311 = vmatprep.subr.mxu0 0.0
        %7312 = vmatpush1.msra.mxu0 0.0
        %7313 = vmatprep.subr.mxu0 0.0
        %7314 = vmatpush1.msra.mxu0 0.0
        %7315 = vmatprep.subr.mxu0 0.0
        %7316 = vmatpush1.msra.mxu0 0.0
        %7317 = vmatprep.subr.mxu0 0.0
        %7318 = vmatpush1.msra.mxu0 0.0
        %7319 = vmatprep.subr.mxu0 0.0
        %7320 = vmatpush1.msra.mxu0 0.0
        %7321 = vmatprep.subr.mxu0 0.0
        %7322 = vmatpush1.msra.mxu0 0.0
        %7323 = vmatprep.subr.mxu0 0.0
        %7324 = vmatpush1.msra.mxu0 0.0
        %7325 = vmatprep.subr.mxu0 0.0
        %7326 = vmatpush1.msra.mxu0 0.0
        %7327 = vmatprep.subr.mxu0 0.0
        %7328 = vmatpush1.msra.mxu0 0.0
        %7329 = vmatprep.subr.mxu0 0.0
        %7330 = vmatpush1.msra.mxu0 0.0
        %7331 = vmatprep.subr.mxu0 0.0
        %7332 = vmatpush1.msra.mxu0 0.0
        %7333 = vmatprep.subr.mxu0 0.0
        %7334 = vmatpush1.msra.mxu0 0.0
        %7335 = vmatprep.subr.mxu0 0.0
        %7336 = vmatpush1.msra.mxu0 0.0
        %7337 = vmatprep.subr.mxu0 0.0
        %7338 = vmatpush1.msra.mxu0 0.0
        %7339 = vmatprep.subr.mxu0 0.0
        %7340 = vmatpush1.msra.mxu0 0.0
        %7341 = vmatprep.subr.mxu0 0.0
        %7342 = vmatpush1.msra.mxu0 0.0
        %7343 = vmatprep.subr.mxu0 0.0
        %7344 = vmatpush1.msra.mxu0 0.0
        %7345 = vmatprep.subr.mxu0 0.0
        %7346 = vmatpush1.msra.mxu0 0.0
        %7347 = vmatprep.subr.mxu0 0.0
        %7348 = vmatpush1.msra.mxu0 0.0
        %7349 = vmatprep.subr.mxu0 0.0
        %7350 = vmatpush1.msra.mxu0 0.0
        %7351 = vmatprep.subr.mxu0 0.0
        %7352 = vmatpush1.msra.mxu0 0.0
        %7353 = vmatprep.subr.mxu0 0.0
        %7354 = vmatpush1.msra.mxu0 0.0
        %7355 = vmatprep.subr.mxu0 0.0
        %7356 = vmatpush1.msra.mxu0 0.0
        %7357 = vmatprep.subr.mxu0 0.0
        %7358 = vmatpush1.msra.mxu0 0.0
        %7359 = vmatprep.mubr.f32.mxu0 0.0
        %7360 = vmatmul.mubr.f32.gmra.mrb[0].mxu0 %v7266
        %v7361 = vpop.f32.mrb[0].mxu0
        %v7362 = vadd.f32 0.0, %v7361
        %v7363 = vpop.f32.mrb[0].mxu0
        %7364 = vmatprep.mubr.f32.mxu0 0.0
        %7365 = vmatmul.mubr.f32.gmra.mrb[0].mxu0 %v7269
        %v7366 = vpop.f32.mrb[0].mxu0
        %v7367 = vadd.f32 0.0, %v7366
        %v7368 = vpop.f32.mrb[0].mxu0
        %7369 = vmatprep.mubr.f32.mxu0 0.0
        %7370 = vmatmul.mubr.f32.gmra.mrb[0].mxu0 %v7272
        %v7371 = vpop.f32.mrb[0].mxu0
        %v7372 = vadd.f32 0.0, %v7371
        %v7373 = vpop.f32.mrb[0].mxu0
        %7374 = vmatprep.mubr.f32.mxu0 0.0
        %7375 = vmatmul.mubr.f32.gmra.mrb[0].mxu0 %v7275
        %v7376 = vpop.f32.mrb[0].mxu0
        %v7377 = vadd.f32 0.0, %v7376
        %v7378 = vpop.f32.mrb[0].mxu0
        %7379 = vmatprep.mubr.f32.mxu0 0.0
        %7380 = vmatmul.mubr.f32.gmra.mrb[0].mxu0 %v7278
        %v7381 = vpop.f32.mrb[0].mxu0
        %v7382 = vadd.f32 0.0, %v7381
        %v7383 = vpop.f32.mrb[0].mxu0
        %7384 = vmatprep.mubr.f32.mxu0 0.0
        %7385 = vmatmul.mubr.f32.gmra.mrb[0].mxu0 %v7281
        %v7386 = vpop.f32.mrb[0].mxu0
        %v7387 = vadd.f32 0.0, %v7386
        %v7388 = vpop.f32.mrb[0].mxu0
        %7389 = vmatprep.mubr.f32.mxu0 0.0
        %7390 = vmatmul.mubr.f32.gmra.mrb[0].mxu0 %v7284
        %v7391 = vpop.f32.mrb[0].mxu0
        %v7392 = vadd.f32 0.0, %v7391
        %v7393 = vpop.f32.mrb[0].mxu0
        %7394 = vmatprep.mubr.f32.mxu0 0.0
        %7395 = vmatmul.mubr.f32.gmra.mrb[0].mxu0 %v7287
        %v7396 = vpop.f32.mrb[0].mxu0
        %v7397 = vadd.f32 0.0, %v7396
        %v7398 = vpop.f32.mrb[0].mxu0
        %7399 = vmatprep.mubr.f32.mxu0 0.0
        %7400 = vmatmul.mubr.f32.gmra.mrb[0].mxu0 %v7290
        %v7401 = vpop.f32.mrb[0].mxu0
        %v7402 = vadd.f32 0.0, %v7401
        %v7403 = vpop.f32.mrb[0].mxu0
        %7404 = vmatprep.mubr.f32.mxu0 0.0
        %7405 = vmatmul.mubr.f32.gmra.mrb[0].mxu0 %v7293
        %v7406 = vpop.f32.mrb[0].mxu0
        %v7407 = vadd.f32 0.0, %v7406
        %v7408 = vpop.f32.mrb[0].mxu0
        %7409 = vdwg.mxu0
        %v7410 = vadd.f32 %v7236, %v7362
        %v7411 = vadd.f32 %v7237, %v7367
        %v7412 = vadd.f32 %v7238, %v7372
        %v7413 = vadd.f32 %v7239, %v7377
        %v7414 = vadd.f32 %v7240, %v7382
        %v7415 = vadd.f32 %v7241, %v7387
        %v7416 = vadd.f32 %v7242, %v7392
        %v7417 = vadd.f32 %v7243, %v7397
        %v7418 = vadd.f32 %v7244, %v7402
        %v7419 = vadd.f32 %v7245, %v7407
        %v7420 = vld [vmem:[%s5] sm:$0x1]
        %v7422 = vlaneseq
        %v7423 = vshrl.u32 %v7422, 7
        %v7424 = vsub.s32 0, %v7423
        %v7425 = vrot.slane %v7420, %v7424
        %v7427 = vadd.f32 %v7410, %v7425
        %v7428 = vadd.f32 %v7411, %v7425
        %v7429 = vadd.f32 %v7412, %v7425
        %v7430 = vadd.f32 %v7413, %v7425
        %v7431 = vadd.f32 %v7414, %v7425
        %v7432 = vadd.f32 %v7415, %v7425
        %v7433 = vadd.f32 %v7416, %v7425
        %v7434 = vadd.f32 %v7417, %v7425
        %v7435 = vadd.f32 %v7418, %v7425
        %v7436 = vadd.f32 %v7419, %v7425
        %v7437 = vmax.f32 %v7427, 0.0
        %v7438 = vmax.f32 %v7428, 0.0
        %v7439 = vmax.f32 %v7429, 0.0
        %v7440 = vmax.f32 %v7430, 0.0
        %v7441 = vmax.f32 %v7431, 0.0
        %v7442 = vmax.f32 %v7432, 0.0
        %v7443 = vmax.f32 %v7433, 0.0
        %v7444 = vmax.f32 %v7434, 0.0
        %v7445 = vmax.f32 %v7435, 0.0
        %v7446 = vmax.f32 %v7436, 0.0
        %v7447 = vld [vmem:[%s6] sm:$0xff]
        %v7448 = vld [vmem:[%s6 + $0x8] sm:$0xff]
        %v7449 = vld [vmem:[%s6 + $0x10] sm:$0xff]
        %v7450 = vld [vmem:[%s6 + $0x18] sm:$0xff]
        %v7451 = vld [vmem:[%s6 + $0x20] sm:$0x3f]
        %vm7452 = vcmask 654336
        %v7454 = vsel %vm7452, %v7447, 0
        %v7457 = vsel %vm7452, %v7448, 0
        %v7460 = vsel %vm7452, %v7449, 0
        %v7463 = vsel %vm7452, %v7450, 0
        %v7466 = vsel %vm7452, %v7451, 0
        %7468 = vmatprep.subr.mxu0 0.0
        %7469 = vmatpush1.msra.mxu0 %v7437
        %7470 = vmatprep.subr.mxu0 0.0
        %7471 = vmatpush1.msra.mxu0 %v7438
        %7472 = vmatprep.subr.mxu0 0.0
        %7473 = vmatpush1.msra.mxu0 %v7439
        %7474 = vmatprep.subr.mxu0 0.0
        %7475 = vmatpush1.msra.mxu0 %v7440
        %7476 = vmatprep.subr.mxu0 0.0
        %7477 = vmatpush1.msra.mxu0 %v7441
        %7478 = vmatprep.subr.mxu0 0.0
        %7479 = vmatpush1.msra.mxu0 %v7442
        %7480 = vmatprep.subr.mxu0 0.0
        %7481 = vmatpush1.msra.mxu0 %v7443
        %7482 = vmatprep.subr.mxu0 0.0
        %7483 = vmatpush1.msra.mxu0 %v7444
        %7484 = vmatprep.subr.mxu0 0.0
        %7485 = vmatpush1.msra.mxu0 %v7445
        %7486 = vmatprep.subr.mxu0 0.0
        %7487 = vmatpush1.msra.mxu0 %v7446
        %7488 = vmatprep.subr.mxu0 0.0
        %7489 = vmatpush1.msra.mxu0 0.0
        %7490 = vmatprep.subr.mxu0 0.0
        %7491 = vmatpush1.msra.mxu0 0.0
        %7492 = vmatprep.subr.mxu0 0.0
        %7493 = vmatpush1.msra.mxu0 0.0
        %7494 = vmatprep.subr.mxu0 0.0
        %7495 = vmatpush1.msra.mxu0 0.0
        %7496 = vmatprep.subr.mxu0 0.0
        %7497 = vmatpush1.msra.mxu0 0.0
        %7498 = vmatprep.subr.mxu0 0.0
        %7499 = vmatpush1.msra.mxu0 0.0
        %7500 = vmatprep.subr.mxu0 0.0
        %7501 = vmatpush1.msra.mxu0 0.0
        %7502 = vmatprep.subr.mxu0 0.0
        %7503 = vmatpush1.msra.mxu0 0.0
        %7504 = vmatprep.subr.mxu0 0.0
        %7505 = vmatpush1.msra.mxu0 0.0
        %7506 = vmatprep.subr.mxu0 0.0
        %7507 = vmatpush1.msra.mxu0 0.0
        %7508 = vmatprep.subr.mxu0 0.0
        %7509 = vmatpush1.msra.mxu0 0.0
        %7510 = vmatprep.subr.mxu0 0.0
        %7511 = vmatpush1.msra.mxu0 0.0
        %7512 = vmatprep.subr.mxu0 0.0
        %7513 = vmatpush1.msra.mxu0 0.0
        %7514 = vmatprep.subr.mxu0 0.0
        %7515 = vmatpush1.msra.mxu0 0.0
        %7516 = vmatprep.subr.mxu0 0.0
        %7517 = vmatpush1.msra.mxu0 0.0
        %7518 = vmatprep.subr.mxu0 0.0
        %7519 = vmatpush1.msra.mxu0 0.0
        %7520 = vmatprep.subr.mxu0 0.0
        %7521 = vmatpush1.msra.mxu0 0.0
        %7522 = vmatprep.subr.mxu0 0.0
        %7523 = vmatpush1.msra.mxu0 0.0
        %7524 = vmatprep.subr.mxu0 0.0
        %7525 = vmatpush1.msra.mxu0 0.0
        %7526 = vmatprep.subr.mxu0 0.0
        %7527 = vmatpush1.msra.mxu0 0.0
        %7528 = vmatprep.subr.mxu0 0.0
        %7529 = vmatpush1.msra.mxu0 0.0
        %7530 = vmatprep.subr.mxu0 0.0
        %7531 = vmatpush1.msra.mxu0 0.0
        %7532 = vmatprep.mubr.f32.mxu0 0.0
        %7533 = vmatmul.mubr.f32.gmra.mrb[0].mxu0 %v7454
        %v7534 = vpop.f32.mrb[0].mxu0
        %v7535 = vadd.f32 0.0, %v7534
        %v7536 = vpop.f32.mrb[0].mxu0
        %7537 = vmatprep.mubr.f32.mxu0 0.0
        %7538 = vmatmul.mubr.f32.gmra.mrb[0].mxu0 %v7457
        %v7539 = vpop.f32.mrb[0].mxu0
        %v7540 = vadd.f32 0.0, %v7539
        %v7541 = vpop.f32.mrb[0].mxu0
        %7542 = vmatprep.mubr.f32.mxu0 0.0
        %7543 = vmatmul.mubr.f32.gmra.mrb[0].mxu0 %v7460
        %v7544 = vpop.f32.mrb[0].mxu0
        %v7545 = vadd.f32 0.0, %v7544
        %v7546 = vpop.f32.mrb[0].mxu0
        %7547 = vmatprep.mubr.f32.mxu0 0.0
        %7548 = vmatmul.mubr.f32.gmra.mrb[0].mxu0 %v7463
        %v7549 = vpop.f32.mrb[0].mxu0
        %v7550 = vadd.f32 0.0, %v7549
        %v7551 = vpop.f32.mrb[0].mxu0
        %7552 = vmatprep.mubr.f32.mxu0 0.0
        %7553 = vmatmul.mubr.f32.gmra.mrb[0].mxu0 %v7466
        %v7554 = vpop.f32.mrb[0].mxu0
        %v7555 = vadd.f32 0.0, %v7554
        %v7556 = vpop.f32.mrb[0].mxu0
        %7557 = vdwg.mxu0
        %s7558 = scalar_lea.vmem %s6, 40
        %v7559 = vld [vmem:[%s7558] sm:$0xff]
        %v7560 = vld [vmem:[%s7558 + $0x8] sm:$0xff]
        %v7561 = vld [vmem:[%s7558 + $0x10] sm:$0xff]
        %v7562 = vld [vmem:[%s7558 + $0x18] sm:$0xff]
        %v7563 = vld [vmem:[%s7558 + $0x20] sm:$0x3f]
        %v7565 = vsel %vm7452, %v7559, 0
        %v7568 = vsel %vm7452, %v7560, 0
        %v7571 = vsel %vm7452, %v7561, 0
        %v7574 = vsel %vm7452, %v7562, 0
        %v7577 = vsel %vm7452, %v7563, 0
        %7579 = vmatprep.subr.mxu0 0.0
        %7580 = vmatpush1.msra.mxu0 %v7437
        %7581 = vmatprep.subr.mxu0 0.0
        %7582 = vmatpush1.msra.mxu0 %v7438
        %7583 = vmatprep.subr.mxu0 0.0
        %7584 = vmatpush1.msra.mxu0 %v7439
        %7585 = vmatprep.subr.mxu0 0.0
        %7586 = vmatpush1.msra.mxu0 %v7440
        %7587 = vmatprep.subr.mxu0 0.0
        %7588 = vmatpush1.msra.mxu0 %v7441
        %7589 = vmatprep.subr.mxu0 0.0
        %7590 = vmatpush1.msra.mxu0 %v7442
        %7591 = vmatprep.subr.mxu0 0.0
        %7592 = vmatpush1.msra.mxu0 %v7443
        %7593 = vmatprep.subr.mxu0 0.0
        %7594 = vmatpush1.msra.mxu0 %v7444
        %7595 = vmatprep.subr.mxu0 0.0
        %7596 = vmatpush1.msra.mxu0 %v7445
        %7597 = vmatprep.subr.mxu0 0.0
        %7598 = vmatpush1.msra.mxu0 %v7446
        %7599 = vmatprep.subr.mxu0 0.0
        %7600 = vmatpush1.msra.mxu0 0.0
        %7601 = vmatprep.subr.mxu0 0.0
        %7602 = vmatpush1.msra.mxu0 0.0
        %7603 = vmatprep.subr.mxu0 0.0
        %7604 = vmatpush1.msra.mxu0 0.0
        %7605 = vmatprep.subr.mxu0 0.0
        %7606 = vmatpush1.msra.mxu0 0.0
        %7607 = vmatprep.subr.mxu0 0.0
        %7608 = vmatpush1.msra.mxu0 0.0
        %7609 = vmatprep.subr.mxu0 0.0
        %7610 = vmatpush1.msra.mxu0 0.0
        %7611 = vmatprep.subr.mxu0 0.0
        %7612 = vmatpush1.msra.mxu0 0.0
        %7613 = vmatprep.subr.mxu0 0.0
        %7614 = vmatpush1.msra.mxu0 0.0
        %7615 = vmatprep.subr.mxu0 0.0
        %7616 = vmatpush1.msra.mxu0 0.0
        %7617 = vmatprep.subr.mxu0 0.0
        %7618 = vmatpush1.msra.mxu0 0.0
        %7619 = vmatprep.subr.mxu0 0.0
        %7620 = vmatpush1.msra.mxu0 0.0
        %7621 = vmatprep.subr.mxu0 0.0
        %7622 = vmatpush1.msra.mxu0 0.0
        %7623 = vmatprep.subr.mxu0 0.0
        %7624 = vmatpush1.msra.mxu0 0.0
        %7625 = vmatprep.subr.mxu0 0.0
        %7626 = vmatpush1.msra.mxu0 0.0
        %7627 = vmatprep.subr.mxu0 0.0
        %7628 = vmatpush1.msra.mxu0 0.0
        %7629 = vmatprep.subr.mxu0 0.0
        %7630 = vmatpush1.msra.mxu0 0.0
        %7631 = vmatprep.subr.mxu0 0.0
        %7632 = vmatpush1.msra.mxu0 0.0
        %7633 = vmatprep.subr.mxu0 0.0
        %7634 = vmatpush1.msra.mxu0 0.0
        %7635 = vmatprep.subr.mxu0 0.0
        %7636 = vmatpush1.msra.mxu0 0.0
        %7637 = vmatprep.subr.mxu0 0.0
        %7638 = vmatpush1.msra.mxu0 0.0
        %7639 = vmatprep.subr.mxu0 0.0
        %7640 = vmatpush1.msra.mxu0 0.0
        %7641 = vmatprep.subr.mxu0 0.0
        %7642 = vmatpush1.msra.mxu0 0.0
        %7643 = vmatprep.mubr.f32.mxu0 0.0
        %7644 = vmatmul.mubr.f32.gmra.mrb[0].mxu0 %v7565
        %v7645 = vpop.f32.mrb[0].mxu0
        %v7646 = vadd.f32 0.0, %v7645
        %v7647 = vpop.f32.mrb[0].mxu0
        %7648 = vmatprep.mubr.f32.mxu0 0.0
        %7649 = vmatmul.mubr.f32.gmra.mrb[0].mxu0 %v7568
        %v7650 = vpop.f32.mrb[0].mxu0
        %v7651 = vadd.f32 0.0, %v7650
        %v7652 = vpop.f32.mrb[0].mxu0
        %7653 = vmatprep.mubr.f32.mxu0 0.0
        %7654 = vmatmul.mubr.f32.gmra.mrb[0].mxu0 %v7571
        %v7655 = vpop.f32.mrb[0].mxu0
        %v7656 = vadd.f32 0.0, %v7655
        %v7657 = vpop.f32.mrb[0].mxu0
        %7658 = vmatprep.mubr.f32.mxu0 0.0
        %7659 = vmatmul.mubr.f32.gmra.mrb[0].mxu0 %v7574
        %v7660 = vpop.f32.mrb[0].mxu0
        %v7661 = vadd.f32 0.0, %v7660
        %v7662 = vpop.f32.mrb[0].mxu0
        %7663 = vmatprep.mubr.f32.mxu0 0.0
        %7664 = vmatmul.mubr.f32.gmra.mrb[0].mxu0 %v7577
        %v7665 = vpop.f32.mrb[0].mxu0
        %v7666 = vadd.f32 0.0, %v7665
        %v7667 = vpop.f32.mrb[0].mxu0
        %7668 = vdwg.mxu0
        %v7669 = vmax.f32 %v7535, %v7646
        %v7670 = vmax.f32 %v7540, %v7651
        %v7671 = vmax.f32 %v7545, %v7656
        %v7672 = vmax.f32 %v7550, %v7661
        %v7673 = vmax.f32 %v7555, %v7666
        %s7674 = scalar_lea.vmem %s6, 80
        %v7675 = vld [vmem:[%s7674] sm:$0xff]
        %v7676 = vld [vmem:[%s7674 + $0x8] sm:$0xff]
        %v7677 = vld [vmem:[%s7674 + $0x10] sm:$0xff]
        %v7678 = vld [vmem:[%s7674 + $0x18] sm:$0xff]
        %v7679 = vld [vmem:[%s7674 + $0x20] sm:$0x3f]
        %v7681 = vsel %vm7452, %v7675, 0
        %v7684 = vsel %vm7452, %v7676, 0
        %v7687 = vsel %vm7452, %v7677, 0
        %v7690 = vsel %vm7452, %v7678, 0
        %v7693 = vsel %vm7452, %v7679, 0
        %7695 = vmatprep.subr.mxu0 0.0
        %7696 = vmatpush1.msra.mxu0 %v7437
        %7697 = vmatprep.subr.mxu0 0.0
        %7698 = vmatpush1.msra.mxu0 %v7438
        %7699 = vmatprep.subr.mxu0 0.0
        %7700 = vmatpush1.msra.mxu0 %v7439
        %7701 = vmatprep.subr.mxu0 0.0
        %7702 = vmatpush1.msra.mxu0 %v7440
        %7703 = vmatprep.subr.mxu0 0.0
        %7704 = vmatpush1.msra.mxu0 %v7441
        %7705 = vmatprep.subr.mxu0 0.0
        %7706 = vmatpush1.msra.mxu0 %v7442
        %7707 = vmatprep.subr.mxu0 0.0
        %7708 = vmatpush1.msra.mxu0 %v7443
        %7709 = vmatprep.subr.mxu0 0.0
        %7710 = vmatpush1.msra.mxu0 %v7444
        %7711 = vmatprep.subr.mxu0 0.0
        %7712 = vmatpush1.msra.mxu0 %v7445
        %7713 = vmatprep.subr.mxu0 0.0
        %7714 = vmatpush1.msra.mxu0 %v7446
        %7715 = vmatprep.subr.mxu0 0.0
        %7716 = vmatpush1.msra.mxu0 0.0
        %7717 = vmatprep.subr.mxu0 0.0
        %7718 = vmatpush1.msra.mxu0 0.0
        %7719 = vmatprep.subr.mxu0 0.0
        %7720 = vmatpush1.msra.mxu0 0.0
        %7721 = vmatprep.subr.mxu0 0.0
        %7722 = vmatpush1.msra.mxu0 0.0
        %7723 = vmatprep.subr.mxu0 0.0
        %7724 = vmatpush1.msra.mxu0 0.0
        %7725 = vmatprep.subr.mxu0 0.0
        %7726 = vmatpush1.msra.mxu0 0.0
        %7727 = vmatprep.subr.mxu0 0.0
        %7728 = vmatpush1.msra.mxu0 0.0
        %7729 = vmatprep.subr.mxu0 0.0
        %7730 = vmatpush1.msra.mxu0 0.0
        %7731 = vmatprep.subr.mxu0 0.0
        %7732 = vmatpush1.msra.mxu0 0.0
        %7733 = vmatprep.subr.mxu0 0.0
        %7734 = vmatpush1.msra.mxu0 0.0
        %7735 = vmatprep.subr.mxu0 0.0
        %7736 = vmatpush1.msra.mxu0 0.0
        %7737 = vmatprep.subr.mxu0 0.0
        %7738 = vmatpush1.msra.mxu0 0.0
        %7739 = vmatprep.subr.mxu0 0.0
        %7740 = vmatpush1.msra.mxu0 0.0
        %7741 = vmatprep.subr.mxu0 0.0
        %7742 = vmatpush1.msra.mxu0 0.0
        %7743 = vmatprep.subr.mxu0 0.0
        %7744 = vmatpush1.msra.mxu0 0.0
        %7745 = vmatprep.subr.mxu0 0.0
        %7746 = vmatpush1.msra.mxu0 0.0
        %7747 = vmatprep.subr.mxu0 0.0
        %7748 = vmatpush1.msra.mxu0 0.0
        %7749 = vmatprep.subr.mxu0 0.0
        %7750 = vmatpush1.msra.mxu0 0.0
        %7751 = vmatprep.subr.mxu0 0.0
        %7752 = vmatpush1.msra.mxu0 0.0
        %7753 = vmatprep.subr.mxu0 0.0
        %7754 = vmatpush1.msra.mxu0 0.0
        %7755 = vmatprep.subr.mxu0 0.0
        %7756 = vmatpush1.msra.mxu0 0.0
        %7757 = vmatprep.subr.mxu0 0.0
        %7758 = vmatpush1.msra.mxu0 0.0
        %7759 = vmatprep.mubr.f32.mxu0 0.0
        %7760 = vmatmul.mubr.f32.gmra.mrb[0].mxu0 %v7681
        %v7761 = vpop.f32.mrb[0].mxu0
        %v7762 = vadd.f32 0.0, %v7761
        %v7763 = vpop.f32.mrb[0].mxu0
        %7764 = vmatprep.mubr.f32.mxu0 0.0
        %7765 = vmatmul.mubr.f32.gmra.mrb[0].mxu0 %v7684
        %v7766 = vpop.f32.mrb[0].mxu0
        %v7767 = vadd.f32 0.0, %v7766
        %v7768 = vpop.f32.mrb[0].mxu0
        %7769 = vmatprep.mubr.f32.mxu0 0.0
        %7770 = vmatmul.mubr.f32.gmra.mrb[0].mxu0 %v7687
        %v7771 = vpop.f32.mrb[0].mxu0
        %v7772 = vadd.f32 0.0, %v7771
        %v7773 = vpop.f32.mrb[0].mxu0
        %7774 = vmatprep.mubr.f32.mxu0 0.0
        %7775 = vmatmul.mubr.f32.gmra.mrb[0].mxu0 %v7690
        %v7776 = vpop.f32.mrb[0].mxu0
        %v7777 = vadd.f32 0.0, %v7776
        %v7778 = vpop.f32.mrb[0].mxu0
        %7779 = vmatprep.mubr.f32.mxu0 0.0
        %7780 = vmatmul.mubr.f32.gmra.mrb[0].mxu0 %v7693
        %v7781 = vpop.f32.mrb[0].mxu0
        %v7782 = vadd.f32 0.0, %v7781
        %v7783 = vpop.f32.mrb[0].mxu0
        %7784 = vdwg.mxu0
        %v7785 = vmax.f32 %v7669, %v7762
        %v7786 = vmax.f32 %v7670, %v7767
        %v7787 = vmax.f32 %v7671, %v7772
        %v7788 = vmax.f32 %v7672, %v7777
        %v7789 = vmax.f32 %v7673, %v7782
        %s7790 = scalar_lea.vmem %s6, 120
        %v7791 = vld [vmem:[%s7790] sm:$0xff]
        %v7792 = vld [vmem:[%s7790 + $0x8] sm:$0xff]
        %v7793 = vld [vmem:[%s7790 + $0x10] sm:$0xff]
        %v7794 = vld [vmem:[%s7790 + $0x18] sm:$0xff]
        %v7795 = vld [vmem:[%s7790 + $0x20] sm:$0x3f]
        %v7797 = vsel %vm7452, %v7791, 0
        %v7800 = vsel %vm7452, %v7792, 0
        %v7803 = vsel %vm7452, %v7793, 0
        %v7806 = vsel %vm7452, %v7794, 0
        %v7809 = vsel %vm7452, %v7795, 0
        %7811 = vmatprep.subr.mxu0 0.0
        %7812 = vmatpush1.msra.mxu0 %v7437
        %7813 = vmatprep.subr.mxu0 0.0
        %7814 = vmatpush1.msra.mxu0 %v7438
        %7815 = vmatprep.subr.mxu0 0.0
        %7816 = vmatpush1.msra.mxu0 %v7439
        %7817 = vmatprep.subr.mxu0 0.0
        %7818 = vmatpush1.msra.mxu0 %v7440
        %7819 = vmatprep.subr.mxu0 0.0
        %7820 = vmatpush1.msra.mxu0 %v7441
        %7821 = vmatprep.subr.mxu0 0.0
        %7822 = vmatpush1.msra.mxu0 %v7442
        %7823 = vmatprep.subr.mxu0 0.0
        %7824 = vmatpush1.msra.mxu0 %v7443
        %7825 = vmatprep.subr.mxu0 0.0
        %7826 = vmatpush1.msra.mxu0 %v7444
        %7827 = vmatprep.subr.mxu0 0.0
        %7828 = vmatpush1.msra.mxu0 %v7445
        %7829 = vmatprep.subr.mxu0 0.0
        %7830 = vmatpush1.msra.mxu0 %v7446
        %7831 = vmatprep.subr.mxu0 0.0
        %7832 = vmatpush1.msra.mxu0 0.0
        %7833 = vmatprep.subr.mxu0 0.0
        %7834 = vmatpush1.msra.mxu0 0.0
        %7835 = vmatprep.subr.mxu0 0.0
        %7836 = vmatpush1.msra.mxu0 0.0
        %7837 = vmatprep.subr.mxu0 0.0
        %7838 = vmatpush1.msra.mxu0 0.0
        %7839 = vmatprep.subr.mxu0 0.0
        %7840 = vmatpush1.msra.mxu0 0.0
        %7841 = vmatprep.subr.mxu0 0.0
        %7842 = vmatpush1.msra.mxu0 0.0
        %7843 = vmatprep.subr.mxu0 0.0
        %7844 = vmatpush1.msra.mxu0 0.0
        %7845 = vmatprep.subr.mxu0 0.0
        %7846 = vmatpush1.msra.mxu0 0.0
        %7847 = vmatprep.subr.mxu0 0.0
        %7848 = vmatpush1.msra.mxu0 0.0
        %7849 = vmatprep.subr.mxu0 0.0
        %7850 = vmatpush1.msra.mxu0 0.0
        %7851 = vmatprep.subr.mxu0 0.0
        %7852 = vmatpush1.msra.mxu0 0.0
        %7853 = vmatprep.subr.mxu0 0.0
        %7854 = vmatpush1.msra.mxu0 0.0
        %7855 = vmatprep.subr.mxu0 0.0
        %7856 = vmatpush1.msra.mxu0 0.0
        %7857 = vmatprep.subr.mxu0 0.0
        %7858 = vmatpush1.msra.mxu0 0.0
        %7859 = vmatprep.subr.mxu0 0.0
        %7860 = vmatpush1.msra.mxu0 0.0
        %7861 = vmatprep.subr.mxu0 0.0
        %7862 = vmatpush1.msra.mxu0 0.0
        %7863 = vmatprep.subr.mxu0 0.0
        %7864 = vmatpush1.msra.mxu0 0.0
        %7865 = vmatprep.subr.mxu0 0.0
        %7866 = vmatpush1.msra.mxu0 0.0
        %7867 = vmatprep.subr.mxu0 0.0
        %7868 = vmatpush1.msra.mxu0 0.0
        %7869 = vmatprep.subr.mxu0 0.0
        %7870 = vmatpush1.msra.mxu0 0.0
        %7871 = vmatprep.subr.mxu0 0.0
        %7872 = vmatpush1.msra.mxu0 0.0
        %7873 = vmatprep.subr.mxu0 0.0
        %7874 = vmatpush1.msra.mxu0 0.0
        %7875 = vmatprep.mubr.f32.mxu0 0.0
        %7876 = vmatmul.mubr.f32.gmra.mrb[0].mxu0 %v7797
        %v7877 = vpop.f32.mrb[0].mxu0
        %v7878 = vadd.f32 0.0, %v7877
        %v7879 = vpop.f32.mrb[0].mxu0
        %7880 = vmatprep.mubr.f32.mxu0 0.0
        %7881 = vmatmul.mubr.f32.gmra.mrb[0].mxu0 %v7800
        %v7882 = vpop.f32.mrb[0].mxu0
        %v7883 = vadd.f32 0.0, %v7882
        %v7884 = vpop.f32.mrb[0].mxu0
        %7885 = vmatprep.mubr.f32.mxu0 0.0
        %7886 = vmatmul.mubr.f32.gmra.mrb[0].mxu0 %v7803
        %v7887 = vpop.f32.mrb[0].mxu0
        %v7888 = vadd.f32 0.0, %v7887
        %v7889 = vpop.f32.mrb[0].mxu0
        %7890 = vmatprep.mubr.f32.mxu0 0.0
        %7891 = vmatmul.mubr.f32.gmra.mrb[0].mxu0 %v7806
        %v7892 = vpop.f32.mrb[0].mxu0
        %v7893 = vadd.f32 0.0, %v7892
        %v7894 = vpop.f32.mrb[0].mxu0
        %7895 = vmatprep.mubr.f32.mxu0 0.0
        %7896 = vmatmul.mubr.f32.gmra.mrb[0].mxu0 %v7809
        %v7897 = vpop.f32.mrb[0].mxu0
        %v7898 = vadd.f32 0.0, %v7897
        %v7899 = vpop.f32.mrb[0].mxu0
        %7900 = vdwg.mxu0
        %v7901 = vmax.f32 %v7785, %v7878
        %v7902 = vmax.f32 %v7786, %v7883
        %v7903 = vmax.f32 %v7787, %v7888
        %v7904 = vmax.f32 %v7788, %v7893
        %v7905 = vmax.f32 %v7789, %v7898
        %vm7906 = vcmask 785408
        %7907 = vst.msk [vmem:[#allocation3] sm:$0xff] %vm7906, %v7901
        %7908 = vst.msk [vmem:[#allocation3 + $0x8] sm:$0xff] %vm7906, %v7902
        %7909 = vst.msk [vmem:[#allocation3 + $0x10] sm:$0xff] %vm7906, %v7903
        %7910 = vst.msk [vmem:[#allocation3 + $0x18] sm:$0xff] %vm7906, %v7904
        %vm7911 = vcmask 783360
        %7912 = vst.msk [vmem:[#allocation3 + $0x20] sm:$0x3f] %vm7911, %v7905
        %v7913 = vld [vmem:[#allocation3] sm:$0xff]
        %v7914 = vld [vmem:[#allocation3 + $0x8] sm:$0xff]
        %v7915 = vld [vmem:[#allocation3 + $0x10] sm:$0xff]
        %v7916 = vld [vmem:[%s7] sm:$0xff]
        %v7917 = vld [vmem:[%s7 + $0x8] sm:$0xff]
        %v7918 = vld [vmem:[%s7 + $0x10] sm:$0xff]
        %v7919 = vld [vmem:[%s7 + $0x18] sm:$0xff]
        %v7920 = vld [vmem:[%s7 + $0x20] sm:$0xff]
        %v7921 = vld [vmem:[%s7 + $0x28] sm:$0xff]
        %v7922 = vld [vmem:[%s7 + $0x30] sm:$0xff]
        %v7923 = vld [vmem:[%s7 + $0x38] sm:$0xff]
        %v7924 = vld [vmem:[%s7 + $0x40] sm:$0xff]
        %v7925 = vld [vmem:[%s7 + $0x48] sm:$0xff]
        %v7926 = vld [vmem:[%s7 + $0x50] sm:$0xff]
        %v7927 = vld [vmem:[%s7 + $0x58] sm:$0xff]
        %v7928 = vld [vmem:[#allocation3 + $0x1] sm:$0xff]
        %v7929 = vld [vmem:[#allocation3 + $0x9] sm:$0xff]
        %v7930 = vld [vmem:[#allocation3 + $0x11] sm:$0xff]
        %s7931 = scalar_lea.vmem %s7, 96
        %v7932 = vld [vmem:[%s7931] sm:$0xff]
        %v7933 = vld [vmem:[%s7931 + $0x8] sm:$0xff]
        %v7934 = vld [vmem:[%s7931 + $0x10] sm:$0xff]
        %v7935 = vld [vmem:[%s7931 + $0x18] sm:$0xff]
        %v7936 = vld [vmem:[%s7931 + $0x20] sm:$0xff]
        %v7937 = vld [vmem:[%s7931 + $0x28] sm:$0xff]
        %v7938 = vld [vmem:[%s7931 + $0x30] sm:$0xff]
        %v7939 = vld [vmem:[%s7931 + $0x38] sm:$0xff]
        %v7940 = vld [vmem:[%s7931 + $0x40] sm:$0xff]
        %v7941 = vld [vmem:[%s7931 + $0x48] sm:$0xff]
        %v7942 = vld [vmem:[%s7931 + $0x50] sm:$0xff]
        %v7943 = vld [vmem:[%s7931 + $0x58] sm:$0xff]
        %v7945 = vsel %vm7906, %v7928, 0
        %v7948 = vsel %vm7906, %v7929, 0
        %v7951 = vsel %vm7906, %v7930, 0
        %7953 = vmatprep.subr.mxu0 0.0
        %7954 = vmatpush1.msra.mxu0 %v7932
        %7955 = vmatprep.subr.mxu0 0.0
        %7956 = vmatpush1.msra.mxu0 %v7933
        %7957 = vmatprep.subr.mxu0 0.0
        %7958 = vmatpush1.msra.mxu0 %v7934
        %7959 = vmatprep.subr.mxu0 0.0
        %7960 = vmatpush1.msra.mxu0 %v7935
        %7961 = vmatprep.subr.mxu0 0.0
        %7962 = vmatpush1.msra.mxu0 %v7936
        %7963 = vmatprep.subr.mxu0 0.0
        %7964 = vmatpush1.msra.mxu0 %v7937
        %7965 = vmatprep.subr.mxu0 0.0
        %7966 = vmatpush1.msra.mxu0 %v7938
        %7967 = vmatprep.subr.mxu0 0.0
        %7968 = vmatpush1.msra.mxu0 %v7939
        %7969 = vmatprep.subr.mxu0 0.0
        %7970 = vmatpush1.msra.mxu0 %v7940
        %7971 = vmatprep.subr.mxu0 0.0
        %7972 = vmatpush1.msra.mxu0 %v7941
        %7973 = vmatprep.subr.mxu0 0.0
        %7974 = vmatpush1.msra.mxu0 %v7942
        %7975 = vmatprep.subr.mxu0 0.0
        %7976 = vmatpush1.msra.mxu0 %v7943
        %7977 = vmatprep.subr.mxu0 0.0
        %7978 = vmatpush1.msra.mxu0 0.0
        %7979 = vmatprep.subr.mxu0 0.0
        %7980 = vmatpush1.msra.mxu0 0.0
        %7981 = vmatprep.subr.mxu0 0.0
        %7982 = vmatpush1.msra.mxu0 0.0
        %7983 = vmatprep.subr.mxu0 0.0
        %7984 = vmatpush1.msra.mxu0 0.0
        %7985 = vmatprep.subr.mxu0 0.0
        %7986 = vmatpush1.msra.mxu0 0.0
        %7987 = vmatprep.subr.mxu0 0.0
        %7988 = vmatpush1.msra.mxu0 0.0
        %7989 = vmatprep.subr.mxu0 0.0
        %7990 = vmatpush1.msra.mxu0 0.0
        %7991 = vmatprep.subr.mxu0 0.0
        %7992 = vmatpush1.msra.mxu0 0.0
        %7993 = vmatprep.subr.mxu0 0.0
        %7994 = vmatpush1.msra.mxu0 0.0
        %7995 = vmatprep.subr.mxu0 0.0
        %7996 = vmatpush1.msra.mxu0 0.0
        %7997 = vmatprep.subr.mxu0 0.0
        %7998 = vmatpush1.msra.mxu0 0.0
        %7999 = vmatprep.subr.mxu0 0.0
        %8000 = vmatpush1.msra.mxu0 0.0
        %8001 = vmatprep.subr.mxu0 0.0
        %8002 = vmatpush1.msra.mxu0 0.0
        %8003 = vmatprep.subr.mxu0 0.0
        %8004 = vmatpush1.msra.mxu0 0.0
        %8005 = vmatprep.subr.mxu0 0.0
        %8006 = vmatpush1.msra.mxu0 0.0
        %8007 = vmatprep.subr.mxu0 0.0
        %8008 = vmatpush1.msra.mxu0 0.0
        %8009 = vmatprep.subr.mxu0 0.0
        %8010 = vmatpush1.msra.mxu0 0.0
        %8011 = vmatprep.subr.mxu0 0.0
        %8012 = vmatpush1.msra.mxu0 0.0
        %8013 = vmatprep.subr.mxu0 0.0
        %8014 = vmatpush1.msra.mxu0 0.0
        %8015 = vmatprep.subr.mxu0 0.0
        %8016 = vmatpush1.msra.mxu0 0.0
        %8017 = vmatprep.mubr.f32.mxu0 0.0
        %8018 = vmatmul.mubr.f32.gmra.mrb[0].mxu0 %v7945
        %v8019 = vpop.f32.mrb[0].mxu0
        %v8020 = vadd.f32 0.0, %v8019
        %v8021 = vpop.f32.mrb[0].mxu0
        %8022 = vmatprep.mubr.f32.mxu0 0.0
        %8023 = vmatmul.mubr.f32.gmra.mrb[0].mxu0 %v7948
        %v8024 = vpop.f32.mrb[0].mxu0
        %v8025 = vadd.f32 0.0, %v8024
        %v8026 = vpop.f32.mrb[0].mxu0
        %8027 = vmatprep.mubr.f32.mxu0 0.0
        %8028 = vmatmul.mubr.f32.gmra.mrb[0].mxu0 %v7951
        %v8029 = vpop.f32.mrb[0].mxu0
        %v8030 = vadd.f32 0.0, %v8029
        %v8031 = vpop.f32.mrb[0].mxu0
        %8032 = vdwg.mxu0
        %v8034 = vsel %vm7906, %v7913, 0
        %v8037 = vsel %vm7906, %v7914, 0
        %v8040 = vsel %vm7906, %v7915, 0
        %8042 = vmatprep.subr.mxu0 0.0
        %8043 = vmatpush1.msra.mxu0 %v7916
        %8044 = vmatprep.subr.mxu0 0.0
        %8045 = vmatpush1.msra.mxu0 %v7917
        %8046 = vmatprep.subr.mxu0 0.0
        %8047 = vmatpush1.msra.mxu0 %v7918
        %8048 = vmatprep.subr.mxu0 0.0
        %8049 = vmatpush1.msra.mxu0 %v7919
        %8050 = vmatprep.subr.mxu0 0.0
        %8051 = vmatpush1.msra.mxu0 %v7920
        %8052 = vmatprep.subr.mxu0 0.0
        %8053 = vmatpush1.msra.mxu0 %v7921
        %8054 = vmatprep.subr.mxu0 0.0
        %8055 = vmatpush1.msra.mxu0 %v7922
        %8056 = vmatprep.subr.mxu0 0.0
        %8057 = vmatpush1.msra.mxu0 %v7923
        %8058 = vmatprep.subr.mxu0 0.0
        %8059 = vmatpush1.msra.mxu0 %v7924
        %8060 = vmatprep.subr.mxu0 0.0
        %8061 = vmatpush1.msra.mxu0 %v7925
        %8062 = vmatprep.subr.mxu0 0.0
        %8063 = vmatpush1.msra.mxu0 %v7926
        %8064 = vmatprep.subr.mxu0 0.0
        %8065 = vmatpush1.msra.mxu0 %v7927
        %8066 = vmatprep.subr.mxu0 0.0
        %8067 = vmatpush1.msra.mxu0 0.0
        %8068 = vmatprep.subr.mxu0 0.0
        %8069 = vmatpush1.msra.mxu0 0.0
        %8070 = vmatprep.subr.mxu0 0.0
        %8071 = vmatpush1.msra.mxu0 0.0
        %8072 = vmatprep.subr.mxu0 0.0
        %8073 = vmatpush1.msra.mxu0 0.0
        %8074 = vmatprep.subr.mxu0 0.0
        %8075 = vmatpush1.msra.mxu0 0.0
        %8076 = vmatprep.subr.mxu0 0.0
        %8077 = vmatpush1.msra.mxu0 0.0
        %8078 = vmatprep.subr.mxu0 0.0
        %8079 = vmatpush1.msra.mxu0 0.0
        %8080 = vmatprep.subr.mxu0 0.0
        %8081 = vmatpush1.msra.mxu0 0.0
        %8082 = vmatprep.subr.mxu0 0.0
        %8083 = vmatpush1.msra.mxu0 0.0
        %8084 = vmatprep.subr.mxu0 0.0
        %8085 = vmatpush1.msra.mxu0 0.0
        %8086 = vmatprep.subr.mxu0 0.0
        %8087 = vmatpush1.msra.mxu0 0.0
        %8088 = vmatprep.subr.mxu0 0.0
        %8089 = vmatpush1.msra.mxu0 0.0
        %8090 = vmatprep.subr.mxu0 0.0
        %8091 = vmatpush1.msra.mxu0 0.0
        %8092 = vmatprep.subr.mxu0 0.0
        %8093 = vmatpush1.msra.mxu0 0.0
        %8094 = vmatprep.subr.mxu0 0.0
        %8095 = vmatpush1.msra.mxu0 0.0
        %8096 = vmatprep.subr.mxu0 0.0
        %8097 = vmatpush1.msra.mxu0 0.0
        %8098 = vmatprep.subr.mxu0 0.0
        %8099 = vmatpush1.msra.mxu0 0.0
        %8100 = vmatprep.subr.mxu0 0.0
        %8101 = vmatpush1.msra.mxu0 0.0
        %8102 = vmatprep.subr.mxu0 0.0
        %8103 = vmatpush1.msra.mxu0 0.0
        %8104 = vmatprep.subr.mxu0 0.0
        %8105 = vmatpush1.msra.mxu0 0.0
        %8106 = vmatprep.mubr.f32.mxu0 0.0
        %8107 = vmatmul.mubr.f32.gmra.mrb[0].mxu0 %v8034
        %v8108 = vpop.f32.mrb[0].mxu0
        %v8109 = vadd.f32 %v8020, %v8108
        %v8110 = vpop.f32.mrb[0].mxu0
        %8111 = vmatprep.mubr.f32.mxu0 0.0
        %8112 = vmatmul.mubr.f32.gmra.mrb[0].mxu0 %v8037
        %v8113 = vpop.f32.mrb[0].mxu0
        %v8114 = vadd.f32 %v8025, %v8113
        %v8115 = vpop.f32.mrb[0].mxu0
        %8116 = vmatprep.mubr.f32.mxu0 0.0
        %8117 = vmatmul.mubr.f32.gmra.mrb[0].mxu0 %v8040
        %v8118 = vpop.f32.mrb[0].mxu0
        %v8119 = vadd.f32 %v8030, %v8118
        %v8120 = vpop.f32.mrb[0].mxu0
        %8121 = vdwg.mxu0
        %v8122 = vld [vmem:[#allocation3 + $0x2] sm:$0xff]
        %v8123 = vld [vmem:[#allocation3 + $0xa] sm:$0xff]
        %v8124 = vld [vmem:[#allocation3 + $0x12] sm:$0xff]
        %s8125 = scalar_lea.vmem %s7, 192
        %v8126 = vld [vmem:[%s8125] sm:$0xff]
        %v8127 = vld [vmem:[%s8125 + $0x8] sm:$0xff]
        %v8128 = vld [vmem:[%s8125 + $0x10] sm:$0xff]
        %v8129 = vld [vmem:[%s8125 + $0x18] sm:$0xff]
        %v8130 = vld [vmem:[%s8125 + $0x20] sm:$0xff]
        %v8131 = vld [vmem:[%s8125 + $0x28] sm:$0xff]
        %v8132 = vld [vmem:[%s8125 + $0x30] sm:$0xff]
        %v8133 = vld [vmem:[%s8125 + $0x38] sm:$0xff]
        %v8134 = vld [vmem:[%s8125 + $0x40] sm:$0xff]
        %v8135 = vld [vmem:[%s8125 + $0x48] sm:$0xff]
        %v8136 = vld [vmem:[%s8125 + $0x50] sm:$0xff]
        %v8137 = vld [vmem:[%s8125 + $0x58] sm:$0xff]
        %v8139 = vsel %vm7906, %v8122, 0
        %v8142 = vsel %vm7906, %v8123, 0
        %v8145 = vsel %vm7906, %v8124, 0
        %8147 = vmatprep.subr.mxu0 0.0
        %8148 = vmatpush1.msra.mxu0 %v8126
        %8149 = vmatprep.subr.mxu0 0.0
        %8150 = vmatpush1.msra.mxu0 %v8127
        %8151 = vmatprep.subr.mxu0 0.0
        %8152 = vmatpush1.msra.mxu0 %v8128
        %8153 = vmatprep.subr.mxu0 0.0
        %8154 = vmatpush1.msra.mxu0 %v8129
        %8155 = vmatprep.subr.mxu0 0.0
        %8156 = vmatpush1.msra.mxu0 %v8130
        %8157 = vmatprep.subr.mxu0 0.0
        %8158 = vmatpush1.msra.mxu0 %v8131
        %8159 = vmatprep.subr.mxu0 0.0
        %8160 = vmatpush1.msra.mxu0 %v8132
        %8161 = vmatprep.subr.mxu0 0.0
        %8162 = vmatpush1.msra.mxu0 %v8133
        %8163 = vmatprep.subr.mxu0 0.0
        %8164 = vmatpush1.msra.mxu0 %v8134
        %8165 = vmatprep.subr.mxu0 0.0
        %8166 = vmatpush1.msra.mxu0 %v8135
        %8167 = vmatprep.subr.mxu0 0.0
        %8168 = vmatpush1.msra.mxu0 %v8136
        %8169 = vmatprep.subr.mxu0 0.0
        %8170 = vmatpush1.msra.mxu0 %v8137
        %8171 = vmatprep.subr.mxu0 0.0
        %8172 = vmatpush1.msra.mxu0 0.0
        %8173 = vmatprep.subr.mxu0 0.0
        %8174 = vmatpush1.msra.mxu0 0.0
        %8175 = vmatprep.subr.mxu0 0.0
        %8176 = vmatpush1.msra.mxu0 0.0
        %8177 = vmatprep.subr.mxu0 0.0
        %8178 = vmatpush1.msra.mxu0 0.0
        %8179 = vmatprep.subr.mxu0 0.0
        %8180 = vmatpush1.msra.mxu0 0.0
        %8181 = vmatprep.subr.mxu0 0.0
        %8182 = vmatpush1.msra.mxu0 0.0
        %8183 = vmatprep.subr.mxu0 0.0
        %8184 = vmatpush1.msra.mxu0 0.0
        %8185 = vmatprep.subr.mxu0 0.0
        %8186 = vmatpush1.msra.mxu0 0.0
        %8187 = vmatprep.subr.mxu0 0.0
        %8188 = vmatpush1.msra.mxu0 0.0
        %8189 = vmatprep.subr.mxu0 0.0
        %8190 = vmatpush1.msra.mxu0 0.0
        %8191 = vmatprep.subr.mxu0 0.0
        %8192 = vmatpush1.msra.mxu0 0.0
        %8193 = vmatprep.subr.mxu0 0.0
        %8194 = vmatpush1.msra.mxu0 0.0
        %8195 = vmatprep.subr.mxu0 0.0
        %8196 = vmatpush1.msra.mxu0 0.0
        %8197 = vmatprep.subr.mxu0 0.0
        %8198 = vmatpush1.msra.mxu0 0.0
        %8199 = vmatprep.subr.mxu0 0.0
        %8200 = vmatpush1.msra.mxu0 0.0
        %8201 = vmatprep.subr.mxu0 0.0
        %8202 = vmatpush1.msra.mxu0 0.0
        %8203 = vmatprep.subr.mxu0 0.0
        %8204 = vmatpush1.msra.mxu0 0.0
        %8205 = vmatprep.subr.mxu0 0.0
        %8206 = vmatpush1.msra.mxu0 0.0
        %8207 = vmatprep.subr.mxu0 0.0
        %8208 = vmatpush1.msra.mxu0 0.0
        %8209 = vmatprep.subr.mxu0 0.0
        %8210 = vmatpush1.msra.mxu0 0.0
        %8211 = vmatprep.mubr.f32.mxu0 0.0
        %8212 = vmatmul.mubr.f32.gmra.mrb[0].mxu0 %v8139
        %v8213 = vpop.f32.mrb[0].mxu0
        %v8214 = vadd.f32 0.0, %v8213
        %v8215 = vpop.f32.mrb[0].mxu0
        %8216 = vmatprep.mubr.f32.mxu0 0.0
        %8217 = vmatmul.mubr.f32.gmra.mrb[0].mxu0 %v8142
        %v8218 = vpop.f32.mrb[0].mxu0
        %v8219 = vadd.f32 0.0, %v8218
        %v8220 = vpop.f32.mrb[0].mxu0
        %8221 = vmatprep.mubr.f32.mxu0 0.0
        %8222 = vmatmul.mubr.f32.gmra.mrb[0].mxu0 %v8145
        %v8223 = vpop.f32.mrb[0].mxu0
        %v8224 = vadd.f32 0.0, %v8223
        %v8225 = vpop.f32.mrb[0].mxu0
        %8226 = vdwg.mxu0
        %v8227 = vadd.f32 %v8109, %v8214
        %v8228 = vadd.f32 %v8114, %v8219
        %v8229 = vadd.f32 %v8119, %v8224
        %v8230 = vld [vmem:[#allocation3 + $0x6] sm:$0xff]
        %v8231 = vld [vmem:[#allocation3 + $0xe] sm:$0xff]
        %v8232 = vld [vmem:[#allocation3 + $0x16] sm:$0xff]
        %s8233 = scalar_lea.vmem %s7, 288
        %v8234 = vld [vmem:[%s8233] sm:$0xff]
        %v8235 = vld [vmem:[%s8233 + $0x8] sm:$0xff]
        %v8236 = vld [vmem:[%s8233 + $0x10] sm:$0xff]
        %v8237 = vld [vmem:[%s8233 + $0x18] sm:$0xff]
        %v8238 = vld [vmem:[%s8233 + $0x20] sm:$0xff]
        %v8239 = vld [vmem:[%s8233 + $0x28] sm:$0xff]
        %v8240 = vld [vmem:[%s8233 + $0x30] sm:$0xff]
        %v8241 = vld [vmem:[%s8233 + $0x38] sm:$0xff]
        %v8242 = vld [vmem:[%s8233 + $0x40] sm:$0xff]
        %v8243 = vld [vmem:[%s8233 + $0x48] sm:$0xff]
        %v8244 = vld [vmem:[%s8233 + $0x50] sm:$0xff]
        %v8245 = vld [vmem:[%s8233 + $0x58] sm:$0xff]
        %v8247 = vsel %vm7906, %v8230, 0
        %v8250 = vsel %vm7906, %v8231, 0
        %v8253 = vsel %vm7906, %v8232, 0
        %8255 = vmatprep.subr.mxu0 0.0
        %8256 = vmatpush1.msra.mxu0 %v8234
        %8257 = vmatprep.subr.mxu0 0.0
        %8258 = vmatpush1.msra.mxu0 %v8235
        %8259 = vmatprep.subr.mxu0 0.0
        %8260 = vmatpush1.msra.mxu0 %v8236
        %8261 = vmatprep.subr.mxu0 0.0
        %8262 = vmatpush1.msra.mxu0 %v8237
        %8263 = vmatprep.subr.mxu0 0.0
        %8264 = vmatpush1.msra.mxu0 %v8238
        %8265 = vmatprep.subr.mxu0 0.0
        %8266 = vmatpush1.msra.mxu0 %v8239
        %8267 = vmatprep.subr.mxu0 0.0
        %8268 = vmatpush1.msra.mxu0 %v8240
        %8269 = vmatprep.subr.mxu0 0.0
        %8270 = vmatpush1.msra.mxu0 %v8241
        %8271 = vmatprep.subr.mxu0 0.0
        %8272 = vmatpush1.msra.mxu0 %v8242
        %8273 = vmatprep.subr.mxu0 0.0
        %8274 = vmatpush1.msra.mxu0 %v8243
        %8275 = vmatprep.subr.mxu0 0.0
        %8276 = vmatpush1.msra.mxu0 %v8244
        %8277 = vmatprep.subr.mxu0 0.0
        %8278 = vmatpush1.msra.mxu0 %v8245
        %8279 = vmatprep.subr.mxu0 0.0
        %8280 = vmatpush1.msra.mxu0 0.0
        %8281 = vmatprep.subr.mxu0 0.0
        %8282 = vmatpush1.msra.mxu0 0.0
        %8283 = vmatprep.subr.mxu0 0.0
        %8284 = vmatpush1.msra.mxu0 0.0
        %8285 = vmatprep.subr.mxu0 0.0
        %8286 = vmatpush1.msra.mxu0 0.0
        %8287 = vmatprep.subr.mxu0 0.0
        %8288 = vmatpush1.msra.mxu0 0.0
        %8289 = vmatprep.subr.mxu0 0.0
        %8290 = vmatpush1.msra.mxu0 0.0
        %8291 = vmatprep.subr.mxu0 0.0
        %8292 = vmatpush1.msra.mxu0 0.0
        %8293 = vmatprep.subr.mxu0 0.0
        %8294 = vmatpush1.msra.mxu0 0.0
        %8295 = vmatprep.subr.mxu0 0.0
        %8296 = vmatpush1.msra.mxu0 0.0
        %8297 = vmatprep.subr.mxu0 0.0
        %8298 = vmatpush1.msra.mxu0 0.0
        %8299 = vmatprep.subr.mxu0 0.0
        %8300 = vmatpush1.msra.mxu0 0.0
        %8301 = vmatprep.subr.mxu0 0.0
        %8302 = vmatpush1.msra.mxu0 0.0
        %8303 = vmatprep.subr.mxu0 0.0
        %8304 = vmatpush1.msra.mxu0 0.0
        %8305 = vmatprep.subr.mxu0 0.0
        %8306 = vmatpush1.msra.mxu0 0.0
        %8307 = vmatprep.subr.mxu0 0.0
        %8308 = vmatpush1.msra.mxu0 0.0
        %8309 = vmatprep.subr.mxu0 0.0
        %8310 = vmatpush1.msra.mxu0 0.0
        %8311 = vmatprep.subr.mxu0 0.0
        %8312 = vmatpush1.msra.mxu0 0.0
        %8313 = vmatprep.subr.mxu0 0.0
        %8314 = vmatpush1.msra.mxu0 0.0
        %8315 = vmatprep.subr.mxu0 0.0
        %8316 = vmatpush1.msra.mxu0 0.0
        %8317 = vmatprep.subr.mxu0 0.0
        %8318 = vmatpush1.msra.mxu0 0.0
        %8319 = vmatprep.mubr.f32.mxu0 0.0
        %8320 = vmatmul.mubr.f32.gmra.mrb[0].mxu0 %v8247
        %v8321 = vpop.f32.mrb[0].mxu0
        %v8322 = vadd.f32 0.0, %v8321
        %v8323 = vpop.f32.mrb[0].mxu0
        %8324 = vmatprep.mubr.f32.mxu0 0.0
        %8325 = vmatmul.mubr.f32.gmra.mrb[0].mxu0 %v8250
        %v8326 = vpop.f32.mrb[0].mxu0
        %v8327 = vadd.f32 0.0, %v8326
        %v8328 = vpop.f32.mrb[0].mxu0
        %8329 = vmatprep.mubr.f32.mxu0 0.0
        %8330 = vmatmul.mubr.f32.gmra.mrb[0].mxu0 %v8253
        %v8331 = vpop.f32.mrb[0].mxu0
        %v8332 = vadd.f32 0.0, %v8331
        %v8333 = vpop.f32.mrb[0].mxu0
        %8334 = vdwg.mxu0
        %v8335 = vadd.f32 %v8227, %v8322
        %v8336 = vadd.f32 %v8228, %v8327
        %v8337 = vadd.f32 %v8229, %v8332
        %v8338 = vld [vmem:[#allocation3 + $0x7] sm:$0xff]
        %v8339 = vld [vmem:[#allocation3 + $0xf] sm:$0xff]
        %v8340 = vld [vmem:[#allocation3 + $0x17] sm:$0xff]
        %s8341 = scalar_lea.vmem %s7, 384
        %v8342 = vld [vmem:[%s8341] sm:$0xff]
        %v8343 = vld [vmem:[%s8341 + $0x8] sm:$0xff]
        %v8344 = vld [vmem:[%s8341 + $0x10] sm:$0xff]
        %v8345 = vld [vmem:[%s8341 + $0x18] sm:$0xff]
        %v8346 = vld [vmem:[%s8341 + $0x20] sm:$0xff]
        %v8347 = vld [vmem:[%s8341 + $0x28] sm:$0xff]
        %v8348 = vld [vmem:[%s8341 + $0x30] sm:$0xff]
        %v8349 = vld [vmem:[%s8341 + $0x38] sm:$0xff]
        %v8350 = vld [vmem:[%s8341 + $0x40] sm:$0xff]
        %v8351 = vld [vmem:[%s8341 + $0x48] sm:$0xff]
        %v8352 = vld [vmem:[%s8341 + $0x50] sm:$0xff]
        %v8353 = vld [vmem:[%s8341 + $0x58] sm:$0xff]
        %v8355 = vsel %vm7906, %v8338, 0
        %v8358 = vsel %vm7906, %v8339, 0
        %v8361 = vsel %vm7906, %v8340, 0
        %8363 = vmatprep.subr.mxu0 0.0
        %8364 = vmatpush1.msra.mxu0 %v8342
        %8365 = vmatprep.subr.mxu0 0.0
        %8366 = vmatpush1.msra.mxu0 %v8343
        %8367 = vmatprep.subr.mxu0 0.0
        %8368 = vmatpush1.msra.mxu0 %v8344
        %8369 = vmatprep.subr.mxu0 0.0
        %8370 = vmatpush1.msra.mxu0 %v8345
        %8371 = vmatprep.subr.mxu0 0.0
        %8372 = vmatpush1.msra.mxu0 %v8346
        %8373 = vmatprep.subr.mxu0 0.0
        %8374 = vmatpush1.msra.mxu0 %v8347
        %8375 = vmatprep.subr.mxu0 0.0
        %8376 = vmatpush1.msra.mxu0 %v8348
        %8377 = vmatprep.subr.mxu0 0.0
        %8378 = vmatpush1.msra.mxu0 %v8349
        %8379 = vmatprep.subr.mxu0 0.0
        %8380 = vmatpush1.msra.mxu0 %v8350
        %8381 = vmatprep.subr.mxu0 0.0
        %8382 = vmatpush1.msra.mxu0 %v8351
        %8383 = vmatprep.subr.mxu0 0.0
        %8384 = vmatpush1.msra.mxu0 %v8352
        %8385 = vmatprep.subr.mxu0 0.0
        %8386 = vmatpush1.msra.mxu0 %v8353
        %8387 = vmatprep.subr.mxu0 0.0
        %8388 = vmatpush1.msra.mxu0 0.0
        %8389 = vmatprep.subr.mxu0 0.0
        %8390 = vmatpush1.msra.mxu0 0.0
        %8391 = vmatprep.subr.mxu0 0.0
        %8392 = vmatpush1.msra.mxu0 0.0
        %8393 = vmatprep.subr.mxu0 0.0
        %8394 = vmatpush1.msra.mxu0 0.0
        %8395 = vmatprep.subr.mxu0 0.0
        %8396 = vmatpush1.msra.mxu0 0.0
        %8397 = vmatprep.subr.mxu0 0.0
        %8398 = vmatpush1.msra.mxu0 0.0
        %8399 = vmatprep.subr.mxu0 0.0
        %8400 = vmatpush1.msra.mxu0 0.0
        %8401 = vmatprep.subr.mxu0 0.0
        %8402 = vmatpush1.msra.mxu0 0.0
        %8403 = vmatprep.subr.mxu0 0.0
        %8404 = vmatpush1.msra.mxu0 0.0
        %8405 = vmatprep.subr.mxu0 0.0
        %8406 = vmatpush1.msra.mxu0 0.0
        %8407 = vmatprep.subr.mxu0 0.0
        %8408 = vmatpush1.msra.mxu0 0.0
        %8409 = vmatprep.subr.mxu0 0.0
        %8410 = vmatpush1.msra.mxu0 0.0
        %8411 = vmatprep.subr.mxu0 0.0
        %8412 = vmatpush1.msra.mxu0 0.0
        %8413 = vmatprep.subr.mxu0 0.0
        %8414 = vmatpush1.msra.mxu0 0.0
        %8415 = vmatprep.subr.mxu0 0.0
        %8416 = vmatpush1.msra.mxu0 0.0
        %8417 = vmatprep.subr.mxu0 0.0
        %8418 = vmatpush1.msra.mxu0 0.0
        %8419 = vmatprep.subr.mxu0 0.0
        %8420 = vmatpush1.msra.mxu0 0.0
        %8421 = vmatprep.subr.mxu0 0.0
        %8422 = vmatpush1.msra.mxu0 0.0
        %8423 = vmatprep.subr.mxu0 0.0
        %8424 = vmatpush1.msra.mxu0 0.0
        %8425 = vmatprep.subr.mxu0 0.0
        %8426 = vmatpush1.msra.mxu0 0.0
        %8427 = vmatprep.mubr.f32.mxu0 0.0
        %8428 = vmatmul.mubr.f32.gmra.mrb[0].mxu0 %v8355
        %v8429 = vpop.f32.mrb[0].mxu0
        %v8430 = vadd.f32 0.0, %v8429
        %v8431 = vpop.f32.mrb[0].mxu0
        %8432 = vmatprep.mubr.f32.mxu0 0.0
        %8433 = vmatmul.mubr.f32.gmra.mrb[0].mxu0 %v8358
        %v8434 = vpop.f32.mrb[0].mxu0
        %v8435 = vadd.f32 0.0, %v8434
        %v8436 = vpop.f32.mrb[0].mxu0
        %8437 = vmatprep.mubr.f32.mxu0 0.0
        %8438 = vmatmul.mubr.f32.gmra.mrb[0].mxu0 %v8361
        %v8439 = vpop.f32.mrb[0].mxu0
        %v8440 = vadd.f32 0.0, %v8439
        %v8441 = vpop.f32.mrb[0].mxu0
        %8442 = vdwg.mxu0
        %v8443 = vadd.f32 %v8335, %v8430
        %v8444 = vadd.f32 %v8336, %v8435
        %v8445 = vadd.f32 %v8337, %v8440
        %v8446 = vld [vmem:[#allocation3 + $0x8] sm:$0xff]
        %v8447 = vld [vmem:[#allocation3 + $0x10] sm:$0xff]
        %v8448 = vld [vmem:[#allocation3 + $0x18] sm:$0xff]
        %s8449 = scalar_lea.vmem %s7, 480
        %v8450 = vld [vmem:[%s8449] sm:$0xff]
        %v8451 = vld [vmem:[%s8449 + $0x8] sm:$0xff]
        %v8452 = vld [vmem:[%s8449 + $0x10] sm:$0xff]
        %v8453 = vld [vmem:[%s8449 + $0x18] sm:$0xff]
        %v8454 = vld [vmem:[%s8449 + $0x20] sm:$0xff]
        %v8455 = vld [vmem:[%s8449 + $0x28] sm:$0xff]
        %v8456 = vld [vmem:[%s8449 + $0x30] sm:$0xff]
        %v8457 = vld [vmem:[%s8449 + $0x38] sm:$0xff]
        %v8458 = vld [vmem:[%s8449 + $0x40] sm:$0xff]
        %v8459 = vld [vmem:[%s8449 + $0x48] sm:$0xff]
        %v8460 = vld [vmem:[%s8449 + $0x50] sm:$0xff]
        %v8461 = vld [vmem:[%s8449 + $0x58] sm:$0xff]
        %v8463 = vsel %vm7906, %v8446, 0
        %v8466 = vsel %vm7906, %v8447, 0
        %v8469 = vsel %vm7906, %v8448, 0
        %8471 = vmatprep.subr.mxu0 0.0
        %8472 = vmatpush1.msra.mxu0 %v8450
        %8473 = vmatprep.subr.mxu0 0.0
        %8474 = vmatpush1.msra.mxu0 %v8451
        %8475 = vmatprep.subr.mxu0 0.0
        %8476 = vmatpush1.msra.mxu0 %v8452
        %8477 = vmatprep.subr.mxu0 0.0
        %8478 = vmatpush1.msra.mxu0 %v8453
        %8479 = vmatprep.subr.mxu0 0.0
        %8480 = vmatpush1.msra.mxu0 %v8454
        %8481 = vmatprep.subr.mxu0 0.0
        %8482 = vmatpush1.msra.mxu0 %v8455
        %8483 = vmatprep.subr.mxu0 0.0
        %8484 = vmatpush1.msra.mxu0 %v8456
        %8485 = vmatprep.subr.mxu0 0.0
        %8486 = vmatpush1.msra.mxu0 %v8457
        %8487 = vmatprep.subr.mxu0 0.0
        %8488 = vmatpush1.msra.mxu0 %v8458
        %8489 = vmatprep.subr.mxu0 0.0
        %8490 = vmatpush1.msra.mxu0 %v8459
        %8491 = vmatprep.subr.mxu0 0.0
        %8492 = vmatpush1.msra.mxu0 %v8460
        %8493 = vmatprep.subr.mxu0 0.0
        %8494 = vmatpush1.msra.mxu0 %v8461
        %8495 = vmatprep.subr.mxu0 0.0
        %8496 = vmatpush1.msra.mxu0 0.0
        %8497 = vmatprep.subr.mxu0 0.0
        %8498 = vmatpush1.msra.mxu0 0.0
        %8499 = vmatprep.subr.mxu0 0.0
        %8500 = vmatpush1.msra.mxu0 0.0
        %8501 = vmatprep.subr.mxu0 0.0
        %8502 = vmatpush1.msra.mxu0 0.0
        %8503 = vmatprep.subr.mxu0 0.0
        %8504 = vmatpush1.msra.mxu0 0.0
        %8505 = vmatprep.subr.mxu0 0.0
        %8506 = vmatpush1.msra.mxu0 0.0
        %8507 = vmatprep.subr.mxu0 0.0
        %8508 = vmatpush1.msra.mxu0 0.0
        %8509 = vmatprep.subr.mxu0 0.0
        %8510 = vmatpush1.msra.mxu0 0.0
        %8511 = vmatprep.subr.mxu0 0.0
        %8512 = vmatpush1.msra.mxu0 0.0
        %8513 = vmatprep.subr.mxu0 0.0
        %8514 = vmatpush1.msra.mxu0 0.0
        %8515 = vmatprep.subr.mxu0 0.0
        %8516 = vmatpush1.msra.mxu0 0.0
        %8517 = vmatprep.subr.mxu0 0.0
        %8518 = vmatpush1.msra.mxu0 0.0
        %8519 = vmatprep.subr.mxu0 0.0
        %8520 = vmatpush1.msra.mxu0 0.0
        %8521 = vmatprep.subr.mxu0 0.0
        %8522 = vmatpush1.msra.mxu0 0.0
        %8523 = vmatprep.subr.mxu0 0.0
        %8524 = vmatpush1.msra.mxu0 0.0
        %8525 = vmatprep.subr.mxu0 0.0
        %8526 = vmatpush1.msra.mxu0 0.0
        %8527 = vmatprep.subr.mxu0 0.0
        %8528 = vmatpush1.msra.mxu0 0.0
        %8529 = vmatprep.subr.mxu0 0.0
        %8530 = vmatpush1.msra.mxu0 0.0
        %8531 = vmatprep.subr.mxu0 0.0
        %8532 = vmatpush1.msra.mxu0 0.0
        %8533 = vmatprep.subr.mxu0 0.0
        %8534 = vmatpush1.msra.mxu0 0.0
        %8535 = vmatprep.mubr.f32.mxu0 0.0
        %8536 = vmatmul.mubr.f32.gmra.mrb[0].mxu0 %v8463
        %v8537 = vpop.f32.mrb[0].mxu0
        %v8538 = vadd.f32 0.0, %v8537
        %v8539 = vpop.f32.mrb[0].mxu0
        %8540 = vmatprep.mubr.f32.mxu0 0.0
        %8541 = vmatmul.mubr.f32.gmra.mrb[0].mxu0 %v8466
        %v8542 = vpop.f32.mrb[0].mxu0
        %v8543 = vadd.f32 0.0, %v8542
        %v8544 = vpop.f32.mrb[0].mxu0
        %8545 = vmatprep.mubr.f32.mxu0 0.0
        %8546 = vmatmul.mubr.f32.gmra.mrb[0].mxu0 %v8469
        %v8547 = vpop.f32.mrb[0].mxu0
        %v8548 = vadd.f32 0.0, %v8547
        %v8549 = vpop.f32.mrb[0].mxu0
        %8550 = vdwg.mxu0
        %v8551 = vadd.f32 %v8443, %v8538
        %v8552 = vadd.f32 %v8444, %v8543
        %v8553 = vadd.f32 %v8445, %v8548
        %v8554 = vld [vmem:[#allocation3 + $0xc] sm:$0xff]
        %v8555 = vld [vmem:[#allocation3 + $0x14] sm:$0xff]
        %v8556 = vld [vmem:[#allocation3 + $0x1c] sm:$0xff]
        %s8557 = scalar_lea.vmem %s7, 576
        %v8558 = vld [vmem:[%s8557] sm:$0xff]
        %v8559 = vld [vmem:[%s8557 + $0x8] sm:$0xff]
        %v8560 = vld [vmem:[%s8557 + $0x10] sm:$0xff]
        %v8561 = vld [vmem:[%s8557 + $0x18] sm:$0xff]
        %v8562 = vld [vmem:[%s8557 + $0x20] sm:$0xff]
        %v8563 = vld [vmem:[%s8557 + $0x28] sm:$0xff]
        %v8564 = vld [vmem:[%s8557 + $0x30] sm:$0xff]
        %v8565 = vld [vmem:[%s8557 + $0x38] sm:$0xff]
        %v8566 = vld [vmem:[%s8557 + $0x40] sm:$0xff]
        %v8567 = vld [vmem:[%s8557 + $0x48] sm:$0xff]
        %v8568 = vld [vmem:[%s8557 + $0x50] sm:$0xff]
        %v8569 = vld [vmem:[%s8557 + $0x58] sm:$0xff]
        %v8571 = vsel %vm7906, %v8554, 0
        %v8574 = vsel %vm7906, %v8555, 0
        %v8577 = vsel %vm7906, %v8556, 0
        %8579 = vmatprep.subr.mxu0 0.0
        %8580 = vmatpush1.msra.mxu0 %v8558
        %8581 = vmatprep.subr.mxu0 0.0
        %8582 = vmatpush1.msra.mxu0 %v8559
        %8583 = vmatprep.subr.mxu0 0.0
        %8584 = vmatpush1.msra.mxu0 %v8560
        %8585 = vmatprep.subr.mxu0 0.0
        %8586 = vmatpush1.msra.mxu0 %v8561
        %8587 = vmatprep.subr.mxu0 0.0
        %8588 = vmatpush1.msra.mxu0 %v8562
        %8589 = vmatprep.subr.mxu0 0.0
        %8590 = vmatpush1.msra.mxu0 %v8563
        %8591 = vmatprep.subr.mxu0 0.0
        %8592 = vmatpush1.msra.mxu0 %v8564
        %8593 = vmatprep.subr.mxu0 0.0
        %8594 = vmatpush1.msra.mxu0 %v8565
        %8595 = vmatprep.subr.mxu0 0.0
        %8596 = vmatpush1.msra.mxu0 %v8566
        %8597 = vmatprep.subr.mxu0 0.0
        %8598 = vmatpush1.msra.mxu0 %v8567
        %8599 = vmatprep.subr.mxu0 0.0
        %8600 = vmatpush1.msra.mxu0 %v8568
        %8601 = vmatprep.subr.mxu0 0.0
        %8602 = vmatpush1.msra.mxu0 %v8569
        %8603 = vmatprep.subr.mxu0 0.0
        %8604 = vmatpush1.msra.mxu0 0.0
        %8605 = vmatprep.subr.mxu0 0.0
        %8606 = vmatpush1.msra.mxu0 0.0
        %8607 = vmatprep.subr.mxu0 0.0
        %8608 = vmatpush1.msra.mxu0 0.0
        %8609 = vmatprep.subr.mxu0 0.0
        %8610 = vmatpush1.msra.mxu0 0.0
        %8611 = vmatprep.subr.mxu0 0.0
        %8612 = vmatpush1.msra.mxu0 0.0
        %8613 = vmatprep.subr.mxu0 0.0
        %8614 = vmatpush1.msra.mxu0 0.0
        %8615 = vmatprep.subr.mxu0 0.0
        %8616 = vmatpush1.msra.mxu0 0.0
        %8617 = vmatprep.subr.mxu0 0.0
        %8618 = vmatpush1.msra.mxu0 0.0
        %8619 = vmatprep.subr.mxu0 0.0
        %8620 = vmatpush1.msra.mxu0 0.0
        %8621 = vmatprep.subr.mxu0 0.0
        %8622 = vmatpush1.msra.mxu0 0.0
        %8623 = vmatprep.subr.mxu0 0.0
        %8624 = vmatpush1.msra.mxu0 0.0
        %8625 = vmatprep.subr.mxu0 0.0
        %8626 = vmatpush1.msra.mxu0 0.0
        %8627 = vmatprep.subr.mxu0 0.0
        %8628 = vmatpush1.msra.mxu0 0.0
        %8629 = vmatprep.subr.mxu0 0.0
        %8630 = vmatpush1.msra.mxu0 0.0
        %8631 = vmatprep.subr.mxu0 0.0
        %8632 = vmatpush1.msra.mxu0 0.0
        %8633 = vmatprep.subr.mxu0 0.0
        %8634 = vmatpush1.msra.mxu0 0.0
        %8635 = vmatprep.subr.mxu0 0.0
        %8636 = vmatpush1.msra.mxu0 0.0
        %8637 = vmatprep.subr.mxu0 0.0
        %8638 = vmatpush1.msra.mxu0 0.0
        %8639 = vmatprep.subr.mxu0 0.0
        %8640 = vmatpush1.msra.mxu0 0.0
        %8641 = vmatprep.subr.mxu0 0.0
        %8642 = vmatpush1.msra.mxu0 0.0
        %8643 = vmatprep.mubr.f32.mxu0 0.0
        %8644 = vmatmul.mubr.f32.gmra.mrb[0].mxu0 %v8571
        %v8645 = vpop.f32.mrb[0].mxu0
        %v8646 = vadd.f32 0.0, %v8645
        %v8647 = vpop.f32.mrb[0].mxu0
        %8648 = vmatprep.mubr.f32.mxu0 0.0
        %8649 = vmatmul.mubr.f32.gmra.mrb[0].mxu0 %v8574
        %v8650 = vpop.f32.mrb[0].mxu0
        %v8651 = vadd.f32 0.0, %v8650
        %v8652 = vpop.f32.mrb[0].mxu0
        %8653 = vmatprep.mubr.f32.mxu0 0.0
        %8654 = vmatmul.mubr.f32.gmra.mrb[0].mxu0 %v8577
        %v8655 = vpop.f32.mrb[0].mxu0
        %v8656 = vadd.f32 0.0, %v8655
        %v8657 = vpop.f32.mrb[0].mxu0
        %8658 = vdwg.mxu0
        %v8659 = vadd.f32 %v8551, %v8646
        %v8660 = vadd.f32 %v8552, %v8651
        %v8661 = vadd.f32 %v8553, %v8656
        %v8662 = vld [vmem:[#allocation3 + $0xd] sm:$0xff]
        %v8663 = vld [vmem:[#allocation3 + $0x15] sm:$0xff]
        %v8664 = vld [vmem:[#allocation3 + $0x1d] sm:$0xff]
        %s8665 = scalar_lea.vmem %s7, 672
        %v8666 = vld [vmem:[%s8665] sm:$0xff]
        %v8667 = vld [vmem:[%s8665 + $0x8] sm:$0xff]
        %v8668 = vld [vmem:[%s8665 + $0x10] sm:$0xff]
        %v8669 = vld [vmem:[%s8665 + $0x18] sm:$0xff]
        %v8670 = vld [vmem:[%s8665 + $0x20] sm:$0xff]
        %v8671 = vld [vmem:[%s8665 + $0x28] sm:$0xff]
        %v8672 = vld [vmem:[%s8665 + $0x30] sm:$0xff]
        %v8673 = vld [vmem:[%s8665 + $0x38] sm:$0xff]
        %v8674 = vld [vmem:[%s8665 + $0x40] sm:$0xff]
        %v8675 = vld [vmem:[%s8665 + $0x48] sm:$0xff]
        %v8676 = vld [vmem:[%s8665 + $0x50] sm:$0xff]
        %v8677 = vld [vmem:[%s8665 + $0x58] sm:$0xff]
        %v8679 = vsel %vm7906, %v8662, 0
        %v8682 = vsel %vm7906, %v8663, 0
        %v8685 = vsel %vm7906, %v8664, 0
        %8687 = vmatprep.subr.mxu0 0.0
        %8688 = vmatpush1.msra.mxu0 %v8666
        %8689 = vmatprep.subr.mxu0 0.0
        %8690 = vmatpush1.msra.mxu0 %v8667
        %8691 = vmatprep.subr.mxu0 0.0
        %8692 = vmatpush1.msra.mxu0 %v8668
        %8693 = vmatprep.subr.mxu0 0.0
        %8694 = vmatpush1.msra.mxu0 %v8669
        %8695 = vmatprep.subr.mxu0 0.0
        %8696 = vmatpush1.msra.mxu0 %v8670
        %8697 = vmatprep.subr.mxu0 0.0
        %8698 = vmatpush1.msra.mxu0 %v8671
        %8699 = vmatprep.subr.mxu0 0.0
        %8700 = vmatpush1.msra.mxu0 %v8672
        %8701 = vmatprep.subr.mxu0 0.0
        %8702 = vmatpush1.msra.mxu0 %v8673
        %8703 = vmatprep.subr.mxu0 0.0
        %8704 = vmatpush1.msra.mxu0 %v8674
        %8705 = vmatprep.subr.mxu0 0.0
        %8706 = vmatpush1.msra.mxu0 %v8675
        %8707 = vmatprep.subr.mxu0 0.0
        %8708 = vmatpush1.msra.mxu0 %v8676
        %8709 = vmatprep.subr.mxu0 0.0
        %8710 = vmatpush1.msra.mxu0 %v8677
        %8711 = vmatprep.subr.mxu0 0.0
        %8712 = vmatpush1.msra.mxu0 0.0
        %8713 = vmatprep.subr.mxu0 0.0
        %8714 = vmatpush1.msra.mxu0 0.0
        %8715 = vmatprep.subr.mxu0 0.0
        %8716 = vmatpush1.msra.mxu0 0.0
        %8717 = vmatprep.subr.mxu0 0.0
        %8718 = vmatpush1.msra.mxu0 0.0
        %8719 = vmatprep.subr.mxu0 0.0
        %8720 = vmatpush1.msra.mxu0 0.0
        %8721 = vmatprep.subr.mxu0 0.0
        %8722 = vmatpush1.msra.mxu0 0.0
        %8723 = vmatprep.subr.mxu0 0.0
        %8724 = vmatpush1.msra.mxu0 0.0
        %8725 = vmatprep.subr.mxu0 0.0
        %8726 = vmatpush1.msra.mxu0 0.0
        %8727 = vmatprep.subr.mxu0 0.0
        %8728 = vmatpush1.msra.mxu0 0.0
        %8729 = vmatprep.subr.mxu0 0.0
        %8730 = vmatpush1.msra.mxu0 0.0
        %8731 = vmatprep.subr.mxu0 0.0
        %8732 = vmatpush1.msra.mxu0 0.0
        %8733 = vmatprep.subr.mxu0 0.0
        %8734 = vmatpush1.msra.mxu0 0.0
        %8735 = vmatprep.subr.mxu0 0.0
        %8736 = vmatpush1.msra.mxu0 0.0
        %8737 = vmatprep.subr.mxu0 0.0
        %8738 = vmatpush1.msra.mxu0 0.0
        %8739 = vmatprep.subr.mxu0 0.0
        %8740 = vmatpush1.msra.mxu0 0.0
        %8741 = vmatprep.subr.mxu0 0.0
        %8742 = vmatpush1.msra.mxu0 0.0
        %8743 = vmatprep.subr.mxu0 0.0
        %8744 = vmatpush1.msra.mxu0 0.0
        %8745 = vmatprep.subr.mxu0 0.0
        %8746 = vmatpush1.msra.mxu0 0.0
        %8747 = vmatprep.subr.mxu0 0.0
        %8748 = vmatpush1.msra.mxu0 0.0
        %8749 = vmatprep.subr.mxu0 0.0
        %8750 = vmatpush1.msra.mxu0 0.0
        %8751 = vmatprep.mubr.f32.mxu0 0.0
        %8752 = vmatmul.mubr.f32.gmra.mrb[0].mxu0 %v8679
        %v8753 = vpop.f32.mrb[0].mxu0
        %v8754 = vadd.f32 0.0, %v8753
        %v8755 = vpop.f32.mrb[0].mxu0
        %8756 = vmatprep.mubr.f32.mxu0 0.0
        %8757 = vmatmul.mubr.f32.gmra.mrb[0].mxu0 %v8682
        %v8758 = vpop.f32.mrb[0].mxu0
        %v8759 = vadd.f32 0.0, %v8758
        %v8760 = vpop.f32.mrb[0].mxu0
        %8761 = vmatprep.mubr.f32.mxu0 0.0
        %8762 = vmatmul.mubr.f32.gmra.mrb[0].mxu0 %v8685
        %v8763 = vpop.f32.mrb[0].mxu0
        %v8764 = vadd.f32 0.0, %v8763
        %v8765 = vpop.f32.mrb[0].mxu0
        %8766 = vdwg.mxu0
        %v8767 = vadd.f32 %v8659, %v8754
        %v8768 = vadd.f32 %v8660, %v8759
        %v8769 = vadd.f32 %v8661, %v8764
        %v8770 = vld [vmem:[#allocation3 + $0xe] sm:$0xff]
        %v8771 = vld [vmem:[#allocation3 + $0x16] sm:$0xff]
        %v8772 = vld [vmem:[#allocation3 + $0x1e] sm:$0xff]
        %s8773 = scalar_lea.vmem %s7, 768
        %v8774 = vld [vmem:[%s8773] sm:$0xff]
        %v8775 = vld [vmem:[%s8773 + $0x8] sm:$0xff]
        %v8776 = vld [vmem:[%s8773 + $0x10] sm:$0xff]
        %v8777 = vld [vmem:[%s8773 + $0x18] sm:$0xff]
        %v8778 = vld [vmem:[%s8773 + $0x20] sm:$0xff]
        %v8779 = vld [vmem:[%s8773 + $0x28] sm:$0xff]
        %v8780 = vld [vmem:[%s8773 + $0x30] sm:$0xff]
        %v8781 = vld [vmem:[%s8773 + $0x38] sm:$0xff]
        %v8782 = vld [vmem:[%s8773 + $0x40] sm:$0xff]
        %v8783 = vld [vmem:[%s8773 + $0x48] sm:$0xff]
        %v8784 = vld [vmem:[%s8773 + $0x50] sm:$0xff]
        %v8785 = vld [vmem:[%s8773 + $0x58] sm:$0xff]
        %v8787 = vsel %vm7906, %v8770, 0
        %v8790 = vsel %vm7906, %v8771, 0
        %v8793 = vsel %vm7906, %v8772, 0
        %8795 = vmatprep.subr.mxu0 0.0
        %8796 = vmatpush1.msra.mxu0 %v8774
        %8797 = vmatprep.subr.mxu0 0.0
        %8798 = vmatpush1.msra.mxu0 %v8775
        %8799 = vmatprep.subr.mxu0 0.0
        %8800 = vmatpush1.msra.mxu0 %v8776
        %8801 = vmatprep.subr.mxu0 0.0
        %8802 = vmatpush1.msra.mxu0 %v8777
        %8803 = vmatprep.subr.mxu0 0.0
        %8804 = vmatpush1.msra.mxu0 %v8778
        %8805 = vmatprep.subr.mxu0 0.0
        %8806 = vmatpush1.msra.mxu0 %v8779
        %8807 = vmatprep.subr.mxu0 0.0
        %8808 = vmatpush1.msra.mxu0 %v8780
        %8809 = vmatprep.subr.mxu0 0.0
        %8810 = vmatpush1.msra.mxu0 %v8781
        %8811 = vmatprep.subr.mxu0 0.0
        %8812 = vmatpush1.msra.mxu0 %v8782
        %8813 = vmatprep.subr.mxu0 0.0
        %8814 = vmatpush1.msra.mxu0 %v8783
        %8815 = vmatprep.subr.mxu0 0.0
        %8816 = vmatpush1.msra.mxu0 %v8784
        %8817 = vmatprep.subr.mxu0 0.0
        %8818 = vmatpush1.msra.mxu0 %v8785
        %8819 = vmatprep.subr.mxu0 0.0
        %8820 = vmatpush1.msra.mxu0 0.0
        %8821 = vmatprep.subr.mxu0 0.0
        %8822 = vmatpush1.msra.mxu0 0.0
        %8823 = vmatprep.subr.mxu0 0.0
        %8824 = vmatpush1.msra.mxu0 0.0
        %8825 = vmatprep.subr.mxu0 0.0
        %8826 = vmatpush1.msra.mxu0 0.0
        %8827 = vmatprep.subr.mxu0 0.0
        %8828 = vmatpush1.msra.mxu0 0.0
        %8829 = vmatprep.subr.mxu0 0.0
        %8830 = vmatpush1.msra.mxu0 0.0
        %8831 = vmatprep.subr.mxu0 0.0
        %8832 = vmatpush1.msra.mxu0 0.0
        %8833 = vmatprep.subr.mxu0 0.0
        %8834 = vmatpush1.msra.mxu0 0.0
        %8835 = vmatprep.subr.mxu0 0.0
        %8836 = vmatpush1.msra.mxu0 0.0
        %8837 = vmatprep.subr.mxu0 0.0
        %8838 = vmatpush1.msra.mxu0 0.0
        %8839 = vmatprep.subr.mxu0 0.0
        %8840 = vmatpush1.msra.mxu0 0.0
        %8841 = vmatprep.subr.mxu0 0.0
        %8842 = vmatpush1.msra.mxu0 0.0
        %8843 = vmatprep.subr.mxu0 0.0
        %8844 = vmatpush1.msra.mxu0 0.0
        %8845 = vmatprep.subr.mxu0 0.0
        %8846 = vmatpush1.msra.mxu0 0.0
        %8847 = vmatprep.subr.mxu0 0.0
        %8848 = vmatpush1.msra.mxu0 0.0
        %8849 = vmatprep.subr.mxu0 0.0
        %8850 = vmatpush1.msra.mxu0 0.0
        %8851 = vmatprep.subr.mxu0 0.0
        %8852 = vmatpush1.msra.mxu0 0.0
        %8853 = vmatprep.subr.mxu0 0.0
        %8854 = vmatpush1.msra.mxu0 0.0
        %8855 = vmatprep.subr.mxu0 0.0
        %8856 = vmatpush1.msra.mxu0 0.0
        %8857 = vmatprep.subr.mxu0 0.0
        %8858 = vmatpush1.msra.mxu0 0.0
        %8859 = vmatprep.mubr.f32.mxu0 0.0
        %8860 = vmatmul.mubr.f32.gmra.mrb[0].mxu0 %v8787
        %v8861 = vpop.f32.mrb[0].mxu0
        %v8862 = vadd.f32 0.0, %v8861
        %v8863 = vpop.f32.mrb[0].mxu0
        %8864 = vmatprep.mubr.f32.mxu0 0.0
        %8865 = vmatmul.mubr.f32.gmra.mrb[0].mxu0 %v8790
        %v8866 = vpop.f32.mrb[0].mxu0
        %v8867 = vadd.f32 0.0, %v8866
        %v8868 = vpop.f32.mrb[0].mxu0
        %8869 = vmatprep.mubr.f32.mxu0 0.0
        %8870 = vmatmul.mubr.f32.gmra.mrb[0].mxu0 %v8793
        %v8871 = vpop.f32.mrb[0].mxu0
        %v8872 = vadd.f32 0.0, %v8871
        %v8873 = vpop.f32.mrb[0].mxu0
        %8874 = vdwg.mxu0
        %v8875 = vadd.f32 %v8767, %v8862
        %v8876 = vadd.f32 %v8768, %v8867
        %v8877 = vadd.f32 %v8769, %v8872
        %v8878 = vld [vmem:[%s8] sm:$0x1]
        %v8880 = vlaneseq
        %v8881 = vshrl.u32 %v8880, 7
        %v8882 = vsub.s32 0, %v8881
        %v8883 = vrot.slane %v8878, %v8882
        %v8885 = vadd.f32 %v8875, %v8883
        %v8886 = vadd.f32 %v8876, %v8883
        %v8887 = vadd.f32 %v8877, %v8883
        %v8888 = vmax.f32 %v8885, 0.0
        %v8889 = vmax.f32 %v8886, 0.0
        %v8890 = vmax.f32 %v8887, 0.0
        %v8891 = vld [vmem:[%s9] sm:$0xff]
        %v8892 = vld [vmem:[%s9 + $0x8] sm:$0xff]
        %v8893 = vld [vmem:[%s9 + $0x10] sm:$0x3]
        %vm8894 = vcmask 195584
        %v8896 = vsel %vm8894, %v8891, 0
        %v8899 = vsel %vm8894, %v8892, 0
        %v8902 = vsel %vm8894, %v8893, 0
        %8904 = vmatprep.subr.mxu0 0.0
        %8905 = vmatpush1.msra.mxu0 %v8888
        %8906 = vmatprep.subr.mxu0 0.0
        %8907 = vmatpush1.msra.mxu0 %v8889
        %8908 = vmatprep.subr.mxu0 0.0
        %8909 = vmatpush1.msra.mxu0 %v8890
        %8910 = vmatprep.subr.mxu0 0.0
        %8911 = vmatpush1.msra.mxu0 0.0
        %8912 = vmatprep.subr.mxu0 0.0
        %8913 = vmatpush1.msra.mxu0 0.0
        %8914 = vmatprep.subr.mxu0 0.0
        %8915 = vmatpush1.msra.mxu0 0.0
        %8916 = vmatprep.subr.mxu0 0.0
        %8917 = vmatpush1.msra.mxu0 0.0
        %8918 = vmatprep.subr.mxu0 0.0
        %8919 = vmatpush1.msra.mxu0 0.0
        %8920 = vmatprep.subr.mxu0 0.0
        %8921 = vmatpush1.msra.mxu0 0.0
        %8922 = vmatprep.subr.mxu0 0.0
        %8923 = vmatpush1.msra.mxu0 0.0
        %8924 = vmatprep.subr.mxu0 0.0
        %8925 = vmatpush1.msra.mxu0 0.0
        %8926 = vmatprep.subr.mxu0 0.0
        %8927 = vmatpush1.msra.mxu0 0.0
        %8928 = vmatprep.subr.mxu0 0.0
        %8929 = vmatpush1.msra.mxu0 0.0
        %8930 = vmatprep.subr.mxu0 0.0
        %8931 = vmatpush1.msra.mxu0 0.0
        %8932 = vmatprep.subr.mxu0 0.0
        %8933 = vmatpush1.msra.mxu0 0.0
        %8934 = vmatprep.subr.mxu0 0.0
        %8935 = vmatpush1.msra.mxu0 0.0
        %8936 = vmatprep.subr.mxu0 0.0
        %8937 = vmatpush1.msra.mxu0 0.0
        %8938 = vmatprep.subr.mxu0 0.0
        %8939 = vmatpush1.msra.mxu0 0.0
        %8940 = vmatprep.subr.mxu0 0.0
        %8941 = vmatpush1.msra.mxu0 0.0
        %8942 = vmatprep.subr.mxu0 0.0
        %8943 = vmatpush1.msra.mxu0 0.0
        %8944 = vmatprep.subr.mxu0 0.0
        %8945 = vmatpush1.msra.mxu0 0.0
        %8946 = vmatprep.subr.mxu0 0.0
        %8947 = vmatpush1.msra.mxu0 0.0
        %8948 = vmatprep.subr.mxu0 0.0
        %8949 = vmatpush1.msra.mxu0 0.0
        %8950 = vmatprep.subr.mxu0 0.0
        %8951 = vmatpush1.msra.mxu0 0.0
        %8952 = vmatprep.subr.mxu0 0.0
        %8953 = vmatpush1.msra.mxu0 0.0
        %8954 = vmatprep.subr.mxu0 0.0
        %8955 = vmatpush1.msra.mxu0 0.0
        %8956 = vmatprep.subr.mxu0 0.0
        %8957 = vmatpush1.msra.mxu0 0.0
        %8958 = vmatprep.subr.mxu0 0.0
        %8959 = vmatpush1.msra.mxu0 0.0
        %8960 = vmatprep.subr.mxu0 0.0
        %8961 = vmatpush1.msra.mxu0 0.0
        %8962 = vmatprep.subr.mxu0 0.0
        %8963 = vmatpush1.msra.mxu0 0.0
        %8964 = vmatprep.subr.mxu0 0.0
        %8965 = vmatpush1.msra.mxu0 0.0
        %8966 = vmatprep.subr.mxu0 0.0
        %8967 = vmatpush1.msra.mxu0 0.0
        %8968 = vmatprep.mubr.f32.mxu0 0.0
        %8969 = vmatmul.mubr.f32.gmra.mrb[0].mxu0 %v8896
        %v8970 = vpop.f32.mrb[0].mxu0
        %v8971 = vadd.f32 0.0, %v8970
        %v8972 = vpop.f32.mrb[0].mxu0
        %8973 = vmatprep.mubr.f32.mxu0 0.0
        %8974 = vmatmul.mubr.f32.gmra.mrb[0].mxu0 %v8899
        %v8975 = vpop.f32.mrb[0].mxu0
        %v8976 = vadd.f32 0.0, %v8975
        %v8977 = vpop.f32.mrb[0].mxu0
        %8978 = vmatprep.mubr.f32.mxu0 0.0
        %8979 = vmatmul.mubr.f32.gmra.mrb[0].mxu0 %v8902
        %v8980 = vpop.f32.mrb[0].mxu0
        %v8981 = vadd.f32 0.0, %v8980
        %v8982 = vpop.f32.mrb[0].mxu0
        %8983 = vdwg.mxu0
        %s8984 = scalar_lea.vmem %s9, 24
        %v8985 = vld [vmem:[%s8984] sm:$0xff]
        %v8986 = vld [vmem:[%s8984 + $0x8] sm:$0xff]
        %v8987 = vld [vmem:[%s8984 + $0x10] sm:$0x3]
        %v8989 = vsel %vm8894, %v8985, 0
        %v8992 = vsel %vm8894, %v8986, 0
        %v8995 = vsel %vm8894, %v8987, 0
        %8997 = vmatprep.subr.mxu0 0.0
        %8998 = vmatpush1.msra.mxu0 %v8888
        %8999 = vmatprep.subr.mxu0 0.0
        %9000 = vmatpush1.msra.mxu0 %v8889
        %9001 = vmatprep.subr.mxu0 0.0
        %9002 = vmatpush1.msra.mxu0 %v8890
        %9003 = vmatprep.subr.mxu0 0.0
        %9004 = vmatpush1.msra.mxu0 0.0
        %9005 = vmatprep.subr.mxu0 0.0
        %9006 = vmatpush1.msra.mxu0 0.0
        %9007 = vmatprep.subr.mxu0 0.0
        %9008 = vmatpush1.msra.mxu0 0.0
        %9009 = vmatprep.subr.mxu0 0.0
        %9010 = vmatpush1.msra.mxu0 0.0
        %9011 = vmatprep.subr.mxu0 0.0
        %9012 = vmatpush1.msra.mxu0 0.0
        %9013 = vmatprep.subr.mxu0 0.0
        %9014 = vmatpush1.msra.mxu0 0.0
        %9015 = vmatprep.subr.mxu0 0.0
        %9016 = vmatpush1.msra.mxu0 0.0
        %9017 = vmatprep.subr.mxu0 0.0
        %9018 = vmatpush1.msra.mxu0 0.0
        %9019 = vmatprep.subr.mxu0 0.0
        %9020 = vmatpush1.msra.mxu0 0.0
        %9021 = vmatprep.subr.mxu0 0.0
        %9022 = vmatpush1.msra.mxu0 0.0
        %9023 = vmatprep.subr.mxu0 0.0
        %9024 = vmatpush1.msra.mxu0 0.0
        %9025 = vmatprep.subr.mxu0 0.0
        %9026 = vmatpush1.msra.mxu0 0.0
        %9027 = vmatprep.subr.mxu0 0.0
        %9028 = vmatpush1.msra.mxu0 0.0
        %9029 = vmatprep.subr.mxu0 0.0
        %9030 = vmatpush1.msra.mxu0 0.0
        %9031 = vmatprep.subr.mxu0 0.0
        %9032 = vmatpush1.msra.mxu0 0.0
        %9033 = vmatprep.subr.mxu0 0.0
        %9034 = vmatpush1.msra.mxu0 0.0
        %9035 = vmatprep.subr.mxu0 0.0
        %9036 = vmatpush1.msra.mxu0 0.0
        %9037 = vmatprep.subr.mxu0 0.0
        %9038 = vmatpush1.msra.mxu0 0.0
        %9039 = vmatprep.subr.mxu0 0.0
        %9040 = vmatpush1.msra.mxu0 0.0
        %9041 = vmatprep.subr.mxu0 0.0
        %9042 = vmatpush1.msra.mxu0 0.0
        %9043 = vmatprep.subr.mxu0 0.0
        %9044 = vmatpush1.msra.mxu0 0.0
        %9045 = vmatprep.subr.mxu0 0.0
        %9046 = vmatpush1.msra.mxu0 0.0
        %9047 = vmatprep.subr.mxu0 0.0
        %9048 = vmatpush1.msra.mxu0 0.0
        %9049 = vmatprep.subr.mxu0 0.0
        %9050 = vmatpush1.msra.mxu0 0.0
        %9051 = vmatprep.subr.mxu0 0.0
        %9052 = vmatpush1.msra.mxu0 0.0
        %9053 = vmatprep.subr.mxu0 0.0
        %9054 = vmatpush1.msra.mxu0 0.0
        %9055 = vmatprep.subr.mxu0 0.0
        %9056 = vmatpush1.msra.mxu0 0.0
        %9057 = vmatprep.subr.mxu0 0.0
        %9058 = vmatpush1.msra.mxu0 0.0
        %9059 = vmatprep.subr.mxu0 0.0
        %9060 = vmatpush1.msra.mxu0 0.0
        %9061 = vmatprep.mubr.f32.mxu0 0.0
        %9062 = vmatmul.mubr.f32.gmra.mrb[0].mxu0 %v8989
        %v9063 = vpop.f32.mrb[0].mxu0
        %v9064 = vadd.f32 0.0, %v9063
        %v9065 = vpop.f32.mrb[0].mxu0
        %9066 = vmatprep.mubr.f32.mxu0 0.0
        %9067 = vmatmul.mubr.f32.gmra.mrb[0].mxu0 %v8992
        %v9068 = vpop.f32.mrb[0].mxu0
        %v9069 = vadd.f32 0.0, %v9068
        %v9070 = vpop.f32.mrb[0].mxu0
        %9071 = vmatprep.mubr.f32.mxu0 0.0
        %9072 = vmatmul.mubr.f32.gmra.mrb[0].mxu0 %v8995
        %v9073 = vpop.f32.mrb[0].mxu0
        %v9074 = vadd.f32 0.0, %v9073
        %v9075 = vpop.f32.mrb[0].mxu0
        %9076 = vdwg.mxu0
        %v9077 = vmax.f32 %v8971, %v9064
        %v9078 = vmax.f32 %v8976, %v9069
        %v9079 = vmax.f32 %v8981, %v9074
        %s9080 = scalar_lea.vmem %s9, 48
        %v9081 = vld [vmem:[%s9080] sm:$0xff]
        %v9082 = vld [vmem:[%s9080 + $0x8] sm:$0xff]
        %v9083 = vld [vmem:[%s9080 + $0x10] sm:$0x3]
        %v9085 = vsel %vm8894, %v9081, 0
        %v9088 = vsel %vm8894, %v9082, 0
        %v9091 = vsel %vm8894, %v9083, 0
        %9093 = vmatprep.subr.mxu0 0.0
        %9094 = vmatpush1.msra.mxu0 %v8888
        %9095 = vmatprep.subr.mxu0 0.0
        %9096 = vmatpush1.msra.mxu0 %v8889
        %9097 = vmatprep.subr.mxu0 0.0
        %9098 = vmatpush1.msra.mxu0 %v8890
        %9099 = vmatprep.subr.mxu0 0.0
        %9100 = vmatpush1.msra.mxu0 0.0
        %9101 = vmatprep.subr.mxu0 0.0
        %9102 = vmatpush1.msra.mxu0 0.0
        %9103 = vmatprep.subr.mxu0 0.0
        %9104 = vmatpush1.msra.mxu0 0.0
        %9105 = vmatprep.subr.mxu0 0.0
        %9106 = vmatpush1.msra.mxu0 0.0
        %9107 = vmatprep.subr.mxu0 0.0
        %9108 = vmatpush1.msra.mxu0 0.0
        %9109 = vmatprep.subr.mxu0 0.0
        %9110 = vmatpush1.msra.mxu0 0.0
        %9111 = vmatprep.subr.mxu0 0.0
        %9112 = vmatpush1.msra.mxu0 0.0
        %9113 = vmatprep.subr.mxu0 0.0
        %9114 = vmatpush1.msra.mxu0 0.0
        %9115 = vmatprep.subr.mxu0 0.0
        %9116 = vmatpush1.msra.mxu0 0.0
        %9117 = vmatprep.subr.mxu0 0.0
        %9118 = vmatpush1.msra.mxu0 0.0
        %9119 = vmatprep.subr.mxu0 0.0
        %9120 = vmatpush1.msra.mxu0 0.0
        %9121 = vmatprep.subr.mxu0 0.0
        %9122 = vmatpush1.msra.mxu0 0.0
        %9123 = vmatprep.subr.mxu0 0.0
        %9124 = vmatpush1.msra.mxu0 0.0
        %9125 = vmatprep.subr.mxu0 0.0
        %9126 = vmatpush1.msra.mxu0 0.0
        %9127 = vmatprep.subr.mxu0 0.0
        %9128 = vmatpush1.msra.mxu0 0.0
        %9129 = vmatprep.subr.mxu0 0.0
        %9130 = vmatpush1.msra.mxu0 0.0
        %9131 = vmatprep.subr.mxu0 0.0
        %9132 = vmatpush1.msra.mxu0 0.0
        %9133 = vmatprep.subr.mxu0 0.0
        %9134 = vmatpush1.msra.mxu0 0.0
        %9135 = vmatprep.subr.mxu0 0.0
        %9136 = vmatpush1.msra.mxu0 0.0
        %9137 = vmatprep.subr.mxu0 0.0
        %9138 = vmatpush1.msra.mxu0 0.0
        %9139 = vmatprep.subr.mxu0 0.0
        %9140 = vmatpush1.msra.mxu0 0.0
        %9141 = vmatprep.subr.mxu0 0.0
        %9142 = vmatpush1.msra.mxu0 0.0
        %9143 = vmatprep.subr.mxu0 0.0
        %9144 = vmatpush1.msra.mxu0 0.0
        %9145 = vmatprep.subr.mxu0 0.0
        %9146 = vmatpush1.msra.mxu0 0.0
        %9147 = vmatprep.subr.mxu0 0.0
        %9148 = vmatpush1.msra.mxu0 0.0
        %9149 = vmatprep.subr.mxu0 0.0
        %9150 = vmatpush1.msra.mxu0 0.0
        %9151 = vmatprep.subr.mxu0 0.0
        %9152 = vmatpush1.msra.mxu0 0.0
        %9153 = vmatprep.subr.mxu0 0.0
        %9154 = vmatpush1.msra.mxu0 0.0
        %9155 = vmatprep.subr.mxu0 0.0
        %9156 = vmatpush1.msra.mxu0 0.0
        %9157 = vmatprep.mubr.f32.mxu0 0.0
        %9158 = vmatmul.mubr.f32.gmra.mrb[0].mxu0 %v9085
        %v9159 = vpop.f32.mrb[0].mxu0
        %v9160 = vadd.f32 0.0, %v9159
        %v9161 = vpop.f32.mrb[0].mxu0
        %9162 = vmatprep.mubr.f32.mxu0 0.0
        %9163 = vmatmul.mubr.f32.gmra.mrb[0].mxu0 %v9088
        %v9164 = vpop.f32.mrb[0].mxu0
        %v9165 = vadd.f32 0.0, %v9164
        %v9166 = vpop.f32.mrb[0].mxu0
        %9167 = vmatprep.mubr.f32.mxu0 0.0
        %9168 = vmatmul.mubr.f32.gmra.mrb[0].mxu0 %v9091
        %v9169 = vpop.f32.mrb[0].mxu0
        %v9170 = vadd.f32 0.0, %v9169
        %v9171 = vpop.f32.mrb[0].mxu0
        %9172 = vdwg.mxu0
        %v9173 = vmax.f32 %v9077, %v9160
        %v9174 = vmax.f32 %v9078, %v9165
        %v9175 = vmax.f32 %v9079, %v9170
        %s9176 = scalar_lea.vmem %s9, 72
        %v9177 = vld [vmem:[%s9176] sm:$0xff]
        %v9178 = vld [vmem:[%s9176 + $0x8] sm:$0xff]
        %v9179 = vld [vmem:[%s9176 + $0x10] sm:$0x3]
        %v9181 = vsel %vm8894, %v9177, 0
        %v9184 = vsel %vm8894, %v9178, 0
        %v9187 = vsel %vm8894, %v9179, 0
        %9189 = vmatprep.subr.mxu0 0.0
        %9190 = vmatpush1.msra.mxu0 %v8888
        %9191 = vmatprep.subr.mxu0 0.0
        %9192 = vmatpush1.msra.mxu0 %v8889
        %9193 = vmatprep.subr.mxu0 0.0
        %9194 = vmatpush1.msra.mxu0 %v8890
        %9195 = vmatprep.subr.mxu0 0.0
        %9196 = vmatpush1.msra.mxu0 0.0
        %9197 = vmatprep.subr.mxu0 0.0
        %9198 = vmatpush1.msra.mxu0 0.0
        %9199 = vmatprep.subr.mxu0 0.0
        %9200 = vmatpush1.msra.mxu0 0.0
        %9201 = vmatprep.subr.mxu0 0.0
        %9202 = vmatpush1.msra.mxu0 0.0
        %9203 = vmatprep.subr.mxu0 0.0
        %9204 = vmatpush1.msra.mxu0 0.0
        %9205 = vmatprep.subr.mxu0 0.0
        %9206 = vmatpush1.msra.mxu0 0.0
        %9207 = vmatprep.subr.mxu0 0.0
        %9208 = vmatpush1.msra.mxu0 0.0
        %9209 = vmatprep.subr.mxu0 0.0
        %9210 = vmatpush1.msra.mxu0 0.0
        %9211 = vmatprep.subr.mxu0 0.0
        %9212 = vmatpush1.msra.mxu0 0.0
        %9213 = vmatprep.subr.mxu0 0.0
        %9214 = vmatpush1.msra.mxu0 0.0
        %9215 = vmatprep.subr.mxu0 0.0
        %9216 = vmatpush1.msra.mxu0 0.0
        %9217 = vmatprep.subr.mxu0 0.0
        %9218 = vmatpush1.msra.mxu0 0.0
        %9219 = vmatprep.subr.mxu0 0.0
        %9220 = vmatpush1.msra.mxu0 0.0
        %9221 = vmatprep.subr.mxu0 0.0
        %9222 = vmatpush1.msra.mxu0 0.0
        %9223 = vmatprep.subr.mxu0 0.0
        %9224 = vmatpush1.msra.mxu0 0.0
        %9225 = vmatprep.subr.mxu0 0.0
        %9226 = vmatpush1.msra.mxu0 0.0
        %9227 = vmatprep.subr.mxu0 0.0
        %9228 = vmatpush1.msra.mxu0 0.0
        %9229 = vmatprep.subr.mxu0 0.0
        %9230 = vmatpush1.msra.mxu0 0.0
        %9231 = vmatprep.subr.mxu0 0.0
        %9232 = vmatpush1.msra.mxu0 0.0
        %9233 = vmatprep.subr.mxu0 0.0
        %9234 = vmatpush1.msra.mxu0 0.0
        %9235 = vmatprep.subr.mxu0 0.0
        %9236 = vmatpush1.msra.mxu0 0.0
        %9237 = vmatprep.subr.mxu0 0.0
        %9238 = vmatpush1.msra.mxu0 0.0
        %9239 = vmatprep.subr.mxu0 0.0
        %9240 = vmatpush1.msra.mxu0 0.0
        %9241 = vmatprep.subr.mxu0 0.0
        %9242 = vmatpush1.msra.mxu0 0.0
        %9243 = vmatprep.subr.mxu0 0.0
        %9244 = vmatpush1.msra.mxu0 0.0
        %9245 = vmatprep.subr.mxu0 0.0
        %9246 = vmatpush1.msra.mxu0 0.0
        %9247 = vmatprep.subr.mxu0 0.0
        %9248 = vmatpush1.msra.mxu0 0.0
        %9249 = vmatprep.subr.mxu0 0.0
        %9250 = vmatpush1.msra.mxu0 0.0
        %9251 = vmatprep.subr.mxu0 0.0
        %9252 = vmatpush1.msra.mxu0 0.0
        %9253 = vmatprep.mubr.f32.mxu0 0.0
        %9254 = vmatmul.mubr.f32.gmra.mrb[0].mxu0 %v9181
        %v9255 = vpop.f32.mrb[0].mxu0
        %v9256 = vadd.f32 0.0, %v9255
        %v9257 = vpop.f32.mrb[0].mxu0
        %9258 = vmatprep.mubr.f32.mxu0 0.0
        %9259 = vmatmul.mubr.f32.gmra.mrb[0].mxu0 %v9184
        %v9260 = vpop.f32.mrb[0].mxu0
        %v9261 = vadd.f32 0.0, %v9260
        %v9262 = vpop.f32.mrb[0].mxu0
        %9263 = vmatprep.mubr.f32.mxu0 0.0
        %9264 = vmatmul.mubr.f32.gmra.mrb[0].mxu0 %v9187
        %v9265 = vpop.f32.mrb[0].mxu0
        %v9266 = vadd.f32 0.0, %v9265
        %v9267 = vpop.f32.mrb[0].mxu0
        %9268 = vdwg.mxu0
        %v9269 = vmax.f32 %v9173, %v9256
        %v9270 = vmax.f32 %v9174, %v9261
        %v9271 = vmax.f32 %v9175, %v9266
        %9272 = vst [vmem:[#allocation4] sm:$0xff] %v9269
        %9273 = vst [vmem:[#allocation4 + $0x8] sm:$0xff] %v9270
        %9274 = vst [vmem:[#allocation4 + $0x10] sm:$0x3] %v9271
        %v9275 = vld [vmem:[#allocation4] sm:$0xff]
        %v9276 = vld [vmem:[%s10] sm:$0xff]
        %v9277 = vld [vmem:[%s10 + $0x8] sm:$0xff]
        %v9278 = vld [vmem:[%s10 + $0x10] sm:$0xff]
        %v9279 = vld [vmem:[%s10 + $0x18] sm:$0xff]
        %v9280 = vld [vmem:[%s10 + $0x20] sm:$0xff]
        %v9281 = vld [vmem:[%s10 + $0x28] sm:$0xff]
        %v9282 = vld [vmem:[%s10 + $0x30] sm:$0xff]
        %v9283 = vld [vmem:[%s10 + $0x38] sm:$0xff]
        %v9284 = vld [vmem:[%s10 + $0x40] sm:$0xff]
        %v9285 = vld [vmem:[%s10 + $0x48] sm:$0xff]
        %v9286 = vld [vmem:[%s10 + $0x50] sm:$0xff]
        %v9287 = vld [vmem:[%s10 + $0x58] sm:$0xff]
        %v9288 = vld [vmem:[%s10 + $0x60] sm:$0xff]
        %v9289 = vld [vmem:[%s10 + $0x68] sm:$0xff]
        %v9290 = vld [vmem:[%s10 + $0x70] sm:$0xff]
        %v9291 = vld [vmem:[%s10 + $0x78] sm:$0xff]
        %v9292 = vld [vmem:[%s10 + $0x80] sm:$0xff]
        %v9293 = vld [vmem:[%s10 + $0x88] sm:$0xff]
        %v9294 = vld [vmem:[%s10 + $0x90] sm:$0xff]
        %v9295 = vld [vmem:[%s10 + $0x98] sm:$0xff]
        %v9296 = vld [vmem:[%s10 + $0xa0] sm:$0xff]
        %v9297 = vld [vmem:[%s10 + $0xa8] sm:$0xff]
        %v9298 = vld [vmem:[%s10 + $0xb0] sm:$0xff]
        %v9299 = vld [vmem:[%s10 + $0xb8] sm:$0xff]
        %v9300 = vld [vmem:[%s10 + $0xc0] sm:$0xff]
        %v9301 = vld [vmem:[%s10 + $0xc8] sm:$0xff]
        %v9302 = vld [vmem:[%s10 + $0xd0] sm:$0xff]
        %v9303 = vld [vmem:[%s10 + $0xd8] sm:$0xff]
        %v9304 = vld [vmem:[%s10 + $0xe0] sm:$0xff]
        %v9305 = vld [vmem:[%s10 + $0xe8] sm:$0xff]
        %v9306 = vld [vmem:[%s10 + $0xf0] sm:$0xff]
        %v9307 = vld [vmem:[%s10 + $0xf8] sm:$0xff]
        %v9308 = vld [vmem:[#allocation4 + $0x1] sm:$0xff]
        %s9309 = scalar_lea.vmem %s10, 256
        %v9310 = vld [vmem:[%s9309] sm:$0xff]
        %v9311 = vld [vmem:[%s9309 + $0x8] sm:$0xff]
        %v9312 = vld [vmem:[%s9309 + $0x10] sm:$0xff]
        %v9313 = vld [vmem:[%s9309 + $0x18] sm:$0xff]
        %v9314 = vld [vmem:[%s9309 + $0x20] sm:$0xff]
        %v9315 = vld [vmem:[%s9309 + $0x28] sm:$0xff]
        %v9316 = vld [vmem:[%s9309 + $0x30] sm:$0xff]
        %v9317 = vld [vmem:[%s9309 + $0x38] sm:$0xff]
        %v9318 = vld [vmem:[%s9309 + $0x40] sm:$0xff]
        %v9319 = vld [vmem:[%s9309 + $0x48] sm:$0xff]
        %v9320 = vld [vmem:[%s9309 + $0x50] sm:$0xff]
        %v9321 = vld [vmem:[%s9309 + $0x58] sm:$0xff]
        %v9322 = vld [vmem:[%s9309 + $0x60] sm:$0xff]
        %v9323 = vld [vmem:[%s9309 + $0x68] sm:$0xff]
        %v9324 = vld [vmem:[%s9309 + $0x70] sm:$0xff]
        %v9325 = vld [vmem:[%s9309 + $0x78] sm:$0xff]
        %v9326 = vld [vmem:[%s9309 + $0x80] sm:$0xff]
        %v9327 = vld [vmem:[%s9309 + $0x88] sm:$0xff]
        %v9328 = vld [vmem:[%s9309 + $0x90] sm:$0xff]
        %v9329 = vld [vmem:[%s9309 + $0x98] sm:$0xff]
        %v9330 = vld [vmem:[%s9309 + $0xa0] sm:$0xff]
        %v9331 = vld [vmem:[%s9309 + $0xa8] sm:$0xff]
        %v9332 = vld [vmem:[%s9309 + $0xb0] sm:$0xff]
        %v9333 = vld [vmem:[%s9309 + $0xb8] sm:$0xff]
        %v9334 = vld [vmem:[%s9309 + $0xc0] sm:$0xff]
        %v9335 = vld [vmem:[%s9309 + $0xc8] sm:$0xff]
        %v9336 = vld [vmem:[%s9309 + $0xd0] sm:$0xff]
        %v9337 = vld [vmem:[%s9309 + $0xd8] sm:$0xff]
        %v9338 = vld [vmem:[%s9309 + $0xe0] sm:$0xff]
        %v9339 = vld [vmem:[%s9309 + $0xe8] sm:$0xff]
        %v9340 = vld [vmem:[%s9309 + $0xf0] sm:$0xff]
        %v9341 = vld [vmem:[%s9309 + $0xf8] sm:$0xff]
        %9342 = vmatprep.subr.mxu0 %v9311
        %9343 = vmatpush1.msra.mxu0 %v9310
        %9344 = vmatprep.subr.mxu0 %v9313
        %9345 = vmatpush1.msra.mxu0 %v9312
        %9346 = vmatprep.subr.mxu0 %v9315
        %9347 = vmatpush1.msra.mxu0 %v9314
        %9348 = vmatprep.subr.mxu0 %v9317
        %9349 = vmatpush1.msra.mxu0 %v9316
        %9350 = vmatprep.subr.mxu0 %v9319
        %9351 = vmatpush1.msra.mxu0 %v9318
        %9352 = vmatprep.subr.mxu0 %v9321
        %9353 = vmatpush1.msra.mxu0 %v9320
        %9354 = vmatprep.subr.mxu0 %v9323
        %9355 = vmatpush1.msra.mxu0 %v9322
        %9356 = vmatprep.subr.mxu0 %v9325
        %9357 = vmatpush1.msra.mxu0 %v9324
        %9358 = vmatprep.subr.mxu0 %v9327
        %9359 = vmatpush1.msra.mxu0 %v9326
        %9360 = vmatprep.subr.mxu0 %v9329
        %9361 = vmatpush1.msra.mxu0 %v9328
        %9362 = vmatprep.subr.mxu0 %v9331
        %9363 = vmatpush1.msra.mxu0 %v9330
        %9364 = vmatprep.subr.mxu0 %v9333
        %9365 = vmatpush1.msra.mxu0 %v9332
        %9366 = vmatprep.subr.mxu0 %v9335
        %9367 = vmatpush1.msra.mxu0 %v9334
        %9368 = vmatprep.subr.mxu0 %v9337
        %9369 = vmatpush1.msra.mxu0 %v9336
        %9370 = vmatprep.subr.mxu0 %v9339
        %9371 = vmatpush1.msra.mxu0 %v9338
        %9372 = vmatprep.subr.mxu0 %v9341
        %9373 = vmatpush1.msra.mxu0 %v9340
        %9374 = vmatprep.subr.mxu0 0.0
        %9375 = vmatpush1.msra.mxu0 0.0
        %9376 = vmatprep.subr.mxu0 0.0
        %9377 = vmatpush1.msra.mxu0 0.0
        %9378 = vmatprep.subr.mxu0 0.0
        %9379 = vmatpush1.msra.mxu0 0.0
        %9380 = vmatprep.subr.mxu0 0.0
        %9381 = vmatpush1.msra.mxu0 0.0
        %9382 = vmatprep.subr.mxu0 0.0
        %9383 = vmatpush1.msra.mxu0 0.0
        %9384 = vmatprep.subr.mxu0 0.0
        %9385 = vmatpush1.msra.mxu0 0.0
        %9386 = vmatprep.subr.mxu0 0.0
        %9387 = vmatpush1.msra.mxu0 0.0
        %9388 = vmatprep.subr.mxu0 0.0
        %9389 = vmatpush1.msra.mxu0 0.0
        %9390 = vmatprep.subr.mxu0 0.0
        %9391 = vmatpush1.msra.mxu0 0.0
        %9392 = vmatprep.subr.mxu0 0.0
        %9393 = vmatpush1.msra.mxu0 0.0
        %9394 = vmatprep.subr.mxu0 0.0
        %9395 = vmatpush1.msra.mxu0 0.0
        %9396 = vmatprep.subr.mxu0 0.0
        %9397 = vmatpush1.msra.mxu0 0.0
        %9398 = vmatprep.subr.mxu0 0.0
        %9399 = vmatpush1.msra.mxu0 0.0
        %9400 = vmatprep.subr.mxu0 0.0
        %9401 = vmatpush1.msra.mxu0 0.0
        %9402 = vmatprep.subr.mxu0 0.0
        %9403 = vmatpush1.msra.mxu0 0.0
        %9404 = vmatprep.subr.mxu0 0.0
        %9405 = vmatpush1.msra.mxu0 0.0
        %9406 = vmatprep.mubr.f32.mxu0 0.0
        %9407 = vmatmul.mubr.f32.gmra.mrb[0].mxu0 %v9308
        %v9408 = vpop.f32.mrb[0].mxu0
        %v9409 = vadd.f32 0.0, %v9408
        %v9410 = vpop.f32.mrb[0].mxu0
        %v9411 = vadd.f32 0.0, %v9410
        %9412 = vdwg.mxu0
        %9413 = vmatprep.subr.mxu0 %v9277
        %9414 = vmatpush1.msra.mxu0 %v9276
        %9415 = vmatprep.subr.mxu0 %v9279
        %9416 = vmatpush1.msra.mxu0 %v9278
        %9417 = vmatprep.subr.mxu0 %v9281
        %9418 = vmatpush1.msra.mxu0 %v9280
        %9419 = vmatprep.subr.mxu0 %v9283
        %9420 = vmatpush1.msra.mxu0 %v9282
        %9421 = vmatprep.subr.mxu0 %v9285
        %9422 = vmatpush1.msra.mxu0 %v9284
        %9423 = vmatprep.subr.mxu0 %v9287
        %9424 = vmatpush1.msra.mxu0 %v9286
        %9425 = vmatprep.subr.mxu0 %v9289
        %9426 = vmatpush1.msra.mxu0 %v9288
        %9427 = vmatprep.subr.mxu0 %v9291
        %9428 = vmatpush1.msra.mxu0 %v9290
        %9429 = vmatprep.subr.mxu0 %v9293
        %9430 = vmatpush1.msra.mxu0 %v9292
        %9431 = vmatprep.subr.mxu0 %v9295
        %9432 = vmatpush1.msra.mxu0 %v9294
        %9433 = vmatprep.subr.mxu0 %v9297
        %9434 = vmatpush1.msra.mxu0 %v9296
        %9435 = vmatprep.subr.mxu0 %v9299
        %9436 = vmatpush1.msra.mxu0 %v9298
        %9437 = vmatprep.subr.mxu0 %v9301
        %9438 = vmatpush1.msra.mxu0 %v9300
        %9439 = vmatprep.subr.mxu0 %v9303
        %9440 = vmatpush1.msra.mxu0 %v9302
        %9441 = vmatprep.subr.mxu0 %v9305
        %9442 = vmatpush1.msra.mxu0 %v9304
        %9443 = vmatprep.subr.mxu0 %v9307
        %9444 = vmatpush1.msra.mxu0 %v9306
        %9445 = vmatprep.subr.mxu0 0.0
        %9446 = vmatpush1.msra.mxu0 0.0
        %9447 = vmatprep.subr.mxu0 0.0
        %9448 = vmatpush1.msra.mxu0 0.0
        %9449 = vmatprep.subr.mxu0 0.0
        %9450 = vmatpush1.msra.mxu0 0.0
        %9451 = vmatprep.subr.mxu0 0.0
        %9452 = vmatpush1.msra.mxu0 0.0
        %9453 = vmatprep.subr.mxu0 0.0
        %9454 = vmatpush1.msra.mxu0 0.0
        %9455 = vmatprep.subr.mxu0 0.0
        %9456 = vmatpush1.msra.mxu0 0.0
        %9457 = vmatprep.subr.mxu0 0.0
        %9458 = vmatpush1.msra.mxu0 0.0
        %9459 = vmatprep.subr.mxu0 0.0
        %9460 = vmatpush1.msra.mxu0 0.0
        %9461 = vmatprep.subr.mxu0 0.0
        %9462 = vmatpush1.msra.mxu0 0.0
        %9463 = vmatprep.subr.mxu0 0.0
        %9464 = vmatpush1.msra.mxu0 0.0
        %9465 = vmatprep.subr.mxu0 0.0
        %9466 = vmatpush1.msra.mxu0 0.0
        %9467 = vmatprep.subr.mxu0 0.0
        %9468 = vmatpush1.msra.mxu0 0.0
        %9469 = vmatprep.subr.mxu0 0.0
        %9470 = vmatpush1.msra.mxu0 0.0
        %9471 = vmatprep.subr.mxu0 0.0
        %9472 = vmatpush1.msra.mxu0 0.0
        %9473 = vmatprep.subr.mxu0 0.0
        %9474 = vmatpush1.msra.mxu0 0.0
        %9475 = vmatprep.subr.mxu0 0.0
        %9476 = vmatpush1.msra.mxu0 0.0
        %9477 = vmatprep.mubr.f32.mxu0 0.0
        %9478 = vmatmul.mubr.f32.gmra.mrb[0].mxu0 %v9275
        %v9479 = vpop.f32.mrb[0].mxu0
        %v9480 = vadd.f32 %v9409, %v9479
        %v9481 = vpop.f32.mrb[0].mxu0
        %v9482 = vadd.f32 %v9411, %v9481
        %9483 = vdwg.mxu0
        %v9484 = vld [vmem:[#allocation4 + $0x2] sm:$0xff]
        %s9485 = scalar_lea.vmem %s10, 512
        %v9486 = vld [vmem:[%s9485] sm:$0xff]
        %v9487 = vld [vmem:[%s9485 + $0x8] sm:$0xff]
        %v9488 = vld [vmem:[%s9485 + $0x10] sm:$0xff]
        %v9489 = vld [vmem:[%s9485 + $0x18] sm:$0xff]
        %v9490 = vld [vmem:[%s9485 + $0x20] sm:$0xff]
        %v9491 = vld [vmem:[%s9485 + $0x28] sm:$0xff]
        %v9492 = vld [vmem:[%s9485 + $0x30] sm:$0xff]
        %v9493 = vld [vmem:[%s9485 + $0x38] sm:$0xff]
        %v9494 = vld [vmem:[%s9485 + $0x40] sm:$0xff]
        %v9495 = vld [vmem:[%s9485 + $0x48] sm:$0xff]
        %v9496 = vld [vmem:[%s9485 + $0x50] sm:$0xff]
        %v9497 = vld [vmem:[%s9485 + $0x58] sm:$0xff]
        %v9498 = vld [vmem:[%s9485 + $0x60] sm:$0xff]
        %v9499 = vld [vmem:[%s9485 + $0x68] sm:$0xff]
        %v9500 = vld [vmem:[%s9485 + $0x70] sm:$0xff]
        %v9501 = vld [vmem:[%s9485 + $0x78] sm:$0xff]
        %v9502 = vld [vmem:[%s9485 + $0x80] sm:$0xff]
        %v9503 = vld [vmem:[%s9485 + $0x88] sm:$0xff]
        %v9504 = vld [vmem:[%s9485 + $0x90] sm:$0xff]
        %v9505 = vld [vmem:[%s9485 + $0x98] sm:$0xff]
        %v9506 = vld [vmem:[%s9485 + $0xa0] sm:$0xff]
        %v9507 = vld [vmem:[%s9485 + $0xa8] sm:$0xff]
        %v9508 = vld [vmem:[%s9485 + $0xb0] sm:$0xff]
        %v9509 = vld [vmem:[%s9485 + $0xb8] sm:$0xff]
        %v9510 = vld [vmem:[%s9485 + $0xc0] sm:$0xff]
        %v9511 = vld [vmem:[%s9485 + $0xc8] sm:$0xff]
        %v9512 = vld [vmem:[%s9485 + $0xd0] sm:$0xff]
        %v9513 = vld [vmem:[%s9485 + $0xd8] sm:$0xff]
        %v9514 = vld [vmem:[%s9485 + $0xe0] sm:$0xff]
        %v9515 = vld [vmem:[%s9485 + $0xe8] sm:$0xff]
        %v9516 = vld [vmem:[%s9485 + $0xf0] sm:$0xff]
        %v9517 = vld [vmem:[%s9485 + $0xf8] sm:$0xff]
        %9518 = vmatprep.subr.mxu0 %v9487
        %9519 = vmatpush1.msra.mxu0 %v9486
        %9520 = vmatprep.subr.mxu0 %v9489
        %9521 = vmatpush1.msra.mxu0 %v9488
        %9522 = vmatprep.subr.mxu0 %v9491
        %9523 = vmatpush1.msra.mxu0 %v9490
        %9524 = vmatprep.subr.mxu0 %v9493
        %9525 = vmatpush1.msra.mxu0 %v9492
        %9526 = vmatprep.subr.mxu0 %v9495
        %9527 = vmatpush1.msra.mxu0 %v9494
        %9528 = vmatprep.subr.mxu0 %v9497
        %9529 = vmatpush1.msra.mxu0 %v9496
        %9530 = vmatprep.subr.mxu0 %v9499
        %9531 = vmatpush1.msra.mxu0 %v9498
        %9532 = vmatprep.subr.mxu0 %v9501
        %9533 = vmatpush1.msra.mxu0 %v9500
        %9534 = vmatprep.subr.mxu0 %v9503
        %9535 = vmatpush1.msra.mxu0 %v9502
        %9536 = vmatprep.subr.mxu0 %v9505
        %9537 = vmatpush1.msra.mxu0 %v9504
        %9538 = vmatprep.subr.mxu0 %v9507
        %9539 = vmatpush1.msra.mxu0 %v9506
        %9540 = vmatprep.subr.mxu0 %v9509
        %9541 = vmatpush1.msra.mxu0 %v9508
        %9542 = vmatprep.subr.mxu0 %v9511
        %9543 = vmatpush1.msra.mxu0 %v9510
        %9544 = vmatprep.subr.mxu0 %v9513
        %9545 = vmatpush1.msra.mxu0 %v9512
        %9546 = vmatprep.subr.mxu0 %v9515
        %9547 = vmatpush1.msra.mxu0 %v9514
        %9548 = vmatprep.subr.mxu0 %v9517
        %9549 = vmatpush1.msra.mxu0 %v9516
        %9550 = vmatprep.subr.mxu0 0.0
        %9551 = vmatpush1.msra.mxu0 0.0
        %9552 = vmatprep.subr.mxu0 0.0
        %9553 = vmatpush1.msra.mxu0 0.0
        %9554 = vmatprep.subr.mxu0 0.0
        %9555 = vmatpush1.msra.mxu0 0.0
        %9556 = vmatprep.subr.mxu0 0.0
        %9557 = vmatpush1.msra.mxu0 0.0
        %9558 = vmatprep.subr.mxu0 0.0
        %9559 = vmatpush1.msra.mxu0 0.0
        %9560 = vmatprep.subr.mxu0 0.0
        %9561 = vmatpush1.msra.mxu0 0.0
        %9562 = vmatprep.subr.mxu0 0.0
        %9563 = vmatpush1.msra.mxu0 0.0
        %9564 = vmatprep.subr.mxu0 0.0
        %9565 = vmatpush1.msra.mxu0 0.0
        %9566 = vmatprep.subr.mxu0 0.0
        %9567 = vmatpush1.msra.mxu0 0.0
        %9568 = vmatprep.subr.mxu0 0.0
        %9569 = vmatpush1.msra.mxu0 0.0
        %9570 = vmatprep.subr.mxu0 0.0
        %9571 = vmatpush1.msra.mxu0 0.0
        %9572 = vmatprep.subr.mxu0 0.0
        %9573 = vmatpush1.msra.mxu0 0.0
        %9574 = vmatprep.subr.mxu0 0.0
        %9575 = vmatpush1.msra.mxu0 0.0
        %9576 = vmatprep.subr.mxu0 0.0
        %9577 = vmatpush1.msra.mxu0 0.0
        %9578 = vmatprep.subr.mxu0 0.0
        %9579 = vmatpush1.msra.mxu0 0.0
        %9580 = vmatprep.subr.mxu0 0.0
        %9581 = vmatpush1.msra.mxu0 0.0
        %9582 = vmatprep.mubr.f32.mxu0 0.0
        %9583 = vmatmul.mubr.f32.gmra.mrb[0].mxu0 %v9484
        %v9584 = vpop.f32.mrb[0].mxu0
        %v9585 = vadd.f32 0.0, %v9584
        %v9586 = vpop.f32.mrb[0].mxu0
        %v9587 = vadd.f32 0.0, %v9586
        %9588 = vdwg.mxu0
        %v9589 = vadd.f32 %v9480, %v9585
        %v9590 = vadd.f32 %v9482, %v9587
        %v9591 = vld [vmem:[#allocation4 + $0x4] sm:$0xff]
        %s9592 = scalar_lea.vmem %s10, 768
        %v9593 = vld [vmem:[%s9592] sm:$0xff]
        %v9594 = vld [vmem:[%s9592 + $0x8] sm:$0xff]
        %v9595 = vld [vmem:[%s9592 + $0x10] sm:$0xff]
        %v9596 = vld [vmem:[%s9592 + $0x18] sm:$0xff]
        %v9597 = vld [vmem:[%s9592 + $0x20] sm:$0xff]
        %v9598 = vld [vmem:[%s9592 + $0x28] sm:$0xff]
        %v9599 = vld [vmem:[%s9592 + $0x30] sm:$0xff]
        %v9600 = vld [vmem:[%s9592 + $0x38] sm:$0xff]
        %v9601 = vld [vmem:[%s9592 + $0x40] sm:$0xff]
        %v9602 = vld [vmem:[%s9592 + $0x48] sm:$0xff]
        %v9603 = vld [vmem:[%s9592 + $0x50] sm:$0xff]
        %v9604 = vld [vmem:[%s9592 + $0x58] sm:$0xff]
        %v9605 = vld [vmem:[%s9592 + $0x60] sm:$0xff]
        %v9606 = vld [vmem:[%s9592 + $0x68] sm:$0xff]
        %v9607 = vld [vmem:[%s9592 + $0x70] sm:$0xff]
        %v9608 = vld [vmem:[%s9592 + $0x78] sm:$0xff]
        %v9609 = vld [vmem:[%s9592 + $0x80] sm:$0xff]
        %v9610 = vld [vmem:[%s9592 + $0x88] sm:$0xff]
        %v9611 = vld [vmem:[%s9592 + $0x90] sm:$0xff]
        %v9612 = vld [vmem:[%s9592 + $0x98] sm:$0xff]
        %v9613 = vld [vmem:[%s9592 + $0xa0] sm:$0xff]
        %v9614 = vld [vmem:[%s9592 + $0xa8] sm:$0xff]
        %v9615 = vld [vmem:[%s9592 + $0xb0] sm:$0xff]
        %v9616 = vld [vmem:[%s9592 + $0xb8] sm:$0xff]
        %v9617 = vld [vmem:[%s9592 + $0xc0] sm:$0xff]
        %v9618 = vld [vmem:[%s9592 + $0xc8] sm:$0xff]
        %v9619 = vld [vmem:[%s9592 + $0xd0] sm:$0xff]
        %v9620 = vld [vmem:[%s9592 + $0xd8] sm:$0xff]
        %v9621 = vld [vmem:[%s9592 + $0xe0] sm:$0xff]
        %v9622 = vld [vmem:[%s9592 + $0xe8] sm:$0xff]
        %v9623 = vld [vmem:[%s9592 + $0xf0] sm:$0xff]
        %v9624 = vld [vmem:[%s9592 + $0xf8] sm:$0xff]
        %9625 = vmatprep.subr.mxu0 %v9594
        %9626 = vmatpush1.msra.mxu0 %v9593
        %9627 = vmatprep.subr.mxu0 %v9596
        %9628 = vmatpush1.msra.mxu0 %v9595
        %9629 = vmatprep.subr.mxu0 %v9598
        %9630 = vmatpush1.msra.mxu0 %v9597
        %9631 = vmatprep.subr.mxu0 %v9600
        %9632 = vmatpush1.msra.mxu0 %v9599
        %9633 = vmatprep.subr.mxu0 %v9602
        %9634 = vmatpush1.msra.mxu0 %v9601
        %9635 = vmatprep.subr.mxu0 %v9604
        %9636 = vmatpush1.msra.mxu0 %v9603
        %9637 = vmatprep.subr.mxu0 %v9606
        %9638 = vmatpush1.msra.mxu0 %v9605
        %9639 = vmatprep.subr.mxu0 %v9608
        %9640 = vmatpush1.msra.mxu0 %v9607
        %9641 = vmatprep.subr.mxu0 %v9610
        %9642 = vmatpush1.msra.mxu0 %v9609
        %9643 = vmatprep.subr.mxu0 %v9612
        %9644 = vmatpush1.msra.mxu0 %v9611
        %9645 = vmatprep.subr.mxu0 %v9614
        %9646 = vmatpush1.msra.mxu0 %v9613
        %9647 = vmatprep.subr.mxu0 %v9616
        %9648 = vmatpush1.msra.mxu0 %v9615
        %9649 = vmatprep.subr.mxu0 %v9618
        %9650 = vmatpush1.msra.mxu0 %v9617
        %9651 = vmatprep.subr.mxu0 %v9620
        %9652 = vmatpush1.msra.mxu0 %v9619
        %9653 = vmatprep.subr.mxu0 %v9622
        %9654 = vmatpush1.msra.mxu0 %v9621
        %9655 = vmatprep.subr.mxu0 %v9624
        %9656 = vmatpush1.msra.mxu0 %v9623
        %9657 = vmatprep.subr.mxu0 0.0
        %9658 = vmatpush1.msra.mxu0 0.0
        %9659 = vmatprep.subr.mxu0 0.0
        %9660 = vmatpush1.msra.mxu0 0.0
        %9661 = vmatprep.subr.mxu0 0.0
        %9662 = vmatpush1.msra.mxu0 0.0
        %9663 = vmatprep.subr.mxu0 0.0
        %9664 = vmatpush1.msra.mxu0 0.0
        %9665 = vmatprep.subr.mxu0 0.0
        %9666 = vmatpush1.msra.mxu0 0.0
        %9667 = vmatprep.subr.mxu0 0.0
        %9668 = vmatpush1.msra.mxu0 0.0
        %9669 = vmatprep.subr.mxu0 0.0
        %9670 = vmatpush1.msra.mxu0 0.0
        %9671 = vmatprep.subr.mxu0 0.0
        %9672 = vmatpush1.msra.mxu0 0.0
        %9673 = vmatprep.subr.mxu0 0.0
        %9674 = vmatpush1.msra.mxu0 0.0
        %9675 = vmatprep.subr.mxu0 0.0
        %9676 = vmatpush1.msra.mxu0 0.0
        %9677 = vmatprep.subr.mxu0 0.0
        %9678 = vmatpush1.msra.mxu0 0.0
        %9679 = vmatprep.subr.mxu0 0.0
        %9680 = vmatpush1.msra.mxu0 0.0
        %9681 = vmatprep.subr.mxu0 0.0
        %9682 = vmatpush1.msra.mxu0 0.0
        %9683 = vmatprep.subr.mxu0 0.0
        %9684 = vmatpush1.msra.mxu0 0.0
        %9685 = vmatprep.subr.mxu0 0.0
        %9686 = vmatpush1.msra.mxu0 0.0
        %9687 = vmatprep.subr.mxu0 0.0
        %9688 = vmatpush1.msra.mxu0 0.0
        %9689 = vmatprep.mubr.f32.mxu0 0.0
        %9690 = vmatmul.mubr.f32.gmra.mrb[0].mxu0 %v9591
        %v9691 = vpop.f32.mrb[0].mxu0
        %v9692 = vadd.f32 0.0, %v9691
        %v9693 = vpop.f32.mrb[0].mxu0
        %v9694 = vadd.f32 0.0, %v9693
        %9695 = vdwg.mxu0
        %v9696 = vadd.f32 %v9589, %v9692
        %v9697 = vadd.f32 %v9590, %v9694
        %v9698 = vld [vmem:[#allocation4 + $0x5] sm:$0xff]
        %s9699 = scalar_lea.vmem %s10, 1024
        %v9700 = vld [vmem:[%s9699] sm:$0xff]
        %v9701 = vld [vmem:[%s9699 + $0x8] sm:$0xff]
        %v9702 = vld [vmem:[%s9699 + $0x10] sm:$0xff]
        %v9703 = vld [vmem:[%s9699 + $0x18] sm:$0xff]
        %v9704 = vld [vmem:[%s9699 + $0x20] sm:$0xff]
        %v9705 = vld [vmem:[%s9699 + $0x28] sm:$0xff]
        %v9706 = vld [vmem:[%s9699 + $0x30] sm:$0xff]
        %v9707 = vld [vmem:[%s9699 + $0x38] sm:$0xff]
        %v9708 = vld [vmem:[%s9699 + $0x40] sm:$0xff]
        %v9709 = vld [vmem:[%s9699 + $0x48] sm:$0xff]
        %v9710 = vld [vmem:[%s9699 + $0x50] sm:$0xff]
        %v9711 = vld [vmem:[%s9699 + $0x58] sm:$0xff]
        %v9712 = vld [vmem:[%s9699 + $0x60] sm:$0xff]
        %v9713 = vld [vmem:[%s9699 + $0x68] sm:$0xff]
        %v9714 = vld [vmem:[%s9699 + $0x70] sm:$0xff]
        %v9715 = vld [vmem:[%s9699 + $0x78] sm:$0xff]
        %v9716 = vld [vmem:[%s9699 + $0x80] sm:$0xff]
        %v9717 = vld [vmem:[%s9699 + $0x88] sm:$0xff]
        %v9718 = vld [vmem:[%s9699 + $0x90] sm:$0xff]
        %v9719 = vld [vmem:[%s9699 + $0x98] sm:$0xff]
        %v9720 = vld [vmem:[%s9699 + $0xa0] sm:$0xff]
        %v9721 = vld [vmem:[%s9699 + $0xa8] sm:$0xff]
        %v9722 = vld [vmem:[%s9699 + $0xb0] sm:$0xff]
        %v9723 = vld [vmem:[%s9699 + $0xb8] sm:$0xff]
        %v9724 = vld [vmem:[%s9699 + $0xc0] sm:$0xff]
        %v9725 = vld [vmem:[%s9699 + $0xc8] sm:$0xff]
        %v9726 = vld [vmem:[%s9699 + $0xd0] sm:$0xff]
        %v9727 = vld [vmem:[%s9699 + $0xd8] sm:$0xff]
        %v9728 = vld [vmem:[%s9699 + $0xe0] sm:$0xff]
        %v9729 = vld [vmem:[%s9699 + $0xe8] sm:$0xff]
        %v9730 = vld [vmem:[%s9699 + $0xf0] sm:$0xff]
        %v9731 = vld [vmem:[%s9699 + $0xf8] sm:$0xff]
        %9732 = vmatprep.subr.mxu0 %v9701
        %9733 = vmatpush1.msra.mxu0 %v9700
        %9734 = vmatprep.subr.mxu0 %v9703
        %9735 = vmatpush1.msra.mxu0 %v9702
        %9736 = vmatprep.subr.mxu0 %v9705
        %9737 = vmatpush1.msra.mxu0 %v9704
        %9738 = vmatprep.subr.mxu0 %v9707
        %9739 = vmatpush1.msra.mxu0 %v9706
        %9740 = vmatprep.subr.mxu0 %v9709
        %9741 = vmatpush1.msra.mxu0 %v9708
        %9742 = vmatprep.subr.mxu0 %v9711
        %9743 = vmatpush1.msra.mxu0 %v9710
        %9744 = vmatprep.subr.mxu0 %v9713
        %9745 = vmatpush1.msra.mxu0 %v9712
        %9746 = vmatprep.subr.mxu0 %v9715
        %9747 = vmatpush1.msra.mxu0 %v9714
        %9748 = vmatprep.subr.mxu0 %v9717
        %9749 = vmatpush1.msra.mxu0 %v9716
        %9750 = vmatprep.subr.mxu0 %v9719
        %9751 = vmatpush1.msra.mxu0 %v9718
        %9752 = vmatprep.subr.mxu0 %v9721
        %9753 = vmatpush1.msra.mxu0 %v9720
        %9754 = vmatprep.subr.mxu0 %v9723
        %9755 = vmatpush1.msra.mxu0 %v9722
        %9756 = vmatprep.subr.mxu0 %v9725
        %9757 = vmatpush1.msra.mxu0 %v9724
        %9758 = vmatprep.subr.mxu0 %v9727
        %9759 = vmatpush1.msra.mxu0 %v9726
        %9760 = vmatprep.subr.mxu0 %v9729
        %9761 = vmatpush1.msra.mxu0 %v9728
        %9762 = vmatprep.subr.mxu0 %v9731
        %9763 = vmatpush1.msra.mxu0 %v9730
        %9764 = vmatprep.subr.mxu0 0.0
        %9765 = vmatpush1.msra.mxu0 0.0
        %9766 = vmatprep.subr.mxu0 0.0
        %9767 = vmatpush1.msra.mxu0 0.0
        %9768 = vmatprep.subr.mxu0 0.0
        %9769 = vmatpush1.msra.mxu0 0.0
        %9770 = vmatprep.subr.mxu0 0.0
        %9771 = vmatpush1.msra.mxu0 0.0
        %9772 = vmatprep.subr.mxu0 0.0
        %9773 = vmatpush1.msra.mxu0 0.0
        %9774 = vmatprep.subr.mxu0 0.0
        %9775 = vmatpush1.msra.mxu0 0.0
        %9776 = vmatprep.subr.mxu0 0.0
        %9777 = vmatpush1.msra.mxu0 0.0
        %9778 = vmatprep.subr.mxu0 0.0
        %9779 = vmatpush1.msra.mxu0 0.0
        %9780 = vmatprep.subr.mxu0 0.0
        %9781 = vmatpush1.msra.mxu0 0.0
        %9782 = vmatprep.subr.mxu0 0.0
        %9783 = vmatpush1.msra.mxu0 0.0
        %9784 = vmatprep.subr.mxu0 0.0
        %9785 = vmatpush1.msra.mxu0 0.0
        %9786 = vmatprep.subr.mxu0 0.0
        %9787 = vmatpush1.msra.mxu0 0.0
        %9788 = vmatprep.subr.mxu0 0.0
        %9789 = vmatpush1.msra.mxu0 0.0
        %9790 = vmatprep.subr.mxu0 0.0
        %9791 = vmatpush1.msra.mxu0 0.0
        %9792 = vmatprep.subr.mxu0 0.0
        %9793 = vmatpush1.msra.mxu0 0.0
        %9794 = vmatprep.subr.mxu0 0.0
        %9795 = vmatpush1.msra.mxu0 0.0
        %9796 = vmatprep.mubr.f32.mxu0 0.0
        %9797 = vmatmul.mubr.f32.gmra.mrb[0].mxu0 %v9698
        %v9798 = vpop.f32.mrb[0].mxu0
        %v9799 = vadd.f32 0.0, %v9798
        %v9800 = vpop.f32.mrb[0].mxu0
        %v9801 = vadd.f32 0.0, %v9800
        %9802 = vdwg.mxu0
        %v9803 = vadd.f32 %v9696, %v9799
        %v9804 = vadd.f32 %v9697, %v9801
        %v9805 = vld [vmem:[#allocation4 + $0x6] sm:$0xff]
        %s9806 = scalar_lea.vmem %s10, 1280
        %v9807 = vld [vmem:[%s9806] sm:$0xff]
        %v9808 = vld [vmem:[%s9806 + $0x8] sm:$0xff]
        %v9809 = vld [vmem:[%s9806 + $0x10] sm:$0xff]
        %v9810 = vld [vmem:[%s9806 + $0x18] sm:$0xff]
        %v9811 = vld [vmem:[%s9806 + $0x20] sm:$0xff]
        %v9812 = vld [vmem:[%s9806 + $0x28] sm:$0xff]
        %v9813 = vld [vmem:[%s9806 + $0x30] sm:$0xff]
        %v9814 = vld [vmem:[%s9806 + $0x38] sm:$0xff]
        %v9815 = vld [vmem:[%s9806 + $0x40] sm:$0xff]
        %v9816 = vld [vmem:[%s9806 + $0x48] sm:$0xff]
        %v9817 = vld [vmem:[%s9806 + $0x50] sm:$0xff]
        %v9818 = vld [vmem:[%s9806 + $0x58] sm:$0xff]
        %v9819 = vld [vmem:[%s9806 + $0x60] sm:$0xff]
        %v9820 = vld [vmem:[%s9806 + $0x68] sm:$0xff]
        %v9821 = vld [vmem:[%s9806 + $0x70] sm:$0xff]
        %v9822 = vld [vmem:[%s9806 + $0x78] sm:$0xff]
        %v9823 = vld [vmem:[%s9806 + $0x80] sm:$0xff]
        %v9824 = vld [vmem:[%s9806 + $0x88] sm:$0xff]
        %v9825 = vld [vmem:[%s9806 + $0x90] sm:$0xff]
        %v9826 = vld [vmem:[%s9806 + $0x98] sm:$0xff]
        %v9827 = vld [vmem:[%s9806 + $0xa0] sm:$0xff]
        %v9828 = vld [vmem:[%s9806 + $0xa8] sm:$0xff]
        %v9829 = vld [vmem:[%s9806 + $0xb0] sm:$0xff]
        %v9830 = vld [vmem:[%s9806 + $0xb8] sm:$0xff]
        %v9831 = vld [vmem:[%s9806 + $0xc0] sm:$0xff]
        %v9832 = vld [vmem:[%s9806 + $0xc8] sm:$0xff]
        %v9833 = vld [vmem:[%s9806 + $0xd0] sm:$0xff]
        %v9834 = vld [vmem:[%s9806 + $0xd8] sm:$0xff]
        %v9835 = vld [vmem:[%s9806 + $0xe0] sm:$0xff]
        %v9836 = vld [vmem:[%s9806 + $0xe8] sm:$0xff]
        %v9837 = vld [vmem:[%s9806 + $0xf0] sm:$0xff]
        %v9838 = vld [vmem:[%s9806 + $0xf8] sm:$0xff]
        %9839 = vmatprep.subr.mxu0 %v9808
        %9840 = vmatpush1.msra.mxu0 %v9807
        %9841 = vmatprep.subr.mxu0 %v9810
        %9842 = vmatpush1.msra.mxu0 %v9809
        %9843 = vmatprep.subr.mxu0 %v9812
        %9844 = vmatpush1.msra.mxu0 %v9811
        %9845 = vmatprep.subr.mxu0 %v9814
        %9846 = vmatpush1.msra.mxu0 %v9813
        %9847 = vmatprep.subr.mxu0 %v9816
        %9848 = vmatpush1.msra.mxu0 %v9815
        %9849 = vmatprep.subr.mxu0 %v9818
        %9850 = vmatpush1.msra.mxu0 %v9817
        %9851 = vmatprep.subr.mxu0 %v9820
        %9852 = vmatpush1.msra.mxu0 %v9819
        %9853 = vmatprep.subr.mxu0 %v9822
        %9854 = vmatpush1.msra.mxu0 %v9821
        %9855 = vmatprep.subr.mxu0 %v9824
        %9856 = vmatpush1.msra.mxu0 %v9823
        %9857 = vmatprep.subr.mxu0 %v9826
        %9858 = vmatpush1.msra.mxu0 %v9825
        %9859 = vmatprep.subr.mxu0 %v9828
        %9860 = vmatpush1.msra.mxu0 %v9827
        %9861 = vmatprep.subr.mxu0 %v9830
        %9862 = vmatpush1.msra.mxu0 %v9829
        %9863 = vmatprep.subr.mxu0 %v9832
        %9864 = vmatpush1.msra.mxu0 %v9831
        %9865 = vmatprep.subr.mxu0 %v9834
        %9866 = vmatpush1.msra.mxu0 %v9833
        %9867 = vmatprep.subr.mxu0 %v9836
        %9868 = vmatpush1.msra.mxu0 %v9835
        %9869 = vmatprep.subr.mxu0 %v9838
        %9870 = vmatpush1.msra.mxu0 %v9837
        %9871 = vmatprep.subr.mxu0 0.0
        %9872 = vmatpush1.msra.mxu0 0.0
        %9873 = vmatprep.subr.mxu0 0.0
        %9874 = vmatpush1.msra.mxu0 0.0
        %9875 = vmatprep.subr.mxu0 0.0
        %9876 = vmatpush1.msra.mxu0 0.0
        %9877 = vmatprep.subr.mxu0 0.0
        %9878 = vmatpush1.msra.mxu0 0.0
        %9879 = vmatprep.subr.mxu0 0.0
        %9880 = vmatpush1.msra.mxu0 0.0
        %9881 = vmatprep.subr.mxu0 0.0
        %9882 = vmatpush1.msra.mxu0 0.0
        %9883 = vmatprep.subr.mxu0 0.0
        %9884 = vmatpush1.msra.mxu0 0.0
        %9885 = vmatprep.subr.mxu0 0.0
        %9886 = vmatpush1.msra.mxu0 0.0
        %9887 = vmatprep.subr.mxu0 0.0
        %9888 = vmatpush1.msra.mxu0 0.0
        %9889 = vmatprep.subr.mxu0 0.0
        %9890 = vmatpush1.msra.mxu0 0.0
        %9891 = vmatprep.subr.mxu0 0.0
        %9892 = vmatpush1.msra.mxu0 0.0
        %9893 = vmatprep.subr.mxu0 0.0
        %9894 = vmatpush1.msra.mxu0 0.0
        %9895 = vmatprep.subr.mxu0 0.0
        %9896 = vmatpush1.msra.mxu0 0.0
        %9897 = vmatprep.subr.mxu0 0.0
        %9898 = vmatpush1.msra.mxu0 0.0
        %9899 = vmatprep.subr.mxu0 0.0
        %9900 = vmatpush1.msra.mxu0 0.0
        %9901 = vmatprep.subr.mxu0 0.0
        %9902 = vmatpush1.msra.mxu0 0.0
        %9903 = vmatprep.mubr.f32.mxu0 0.0
        %9904 = vmatmul.mubr.f32.gmra.mrb[0].mxu0 %v9805
        %v9905 = vpop.f32.mrb[0].mxu0
        %v9906 = vadd.f32 0.0, %v9905
        %v9907 = vpop.f32.mrb[0].mxu0
        %v9908 = vadd.f32 0.0, %v9907
        %9909 = vdwg.mxu0
        %v9910 = vadd.f32 %v9803, %v9906
        %v9911 = vadd.f32 %v9804, %v9908
        %v9912 = vld [vmem:[#allocation4 + $0x8] sm:$0xff]
        %s9913 = scalar_lea.vmem %s10, 1536
        %v9914 = vld [vmem:[%s9913] sm:$0xff]
        %v9915 = vld [vmem:[%s9913 + $0x8] sm:$0xff]
        %v9916 = vld [vmem:[%s9913 + $0x10] sm:$0xff]
        %v9917 = vld [vmem:[%s9913 + $0x18] sm:$0xff]
        %v9918 = vld [vmem:[%s9913 + $0x20] sm:$0xff]
        %v9919 = vld [vmem:[%s9913 + $0x28] sm:$0xff]
        %v9920 = vld [vmem:[%s9913 + $0x30] sm:$0xff]
        %v9921 = vld [vmem:[%s9913 + $0x38] sm:$0xff]
        %v9922 = vld [vmem:[%s9913 + $0x40] sm:$0xff]
        %v9923 = vld [vmem:[%s9913 + $0x48] sm:$0xff]
        %v9924 = vld [vmem:[%s9913 + $0x50] sm:$0xff]
        %v9925 = vld [vmem:[%s9913 + $0x58] sm:$0xff]
        %v9926 = vld [vmem:[%s9913 + $0x60] sm:$0xff]
        %v9927 = vld [vmem:[%s9913 + $0x68] sm:$0xff]
        %v9928 = vld [vmem:[%s9913 + $0x70] sm:$0xff]
        %v9929 = vld [vmem:[%s9913 + $0x78] sm:$0xff]
        %v9930 = vld [vmem:[%s9913 + $0x80] sm:$0xff]
        %v9931 = vld [vmem:[%s9913 + $0x88] sm:$0xff]
        %v9932 = vld [vmem:[%s9913 + $0x90] sm:$0xff]
        %v9933 = vld [vmem:[%s9913 + $0x98] sm:$0xff]
        %v9934 = vld [vmem:[%s9913 + $0xa0] sm:$0xff]
        %v9935 = vld [vmem:[%s9913 + $0xa8] sm:$0xff]
        %v9936 = vld [vmem:[%s9913 + $0xb0] sm:$0xff]
        %v9937 = vld [vmem:[%s9913 + $0xb8] sm:$0xff]
        %v9938 = vld [vmem:[%s9913 + $0xc0] sm:$0xff]
        %v9939 = vld [vmem:[%s9913 + $0xc8] sm:$0xff]
        %v9940 = vld [vmem:[%s9913 + $0xd0] sm:$0xff]
        %v9941 = vld [vmem:[%s9913 + $0xd8] sm:$0xff]
        %v9942 = vld [vmem:[%s9913 + $0xe0] sm:$0xff]
        %v9943 = vld [vmem:[%s9913 + $0xe8] sm:$0xff]
        %v9944 = vld [vmem:[%s9913 + $0xf0] sm:$0xff]
        %v9945 = vld [vmem:[%s9913 + $0xf8] sm:$0xff]
        %9946 = vmatprep.subr.mxu0 %v9915
        %9947 = vmatpush1.msra.mxu0 %v9914
        %9948 = vmatprep.subr.mxu0 %v9917
        %9949 = vmatpush1.msra.mxu0 %v9916
        %9950 = vmatprep.subr.mxu0 %v9919
        %9951 = vmatpush1.msra.mxu0 %v9918
        %9952 = vmatprep.subr.mxu0 %v9921
        %9953 = vmatpush1.msra.mxu0 %v9920
        %9954 = vmatprep.subr.mxu0 %v9923
        %9955 = vmatpush1.msra.mxu0 %v9922
        %9956 = vmatprep.subr.mxu0 %v9925
        %9957 = vmatpush1.msra.mxu0 %v9924
        %9958 = vmatprep.subr.mxu0 %v9927
        %9959 = vmatpush1.msra.mxu0 %v9926
        %9960 = vmatprep.subr.mxu0 %v9929
        %9961 = vmatpush1.msra.mxu0 %v9928
        %9962 = vmatprep.subr.mxu0 %v9931
        %9963 = vmatpush1.msra.mxu0 %v9930
        %9964 = vmatprep.subr.mxu0 %v9933
        %9965 = vmatpush1.msra.mxu0 %v9932
        %9966 = vmatprep.subr.mxu0 %v9935
        %9967 = vmatpush1.msra.mxu0 %v9934
        %9968 = vmatprep.subr.mxu0 %v9937
        %9969 = vmatpush1.msra.mxu0 %v9936
        %9970 = vmatprep.subr.mxu0 %v9939
        %9971 = vmatpush1.msra.mxu0 %v9938
        %9972 = vmatprep.subr.mxu0 %v9941
        %9973 = vmatpush1.msra.mxu0 %v9940
        %9974 = vmatprep.subr.mxu0 %v9943
        %9975 = vmatpush1.msra.mxu0 %v9942
        %9976 = vmatprep.subr.mxu0 %v9945
        %9977 = vmatpush1.msra.mxu0 %v9944
        %9978 = vmatprep.subr.mxu0 0.0
        %9979 = vmatpush1.msra.mxu0 0.0
        %9980 = vmatprep.subr.mxu0 0.0
        %9981 = vmatpush1.msra.mxu0 0.0
        %9982 = vmatprep.subr.mxu0 0.0
        %9983 = vmatpush1.msra.mxu0 0.0
        %9984 = vmatprep.subr.mxu0 0.0
        %9985 = vmatpush1.msra.mxu0 0.0
        %9986 = vmatprep.subr.mxu0 0.0
        %9987 = vmatpush1.msra.mxu0 0.0
        %9988 = vmatprep.subr.mxu0 0.0
        %9989 = vmatpush1.msra.mxu0 0.0
        %9990 = vmatprep.subr.mxu0 0.0
        %9991 = vmatpush1.msra.mxu0 0.0
        %9992 = vmatprep.subr.mxu0 0.0
        %9993 = vmatpush1.msra.mxu0 0.0
        %9994 = vmatprep.subr.mxu0 0.0
        %9995 = vmatpush1.msra.mxu0 0.0
        %9996 = vmatprep.subr.mxu0 0.0
        %9997 = vmatpush1.msra.mxu0 0.0
        %9998 = vmatprep.subr.mxu0 0.0
        %9999 = vmatpush1.msra.mxu0 0.0
        %10000 = vmatprep.subr.mxu0 0.0
        %10001 = vmatpush1.msra.mxu0 0.0
        %10002 = vmatprep.subr.mxu0 0.0
        %10003 = vmatpush1.msra.mxu0 0.0
        %10004 = vmatprep.subr.mxu0 0.0
        %10005 = vmatpush1.msra.mxu0 0.0
        %10006 = vmatprep.subr.mxu0 0.0
        %10007 = vmatpush1.msra.mxu0 0.0
        %10008 = vmatprep.subr.mxu0 0.0
        %10009 = vmatpush1.msra.mxu0 0.0
        %10010 = vmatprep.mubr.f32.mxu0 0.0
        %10011 = vmatmul.mubr.f32.gmra.mrb[0].mxu0 %v9912
        %v10012 = vpop.f32.mrb[0].mxu0
        %v10013 = vadd.f32 0.0, %v10012
        %v10014 = vpop.f32.mrb[0].mxu0
        %v10015 = vadd.f32 0.0, %v10014
        %10016 = vdwg.mxu0
        %v10017 = vadd.f32 %v9910, %v10013
        %v10018 = vadd.f32 %v9911, %v10015
        %v10019 = vld [vmem:[#allocation4 + $0x9] sm:$0xff]
        %s10020 = scalar_lea.vmem %s10, 1792
        %v10021 = vld [vmem:[%s10020] sm:$0xff]
        %v10022 = vld [vmem:[%s10020 + $0x8] sm:$0xff]
        %v10023 = vld [vmem:[%s10020 + $0x10] sm:$0xff]
        %v10024 = vld [vmem:[%s10020 + $0x18] sm:$0xff]
        %v10025 = vld [vmem:[%s10020 + $0x20] sm:$0xff]
        %v10026 = vld [vmem:[%s10020 + $0x28] sm:$0xff]
        %v10027 = vld [vmem:[%s10020 + $0x30] sm:$0xff]
        %v10028 = vld [vmem:[%s10020 + $0x38] sm:$0xff]
        %v10029 = vld [vmem:[%s10020 + $0x40] sm:$0xff]
        %v10030 = vld [vmem:[%s10020 + $0x48] sm:$0xff]
        %v10031 = vld [vmem:[%s10020 + $0x50] sm:$0xff]
        %v10032 = vld [vmem:[%s10020 + $0x58] sm:$0xff]
        %v10033 = vld [vmem:[%s10020 + $0x60] sm:$0xff]
        %v10034 = vld [vmem:[%s10020 + $0x68] sm:$0xff]
        %v10035 = vld [vmem:[%s10020 + $0x70] sm:$0xff]
        %v10036 = vld [vmem:[%s10020 + $0x78] sm:$0xff]
        %v10037 = vld [vmem:[%s10020 + $0x80] sm:$0xff]
        %v10038 = vld [vmem:[%s10020 + $0x88] sm:$0xff]
        %v10039 = vld [vmem:[%s10020 + $0x90] sm:$0xff]
        %v10040 = vld [vmem:[%s10020 + $0x98] sm:$0xff]
        %v10041 = vld [vmem:[%s10020 + $0xa0] sm:$0xff]
        %v10042 = vld [vmem:[%s10020 + $0xa8] sm:$0xff]
        %v10043 = vld [vmem:[%s10020 + $0xb0] sm:$0xff]
        %v10044 = vld [vmem:[%s10020 + $0xb8] sm:$0xff]
        %v10045 = vld [vmem:[%s10020 + $0xc0] sm:$0xff]
        %v10046 = vld [vmem:[%s10020 + $0xc8] sm:$0xff]
        %v10047 = vld [vmem:[%s10020 + $0xd0] sm:$0xff]
        %v10048 = vld [vmem:[%s10020 + $0xd8] sm:$0xff]
        %v10049 = vld [vmem:[%s10020 + $0xe0] sm:$0xff]
        %v10050 = vld [vmem:[%s10020 + $0xe8] sm:$0xff]
        %v10051 = vld [vmem:[%s10020 + $0xf0] sm:$0xff]
        %v10052 = vld [vmem:[%s10020 + $0xf8] sm:$0xff]
        %10053 = vmatprep.subr.mxu0 %v10022
        %10054 = vmatpush1.msra.mxu0 %v10021
        %10055 = vmatprep.subr.mxu0 %v10024
        %10056 = vmatpush1.msra.mxu0 %v10023
        %10057 = vmatprep.subr.mxu0 %v10026
        %10058 = vmatpush1.msra.mxu0 %v10025
        %10059 = vmatprep.subr.mxu0 %v10028
        %10060 = vmatpush1.msra.mxu0 %v10027
        %10061 = vmatprep.subr.mxu0 %v10030
        %10062 = vmatpush1.msra.mxu0 %v10029
        %10063 = vmatprep.subr.mxu0 %v10032
        %10064 = vmatpush1.msra.mxu0 %v10031
        %10065 = vmatprep.subr.mxu0 %v10034
        %10066 = vmatpush1.msra.mxu0 %v10033
        %10067 = vmatprep.subr.mxu0 %v10036
        %10068 = vmatpush1.msra.mxu0 %v10035
        %10069 = vmatprep.subr.mxu0 %v10038
        %10070 = vmatpush1.msra.mxu0 %v10037
        %10071 = vmatprep.subr.mxu0 %v10040
        %10072 = vmatpush1.msra.mxu0 %v10039
        %10073 = vmatprep.subr.mxu0 %v10042
        %10074 = vmatpush1.msra.mxu0 %v10041
        %10075 = vmatprep.subr.mxu0 %v10044
        %10076 = vmatpush1.msra.mxu0 %v10043
        %10077 = vmatprep.subr.mxu0 %v10046
        %10078 = vmatpush1.msra.mxu0 %v10045
        %10079 = vmatprep.subr.mxu0 %v10048
        %10080 = vmatpush1.msra.mxu0 %v10047
        %10081 = vmatprep.subr.mxu0 %v10050
        %10082 = vmatpush1.msra.mxu0 %v10049
        %10083 = vmatprep.subr.mxu0 %v10052
        %10084 = vmatpush1.msra.mxu0 %v10051
        %10085 = vmatprep.subr.mxu0 0.0
        %10086 = vmatpush1.msra.mxu0 0.0
        %10087 = vmatprep.subr.mxu0 0.0
        %10088 = vmatpush1.msra.mxu0 0.0
        %10089 = vmatprep.subr.mxu0 0.0
        %10090 = vmatpush1.msra.mxu0 0.0
        %10091 = vmatprep.subr.mxu0 0.0
        %10092 = vmatpush1.msra.mxu0 0.0
        %10093 = vmatprep.subr.mxu0 0.0
        %10094 = vmatpush1.msra.mxu0 0.0
        %10095 = vmatprep.subr.mxu0 0.0
        %10096 = vmatpush1.msra.mxu0 0.0
        %10097 = vmatprep.subr.mxu0 0.0
        %10098 = vmatpush1.msra.mxu0 0.0
        %10099 = vmatprep.subr.mxu0 0.0
        %10100 = vmatpush1.msra.mxu0 0.0
        %10101 = vmatprep.subr.mxu0 0.0
        %10102 = vmatpush1.msra.mxu0 0.0
        %10103 = vmatprep.subr.mxu0 0.0
        %10104 = vmatpush1.msra.mxu0 0.0
        %10105 = vmatprep.subr.mxu0 0.0
        %10106 = vmatpush1.msra.mxu0 0.0
        %10107 = vmatprep.subr.mxu0 0.0
        %10108 = vmatpush1.msra.mxu0 0.0
        %10109 = vmatprep.subr.mxu0 0.0
        %10110 = vmatpush1.msra.mxu0 0.0
        %10111 = vmatprep.subr.mxu0 0.0
        %10112 = vmatpush1.msra.mxu0 0.0
        %10113 = vmatprep.subr.mxu0 0.0
        %10114 = vmatpush1.msra.mxu0 0.0
        %10115 = vmatprep.subr.mxu0 0.0
        %10116 = vmatpush1.msra.mxu0 0.0
        %10117 = vmatprep.mubr.f32.mxu0 0.0
        %10118 = vmatmul.mubr.f32.gmra.mrb[0].mxu0 %v10019
        %v10119 = vpop.f32.mrb[0].mxu0
        %v10120 = vadd.f32 0.0, %v10119
        %v10121 = vpop.f32.mrb[0].mxu0
        %v10122 = vadd.f32 0.0, %v10121
        %10123 = vdwg.mxu0
        %v10124 = vadd.f32 %v10017, %v10120
        %v10125 = vadd.f32 %v10018, %v10122
        %v10126 = vld [vmem:[#allocation4 + $0xa] sm:$0xff]
        %s10127 = scalar_lea.vmem %s10, 2048
        %v10128 = vld [vmem:[%s10127] sm:$0xff]
        %v10129 = vld [vmem:[%s10127 + $0x8] sm:$0xff]
        %v10130 = vld [vmem:[%s10127 + $0x10] sm:$0xff]
        %v10131 = vld [vmem:[%s10127 + $0x18] sm:$0xff]
        %v10132 = vld [vmem:[%s10127 + $0x20] sm:$0xff]
        %v10133 = vld [vmem:[%s10127 + $0x28] sm:$0xff]
        %v10134 = vld [vmem:[%s10127 + $0x30] sm:$0xff]
        %v10135 = vld [vmem:[%s10127 + $0x38] sm:$0xff]
        %v10136 = vld [vmem:[%s10127 + $0x40] sm:$0xff]
        %v10137 = vld [vmem:[%s10127 + $0x48] sm:$0xff]
        %v10138 = vld [vmem:[%s10127 + $0x50] sm:$0xff]
        %v10139 = vld [vmem:[%s10127 + $0x58] sm:$0xff]
        %v10140 = vld [vmem:[%s10127 + $0x60] sm:$0xff]
        %v10141 = vld [vmem:[%s10127 + $0x68] sm:$0xff]
        %v10142 = vld [vmem:[%s10127 + $0x70] sm:$0xff]
        %v10143 = vld [vmem:[%s10127 + $0x78] sm:$0xff]
        %v10144 = vld [vmem:[%s10127 + $0x80] sm:$0xff]
        %v10145 = vld [vmem:[%s10127 + $0x88] sm:$0xff]
        %v10146 = vld [vmem:[%s10127 + $0x90] sm:$0xff]
        %v10147 = vld [vmem:[%s10127 + $0x98] sm:$0xff]
        %v10148 = vld [vmem:[%s10127 + $0xa0] sm:$0xff]
        %v10149 = vld [vmem:[%s10127 + $0xa8] sm:$0xff]
        %v10150 = vld [vmem:[%s10127 + $0xb0] sm:$0xff]
        %v10151 = vld [vmem:[%s10127 + $0xb8] sm:$0xff]
        %v10152 = vld [vmem:[%s10127 + $0xc0] sm:$0xff]
        %v10153 = vld [vmem:[%s10127 + $0xc8] sm:$0xff]
        %v10154 = vld [vmem:[%s10127 + $0xd0] sm:$0xff]
        %v10155 = vld [vmem:[%s10127 + $0xd8] sm:$0xff]
        %v10156 = vld [vmem:[%s10127 + $0xe0] sm:$0xff]
        %v10157 = vld [vmem:[%s10127 + $0xe8] sm:$0xff]
        %v10158 = vld [vmem:[%s10127 + $0xf0] sm:$0xff]
        %v10159 = vld [vmem:[%s10127 + $0xf8] sm:$0xff]
        %10160 = vmatprep.subr.mxu0 %v10129
        %10161 = vmatpush1.msra.mxu0 %v10128
        %10162 = vmatprep.subr.mxu0 %v10131
        %10163 = vmatpush1.msra.mxu0 %v10130
        %10164 = vmatprep.subr.mxu0 %v10133
        %10165 = vmatpush1.msra.mxu0 %v10132
        %10166 = vmatprep.subr.mxu0 %v10135
        %10167 = vmatpush1.msra.mxu0 %v10134
        %10168 = vmatprep.subr.mxu0 %v10137
        %10169 = vmatpush1.msra.mxu0 %v10136
        %10170 = vmatprep.subr.mxu0 %v10139
        %10171 = vmatpush1.msra.mxu0 %v10138
        %10172 = vmatprep.subr.mxu0 %v10141
        %10173 = vmatpush1.msra.mxu0 %v10140
        %10174 = vmatprep.subr.mxu0 %v10143
        %10175 = vmatpush1.msra.mxu0 %v10142
        %10176 = vmatprep.subr.mxu0 %v10145
        %10177 = vmatpush1.msra.mxu0 %v10144
        %10178 = vmatprep.subr.mxu0 %v10147
        %10179 = vmatpush1.msra.mxu0 %v10146
        %10180 = vmatprep.subr.mxu0 %v10149
        %10181 = vmatpush1.msra.mxu0 %v10148
        %10182 = vmatprep.subr.mxu0 %v10151
        %10183 = vmatpush1.msra.mxu0 %v10150
        %10184 = vmatprep.subr.mxu0 %v10153
        %10185 = vmatpush1.msra.mxu0 %v10152
        %10186 = vmatprep.subr.mxu0 %v10155
        %10187 = vmatpush1.msra.mxu0 %v10154
        %10188 = vmatprep.subr.mxu0 %v10157
        %10189 = vmatpush1.msra.mxu0 %v10156
        %10190 = vmatprep.subr.mxu0 %v10159
        %10191 = vmatpush1.msra.mxu0 %v10158
        %10192 = vmatprep.subr.mxu0 0.0
        %10193 = vmatpush1.msra.mxu0 0.0
        %10194 = vmatprep.subr.mxu0 0.0
        %10195 = vmatpush1.msra.mxu0 0.0
        %10196 = vmatprep.subr.mxu0 0.0
        %10197 = vmatpush1.msra.mxu0 0.0
        %10198 = vmatprep.subr.mxu0 0.0
        %10199 = vmatpush1.msra.mxu0 0.0
        %10200 = vmatprep.subr.mxu0 0.0
        %10201 = vmatpush1.msra.mxu0 0.0
        %10202 = vmatprep.subr.mxu0 0.0
        %10203 = vmatpush1.msra.mxu0 0.0
        %10204 = vmatprep.subr.mxu0 0.0
        %10205 = vmatpush1.msra.mxu0 0.0
        %10206 = vmatprep.subr.mxu0 0.0
        %10207 = vmatpush1.msra.mxu0 0.0
        %10208 = vmatprep.subr.mxu0 0.0
        %10209 = vmatpush1.msra.mxu0 0.0
        %10210 = vmatprep.subr.mxu0 0.0
        %10211 = vmatpush1.msra.mxu0 0.0
        %10212 = vmatprep.subr.mxu0 0.0
        %10213 = vmatpush1.msra.mxu0 0.0
        %10214 = vmatprep.subr.mxu0 0.0
        %10215 = vmatpush1.msra.mxu0 0.0
        %10216 = vmatprep.subr.mxu0 0.0
        %10217 = vmatpush1.msra.mxu0 0.0
        %10218 = vmatprep.subr.mxu0 0.0
        %10219 = vmatpush1.msra.mxu0 0.0
        %10220 = vmatprep.subr.mxu0 0.0
        %10221 = vmatpush1.msra.mxu0 0.0
        %10222 = vmatprep.subr.mxu0 0.0
        %10223 = vmatpush1.msra.mxu0 0.0
        %10224 = vmatprep.mubr.f32.mxu0 0.0
        %10225 = vmatmul.mubr.f32.gmra.mrb[0].mxu0 %v10126
        %v10226 = vpop.f32.mrb[0].mxu0
        %v10227 = vadd.f32 0.0, %v10226
        %v10228 = vpop.f32.mrb[0].mxu0
        %v10229 = vadd.f32 0.0, %v10228
        %10230 = vdwg.mxu0
        %v10231 = vadd.f32 %v10124, %v10227
        %v10232 = vadd.f32 %v10125, %v10229
        %v10233 = vld [vmem:[%s11] sm:$0x3]
        %v10235 = vlaneseq
        %v10236 = vshrl.u32 %v10235, 7
        %v10237 = vsub.s32 0, %v10236
        %v10238 = vrot.slane %v10233, %v10237
        %v10239 = vlaneseq
        %v10240 = vshrl.u32 %v10239, 7
        %v10241 = vsub.s32 1, %v10240
        %v10242 = vrot.slane %v10233, %v10241
        %v10245 = vadd.f32 %v10231, %v10238
        %v10246 = vadd.f32 %v10232, %v10242
        %v10247 = vmax.f32 %v10245, 0.0
        %v10248 = vmax.f32 %v10246, 0.0
        %v10249 = vld [vmem:[%s12] sm:$0x1]
        %vm10250 = vcmask 64512
        %v10252 = vsel %vm10250, %v10249, 0
        %10254 = vmatprep.subr.mxu0 %v10248
        %10255 = vmatpush1.msra.mxu0 %v10247
        %10256 = vmatprep.subr.mxu0 0.0
        %10257 = vmatpush1.msra.mxu0 0.0
        %10258 = vmatprep.subr.mxu0 0.0
        %10259 = vmatpush1.msra.mxu0 0.0
        %10260 = vmatprep.subr.mxu0 0.0
        %10261 = vmatpush1.msra.mxu0 0.0
        %10262 = vmatprep.subr.mxu0 0.0
        %10263 = vmatpush1.msra.mxu0 0.0
        %10264 = vmatprep.subr.mxu0 0.0
        %10265 = vmatpush1.msra.mxu0 0.0
        %10266 = vmatprep.subr.mxu0 0.0
        %10267 = vmatpush1.msra.mxu0 0.0
        %10268 = vmatprep.subr.mxu0 0.0
        %10269 = vmatpush1.msra.mxu0 0.0
        %10270 = vmatprep.subr.mxu0 0.0
        %10271 = vmatpush1.msra.mxu0 0.0
        %10272 = vmatprep.subr.mxu0 0.0
        %10273 = vmatpush1.msra.mxu0 0.0
        %10274 = vmatprep.subr.mxu0 0.0
        %10275 = vmatpush1.msra.mxu0 0.0
        %10276 = vmatprep.subr.mxu0 0.0
        %10277 = vmatpush1.msra.mxu0 0.0
        %10278 = vmatprep.subr.mxu0 0.0
        %10279 = vmatpush1.msra.mxu0 0.0
        %10280 = vmatprep.subr.mxu0 0.0
        %10281 = vmatpush1.msra.mxu0 0.0
        %10282 = vmatprep.subr.mxu0 0.0
        %10283 = vmatpush1.msra.mxu0 0.0
        %10284 = vmatprep.subr.mxu0 0.0
        %10285 = vmatpush1.msra.mxu0 0.0
        %10286 = vmatprep.subr.mxu0 0.0
        %10287 = vmatpush1.msra.mxu0 0.0
        %10288 = vmatprep.subr.mxu0 0.0
        %10289 = vmatpush1.msra.mxu0 0.0
        %10290 = vmatprep.subr.mxu0 0.0
        %10291 = vmatpush1.msra.mxu0 0.0
        %10292 = vmatprep.subr.mxu0 0.0
        %10293 = vmatpush1.msra.mxu0 0.0
        %10294 = vmatprep.subr.mxu0 0.0
        %10295 = vmatpush1.msra.mxu0 0.0
        %10296 = vmatprep.subr.mxu0 0.0
        %10297 = vmatpush1.msra.mxu0 0.0
        %10298 = vmatprep.subr.mxu0 0.0
        %10299 = vmatpush1.msra.mxu0 0.0
        %10300 = vmatprep.subr.mxu0 0.0
        %10301 = vmatpush1.msra.mxu0 0.0
        %10302 = vmatprep.subr.mxu0 0.0
        %10303 = vmatpush1.msra.mxu0 0.0
        %10304 = vmatprep.subr.mxu0 0.0
        %10305 = vmatpush1.msra.mxu0 0.0
        %10306 = vmatprep.subr.mxu0 0.0
        %10307 = vmatpush1.msra.mxu0 0.0
        %10308 = vmatprep.subr.mxu0 0.0
        %10309 = vmatpush1.msra.mxu0 0.0
        %10310 = vmatprep.subr.mxu0 0.0
        %10311 = vmatpush1.msra.mxu0 0.0
        %10312 = vmatprep.subr.mxu0 0.0
        %10313 = vmatpush1.msra.mxu0 0.0
        %10314 = vmatprep.subr.mxu0 0.0
        %10315 = vmatpush1.msra.mxu0 0.0
        %10316 = vmatprep.subr.mxu0 0.0
        %10317 = vmatpush1.msra.mxu0 0.0
        %10318 = vmatprep.mubr.f32.mxu0 0.0
        %10319 = vmatmul.mubr.f32.gmra.mrb[0].mxu0 %v10252
        %v10320 = vpop.f32.mrb[0].mxu0
        %v10321 = vadd.f32 0.0, %v10320
        %v10322 = vpop.f32.mrb[0].mxu0
        %v10323 = vadd.f32 0.0, %v10322
        %10324 = vdwg.mxu0
        %v10325 = vld [vmem:[%s13] sm:$0xff]
        %v10326 = vld [vmem:[%s13 + $0x8] sm:$0xff]
        %v10327 = vld [vmem:[%s13 + $0x10] sm:$0xff]
        %v10328 = vld [vmem:[%s13 + $0x18] sm:$0xff]
        %v10329 = vld [vmem:[%s13 + $0x20] sm:$0xff]
        %v10330 = vld [vmem:[%s13 + $0x28] sm:$0xff]
        %v10331 = vld [vmem:[%s13 + $0x30] sm:$0xff]
        %v10332 = vld [vmem:[%s13 + $0x38] sm:$0xff]
        %v10333 = vld [vmem:[%s13 + $0x40] sm:$0xff]
        %v10334 = vld [vmem:[%s13 + $0x48] sm:$0xff]
        %v10335 = vld [vmem:[%s13 + $0x50] sm:$0xff]
        %v10336 = vld [vmem:[%s13 + $0x58] sm:$0xff]
        %v10337 = vld [vmem:[%s13 + $0x60] sm:$0xff]
        %v10338 = vld [vmem:[%s13 + $0x68] sm:$0xff]
        %v10339 = vld [vmem:[%s13 + $0x70] sm:$0xff]
        %v10340 = vld [vmem:[%s13 + $0x78] sm:$0xff]
        %v10341 = vld [vmem:[%s13 + $0x80] sm:$0xff]
        %v10342 = vld [vmem:[%s13 + $0x88] sm:$0xff]
        %v10343 = vld [vmem:[%s13 + $0x90] sm:$0xff]
        %v10344 = vld [vmem:[%s13 + $0x98] sm:$0xff]
        %v10345 = vld [vmem:[%s13 + $0xa0] sm:$0xff]
        %v10346 = vld [vmem:[%s13 + $0xa8] sm:$0xff]
        %v10347 = vld [vmem:[%s13 + $0xb0] sm:$0xff]
        %v10348 = vld [vmem:[%s13 + $0xb8] sm:$0xff]
        %v10349 = vld [vmem:[%s14] sm:$0x1]
        %v10351 = vsel %vm5860, %v10323, 0
        %10353 = vmatprep.subr.mxu0 0.0
        %10354 = vmatpush1.msra.mxu0 %v10325
        %10355 = vmatprep.subr.mxu0 0.0
        %10356 = vmatpush1.msra.mxu0 %v10326
        %10357 = vmatprep.subr.mxu0 0.0
        %10358 = vmatpush1.msra.mxu0 %v10327
        %10359 = vmatprep.subr.mxu0 0.0
        %10360 = vmatpush1.msra.mxu0 %v10328
        %10361 = vmatprep.subr.mxu0 0.0
        %10362 = vmatpush1.msra.mxu0 %v10329
        %10363 = vmatprep.subr.mxu0 0.0
        %10364 = vmatpush1.msra.mxu0 %v10330
        %10365 = vmatprep.subr.mxu0 0.0
        %10366 = vmatpush1.msra.mxu0 %v10331
        %10367 = vmatprep.subr.mxu0 0.0
        %10368 = vmatpush1.msra.mxu0 %v10332
        %10369 = vmatprep.subr.mxu0 0.0
        %10370 = vmatpush1.msra.mxu0 %v10333
        %10371 = vmatprep.subr.mxu0 0.0
        %10372 = vmatpush1.msra.mxu0 %v10334
        %10373 = vmatprep.subr.mxu0 0.0
        %10374 = vmatpush1.msra.mxu0 %v10335
        %10375 = vmatprep.subr.mxu0 0.0
        %10376 = vmatpush1.msra.mxu0 %v10336
        %10377 = vmatprep.subr.mxu0 0.0
        %10378 = vmatpush1.msra.mxu0 %v10337
        %10379 = vmatprep.subr.mxu0 0.0
        %10380 = vmatpush1.msra.mxu0 %v10338
        %10381 = vmatprep.subr.mxu0 0.0
        %10382 = vmatpush1.msra.mxu0 %v10339
        %10383 = vmatprep.subr.mxu0 0.0
        %10384 = vmatpush1.msra.mxu0 %v10340
        %10385 = vmatprep.subr.mxu0 0.0
        %10386 = vmatpush1.msra.mxu0 %v10341
        %10387 = vmatprep.subr.mxu0 0.0
        %10388 = vmatpush1.msra.mxu0 %v10342
        %10389 = vmatprep.subr.mxu0 0.0
        %10390 = vmatpush1.msra.mxu0 %v10343
        %10391 = vmatprep.subr.mxu0 0.0
        %10392 = vmatpush1.msra.mxu0 %v10344
        %10393 = vmatprep.subr.mxu0 0.0
        %10394 = vmatpush1.msra.mxu0 %v10345
        %10395 = vmatprep.subr.mxu0 0.0
        %10396 = vmatpush1.msra.mxu0 %v10346
        %10397 = vmatprep.subr.mxu0 0.0
        %10398 = vmatpush1.msra.mxu0 %v10347
        %10399 = vmatprep.subr.mxu0 0.0
        %10400 = vmatpush1.msra.mxu0 %v10348
        %10401 = vmatprep.subr.mxu0 0.0
        %10402 = vmatpush1.msra.mxu0 0.0
        %10403 = vmatprep.subr.mxu0 0.0
        %10404 = vmatpush1.msra.mxu0 0.0
        %10405 = vmatprep.subr.mxu0 0.0
        %10406 = vmatpush1.msra.mxu0 0.0
        %10407 = vmatprep.subr.mxu0 0.0
        %10408 = vmatpush1.msra.mxu0 0.0
        %10409 = vmatprep.subr.mxu0 0.0
        %10410 = vmatpush1.msra.mxu0 0.0
        %10411 = vmatprep.subr.mxu0 0.0
        %10412 = vmatpush1.msra.mxu0 0.0
        %10413 = vmatprep.subr.mxu0 0.0
        %10414 = vmatpush1.msra.mxu0 0.0
        %10415 = vmatprep.subr.mxu0 0.0
        %10416 = vmatpush1.msra.mxu0 0.0
        %10417 = vmatprep.mubr.f32.mxu0 %v10351
        %10418 = vmatmul.mubr.f32.gmra.mrb[0].mxu0 %v10321
        %v10419 = vpop.f32.mrb[0].mxu0
        %v10420 = vadd.f32 %v10349, %v10419
        %v10421 = vpop.f32.mrb[0].mxu0
        %10422 = vdwg.mxu0
        %v10423 = vmax.f32 %v10420, 0.0
        %v10424 = vld [vmem:[%s15] sm:$0xff]
        %v10425 = vld [vmem:[%s15 + $0x8] sm:$0xff]
        %v10426 = vld [vmem:[%s15 + $0x10] sm:$0xff]
        %v10427 = vld [vmem:[%s15 + $0x18] sm:$0xff]
        %v10428 = vld [vmem:[%s15 + $0x20] sm:$0xff]
        %v10429 = vld [vmem:[%s15 + $0x28] sm:$0xff]
        %v10430 = vld [vmem:[%s15 + $0x30] sm:$0xff]
        %v10431 = vld [vmem:[%s15 + $0x38] sm:$0xff]
        %v10432 = vld [vmem:[%s16] sm:$0x1]
        %v10434 = vsel %vm5860, %v10423, 0
        %10436 = vmatprep.subr.mxu0 0.0
        %10437 = vmatpush1.msra.mxu0 %v10424
        %10438 = vmatprep.subr.mxu0 0.0
        %10439 = vmatpush1.msra.mxu0 %v10425
        %10440 = vmatprep.subr.mxu0 0.0
        %10441 = vmatpush1.msra.mxu0 %v10426
        %10442 = vmatprep.subr.mxu0 0.0
        %10443 = vmatpush1.msra.mxu0 %v10427
        %10444 = vmatprep.subr.mxu0 0.0
        %10445 = vmatpush1.msra.mxu0 %v10428
        %10446 = vmatprep.subr.mxu0 0.0
        %10447 = vmatpush1.msra.mxu0 %v10429
        %10448 = vmatprep.subr.mxu0 0.0
        %10449 = vmatpush1.msra.mxu0 %v10430
        %10450 = vmatprep.subr.mxu0 0.0
        %10451 = vmatpush1.msra.mxu0 %v10431
        %10452 = vmatprep.subr.mxu0 0.0
        %10453 = vmatpush1.msra.mxu0 0.0
        %10454 = vmatprep.subr.mxu0 0.0
        %10455 = vmatpush1.msra.mxu0 0.0
        %10456 = vmatprep.subr.mxu0 0.0
        %10457 = vmatpush1.msra.mxu0 0.0
        %10458 = vmatprep.subr.mxu0 0.0
        %10459 = vmatpush1.msra.mxu0 0.0
        %10460 = vmatprep.subr.mxu0 0.0
        %10461 = vmatpush1.msra.mxu0 0.0
        %10462 = vmatprep.subr.mxu0 0.0
        %10463 = vmatpush1.msra.mxu0 0.0
        %10464 = vmatprep.subr.mxu0 0.0
        %10465 = vmatpush1.msra.mxu0 0.0
        %10466 = vmatprep.subr.mxu0 0.0
        %10467 = vmatpush1.msra.mxu0 0.0
        %10468 = vmatprep.subr.mxu0 0.0
        %10469 = vmatpush1.msra.mxu0 0.0
        %10470 = vmatprep.subr.mxu0 0.0
        %10471 = vmatpush1.msra.mxu0 0.0
        %10472 = vmatprep.subr.mxu0 0.0
        %10473 = vmatpush1.msra.mxu0 0.0
        %10474 = vmatprep.subr.mxu0 0.0
        %10475 = vmatpush1.msra.mxu0 0.0
        %10476 = vmatprep.subr.mxu0 0.0
        %10477 = vmatpush1.msra.mxu0 0.0
        %10478 = vmatprep.subr.mxu0 0.0
        %10479 = vmatpush1.msra.mxu0 0.0
        %10480 = vmatprep.subr.mxu0 0.0
        %10481 = vmatpush1.msra.mxu0 0.0
        %10482 = vmatprep.subr.mxu0 0.0
        %10483 = vmatpush1.msra.mxu0 0.0
        %10484 = vmatprep.subr.mxu0 0.0
        %10485 = vmatpush1.msra.mxu0 0.0
        %10486 = vmatprep.subr.mxu0 0.0
        %10487 = vmatpush1.msra.mxu0 0.0
        %10488 = vmatprep.subr.mxu0 0.0
        %10489 = vmatpush1.msra.mxu0 0.0
        %10490 = vmatprep.subr.mxu0 0.0
        %10491 = vmatpush1.msra.mxu0 0.0
        %10492 = vmatprep.subr.mxu0 0.0
        %10493 = vmatpush1.msra.mxu0 0.0
        %10494 = vmatprep.subr.mxu0 0.0
        %10495 = vmatpush1.msra.mxu0 0.0
        %10496 = vmatprep.subr.mxu0 0.0
        %10497 = vmatpush1.msra.mxu0 0.0
        %10498 = vmatprep.subr.mxu0 0.0
        %10499 = vmatpush1.msra.mxu0 0.0
        %10500 = vmatprep.mubr.f32.mxu0 0.0
        %10501 = vmatmul.mubr.f32.gmra.mrb[0].mxu0 %v10434
        %v10502 = vpop.f32.mrb[0].mxu0
        %v10503 = vadd.f32 %v10432, %v10502
        %v10504 = vpop.f32.mrb[0].mxu0
        %10505 = vdwg.mxu0
        %v10506 = vmax.f32 %v10503, 0.0
        %v10507 = vld [vmem:[%s586] sm:$0x1]
        %v10508 = vadd.f32 %v10506, %v10507
        %vm10509 = vcmask 24576
        %10510 = vst.msk [vmem:[%s578] sm:$0x1] %vm10509, %v10508
        %s10511 = sand.u32 %s428, 1
        %s10512 = scalar_lea.sflag [#allocation6], %s10511
        %s10513 = sand.u32 %s428, 1
        %s10514 = scalar_lea.vmem [#allocation5], %s10513
        // Predicated region
        $region93: #{multi_input_net2.1} parent=91 // pred_check
          %p10515 = pneg %p438
        $region94: #{multi_input_net2.1} parent=91 // pred_check_branch
          %10517 = sbr.rel (%p10515) target = $region96
        $region95: #{multi_input_net2.1} parent=91 // pred_region
          %s10519 = ssub.s32 16, 16
          %10520 = vsyncadd %s10512, %s10519
          %s10521 = smul.addr %s32, 16
          %s10522 = scalar_lea.hbm %s18, %s10521
          %s10524 = sshll.u32 %s10514, 4
          %s10525 = int_to_ptr.vmem [resolvable:$true] %s10524
          %10527 = dma.vmem_to_hbm [thread:$0]  %s10525, 16, %s10522, %s10512
        $region96: #{multi_input_net2.1} parent=91 // pred_fallthru
          _
      $region92: #{multi_input_net2.1} parent=5 // pred_fallthru
        _
      %p10528 = scmp.le.s32.totalorder 2, %s27
      // Predicated region
      $region97: #{multi_input_net2.1} parent=5 // pred_check
        %p10529 = pneg %p10528
      $region98: #{multi_input_net2.1} parent=5 // pred_check_branch
        %10531 = sbr.rel (%p10529) target = $region100
      $region99: #{multi_input_net2.1} parent=5 // pred_region
        %s10532 = ssub.s32 %s27, 2
        // Predicated region
        $region101: #{multi_input_net2.1} parent=99 // pred_check
          %p10533 = pneg %p444
        $region102: #{multi_input_net2.1} parent=99 // pred_check_branch
          %10535 = sbr.rel (%p10533) target = $region104
        $region103: #{multi_input_net2.1} parent=99 // pred_region
          %s10536 = sand.u32 %s429, 1
          %s10537 = scalar_lea.sflag [#allocation6], %s10536
          %s10538 = sand.u32 %s429, 1
          %s10539 = scalar_lea.vmem [#allocation5], %s10538
          %10540 = dma.done %s10537, 16
        $region104: #{multi_input_net2.1} parent=99 // pred_fallthru
          _
      $region100: #{multi_input_net2.1} parent=5 // pred_fallthru
        _
    $region6: #{multi_input_net2.1} parent=1 // loop_footer
      %s31 = sadd.s32 1, %s27
    $region7: #{multi_input_net2.1} parent=1 // loop_footer_branch
      %26 = sbr.rel target = $region3
    $region8: #{multi_input_net2.1} parent=1 // loop_exit
      _
    %10541 = vsyncpa [#allocation6], 1
    %s10542 = scalar_lea.sflag [#allocation6], 1
    %10543 = vsyncpa %s10542, 1

</llo_original>
